<compile_context>
chip_gen: v6e
topology: v6e:2x2x1
jax: 0.10.0
libtpu: 0.0.40
codegen_flags: <defaults>
</compile_context>

<pallas_src>
import functools
from functools import reduce
from operator import mul

import numpy as np
import jax
import jax.numpy as jnp
from jax.experimental import pallas as pl
from jax.experimental.pallas import tpu as pltpu


# ----------------------------------------------------------------------------
# Fused Pallas kernel: qkv projection + windowed MHSA + output projection
# ----------------------------------------------------------------------------
def _fused_window_attn_kernel(nH, Wm, has_mask,
                              x_ref, wqkv_ref, bqkv_ref, rpb_ref, *rest):
    if has_mask:
        mask_ref, wproj_ref, bproj_ref, o_ref = rest
    else:
        mask_ref = None
        wproj_ref, bproj_ref, o_ref = rest

    W, N, C = x_ref.shape
    Dh = C // nH
    in_dtype = x_ref.dtype

    # ---- qkv projection: one lane-dense MXU matmul for the whole block ------
    # (scale is already folded into the Q columns of wqkv / bqkv)
    x2d = x_ref[...].reshape(W * N, C)
    qkv = jnp.dot(x2d, wqkv_ref[...], preferred_element_type=jnp.float32)
    qkv = qkv + bqkv_ref[...].astype(jnp.float32)          # (W*N, 3C), f32

    if has_mask:
        # Window j of this block uses mask row (j % Wm); blocks are Wm-aligned,
        # matching PyTorch's A.view(B_//nW, nW, nH, N, N) + mask[None,:,None].
        m = mask_ref[...].astype(jnp.float32)               # (Wm, N, N)
        m = jnp.broadcast_to(m[None], (W // Wm, Wm, N, N)).reshape(W, N, N)

    # ---- per-head attention (3-D einsums over the window batch dim) ---------
    # TODO(synk): a single head-batched einsum would cut instruction count, but
    # needs a multi-batch-dim dot_general / non-minor transpose lowering that is
    # not verified on this Mosaic version; per-head 3-D einsums are proven.
    head_outs = []
    for h in range(nH):
        q_h = qkv[:, h * Dh:(h + 1) * Dh].astype(in_dtype).reshape(W, N, Dh)
        k_h = qkv[:, C + h * Dh:C + (h + 1) * Dh].astype(in_dtype).reshape(W, N, Dh)
        v_h = qkv[:, 2 * C + h * Dh:2 * C + (h + 1) * Dh].astype(in_dtype).reshape(W, N, Dh)

        s = jnp.einsum("wqd,wkd->wqk", q_h, k_h,
                       preferred_element_type=jnp.float32)   # (W, N, N) f32
        s = s + rpb_ref[h].astype(jnp.float32)                # (N, N), VMEM-resident
        if has_mask:
            s = s + m

        s = s - jnp.max(s, axis=-1, keepdims=True)
        p = jnp.exp(s)
        # approx=False keeps softmax exact enough for the 2e-4 check vs f32 ref.
        p = p * pl.reciprocal(jnp.sum(p, axis=-1, keepdims=True), approx=False)

        y_h = jnp.einsum("wqk,wkd->wqd", p.astype(in_dtype), v_h,
                         preferred_element_type=jnp.float32)  # (W, N, Dh)
        head_outs.append(y_h.astype(in_dtype))

    # channels-last (lane-dense) head concat: (W, N, C) -> (W*N, C)
    y = jnp.concatenate(head_outs, axis=-1).reshape(W * N, C)

    # ---- output projection ---------------------------------------------------
    out = jnp.dot(y, wproj_ref[...], preferred_element_type=jnp.float32)
    out = out + bproj_ref[...].astype(jnp.float32)
    o_ref[...] = out.reshape(W, N, C).astype(o_ref.dtype)


# ----------------------------------------------------------------------------
# Chip-aware blocking heuristics
# ----------------------------------------------------------------------------
def _chip_info():
    """(num_tensorcores, physical_vmem_bytes) with conservative fallbacks."""
    kind = ""
    try:
        kind = jax.devices()[0].device_kind.lower()
    except Exception:
        pass
    num_tc = 2 if any(t in kind for t in ("v7", "v5p", "v4")) else 1
    vmem_bytes = (64 << 20) if "v7" in kind else (128 << 20)
    try:
        info = pltpu.get_tpu_info()
        cap = getattr(info, "vmem_capacity_bytes", None)
        if cap:
            vmem_bytes = int(cap)
    except Exception:
        pass
    return num_tc, vmem_bytes


def _choose_windows_per_block(B_, nW, N, C, nH, dtype_bytes, has_mask,
                              num_tc, budget_bytes):
    """Pick W (windows per grid step): divides B_, compatible with the mask
    layout (W % nW == 0 or nW % W == 0), bounded by a realistic VMEM budget.
    Single-TC chips: fewest grid steps (largest W).  Megacore chips: largest W
    whose step count splits evenly across the TensorCores."""

    def per_step_bytes(w):
        wm = min(w, nW)
        b = 0
        b += 2 * w * N * C * dtype_bytes                 # x block, double-buffered
        b += 2 * w * N * C * dtype_bytes                 # out block, double-buffered
        if has_mask:
            b += 2 * wm * N * N * 4                      # mask block, double-buffered
        b += w * N * 3 * C * 4                           # qkv activations (f32)
        b += 2 * nH * w * N * N * 4                      # scores+probs, nH live (unrolled)
        b += w * N * C * dtype_bytes                     # concatenated head outputs
        b += w * N * C * 4                               # proj accumulator (f32)
        b += 2 * (C * 3 * C + 3 * C + C * C + C + nH * N * N) * 4  # resident weights/rpb
        return b

    divisors = [w for w in range(1, B_ + 1)
                if B_ % w == 0 and (w % nW == 0 or nW % w == 0)]
    fits = [w for w in divisors if per_step_bytes(w) <= budget_bytes] or [min(divisors)]
    if num_tc > 1:
        even = [w for w in fits if (B_ // w) % num_tc == 0]
        if even:
            return max(even)
    return max(fits)


# ----------------------------------------------------------------------------
# Wrapper around pallas_call
# ----------------------------------------------------------------------------
def fused_window_attention(x, qkv_w, qkv_b, rpb, proj_w, proj_b,
                           mask=None, windows_per_block=None):
    """x: (B_, N, C); rpb: (nH, N, N); mask: (nW, N, N) or None -> (B_, N, C).
    qkv_w / qkv_b must already have the softmax scale folded into the Q part."""
    B_, N, C = x.shape
    nH = rpb.shape[0]
    Dh = C // nH
    has_mask = mask is not None
    nW = mask.shape[0] if has_mask else 1
    itemsize = jnp.dtype(x.dtype).itemsize

    num_tc, vmem_bytes = _chip_info()
    W = windows_per_block or _choose_windows_per_block(
        B_, nW, N, C, nH, itemsize, has_mask, num_tc, vmem_bytes // 4)
    assert B_ % W == 0 and (W % nW == 0 or nW % W == 0), (B_, W, nW)
    Wm = min(W, nW)
    grid = (B_ // W,)

    in_specs = [
        pl.BlockSpec((W, N, C), lambda i: (i, 0, 0)),       # x (pipelined)
        pl.BlockSpec((C, 3 * C), lambda i: (0, 0)),         # qkv_w (resident)
        pl.BlockSpec((1, 3 * C), lambda i: (0, 0)),         # qkv_b (resident)
        pl.BlockSpec((nH, N, N), lambda i: (0, 0, 0)),      # rpb   (resident)
    ]
    inputs = [x, qkv_w, qkv_b.reshape(1, 3 * C), rpb]

    if has_mask:
        # Windows [i*W, (i+1)*W) need mask rows starting at (i*W) % nW, i.e.
        # block (i*(W//Wm)) % (nW//Wm); constant 0 (resident) when W >= nW.
        def mask_index_map(i, W=W, Wm=Wm, nW=nW):
            return ((i * (W // Wm)) % (nW // Wm), 0, 0)
        in_specs.append(pl.BlockSpec((Wm, N, N), mask_index_map))
        inputs.append(mask)

    in_specs += [
        pl.BlockSpec((C, C), lambda i: (0, 0)),             # proj_w (resident)
        pl.BlockSpec((1, C), lambda i: (0, 0)),              # proj_b (resident)
    ]
    inputs += [proj_w, proj_b.reshape(1, C)]

    # Advisory cost estimate for XLA's scheduler.
    flops = int(2 * B_ * N * C * 3 * C          # qkv projection
                + 4 * B_ * nH * N * N * Dh      # q@k^T and p@v
                + 2 * B_ * N * C * C)           # output projection
    transcendentals = int(B_ * nH * N * N)      # exp in softmax
    bytes_accessed = int(
        2 * B_ * N * C * itemsize
        + (C * 3 * C + 3 * C + C * C + C + nH * N * N) * 4
        + (nW * N * N * jnp.dtype(mask.dtype).itemsize if has_mask else 0))

    kernel = functools.partial(_fused_window_attn_kernel, nH, Wm, has_mask)

    return pl.pallas_call(
        kernel,
        out_shape=jax.ShapeDtypeStruct((B_, N, C), x.dtype),
        grid_spec=pltpu.PrefetchScalarGridSpec(
            num_scalar_prefetch=0,
            grid=grid,
            in_specs=in_specs,
            out_specs=pl.BlockSpec((W, N, C), lambda i: (i, 0, 0)),
        ),
        compiler_params=pltpu.CompilerParams(
            dimension_semantics=("parallel",),
            vmem_limit_bytes=int(min(vmem_bytes // 2, 64 << 20))),
        cost_estimate=pl.CostEstimate(
            flops=flops, transcendentals=transcendentals,
            bytes_accessed=bytes_accessed),
    )(*inputs)


# ----------------------------------------------------------------------------
# WindowAttention3D module (JAX / Pallas)
# ----------------------------------------------------------------------------
def _relative_position_index(window_size):
    wd, wh, ww = window_size
    coords = np.stack(np.meshgrid(np.arange(wd), np.arange(wh), np.arange(ww),
                                  indexing="ij"))                     # (3, wd, wh, ww)
    coords_flatten = coords.reshape(3, -1)                            # (3, N)
    rel = coords_flatten[:, :, None] - coords_flatten[:, None, :]     # (3, N, N)
    rel = rel.transpose(1, 2, 0).astype(np.int64)                     # (N, N, 3)
    rel[:, :, 0] += wd - 1
    rel[:, :, 1] += wh - 1
    rel[:, :, 2] += ww - 1
    rel[:, :, 0] *= (2 * wh - 1) * (2 * ww - 1)
    rel[:, :, 1] *= (2 * ww - 1)
    return rel.sum(-1)                                                # (N, N)


class WindowAttention3DPallas:
    def __init__(self, dim, window_size, num_heads, qkv_bias=False, qk_scale=None,
                 *, key):
        assert dim % num_heads == 0
        self.dim = dim
        self.window_size = window_size
        self.num_heads = num_heads
        head_dim = dim // num_heads
        self.scale = qk_scale or head_dim ** (-0.5)

        k_tab, k_qkv, k_proj_w, k_proj_b = jax.random.split(key, 4)
        table_len = ((2 * window_size[0] - 1) * (2 * window_size[1] - 1)
                     * (2 * window_size[2] - 1))
        # trunc_normal_(std=0.02)
        self.rpb_table = 0.02 * jax.random.truncated_normal(
            k_tab, -2.0, 2.0, (table_len, num_heads), jnp.float32)
        self.rel_pos_index = jnp.asarray(_relative_position_index(window_size),
                                         dtype=jnp.int32)

        # Precompute relative-position bias once: (nH, N, N)
        N = reduce(mul, window_size)
        idx = self.rel_pos_index.reshape(-1)
        rpb = jnp.take(self.rpb_table, idx, axis=0).reshape(N, N, num_heads)
        self.rpb = jnp.transpose(rpb, (2, 0, 1))

        # qkv: Linear(dim, 3*dim, bias=qkv_bias); proj: Linear(dim, dim)
        self.qkv_w = (jax.random.normal(k_qkv, (dim, 3 * dim), jnp.float32)
                      * (1.0 / np.sqrt(dim)))
        self.qkv_b = (jnp.zeros((3 * dim,), jnp.float32) if not qkv_bias
                      else 0.01 * jnp.arange(3 * dim, dtype=jnp.float32))
        self.proj_w = (jax.random.normal(k_proj_w, (dim, dim), jnp.float32)
                       * (1.0 / np.sqrt(dim)))
        self.proj_b = 0.01 * jax.random.normal(k_proj_b, (dim,), jnp.float32)

        # Fold the softmax scale into the Q third of the fused qkv weights/bias,
        # so the kernel never multiplies q by scale at runtime.
        self.qkv_w_fused = self.qkv_w.at[:, :dim].multiply(self.scale)
        self.qkv_b_fused = self.qkv_b.at[:dim].multiply(self.scale)

    def forward(self, x, mask=None):
        """x: (B_, N, C); mask: (num_windows, N, N) with 0 / -100 entries, or None."""
        B_, N, C = x.shape
        assert C == self.dim and N == self.rpb.shape[-1]
        return fused_window_attention(x, self.qkv_w_fused, self.qkv_b_fused,
                                      self.rpb, self.proj_w, self.proj_b, mask)


# ----------------------------------------------------------------------------
# Pure-JAX reference (mirrors the PyTorch forward exactly; uses unfolded scale)
# ----------------------------------------------------------------------------
def reference_forward(mod: WindowAttention3DPallas, x, mask=None):
    B_, N, C = x.shape
    nH = mod.num_heads
    Dh = C // nH
    qkv = (x.reshape(B_ * N, C) @ mod.qkv_w + mod.qkv_b).reshape(B_, N, 3, nH, Dh)
    qkv = qkv.transpose(2, 0, 3, 1, 4)
    q, k, v = qkv[0] * mod.scale, qkv[1], qkv[2]
    idx = mod.rel_pos_index[:N, :N].reshape(-1)
    rpb = jnp.take(mod.rpb_table, idx, axis=0).reshape(N, N, nH).transpose(2, 0, 1)
    A = jnp.einsum("bhqd,bhkd->bhqk", q, k) + rpb[None]
    if mask is not None:
        nW = mask.shape[0]
        A = A.reshape(B_ // nW, nW, nH, N, N) + mask[None, :, None, :, :]
        A = A.reshape(B_, nH, N, N)
    A = jax.nn.softmax(A, axis=-1)
    y = jnp.einsum("bhqk,bhkd->bhqd", A, v)
    y = jnp.transpose(y, (0, 2, 1, 3)).reshape(B_, N, C)
    return (y.reshape(B_ * N, C) @ mod.proj_w + mod.proj_b).reshape(B_, N, C)


# ----------------------------------------------------------------------------
# Main
# ----------------------------------------------------------------------------
if __name__ == "__main__":
    key = jax.random.PRNGKey(0)
    k_mod, k_x, k_mask = jax.random.split(key, 3)

    dim = 32
    num_heads = 4
    window_size = (2, 4, 4)
    N = reduce(mul, window_size)        # 32 tokens per window
    B = 2                               # batch
    nW = 4                              # windows per batch element
    B_ = B * nW                         # 8

    module = WindowAttention3DPallas(dim, window_size, num_heads,
                                     qkv_bias=False, qk_scale=None, key=k_mod)

    x = jax.random.normal(k_x, (B_, N, dim), jnp.float32)
    # shifted-window style (0 / -100) attention mask, shape (num_windows, N, N)
    mask = jnp.where(jax.random.uniform(k_mask, (nW, N, N)) > 0.85, -100.0, 0.0)

    # masked path
    out = jax.block_until_ready(module.forward(x, mask))
    ref = reference_forward(module, x, mask)
    assert out.shape == (B_, N, dim)
    np.testing.assert_allclose(np.asarray(out), np.asarray(ref), atol=2e-4, rtol=2e-4)

    # unmasked path (separate pallas_call variant without a mask operand)
    out_nm = jax.block_until_ready(module.forward(x, None))
    ref_nm = reference_forward(module, x, None)
    np.testing.assert_allclose(np.asarray(out_nm), np.asarray(ref_nm),
                               atol=2e-4, rtol=2e-4)

    print("KERNEL_OK")
</pallas_src>

<mosaic_0001>
module attributes {stable_mosaic.version = 11 : i64} {
  func.func @_fused_window_attn_kernel(%arg0: i32, %arg1: memref<8x32x32xf32, #tpu.memory_space<vmem>>, %arg2: memref<32x96xf32, #tpu.memory_space<vmem>>, %arg3: memref<1x96xf32, #tpu.memory_space<vmem>>, %arg4: memref<4x32x32xf32, #tpu.memory_space<vmem>>, %arg5: memref<4x32x32xf32, #tpu.memory_space<vmem>>, %arg6: memref<32x32xf32, #tpu.memory_space<vmem>>, %arg7: memref<1x32xf32, #tpu.memory_space<vmem>>, %arg8: memref<8x32x32xf32, #tpu.memory_space<vmem>>) attributes {dimension_semantics = [#tpu.dimension_semantics<parallel>], iteration_bounds = array<i64: 1>, scalar_prefetch = 0 : i64, scratch_operands = 0 : i64, tpu.core_type = #tpu.core_type<tc>, window_params = [{transform_indices = @transform_0, window_bounds = array<i64: 8, 32, 32>}, {pipeline_mode = #tpu.pipeline_mode<synchronous>, transform_indices = @transform_1, window_bounds = array<i64: 32, 96>}, {pipeline_mode = #tpu.pipeline_mode<synchronous>, transform_indices = @transform_2, window_bounds = array<i64: 1, 96>}, {pipeline_mode = #tpu.pipeline_mode<synchronous>, transform_indices = @transform_3, window_bounds = array<i64: 4, 32, 32>}, {transform_indices = @transform_4, window_bounds = array<i64: 4, 32, 32>}, {pipeline_mode = #tpu.pipeline_mode<synchronous>, transform_indices = @transform_5, window_bounds = array<i64: 32, 32>}, {pipeline_mode = #tpu.pipeline_mode<synchronous>, transform_indices = @transform_6, window_bounds = array<i64: 1, 32>}, {transform_indices = @transform_7, window_bounds = array<i64: 8, 32, 32>}]} {
    %c0 = arith.constant 0 : index
    %c0_0 = arith.constant 0 : index
    %c0_1 = arith.constant 0 : index
    %0 = vector.load %arg1[%c0, %c0_0, %c0_1] : memref<8x32x32xf32, #tpu.memory_space<vmem>>, vector<8x32x32xf32>
    %1 = vector.shape_cast %0 : vector<8x32x32xf32> to vector<256x32xf32>
    %c0_2 = arith.constant 0 : index
    %c0_3 = arith.constant 0 : index
    %2 = vector.load %arg2[%c0_2, %c0_3] : memref<32x96xf32, #tpu.memory_space<vmem>>, vector<32x96xf32>
    %cst = arith.constant dense<0.000000e+00> : vector<256x96xf32>
    %3 = tpu.matmul %1, %2, %cst {dimension_numbers = #tpu.dot_dimension_numbers<[1], [0], [0], [1], [0, 0, 1, 1], [], []>} : vector<256x32xf32>, vector<32x96xf32>, vector<256x96xf32> -> vector<256x96xf32>
    %c0_4 = arith.constant 0 : index
    %c0_5 = arith.constant 0 : index
    %4 = vector.load %arg3[%c0_4, %c0_5] : memref<1x96xf32, #tpu.memory_space<vmem>>, vector<1x96xf32>
    %5 = vector.broadcast %4 : vector<1x96xf32> to vector<256x96xf32>
    %6 = arith.addf %3, %5 : vector<256x96xf32>
    %c0_6 = arith.constant 0 : index
    %c0_7 = arith.constant 0 : index
    %c0_8 = arith.constant 0 : index
    %7 = vector.load %arg5[%c0_6, %c0_7, %c0_8] : memref<4x32x32xf32, #tpu.memory_space<vmem>>, vector<4x32x32xf32>
    %8 = vector.shape_cast %7 : vector<4x32x32xf32> to vector<1x4x32x32xf32>
    %9 = vector.shape_cast %8 : vector<1x4x32x32xf32> to vector<1x4x32x32xf32>
    %10 = vector.broadcast %9 : vector<1x4x32x32xf32> to vector<2x4x32x32xf32>
    %11 = vector.shape_cast %10 : vector<2x4x32x32xf32> to vector<8x32x32xf32>
    %12 = vector.extract_strided_slice %6 {offsets = [0, 0], sizes = [256, 8], strides = [1, 1]} : vector<256x96xf32> to vector<256x8xf32>
    %13 = vector.shape_cast %12 : vector<256x8xf32> to vector<8x32x8xf32>
    %14 = vector.extract_strided_slice %6 {offsets = [0, 32], sizes = [256, 8], strides = [1, 1]} : vector<256x96xf32> to vector<256x8xf32>
    %15 = vector.shape_cast %14 : vector<256x8xf32> to vector<8x32x8xf32>
    %16 = vector.extract_strided_slice %6 {offsets = [0, 64], sizes = [256, 8], strides = [1, 1]} : vector<256x96xf32> to vector<256x8xf32>
    %17 = vector.shape_cast %16 : vector<256x8xf32> to vector<8x32x8xf32>
    "tpu.trace_start"() <{level = 10 : i32, message = "wqd,wkd->wqk"}> : () -> ()
    %cst_9 = arith.constant dense<0.000000e+00> : vector<8x32x32xf32>
    %18 = tpu.matmul %13, %15, %cst_9 {dimension_numbers = #tpu.dot_dimension_numbers<[2], [2], [1], [1], [0, 0, 0, 1, 1, 1], [0], [0]>} : vector<8x32x8xf32>, vector<8x32x8xf32>, vector<8x32x32xf32> -> vector<8x32x32xf32>
    "tpu.trace_stop"() : () -> ()
    %c0_10 = arith.constant 0 : index
    %c0_11 = arith.constant 0 : index
    %c0_12 = arith.constant 0 : index
    %19 = vector.load %arg4[%c0_10, %c0_11, %c0_12] : memref<4x32x32xf32, #tpu.memory_space<vmem>>, vector<1x32x32xf32>
    %20 = vector.shape_cast %19 : vector<1x32x32xf32> to vector<32x32xf32>
    %21 = vector.shape_cast %20 : vector<32x32xf32> to vector<1x32x32xf32>
    %22 = vector.broadcast %21 : vector<1x32x32xf32> to vector<8x32x32xf32>
    %23 = arith.addf %18, %22 : vector<8x32x32xf32>
    %24 = arith.addf %23, %11 : vector<8x32x32xf32>
    %cst_13 = arith.constant dense<0xFF800000> : vector<8x32xf32>
    %25 = vector.multi_reduction <maximumf>, %24, %cst_13 [2] : vector<8x32x32xf32> to vector<8x32xf32>
    %26 = vector.shape_cast %25 : vector<8x32xf32> to vector<8x32x1xf32>
    %27 = vector.broadcast %26 : vector<8x32x1xf32> to vector<8x32x32xf32>
    %28 = arith.subf %24, %27 : vector<8x32x32xf32>
    %29 = math.exp %28 : vector<8x32x32xf32>
    %cst_14 = arith.constant dense<0.000000e+00> : vector<8x32xf32>
    %30 = vector.multi_reduction <add>, %29, %cst_14 [2] : vector<8x32x32xf32> to vector<8x32xf32>
    %31 = vector.shape_cast %30 : vector<8x32xf32> to vector<8x32x1xf32>
    %32 = tpu.reciprocal %31 : vector<8x32x1xf32> -> vector<8x32x1xf32>
    %33 = vector.broadcast %32 : vector<8x32x1xf32> to vector<8x32x32xf32>
    %34 = arith.mulf %29, %33 : vector<8x32x32xf32>
    "tpu.trace_start"() <{level = 10 : i32, message = "wqk,wkd->wqd"}> : () -> ()
    %cst_15 = arith.constant dense<0.000000e+00> : vector<8x32x8xf32>
    %35 = tpu.matmul %34, %17, %cst_15 {dimension_numbers = #tpu.dot_dimension_numbers<[2], [1], [1], [2], [0, 0, 0, 1, 1, 2], [0], [0]>} : vector<8x32x32xf32>, vector<8x32x8xf32>, vector<8x32x8xf32> -> vector<8x32x8xf32>
    "tpu.trace_stop"() : () -> ()
    %36 = vector.extract_strided_slice %6 {offsets = [0, 8], sizes = [256, 8], strides = [1, 1]} : vector<256x96xf32> to vector<256x8xf32>
    %37 = vector.shape_cast %36 : vector<256x8xf32> to vector<8x32x8xf32>
    %38 = vector.extract_strided_slice %6 {offsets = [0, 40], sizes = [256, 8], strides = [1, 1]} : vector<256x96xf32> to vector<256x8xf32>
    %39 = vector.shape_cast %38 : vector<256x8xf32> to vector<8x32x8xf32>
    %40 = vector.extract_strided_slice %6 {offsets = [0, 72], sizes = [256, 8], strides = [1, 1]} : vector<256x96xf32> to vector<256x8xf32>
    %41 = vector.shape_cast %40 : vector<256x8xf32> to vector<8x32x8xf32>
    "tpu.trace_start"() <{level = 10 : i32, message = "wqd,wkd->wqk"}> : () -> ()
    %cst_16 = arith.constant dense<0.000000e+00> : vector<8x32x32xf32>
    %42 = tpu.matmul %37, %39, %cst_16 {dimension_numbers = #tpu.dot_dimension_numbers<[2], [2], [1], [1], [0, 0, 0, 1, 1, 1], [0], [0]>} : vector<8x32x8xf32>, vector<8x32x8xf32>, vector<8x32x32xf32> -> vector<8x32x32xf32>
    "tpu.trace_stop"() : () -> ()
    %c1 = arith.constant 1 : index
    %c0_17 = arith.constant 0 : index
    %c0_18 = arith.constant 0 : index
    %43 = vector.load %arg4[%c1, %c0_17, %c0_18] : memref<4x32x32xf32, #tpu.memory_space<vmem>>, vector<1x32x32xf32>
    %44 = vector.shape_cast %43 : vector<1x32x32xf32> to vector<32x32xf32>
    %45 = vector.shape_cast %44 : vector<32x32xf32> to vector<1x32x32xf32>
    %46 = vector.broadcast %45 : vector<1x32x32xf32> to vector<8x32x32xf32>
    %47 = arith.addf %42, %46 : vector<8x32x32xf32>
    %48 = arith.addf %47, %11 : vector<8x32x32xf32>
    %cst_19 = arith.constant dense<0xFF800000> : vector<8x32xf32>
    %49 = vector.multi_reduction <maximumf>, %48, %cst_19 [2] : vector<8x32x32xf32> to vector<8x32xf32>
    %50 = vector.shape_cast %49 : vector<8x32xf32> to vector<8x32x1xf32>
    %51 = vector.broadcast %50 : vector<8x32x1xf32> to vector<8x32x32xf32>
    %52 = arith.subf %48, %51 : vector<8x32x32xf32>
    %53 = math.exp %52 : vector<8x32x32xf32>
    %cst_20 = arith.constant dense<0.000000e+00> : vector<8x32xf32>
    %54 = vector.multi_reduction <add>, %53, %cst_20 [2] : vector<8x32x32xf32> to vector<8x32xf32>
    %55 = vector.shape_cast %54 : vector<8x32xf32> to vector<8x32x1xf32>
    %56 = tpu.reciprocal %55 : vector<8x32x1xf32> -> vector<8x32x1xf32>
    %57 = vector.broadcast %56 : vector<8x32x1xf32> to vector<8x32x32xf32>
    %58 = arith.mulf %53, %57 : vector<8x32x32xf32>
    "tpu.trace_start"() <{level = 10 : i32, message = "wqk,wkd->wqd"}> : () -> ()
    %cst_21 = arith.constant dense<0.000000e+00> : vector<8x32x8xf32>
    %59 = tpu.matmul %58, %41, %cst_21 {dimension_numbers = #tpu.dot_dimension_numbers<[2], [1], [1], [2], [0, 0, 0, 1, 1, 2], [0], [0]>} : vector<8x32x32xf32>, vector<8x32x8xf32>, vector<8x32x8xf32> -> vector<8x32x8xf32>
    "tpu.trace_stop"() : () -> ()
    %60 = vector.extract_strided_slice %6 {offsets = [0, 16], sizes = [256, 8], strides = [1, 1]} : vector<256x96xf32> to vector<256x8xf32>
    %61 = vector.shape_cast %60 : vector<256x8xf32> to vector<8x32x8xf32>
    %62 = vector.extract_strided_slice %6 {offsets = [0, 48], sizes = [256, 8], strides = [1, 1]} : vector<256x96xf32> to vector<256x8xf32>
    %63 = vector.shape_cast %62 : vector<256x8xf32> to vector<8x32x8xf32>
    %64 = vector.extract_strided_slice %6 {offsets = [0, 80], sizes = [256, 8], strides = [1, 1]} : vector<256x96xf32> to vector<256x8xf32>
    %65 = vector.shape_cast %64 : vector<256x8xf32> to vector<8x32x8xf32>
    "tpu.trace_start"() <{level = 10 : i32, message = "wqd,wkd->wqk"}> : () -> ()
    %cst_22 = arith.constant dense<0.000000e+00> : vector<8x32x32xf32>
    %66 = tpu.matmul %61, %63, %cst_22 {dimension_numbers = #tpu.dot_dimension_numbers<[2], [2], [1], [1], [0, 0, 0, 1, 1, 1], [0], [0]>} : vector<8x32x8xf32>, vector<8x32x8xf32>, vector<8x32x32xf32> -> vector<8x32x32xf32>
    "tpu.trace_stop"() : () -> ()
    %c2 = arith.constant 2 : index
    %c0_23 = arith.constant 0 : index
    %c0_24 = arith.constant 0 : index
    %67 = vector.load %arg4[%c2, %c0_23, %c0_24] : memref<4x32x32xf32, #tpu.memory_space<vmem>>, vector<1x32x32xf32>
    %68 = vector.shape_cast %67 : vector<1x32x32xf32> to vector<32x32xf32>
    %69 = vector.shape_cast %68 : vector<32x32xf32> to vector<1x32x32xf32>
    %70 = vector.broadcast %69 : vector<1x32x32xf32> to vector<8x32x32xf32>
    %71 = arith.addf %66, %70 : vector<8x32x32xf32>
    %72 = arith.addf %71, %11 : vector<8x32x32xf32>
    %cst_25 = arith.constant dense<0xFF800000> : vector<8x32xf32>
    %73 = vector.multi_reduction <maximumf>, %72, %cst_25 [2] : vector<8x32x32xf32> to vector<8x32xf32>
    %74 = vector.shape_cast %73 : vector<8x32xf32> to vector<8x32x1xf32>
    %75 = vector.broadcast %74 : vector<8x32x1xf32> to vector<8x32x32xf32>
    %76 = arith.subf %72, %75 : vector<8x32x32xf32>
    %77 = math.exp %76 : vector<8x32x32xf32>
    %cst_26 = arith.constant dense<0.000000e+00> : vector<8x32xf32>
    %78 = vector.multi_reduction <add>, %77, %cst_26 [2] : vector<8x32x32xf32> to vector<8x32xf32>
    %79 = vector.shape_cast %78 : vector<8x32xf32> to vector<8x32x1xf32>
    %80 = tpu.reciprocal %79 : vector<8x32x1xf32> -> vector<8x32x1xf32>
    %81 = vector.broadcast %80 : vector<8x32x1xf32> to vector<8x32x32xf32>
    %82 = arith.mulf %77, %81 : vector<8x32x32xf32>
    "tpu.trace_start"() <{level = 10 : i32, message = "wqk,wkd->wqd"}> : () -> ()
    %cst_27 = arith.constant dense<0.000000e+00> : vector<8x32x8xf32>
    %83 = tpu.matmul %82, %65, %cst_27 {dimension_numbers = #tpu.dot_dimension_numbers<[2], [1], [1], [2], [0, 0, 0, 1, 1, 2], [0], [0]>} : vector<8x32x32xf32>, vector<8x32x8xf32>, vector<8x32x8xf32> -> vector<8x32x8xf32>
    "tpu.trace_stop"() : () -> ()
    %84 = vector.extract_strided_slice %6 {offsets = [0, 24], sizes = [256, 8], strides = [1, 1]} : vector<256x96xf32> to vector<256x8xf32>
    %85 = vector.shape_cast %84 : vector<256x8xf32> to vector<8x32x8xf32>
    %86 = vector.extract_strided_slice %6 {offsets = [0, 56], sizes = [256, 8], strides = [1, 1]} : vector<256x96xf32> to vector<256x8xf32>
    %87 = vector.shape_cast %86 : vector<256x8xf32> to vector<8x32x8xf32>
    %88 = vector.extract_strided_slice %6 {offsets = [0, 88], sizes = [256, 8], strides = [1, 1]} : vector<256x96xf32> to vector<256x8xf32>
    %89 = vector.shape_cast %88 : vector<256x8xf32> to vector<8x32x8xf32>
    "tpu.trace_start"() <{level = 10 : i32, message = "wqd,wkd->wqk"}> : () -> ()
    %cst_28 = arith.constant dense<0.000000e+00> : vector<8x32x32xf32>
    %90 = tpu.matmul %85, %87, %cst_28 {dimension_numbers = #tpu.dot_dimension_numbers<[2], [2], [1], [1], [0, 0, 0, 1, 1, 1], [0], [0]>} : vector<8x32x8xf32>, vector<8x32x8xf32>, vector<8x32x32xf32> -> vector<8x32x32xf32>
    "tpu.trace_stop"() : () -> ()
    %c3 = arith.constant 3 : index
    %c0_29 = arith.constant 0 : index
    %c0_30 = arith.constant 0 : index
    %91 = vector.load %arg4[%c3, %c0_29, %c0_30] : memref<4x32x32xf32, #tpu.memory_space<vmem>>, vector<1x32x32xf32>
    %92 = vector.shape_cast %91 : vector<1x32x32xf32> to vector<32x32xf32>
    %93 = vector.shape_cast %92 : vector<32x32xf32> to vector<1x32x32xf32>
    %94 = vector.broadcast %93 : vector<1x32x32xf32> to vector<8x32x32xf32>
    %95 = arith.addf %90, %94 : vector<8x32x32xf32>
    %96 = arith.addf %95, %11 : vector<8x32x32xf32>
    %cst_31 = arith.constant dense<0xFF800000> : vector<8x32xf32>
    %97 = vector.multi_reduction <maximumf>, %96, %cst_31 [2] : vector<8x32x32xf32> to vector<8x32xf32>
    %98 = vector.shape_cast %97 : vector<8x32xf32> to vector<8x32x1xf32>
    %99 = vector.broadcast %98 : vector<8x32x1xf32> to vector<8x32x32xf32>
    %100 = arith.subf %96, %99 : vector<8x32x32xf32>
    %101 = math.exp %100 : vector<8x32x32xf32>
    %cst_32 = arith.constant dense<0.000000e+00> : vector<8x32xf32>
    %102 = vector.multi_reduction <add>, %101, %cst_32 [2] : vector<8x32x32xf32> to vector<8x32xf32>
    %103 = vector.shape_cast %102 : vector<8x32xf32> to vector<8x32x1xf32>
    %104 = tpu.reciprocal %103 : vector<8x32x1xf32> -> vector<8x32x1xf32>
    %105 = vector.broadcast %104 : vector<8x32x1xf32> to vector<8x32x32xf32>
    %106 = arith.mulf %101, %105 : vector<8x32x32xf32>
    "tpu.trace_start"() <{level = 10 : i32, message = "wqk,wkd->wqd"}> : () -> ()
    %cst_33 = arith.constant dense<0.000000e+00> : vector<8x32x8xf32>
    %107 = tpu.matmul %106, %89, %cst_33 {dimension_numbers = #tpu.dot_dimension_numbers<[2], [1], [1], [2], [0, 0, 0, 1, 1, 2], [0], [0]>} : vector<8x32x32xf32>, vector<8x32x8xf32>, vector<8x32x8xf32> -> vector<8x32x8xf32>
    "tpu.trace_stop"() : () -> ()
    %108 = tpu.concatenate %35, %59, %83, %107 in 2 : vector<8x32x8xf32>, vector<8x32x8xf32>, vector<8x32x8xf32>, vector<8x32x8xf32> -> vector<8x32x32xf32>
    %109 = vector.shape_cast %108 : vector<8x32x32xf32> to vector<256x32xf32>
    %c0_34 = arith.constant 0 : index
    %c0_35 = arith.constant 0 : index
    %110 = vector.load %arg6[%c0_34, %c0_35] : memref<32x32xf32, #tpu.memory_space<vmem>>, vector<32x32xf32>
    %cst_36 = arith.constant dense<0.000000e+00> : vector<256x32xf32>
    %111 = tpu.matmul %109, %110, %cst_36 {dimension_numbers = #tpu.dot_dimension_numbers<[1], [0], [0], [1], [0, 0, 1, 1], [], []>} : vector<256x32xf32>, vector<32x32xf32>, vector<256x32xf32> -> vector<256x32xf32>
    %c0_37 = arith.constant 0 : index
    %c0_38 = arith.constant 0 : index
    %112 = vector.load %arg7[%c0_37, %c0_38] : memref<1x32xf32, #tpu.memory_space<vmem>>, vector<1x32xf32>
    %113 = vector.broadcast %112 : vector<1x32xf32> to vector<256x32xf32>
    %114 = arith.addf %111, %113 : vector<256x32xf32>
    %115 = vector.shape_cast %114 : vector<256x32xf32> to vector<8x32x32xf32>
    %c0_39 = arith.constant 0 : index
    %c0_40 = arith.constant 0 : index
    %c0_41 = arith.constant 0 : index
    %116 = vector.load %arg8[%c0_39, %c0_40, %c0_41] : memref<8x32x32xf32, #tpu.memory_space<vmem>>, vector<8x32x32xf32>
    tpu.vector_store %arg8[%c0_39, %c0_40, %c0_41], %115 {strides = array<i32>} : memref<8x32x32xf32, #tpu.memory_space<vmem>>, vector<8x32x32xf32>,
    return
  }
  func.func @transform_0(%arg0: i32) -> (i32, i32, i32) {
    %c0_i32 = arith.constant 0 : i32
    %c0_i32_0 = arith.constant 0 : i32
    %c0_i32_1 = arith.constant 0 : i32
    return %arg0, %c0_i32, %c0_i32_0 : i32, i32, i32
  }
  func.func @transform_1(%arg0: i32) -> (i32, i32) {
    %c0_i32 = arith.constant 0 : i32
    %c0_i32_0 = arith.constant 0 : i32
    %c0_i32_1 = arith.constant 0 : i32
    return %c0_i32, %c0_i32_0 : i32, i32
  }
  func.func @transform_2(%arg0: i32) -> (i32, i32) {
    %c0_i32 = arith.constant 0 : i32
    %c0_i32_0 = arith.constant 0 : i32
    %c0_i32_1 = arith.constant 0 : i32
    return %c0_i32, %c0_i32_0 : i32, i32
  }
  func.func @transform_3(%arg0: i32) -> (i32, i32, i32) {
    %c0_i32 = arith.constant 0 : i32
    %c0_i32_0 = arith.constant 0 : i32
    %c0_i32_1 = arith.constant 0 : i32
    %c0_i32_2 = arith.constant 0 : i32
    return %c0_i32, %c0_i32_0, %c0_i32_1 : i32, i32, i32
  }
  func.func @transform_4(%arg0: i32) -> (i32, i32, i32) {
    %c2_i32 = arith.constant 2 : i32
    %0 = arith.muli %arg0, %c2_i32 : i32
    %c1_i32 = arith.constant 1 : i32
    %c0_i32 = arith.constant 0 : i32
    %1 = arith.cmpi eq, %c1_i32, %c0_i32 : i32
    %c1_i32_0 = arith.constant 1 : i32
    %2 = arith.select %1, %c1_i32_0, %c1_i32 : i32
    %3 = arith.remsi %0, %2 : i32
    %c0_i32_1 = arith.constant 0 : i32
    %4 = arith.cmpi ne, %3, %c0_i32_1 : i32
    %c0_i32_2 = arith.constant 0 : i32
    %5 = arith.cmpi slt, %3, %c0_i32_2 : i32
    %c0_i32_3 = arith.constant 0 : i32
    %6 = arith.cmpi slt, %2, %c0_i32_3 : i32
    %7 = arith.xori %5, %6 : i1
    %8 = arith.andi %7, %4 : i1
    %9 = arith.addi %3, %2 : i32
    %10 = arith.select %8, %9, %3 : i32
    %c0_i32_4 = arith.constant 0 : i32
    %c0_i32_5 = arith.constant 0 : i32
    %c0_i32_6 = arith.constant 0 : i32
    return %10, %c0_i32_4, %c0_i32_5 : i32, i32, i32
  }
  func.func @transform_5(%arg0: i32) -> (i32, i32) {
    %c0_i32 = arith.constant 0 : i32
    %c0_i32_0 = arith.constant 0 : i32
    %c0_i32_1 = arith.constant 0 : i32
    return %c0_i32, %c0_i32_0 : i32, i32
  }
  func.func @transform_6(%arg0: i32) -> (i32, i32) {
    %c0_i32 = arith.constant 0 : i32
    %c0_i32_0 = arith.constant 0 : i32
    %c0_i32_1 = arith.constant 0 : i32
    return %c0_i32, %c0_i32_0 : i32, i32
  }
  func.func @transform_7(%arg0: i32) -> (i32, i32, i32) {
    %c0_i32 = arith.constant 0 : i32
    %c0_i32_0 = arith.constant 0 : i32
    %c0_i32_1 = arith.constant 0 : i32
    return %arg0, %c0_i32, %c0_i32_0 : i32, i32, i32
  }
}

</mosaic_0001>

<llo_original>
// kernel: tpu_custom_call.1
$region0: #{tpu_custom_call.1}
  #allocation0 [shape = 'u32[]', space=smem, size = 0x4, offset = 0x4, fixed_abs, tag = 'smem constant byte address 0x4 - core index']
  #allocation1 [shape = 'u32[144,128]{1,0:T(1,128)}', space=vmem, size = 0x12000, scoped, tag = 'internal scratch']
  %s0 = inlined_call_operand.hbm [shape: f32[8,32,32], index: 0, kind: input, shape index: {}]
  %s1 = inlined_call_operand.hbm [shape: f32[32,96], index: 1, kind: input, shape index: {}]
  %s2 = inlined_call_operand.vmem [shape: f32[1,96], index: 2, kind: input, shape index: {}]
  %s3 = inlined_call_operand.hbm [shape: f32[4,32,32], index: 3, kind: input, shape index: {}]
  %s4 = inlined_call_operand.hbm [shape: f32[4,32,32], index: 4, kind: input, shape index: {}]
  %s5 = inlined_call_operand.hbm [shape: f32[32,32], index: 5, kind: input, shape index: {}]
  %s6 = inlined_call_operand.vmem [shape: f32[1,32], index: 6, kind: input, shape index: {}]
  %s7 = inlined_call_operand.hbm [shape: f32[8,32,32], index: 7, kind: output, shape index: {}]
  %s8 = sld [smem:[#allocation0]]
  $region58: #{tpu_custom_call.1} parent=0
    _
  %s10 = ssub.s32 1, %s8
  %s11 = scalar_select 0, %s10, %s8
  $region1: #{tpu_custom_call.1} parent=0
    #allocation2 [shape = 'u8[131072]{0}', space=vmem, size = 0x20000, scoped, tag = 'input window, operand 0, single buffered']
    #allocation3 [shape = 's32[1]{0}', space=sflag, size = 0x4, scoped, tag = 'scoped memory for tpu_custom_call.1']
    #allocation4 [shape = 's32[1]{0}', space=sflag, size = 0x4, scoped, tag = 'scoped memory for tpu_custom_call.1']
    #allocation5 [shape = 'u8[16384]{0}', space=vmem, size = 0x4000, scoped, tag = 'input window, operand 1, single buffered']
    #allocation6 [shape = 's32[1]{0}', space=sflag, size = 0x4, scoped, tag = 'scoped memory for tpu_custom_call.1']
    #allocation7 [shape = 'u8[65536]{0}', space=vmem, size = 0x10000, scoped, tag = 'input window, operand 3, single buffered']
    #allocation8 [shape = 'u8[65536]{0}', space=vmem, size = 0x10000, scoped, tag = 'input window, operand 4, single buffered']
    #allocation9 [shape = 's32[1]{0}', space=sflag, size = 0x4, scoped, tag = 'scoped memory for tpu_custom_call.1']
    #allocation10 [shape = 'u8[16384]{0}', space=vmem, size = 0x4000, scoped, tag = 'input window, operand 5, single buffered']
    #allocation11 [shape = 'u8[131072]{0}', space=vmem, size = 0x20000, scoped, tag = 'output window, operand 0, single buffered']
    %12 = vsyncpa [#allocation3], 0
    %13 = vsyncpa [#allocation6], 0
    %14 = vsyncpa [#allocation9], 0
    %15 = vsyncpa [#allocation4], 0
    // Predicated region
    $region2: #{tpu_custom_call.1} parent=1 // pred_check
      _
    $region3: #{tpu_custom_call.1} parent=1 // pred_check_branch
      %17 = sbr.rel (0) target = $region5
    $region4: #{tpu_custom_call.1} parent=1 // pred_region
      %s19 = ssub.s32 4096, 4096
      %20 = vsyncadd [#allocation3], %s19
      %s21 = sshll.u32 [#allocation2], 4
      %s22 = int_to_ptr.vmem [resolvable:$true] %s21
      %27 = dma.hbm_to_vmem [thread:$0]  %s0, 4096, %s22, [#allocation3], 128, 128, 8
    $region5: #{tpu_custom_call.1} parent=1 // pred_fallthru
      _
    // Predicated region
    $region6: #{tpu_custom_call.1} parent=1 // pred_check
      _
    $region7: #{tpu_custom_call.1} parent=1 // pred_check_branch
      %29 = sbr.rel (0) target = $region9
    $region8: #{tpu_custom_call.1} parent=1 // pred_region
      %s31 = ssub.s32 512, 512
      %32 = vsyncadd [#allocation6], %s31
      %s33 = sshll.u32 [#allocation5], 4
      %s34 = int_to_ptr.vmem [resolvable:$true] %s33
      %39 = dma.hbm_to_vmem [thread:$0]  %s1, 512, %s34, [#allocation6], 128, 128, 8
    $region9: #{tpu_custom_call.1} parent=1 // pred_fallthru
      _
    // Predicated region
    $region10: #{tpu_custom_call.1} parent=1 // pred_check
      _
    $region11: #{tpu_custom_call.1} parent=1 // pred_check_branch
      %41 = sbr.rel (0) target = $region13
    $region12: #{tpu_custom_call.1} parent=1 // pred_region
      _
    $region13: #{tpu_custom_call.1} parent=1 // pred_fallthru
      _
    // Predicated region
    $region14: #{tpu_custom_call.1} parent=1 // pred_check
      _
    $region15: #{tpu_custom_call.1} parent=1 // pred_check_branch
      %43 = sbr.rel (0) target = $region17
    $region16: #{tpu_custom_call.1} parent=1 // pred_region
      %s45 = ssub.s32 2048, 2048
      %46 = vsyncadd [#allocation6], %s45
      %s47 = sshll.u32 [#allocation7], 4
      %s48 = int_to_ptr.vmem [resolvable:$true] %s47
      %53 = dma.hbm_to_vmem [thread:$0]  %s3, 2048, %s48, [#allocation6], 128, 128, 8
    $region17: #{tpu_custom_call.1} parent=1 // pred_fallthru
      _
    // Predicated region
    $region18: #{tpu_custom_call.1} parent=1 // pred_check
      _
    $region19: #{tpu_custom_call.1} parent=1 // pred_check_branch
      %55 = sbr.rel (0) target = $region21
    $region20: #{tpu_custom_call.1} parent=1 // pred_region
      %s57 = ssub.s32 2048, 2048
      %58 = vsyncadd [#allocation9], %s57
      %s59 = sshll.u32 [#allocation8], 4
      %s60 = int_to_ptr.vmem [resolvable:$true] %s59
      %65 = dma.hbm_to_vmem [thread:$0]  %s4, 2048, %s60, [#allocation9], 128, 128, 8
    $region21: #{tpu_custom_call.1} parent=1 // pred_fallthru
      _
    // Predicated region
    $region22: #{tpu_custom_call.1} parent=1 // pred_check
      _
    $region23: #{tpu_custom_call.1} parent=1 // pred_check_branch
      %67 = sbr.rel (0) target = $region25
    $region24: #{tpu_custom_call.1} parent=1 // pred_region
      %s69 = ssub.s32 512, 512
      %70 = vsyncadd [#allocation9], %s69
      %s71 = sshll.u32 [#allocation10], 4
      %s72 = int_to_ptr.vmem [resolvable:$true] %s71
      %77 = dma.hbm_to_vmem [thread:$0]  %s5, 512, %s72, [#allocation9], 128, 128, 8
    $region25: #{tpu_custom_call.1} parent=1 // pred_fallthru
      _
    // Predicated region
    $region26: #{tpu_custom_call.1} parent=1 // pred_check
      _
    $region27: #{tpu_custom_call.1} parent=1 // pred_check_branch
      %79 = sbr.rel (0) target = $region29
    $region28: #{tpu_custom_call.1} parent=1 // pred_region
      _
    $region29: #{tpu_custom_call.1} parent=1 // pred_fallthru
      _
    // Predicated region
    $region30: #{tpu_custom_call.1} parent=1 // pred_check
      _
    $region31: #{tpu_custom_call.1} parent=1 // pred_check_branch
      %81 = sbr.rel (0) target = $region33
    $region32: #{tpu_custom_call.1} parent=1 // pred_region
      %82 = dma.done [#allocation3], 4096
    $region33: #{tpu_custom_call.1} parent=1 // pred_fallthru
      _
    // Predicated region
    $region34: #{tpu_custom_call.1} parent=1 // pred_check
      _
    $region35: #{tpu_custom_call.1} parent=1 // pred_check_branch
      %84 = sbr.rel (0) target = $region37
    $region36: #{tpu_custom_call.1} parent=1 // pred_region
      %85 = dma.done [#allocation6], 512
    $region37: #{tpu_custom_call.1} parent=1 // pred_fallthru
      _
    // Predicated region
    $region38: #{tpu_custom_call.1} parent=1 // pred_check
      _
    $region39: #{tpu_custom_call.1} parent=1 // pred_check_branch
      %87 = sbr.rel (0) target = $region41
    $region40: #{tpu_custom_call.1} parent=1 // pred_region
      %88 = dma.done [#allocation6], 2048
    $region41: #{tpu_custom_call.1} parent=1 // pred_fallthru
      _
    // Predicated region
    $region42: #{tpu_custom_call.1} parent=1 // pred_check
      _
    $region43: #{tpu_custom_call.1} parent=1 // pred_check_branch
      %90 = sbr.rel (0) target = $region45
    $region44: #{tpu_custom_call.1} parent=1 // pred_region
      %91 = dma.done [#allocation9], 2048
    $region45: #{tpu_custom_call.1} parent=1 // pred_fallthru
      _
    // Predicated region
    $region46: #{tpu_custom_call.1} parent=1 // pred_check
      _
    $region47: #{tpu_custom_call.1} parent=1 // pred_check_branch
      %93 = sbr.rel (0) target = $region49
    $region48: #{tpu_custom_call.1} parent=1 // pred_region
      %94 = dma.done [#allocation9], 512
    $region49: #{tpu_custom_call.1} parent=1 // pred_fallthru
      _
    %v95 = vld [vmem:[#allocation2] sm:$0xff]
    %v96 = vld [vmem:[#allocation2 + $0x8] sm:$0xff]
    %v97 = vld [vmem:[#allocation2 + $0x10] sm:$0xff]
    %v98 = vld [vmem:[#allocation2 + $0x18] sm:$0xff]
    %v99 = vld [vmem:[#allocation2 + $0x20] sm:$0xff]
    %v100 = vld [vmem:[#allocation2 + $0x28] sm:$0xff]
    %v101 = vld [vmem:[#allocation2 + $0x30] sm:$0xff]
    %v102 = vld [vmem:[#allocation2 + $0x38] sm:$0xff]
    %v103 = vld [vmem:[#allocation2 + $0x40] sm:$0xff]
    %v104 = vld [vmem:[#allocation2 + $0x48] sm:$0xff]
    %v105 = vld [vmem:[#allocation2 + $0x50] sm:$0xff]
    %v106 = vld [vmem:[#allocation2 + $0x58] sm:$0xff]
    %v107 = vld [vmem:[#allocation2 + $0x60] sm:$0xff]
    %v108 = vld [vmem:[#allocation2 + $0x68] sm:$0xff]
    %v109 = vld [vmem:[#allocation2 + $0x70] sm:$0xff]
    %v110 = vld [vmem:[#allocation2 + $0x78] sm:$0xff]
    %v111 = vld [vmem:[#allocation2 + $0x80] sm:$0xff]
    %v112 = vld [vmem:[#allocation2 + $0x88] sm:$0xff]
    %v113 = vld [vmem:[#allocation2 + $0x90] sm:$0xff]
    %v114 = vld [vmem:[#allocation2 + $0x98] sm:$0xff]
    %v115 = vld [vmem:[#allocation2 + $0xa0] sm:$0xff]
    %v116 = vld [vmem:[#allocation2 + $0xa8] sm:$0xff]
    %v117 = vld [vmem:[#allocation2 + $0xb0] sm:$0xff]
    %v118 = vld [vmem:[#allocation2 + $0xb8] sm:$0xff]
    %v119 = vld [vmem:[#allocation2 + $0xc0] sm:$0xff]
    %v120 = vld [vmem:[#allocation2 + $0xc8] sm:$0xff]
    %v121 = vld [vmem:[#allocation2 + $0xd0] sm:$0xff]
    %v122 = vld [vmem:[#allocation2 + $0xd8] sm:$0xff]
    %v123 = vld [vmem:[#allocation2 + $0xe0] sm:$0xff]
    %v124 = vld [vmem:[#allocation2 + $0xe8] sm:$0xff]
    %v125 = vld [vmem:[#allocation2 + $0xf0] sm:$0xff]
    %v126 = vld [vmem:[#allocation2 + $0xf8] sm:$0xff]
    %v127 = vld [vmem:[#allocation5] sm:$0xff]
    %v128 = vld [vmem:[#allocation5 + $0x8] sm:$0xff]
    %v129 = vld [vmem:[#allocation5 + $0x10] sm:$0xff]
    %v130 = vld [vmem:[#allocation5 + $0x18] sm:$0xff]
    %v131 = vld [vmem:[%s2] sm:$0x1]
    %v133 = vlaneseq
    %v134 = vshrl.u32 %v133, 7
    %v135 = vsub.s32 0, %v134
    %v136 = vrot.slane %v131, %v135
    %vm138 = vcmask 261120
    %v140 = vsel %vm138, %v95, 0
    %v143 = vsel %vm138, %v96, 0
    %v146 = vsel %vm138, %v97, 0
    %v149 = vsel %vm138, %v98, 0
    %v152 = vsel %vm138, %v99, 0
    %v155 = vsel %vm138, %v100, 0
    %v158 = vsel %vm138, %v101, 0
    %v161 = vsel %vm138, %v102, 0
    %v164 = vsel %vm138, %v103, 0
    %v167 = vsel %vm138, %v104, 0
    %v170 = vsel %vm138, %v105, 0
    %v173 = vsel %vm138, %v106, 0
    %v176 = vsel %vm138, %v107, 0
    %v179 = vsel %vm138, %v108, 0
    %v182 = vsel %vm138, %v109, 0
    %v185 = vsel %vm138, %v110, 0
    %v188 = vsel %vm138, %v111, 0
    %v191 = vsel %vm138, %v112, 0
    %v194 = vsel %vm138, %v113, 0
    %v197 = vsel %vm138, %v114, 0
    %v200 = vsel %vm138, %v115, 0
    %v203 = vsel %vm138, %v116, 0
    %v206 = vsel %vm138, %v117, 0
    %v209 = vsel %vm138, %v118, 0
    %v212 = vsel %vm138, %v119, 0
    %v215 = vsel %vm138, %v120, 0
    %v218 = vsel %vm138, %v121, 0
    %v221 = vsel %vm138, %v122, 0
    %v224 = vsel %vm138, %v123, 0
    %v227 = vsel %vm138, %v124, 0
    %v230 = vsel %vm138, %v125, 0
    %v233 = vsel %vm138, %v126, 0
    %235 = vmatprep.subr.mxu0 0.0
    %236 = vmatpush1.msra.mxu0 0.0
    %237 = vmatprep.subr.mxu0 0.0
    %238 = vmatpush1.msra.mxu0 0.0
    %239 = vmatprep.subr.mxu0 0.0
    %240 = vmatpush1.msra.mxu0 0.0
    %241 = vmatprep.subr.mxu0 0.0
    %242 = vmatpush1.msra.mxu0 0.0
    %243 = vmatprep.subr.mxu0 0.0
    %244 = vmatpush1.msra.mxu0 0.0
    %245 = vmatprep.subr.mxu0 0.0
    %246 = vmatpush1.msra.mxu0 0.0
    %247 = vmatprep.subr.mxu0 0.0
    %248 = vmatpush1.msra.mxu0 0.0
    %249 = vmatprep.subr.mxu0 0.0
    %250 = vmatpush1.msra.mxu0 0.0
    %251 = vmatprep.subr.mxu0 0.0
    %252 = vmatpush1.msra.mxu0 0.0
    %253 = vmatprep.subr.mxu0 0.0
    %254 = vmatpush1.msra.mxu0 0.0
    %255 = vmatprep.subr.mxu0 0.0
    %256 = vmatpush1.msra.mxu0 0.0
    %257 = vmatprep.subr.mxu0 0.0
    %258 = vmatpush1.msra.mxu0 0.0
    %259 = vmatprep.subr.mxu0 0.0
    %260 = vmatpush1.msra.mxu0 %v130
    %261 = vmatprep.subr.mxu0 0.0
    %262 = vmatpush1.msra.mxu0 %v129
    %263 = vmatprep.subr.mxu0 0.0
    %264 = vmatpush1.msra.mxu0 %v128
    %265 = vmatprep.subr.mxu0 0.0
    %266 = vmatpush1.msra.mxu0 %v127
    %267 = vmatprep.subr.mxu0 0.0
    %268 = vmatpush2.msra.mxu0 0.0
    %269 = vmatprep.subr.mxu0 0.0
    %270 = vmatpush2.msra.mxu0 0.0
    %271 = vmatprep.subr.mxu0 0.0
    %272 = vmatpush2.msra.mxu0 0.0
    %273 = vmatprep.subr.mxu0 0.0
    %274 = vmatpush2.msra.mxu0 0.0
    %275 = vmatprep.subr.mxu0 0.0
    %276 = vmatpush2.msra.mxu0 0.0
    %277 = vmatprep.subr.mxu0 0.0
    %278 = vmatpush2.msra.mxu0 0.0
    %279 = vmatprep.subr.mxu0 0.0
    %280 = vmatpush2.msra.mxu0 0.0
    %281 = vmatprep.subr.mxu0 0.0
    %282 = vmatpush2.msra.mxu0 0.0
    %283 = vmatprep.subr.mxu0 0.0
    %284 = vmatpush2.msra.mxu0 0.0
    %285 = vmatprep.subr.mxu0 0.0
    %286 = vmatpush2.msra.mxu0 0.0
    %287 = vmatprep.subr.mxu0 0.0
    %288 = vmatpush2.msra.mxu0 0.0
    %289 = vmatprep.subr.mxu0 0.0
    %290 = vmatpush2.msra.mxu0 0.0
    %291 = vmatprep.subr.mxu0 0.0
    %292 = vmatpush2.msra.mxu0 0.0
    %293 = vmatprep.subr.mxu0 0.0
    %294 = vmatpush2.msra.mxu0 0.0
    %295 = vmatprep.subr.mxu0 0.0
    %296 = vmatpush2.msra.mxu0 0.0
    %297 = vmatprep.subr.mxu0 0.0
    %298 = vmatpush2.msra.mxu0 0.0
    %299 = vmatprep.mubr.f32.mxu0 0.0
    %300 = vmatmul.mubr.f32.gmra.mxu0 %v140
    %v301 = vpop.f32.mrf.mxu0
    %v302 = vadd.f32 %v136, %v301
    %v303 = vpop.f32.mrf.mxu0
    %304 = vmatprep.mubr.f32.mxu0 0.0
    %305 = vmatmul.mubr.f32.gmra.mxu0 %v143
    %v306 = vpop.f32.mrf.mxu0
    %v307 = vadd.f32 %v136, %v306
    %v308 = vpop.f32.mrf.mxu0
    %309 = vmatprep.mubr.f32.mxu0 0.0
    %310 = vmatmul.mubr.f32.gmra.mxu0 %v146
    %v311 = vpop.f32.mrf.mxu0
    %v312 = vadd.f32 %v136, %v311
    %v313 = vpop.f32.mrf.mxu0
    %314 = vmatprep.mubr.f32.mxu0 0.0
    %315 = vmatmul.mubr.f32.gmra.mxu0 %v149
    %v316 = vpop.f32.mrf.mxu0
    %v317 = vadd.f32 %v136, %v316
    %v318 = vpop.f32.mrf.mxu0
    %319 = vmatprep.mubr.f32.mxu0 0.0
    %320 = vmatmul.mubr.f32.gmra.mxu0 %v152
    %v321 = vpop.f32.mrf.mxu0
    %v322 = vadd.f32 %v136, %v321
    %v323 = vpop.f32.mrf.mxu0
    %324 = vmatprep.mubr.f32.mxu0 0.0
    %325 = vmatmul.mubr.f32.gmra.mxu0 %v155
    %v326 = vpop.f32.mrf.mxu0
    %v327 = vadd.f32 %v136, %v326
    %v328 = vpop.f32.mrf.mxu0
    %329 = vmatprep.mubr.f32.mxu0 0.0
    %330 = vmatmul.mubr.f32.gmra.mxu0 %v158
    %v331 = vpop.f32.mrf.mxu0
    %v332 = vadd.f32 %v136, %v331
    %v333 = vpop.f32.mrf.mxu0
    %334 = vmatprep.mubr.f32.mxu0 0.0
    %335 = vmatmul.mubr.f32.gmra.mxu0 %v161
    %v336 = vpop.f32.mrf.mxu0
    %v337 = vadd.f32 %v136, %v336
    %v338 = vpop.f32.mrf.mxu0
    %339 = vmatprep.mubr.f32.mxu0 0.0
    %340 = vmatmul.mubr.f32.gmra.mxu0 %v164
    %v341 = vpop.f32.mrf.mxu0
    %v342 = vadd.f32 %v136, %v341
    %v343 = vpop.f32.mrf.mxu0
    %344 = vmatprep.mubr.f32.mxu0 0.0
    %345 = vmatmul.mubr.f32.gmra.mxu0 %v167
    %v346 = vpop.f32.mrf.mxu0
    %v347 = vadd.f32 %v136, %v346
    %v348 = vpop.f32.mrf.mxu0
    %349 = vmatprep.mubr.f32.mxu0 0.0
    %350 = vmatmul.mubr.f32.gmra.mxu0 %v170
    %v351 = vpop.f32.mrf.mxu0
    %v352 = vadd.f32 %v136, %v351
    %v353 = vpop.f32.mrf.mxu0
    %354 = vmatprep.mubr.f32.mxu0 0.0
    %355 = vmatmul.mubr.f32.gmra.mxu0 %v173
    %v356 = vpop.f32.mrf.mxu0
    %v357 = vadd.f32 %v136, %v356
    %v358 = vpop.f32.mrf.mxu0
    %359 = vmatprep.mubr.f32.mxu0 0.0
    %360 = vmatmul.mubr.f32.gmra.mxu0 %v176
    %v361 = vpop.f32.mrf.mxu0
    %v362 = vadd.f32 %v136, %v361
    %v363 = vpop.f32.mrf.mxu0
    %364 = vmatprep.mubr.f32.mxu0 0.0
    %365 = vmatmul.mubr.f32.gmra.mxu0 %v179
    %v366 = vpop.f32.mrf.mxu0
    %v367 = vadd.f32 %v136, %v366
    %v368 = vpop.f32.mrf.mxu0
    %369 = vmatprep.mubr.f32.mxu0 0.0
    %370 = vmatmul.mubr.f32.gmra.mxu0 %v182
    %v371 = vpop.f32.mrf.mxu0
    %v372 = vadd.f32 %v136, %v371
    %v373 = vpop.f32.mrf.mxu0
    %374 = vmatprep.mubr.f32.mxu0 0.0
    %375 = vmatmul.mubr.f32.gmra.mxu0 %v185
    %v376 = vpop.f32.mrf.mxu0
    %v377 = vadd.f32 %v136, %v376
    %v378 = vpop.f32.mrf.mxu0
    %379 = vmatprep.mubr.f32.mxu0 0.0
    %380 = vmatmul.mubr.f32.gmra.mxu0 %v188
    %v381 = vpop.f32.mrf.mxu0
    %v382 = vadd.f32 %v136, %v381
    %v383 = vpop.f32.mrf.mxu0
    %384 = vmatprep.mubr.f32.mxu0 0.0
    %385 = vmatmul.mubr.f32.gmra.mxu0 %v191
    %v386 = vpop.f32.mrf.mxu0
    %v387 = vadd.f32 %v136, %v386
    %v388 = vpop.f32.mrf.mxu0
    %389 = vmatprep.mubr.f32.mxu0 0.0
    %390 = vmatmul.mubr.f32.gmra.mxu0 %v194
    %v391 = vpop.f32.mrf.mxu0
    %v392 = vadd.f32 %v136, %v391
    %v393 = vpop.f32.mrf.mxu0
    %394 = vmatprep.mubr.f32.mxu0 0.0
    %395 = vmatmul.mubr.f32.gmra.mxu0 %v197
    %v396 = vpop.f32.mrf.mxu0
    %v397 = vadd.f32 %v136, %v396
    %v398 = vpop.f32.mrf.mxu0
    %399 = vmatprep.mubr.f32.mxu0 0.0
    %400 = vmatmul.mubr.f32.gmra.mxu0 %v200
    %v401 = vpop.f32.mrf.mxu0
    %v402 = vadd.f32 %v136, %v401
    %v403 = vpop.f32.mrf.mxu0
    %404 = vmatprep.mubr.f32.mxu0 0.0
    %405 = vmatmul.mubr.f32.gmra.mxu0 %v203
    %v406 = vpop.f32.mrf.mxu0
    %v407 = vadd.f32 %v136, %v406
    %v408 = vpop.f32.mrf.mxu0
    %409 = vmatprep.mubr.f32.mxu0 0.0
    %410 = vmatmul.mubr.f32.gmra.mxu0 %v206
    %v411 = vpop.f32.mrf.mxu0
    %v412 = vadd.f32 %v136, %v411
    %v413 = vpop.f32.mrf.mxu0
    %414 = vmatprep.mubr.f32.mxu0 0.0
    %415 = vmatmul.mubr.f32.gmra.mxu0 %v209
    %v416 = vpop.f32.mrf.mxu0
    %v417 = vadd.f32 %v136, %v416
    %v418 = vpop.f32.mrf.mxu0
    %419 = vmatprep.mubr.f32.mxu0 0.0
    %420 = vmatmul.mubr.f32.gmra.mxu0 %v212
    %v421 = vpop.f32.mrf.mxu0
    %v422 = vadd.f32 %v136, %v421
    %v423 = vpop.f32.mrf.mxu0
    %424 = vmatprep.mubr.f32.mxu0 0.0
    %425 = vmatmul.mubr.f32.gmra.mxu0 %v215
    %v426 = vpop.f32.mrf.mxu0
    %v427 = vadd.f32 %v136, %v426
    %v428 = vpop.f32.mrf.mxu0
    %429 = vmatprep.mubr.f32.mxu0 0.0
    %430 = vmatmul.mubr.f32.gmra.mxu0 %v218
    %v431 = vpop.f32.mrf.mxu0
    %v432 = vadd.f32 %v136, %v431
    %v433 = vpop.f32.mrf.mxu0
    %434 = vmatprep.mubr.f32.mxu0 0.0
    %435 = vmatmul.mubr.f32.gmra.mxu0 %v221
    %v436 = vpop.f32.mrf.mxu0
    %v437 = vadd.f32 %v136, %v436
    %v438 = vpop.f32.mrf.mxu0
    %439 = vmatprep.mubr.f32.mxu0 0.0
    %440 = vmatmul.mubr.f32.gmra.mxu0 %v224
    %v441 = vpop.f32.mrf.mxu0
    %v442 = vadd.f32 %v136, %v441
    %v443 = vpop.f32.mrf.mxu0
    %444 = vmatprep.mubr.f32.mxu0 0.0
    %445 = vmatmul.mubr.f32.gmra.mxu0 %v227
    %v446 = vpop.f32.mrf.mxu0
    %v447 = vadd.f32 %v136, %v446
    %v448 = vpop.f32.mrf.mxu0
    %449 = vmatprep.mubr.f32.mxu0 0.0
    %450 = vmatmul.mubr.f32.gmra.mxu0 %v230
    %v451 = vpop.f32.mrf.mxu0
    %v452 = vadd.f32 %v136, %v451
    %v453 = vpop.f32.mrf.mxu0
    %454 = vmatprep.mubr.f32.mxu0 0.0
    %455 = vmatmul.mubr.f32.gmra.mxu0 %v233
    %v456 = vpop.f32.mrf.mxu0
    %v457 = vadd.f32 %v136, %v456
    %v458 = vpop.f32.mrf.mxu0
    %459 = vdwg.mxu0
    %v460 = vld [vmem:[#allocation8] sm:$0xff]
    %v461 = vld [vmem:[#allocation8 + $0x8] sm:$0xff]
    %v462 = vld [vmem:[#allocation8 + $0x10] sm:$0xff]
    %v463 = vld [vmem:[#allocation8 + $0x18] sm:$0xff]
    %v464 = vld [vmem:[#allocation8 + $0x20] sm:$0xff]
    %v465 = vld [vmem:[#allocation8 + $0x28] sm:$0xff]
    %v466 = vld [vmem:[#allocation8 + $0x30] sm:$0xff]
    %v467 = vld [vmem:[#allocation8 + $0x38] sm:$0xff]
    %v468 = vld [vmem:[#allocation8 + $0x40] sm:$0xff]
    %v469 = vld [vmem:[#allocation8 + $0x48] sm:$0xff]
    %v470 = vld [vmem:[#allocation8 + $0x50] sm:$0xff]
    %v471 = vld [vmem:[#allocation8 + $0x58] sm:$0xff]
    %v472 = vld [vmem:[#allocation8 + $0x60] sm:$0xff]
    %v473 = vld [vmem:[#allocation8 + $0x68] sm:$0xff]
    %v474 = vld [vmem:[#allocation8 + $0x70] sm:$0xff]
    %v475 = vld [vmem:[#allocation8 + $0x78] sm:$0xff]
    %v476 = vld [vmem:[#allocation7] sm:$0xff]
    %v477 = vld [vmem:[#allocation7 + $0x8] sm:$0xff]
    %v478 = vld [vmem:[#allocation7 + $0x10] sm:$0xff]
    %v479 = vld [vmem:[#allocation7 + $0x18] sm:$0xff]
    %484 = vrot.lane.b32.xlu0 %v302, 96
    %v485 = vpop.permute.xlu0 %484
    %486 = vrot.lane.b32.xlu0 %v307, 96
    %v487 = vpop.permute.xlu0 %486
    %488 = vrot.lane.b32.xlu0 %v312, 96
    %v489 = vpop.permute.xlu0 %488
    %490 = vrot.lane.b32.xlu0 %v317, 96
    %v491 = vpop.permute.xlu0 %490
    %vm492 = vcmask 64512
    %v493 = vsel %vm492, %v302, 0
    %v495 = vsel %vm492, %v307, 0
    %v497 = vsel %vm492, %v312, 0
    %v499 = vsel %vm492, %v317, 0
    %v501 = vsel %vm492, %v485, 0
    %v503 = vsel %vm492, %v487, 0
    %v505 = vsel %vm492, %v489, 0
    %v507 = vsel %vm492, %v491, 0
    %509 = vmatprep.subr.mxu0 0.0
    %510 = vmatpush1.xpose.msra.mxu0 0.0
    %511 = vmatprep.subr.mxu0 0.0
    %512 = vmatpush1.xpose.msra.mxu0 0.0
    %513 = vmatprep.subr.mxu0 0.0
    %514 = vmatpush1.xpose.msra.mxu0 0.0
    %515 = vmatprep.subr.mxu0 0.0
    %516 = vmatpush1.xpose.msra.mxu0 0.0
    %517 = vmatprep.subr.mxu0 0.0
    %518 = vmatpush1.xpose.msra.mxu0 0.0
    %519 = vmatprep.subr.mxu0 0.0
    %520 = vmatpush1.xpose.msra.mxu0 0.0
    %521 = vmatprep.subr.mxu0 0.0
    %522 = vmatpush1.xpose.msra.mxu0 0.0
    %523 = vmatprep.subr.mxu0 0.0
    %524 = vmatpush1.xpose.msra.mxu0 0.0
    %525 = vmatprep.subr.mxu0 0.0
    %526 = vmatpush1.xpose.msra.mxu0 0.0
    %527 = vmatprep.subr.mxu0 0.0
    %528 = vmatpush1.xpose.msra.mxu0 0.0
    %529 = vmatprep.subr.mxu0 0.0
    %530 = vmatpush1.xpose.msra.mxu0 0.0
    %531 = vmatprep.subr.mxu0 0.0
    %532 = vmatpush1.xpose.msra.mxu0 0.0
    %533 = vmatprep.subr.mxu0 0.0
    %534 = vmatpush1.xpose.msra.mxu0 %v507
    %535 = vmatprep.subr.mxu0 0.0
    %536 = vmatpush1.xpose.msra.mxu0 %v505
    %537 = vmatprep.subr.mxu0 0.0
    %538 = vmatpush1.xpose.msra.mxu0 %v503
    %539 = vmatprep.subr.mxu0 0.0
    %540 = vmatpush1.xpose.msra.mxu0 %v501
    %541 = vmatprep.subr.mxu0 0.0
    %542 = vmatpush2.xpose.msra.mxu0 0.0
    %543 = vmatprep.subr.mxu0 0.0
    %544 = vmatpush2.xpose.msra.mxu0 0.0
    %545 = vmatprep.subr.mxu0 0.0
    %546 = vmatpush2.xpose.msra.mxu0 0.0
    %547 = vmatprep.subr.mxu0 0.0
    %548 = vmatpush2.xpose.msra.mxu0 0.0
    %549 = vmatprep.subr.mxu0 0.0
    %550 = vmatpush2.xpose.msra.mxu0 0.0
    %551 = vmatprep.subr.mxu0 0.0
    %552 = vmatpush2.xpose.msra.mxu0 0.0
    %553 = vmatprep.subr.mxu0 0.0
    %554 = vmatpush2.xpose.msra.mxu0 0.0
    %555 = vmatprep.subr.mxu0 0.0
    %556 = vmatpush2.xpose.msra.mxu0 0.0
    %557 = vmatprep.subr.mxu0 0.0
    %558 = vmatpush2.xpose.msra.mxu0 0.0
    %559 = vmatprep.subr.mxu0 0.0
    %560 = vmatpush2.xpose.msra.mxu0 0.0
    %561 = vmatprep.subr.mxu0 0.0
    %562 = vmatpush2.xpose.msra.mxu0 0.0
    %563 = vmatprep.subr.mxu0 0.0
    %564 = vmatpush2.xpose.msra.mxu0 0.0
    %565 = vmatprep.subr.mxu0 0.0
    %566 = vmatpush2.xpose.msra.mxu0 0.0
    %567 = vmatprep.subr.mxu0 0.0
    %568 = vmatpush2.xpose.msra.mxu0 0.0
    %569 = vmatprep.subr.mxu0 0.0
    %570 = vmatpush2.xpose.msra.mxu0 0.0
    %571 = vmatprep.subr.mxu0 0.0
    %572 = vmatpush2.xpose.msra.mxu0 0.0
    %573 = vmatprep.mubr.f32.mxu0 0.0
    %574 = vmatmul.mubr.f32.gmra.mxu0 %v493
    %v575 = vpop.f32.mrf.mxu0
    %v576 = vadd.f32 %v476, %v575
    %v577 = vpop.f32.mrf.mxu0
    %578 = vmatprep.mubr.f32.mxu0 0.0
    %579 = vmatmul.mubr.f32.gmra.mxu0 %v495
    %v580 = vpop.f32.mrf.mxu0
    %v581 = vadd.f32 %v477, %v580
    %v582 = vpop.f32.mrf.mxu0
    %583 = vmatprep.mubr.f32.mxu0 0.0
    %584 = vmatmul.mubr.f32.gmra.mxu0 %v497
    %v585 = vpop.f32.mrf.mxu0
    %v586 = vadd.f32 %v478, %v585
    %v587 = vpop.f32.mrf.mxu0
    %588 = vmatprep.mubr.f32.mxu0 0.0
    %589 = vmatmul.mubr.f32.gmra.mxu0 %v499
    %v590 = vpop.f32.mrf.mxu0
    %v591 = vadd.f32 %v479, %v590
    %v592 = vpop.f32.mrf.mxu0
    %593 = vdwg.mxu0
    %598 = vrot.lane.b32.xlu0 %v322, 96
    %v599 = vpop.permute.xlu0 %598
    %600 = vrot.lane.b32.xlu0 %v327, 96
    %v601 = vpop.permute.xlu0 %600
    %602 = vrot.lane.b32.xlu0 %v332, 96
    %v603 = vpop.permute.xlu0 %602
    %604 = vrot.lane.b32.xlu0 %v337, 96
    %v605 = vpop.permute.xlu0 %604
    %v606 = vsel %vm492, %v322, 0
    %v608 = vsel %vm492, %v327, 0
    %v610 = vsel %vm492, %v332, 0
    %v612 = vsel %vm492, %v337, 0
    %v614 = vsel %vm492, %v599, 0
    %v616 = vsel %vm492, %v601, 0
    %v618 = vsel %vm492, %v603, 0
    %v620 = vsel %vm492, %v605, 0
    %622 = vmatprep.subr.mxu0 0.0
    %623 = vmatpush1.xpose.msra.mxu0 0.0
    %624 = vmatprep.subr.mxu0 0.0
    %625 = vmatpush1.xpose.msra.mxu0 0.0
    %626 = vmatprep.subr.mxu0 0.0
    %627 = vmatpush1.xpose.msra.mxu0 0.0
    %628 = vmatprep.subr.mxu0 0.0
    %629 = vmatpush1.xpose.msra.mxu0 0.0
    %630 = vmatprep.subr.mxu0 0.0
    %631 = vmatpush1.xpose.msra.mxu0 0.0
    %632 = vmatprep.subr.mxu0 0.0
    %633 = vmatpush1.xpose.msra.mxu0 0.0
    %634 = vmatprep.subr.mxu0 0.0
    %635 = vmatpush1.xpose.msra.mxu0 0.0
    %636 = vmatprep.subr.mxu0 0.0
    %637 = vmatpush1.xpose.msra.mxu0 0.0
    %638 = vmatprep.subr.mxu0 0.0
    %639 = vmatpush1.xpose.msra.mxu0 0.0
    %640 = vmatprep.subr.mxu0 0.0
    %641 = vmatpush1.xpose.msra.mxu0 0.0
    %642 = vmatprep.subr.mxu0 0.0
    %643 = vmatpush1.xpose.msra.mxu0 0.0
    %644 = vmatprep.subr.mxu0 0.0
    %645 = vmatpush1.xpose.msra.mxu0 0.0
    %646 = vmatprep.subr.mxu0 0.0
    %647 = vmatpush1.xpose.msra.mxu0 %v620
    %648 = vmatprep.subr.mxu0 0.0
    %649 = vmatpush1.xpose.msra.mxu0 %v618
    %650 = vmatprep.subr.mxu0 0.0
    %651 = vmatpush1.xpose.msra.mxu0 %v616
    %652 = vmatprep.subr.mxu0 0.0
    %653 = vmatpush1.xpose.msra.mxu0 %v614
    %654 = vmatprep.subr.mxu0 0.0
    %655 = vmatpush2.xpose.msra.mxu0 0.0
    %656 = vmatprep.subr.mxu0 0.0
    %657 = vmatpush2.xpose.msra.mxu0 0.0
    %658 = vmatprep.subr.mxu0 0.0
    %659 = vmatpush2.xpose.msra.mxu0 0.0
    %660 = vmatprep.subr.mxu0 0.0
    %661 = vmatpush2.xpose.msra.mxu0 0.0
    %662 = vmatprep.subr.mxu0 0.0
    %663 = vmatpush2.xpose.msra.mxu0 0.0
    %664 = vmatprep.subr.mxu0 0.0
    %665 = vmatpush2.xpose.msra.mxu0 0.0
    %666 = vmatprep.subr.mxu0 0.0
    %667 = vmatpush2.xpose.msra.mxu0 0.0
    %668 = vmatprep.subr.mxu0 0.0
    %669 = vmatpush2.xpose.msra.mxu0 0.0
    %670 = vmatprep.subr.mxu0 0.0
    %671 = vmatpush2.xpose.msra.mxu0 0.0
    %672 = vmatprep.subr.mxu0 0.0
    %673 = vmatpush2.xpose.msra.mxu0 0.0
    %674 = vmatprep.subr.mxu0 0.0
    %675 = vmatpush2.xpose.msra.mxu0 0.0
    %676 = vmatprep.subr.mxu0 0.0
    %677 = vmatpush2.xpose.msra.mxu0 0.0
    %678 = vmatprep.subr.mxu0 0.0
    %679 = vmatpush2.xpose.msra.mxu0 0.0
    %680 = vmatprep.subr.mxu0 0.0
    %681 = vmatpush2.xpose.msra.mxu0 0.0
    %682 = vmatprep.subr.mxu0 0.0
    %683 = vmatpush2.xpose.msra.mxu0 0.0
    %684 = vmatprep.subr.mxu0 0.0
    %685 = vmatpush2.xpose.msra.mxu0 0.0
    %686 = vmatprep.mubr.f32.mxu0 0.0
    %687 = vmatmul.mubr.f32.gmra.mxu0 %v606
    %v688 = vpop.f32.mrf.mxu0
    %v689 = vadd.f32 %v476, %v688
    %v690 = vpop.f32.mrf.mxu0
    %691 = vmatprep.mubr.f32.mxu0 0.0
    %692 = vmatmul.mubr.f32.gmra.mxu0 %v608
    %v693 = vpop.f32.mrf.mxu0
    %v694 = vadd.f32 %v477, %v693
    %v695 = vpop.f32.mrf.mxu0
    %696 = vmatprep.mubr.f32.mxu0 0.0
    %697 = vmatmul.mubr.f32.gmra.mxu0 %v610
    %v698 = vpop.f32.mrf.mxu0
    %v699 = vadd.f32 %v478, %v698
    %v700 = vpop.f32.mrf.mxu0
    %701 = vmatprep.mubr.f32.mxu0 0.0
    %702 = vmatmul.mubr.f32.gmra.mxu0 %v612
    %v703 = vpop.f32.mrf.mxu0
    %v704 = vadd.f32 %v479, %v703
    %v705 = vpop.f32.mrf.mxu0
    %706 = vdwg.mxu0
    %711 = vrot.lane.b32.xlu0 %v342, 96
    %v712 = vpop.permute.xlu0 %711
    %713 = vrot.lane.b32.xlu0 %v347, 96
    %v714 = vpop.permute.xlu0 %713
    %715 = vrot.lane.b32.xlu0 %v352, 96
    %v716 = vpop.permute.xlu0 %715
    %717 = vrot.lane.b32.xlu0 %v357, 96
    %v718 = vpop.permute.xlu0 %717
    %v719 = vsel %vm492, %v342, 0
    %v721 = vsel %vm492, %v347, 0
    %v723 = vsel %vm492, %v352, 0
    %v725 = vsel %vm492, %v357, 0
    %v727 = vsel %vm492, %v712, 0
    %v729 = vsel %vm492, %v714, 0
    %v731 = vsel %vm492, %v716, 0
    %v733 = vsel %vm492, %v718, 0
    %735 = vmatprep.subr.mxu0 0.0
    %736 = vmatpush1.xpose.msra.mxu0 0.0
    %737 = vmatprep.subr.mxu0 0.0
    %738 = vmatpush1.xpose.msra.mxu0 0.0
    %739 = vmatprep.subr.mxu0 0.0
    %740 = vmatpush1.xpose.msra.mxu0 0.0
    %741 = vmatprep.subr.mxu0 0.0
    %742 = vmatpush1.xpose.msra.mxu0 0.0
    %743 = vmatprep.subr.mxu0 0.0
    %744 = vmatpush1.xpose.msra.mxu0 0.0
    %745 = vmatprep.subr.mxu0 0.0
    %746 = vmatpush1.xpose.msra.mxu0 0.0
    %747 = vmatprep.subr.mxu0 0.0
    %748 = vmatpush1.xpose.msra.mxu0 0.0
    %749 = vmatprep.subr.mxu0 0.0
    %750 = vmatpush1.xpose.msra.mxu0 0.0
    %751 = vmatprep.subr.mxu0 0.0
    %752 = vmatpush1.xpose.msra.mxu0 0.0
    %753 = vmatprep.subr.mxu0 0.0
    %754 = vmatpush1.xpose.msra.mxu0 0.0
    %755 = vmatprep.subr.mxu0 0.0
    %756 = vmatpush1.xpose.msra.mxu0 0.0
    %757 = vmatprep.subr.mxu0 0.0
    %758 = vmatpush1.xpose.msra.mxu0 0.0
    %759 = vmatprep.subr.mxu0 0.0
    %760 = vmatpush1.xpose.msra.mxu0 %v733
    %761 = vmatprep.subr.mxu0 0.0
    %762 = vmatpush1.xpose.msra.mxu0 %v731
    %763 = vmatprep.subr.mxu0 0.0
    %764 = vmatpush1.xpose.msra.mxu0 %v729
    %765 = vmatprep.subr.mxu0 0.0
    %766 = vmatpush1.xpose.msra.mxu0 %v727
    %767 = vmatprep.subr.mxu0 0.0
    %768 = vmatpush2.xpose.msra.mxu0 0.0
    %769 = vmatprep.subr.mxu0 0.0
    %770 = vmatpush2.xpose.msra.mxu0 0.0
    %771 = vmatprep.subr.mxu0 0.0
    %772 = vmatpush2.xpose.msra.mxu0 0.0
    %773 = vmatprep.subr.mxu0 0.0
    %774 = vmatpush2.xpose.msra.mxu0 0.0
    %775 = vmatprep.subr.mxu0 0.0
    %776 = vmatpush2.xpose.msra.mxu0 0.0
    %777 = vmatprep.subr.mxu0 0.0
    %778 = vmatpush2.xpose.msra.mxu0 0.0
    %779 = vmatprep.subr.mxu0 0.0
    %780 = vmatpush2.xpose.msra.mxu0 0.0
    %781 = vmatprep.subr.mxu0 0.0
    %782 = vmatpush2.xpose.msra.mxu0 0.0
    %783 = vmatprep.subr.mxu0 0.0
    %784 = vmatpush2.xpose.msra.mxu0 0.0
    %785 = vmatprep.subr.mxu0 0.0
    %786 = vmatpush2.xpose.msra.mxu0 0.0
    %787 = vmatprep.subr.mxu0 0.0
    %788 = vmatpush2.xpose.msra.mxu0 0.0
    %789 = vmatprep.subr.mxu0 0.0
    %790 = vmatpush2.xpose.msra.mxu0 0.0
    %791 = vmatprep.subr.mxu0 0.0
    %792 = vmatpush2.xpose.msra.mxu0 0.0
    %793 = vmatprep.subr.mxu0 0.0
    %794 = vmatpush2.xpose.msra.mxu0 0.0
    %795 = vmatprep.subr.mxu0 0.0
    %796 = vmatpush2.xpose.msra.mxu0 0.0
    %797 = vmatprep.subr.mxu0 0.0
    %798 = vmatpush2.xpose.msra.mxu0 0.0
    %799 = vmatprep.mubr.f32.mxu0 0.0
    %800 = vmatmul.mubr.f32.gmra.mxu0 %v719
    %v801 = vpop.f32.mrf.mxu0
    %v802 = vadd.f32 %v476, %v801
    %v803 = vpop.f32.mrf.mxu0
    %804 = vmatprep.mubr.f32.mxu0 0.0
    %805 = vmatmul.mubr.f32.gmra.mxu0 %v721
    %v806 = vpop.f32.mrf.mxu0
    %v807 = vadd.f32 %v477, %v806
    %v808 = vpop.f32.mrf.mxu0
    %809 = vmatprep.mubr.f32.mxu0 0.0
    %810 = vmatmul.mubr.f32.gmra.mxu0 %v723
    %v811 = vpop.f32.mrf.mxu0
    %v812 = vadd.f32 %v478, %v811
    %v813 = vpop.f32.mrf.mxu0
    %814 = vmatprep.mubr.f32.mxu0 0.0
    %815 = vmatmul.mubr.f32.gmra.mxu0 %v725
    %v816 = vpop.f32.mrf.mxu0
    %v817 = vadd.f32 %v479, %v816
    %v818 = vpop.f32.mrf.mxu0
    %819 = vdwg.mxu0
    %824 = vrot.lane.b32.xlu0 %v362, 96
    %v825 = vpop.permute.xlu0 %824
    %826 = vrot.lane.b32.xlu0 %v367, 96
    %v827 = vpop.permute.xlu0 %826
    %828 = vrot.lane.b32.xlu0 %v372, 96
    %v829 = vpop.permute.xlu0 %828
    %830 = vrot.lane.b32.xlu0 %v377, 96
    %v831 = vpop.permute.xlu0 %830
    %v832 = vsel %vm492, %v362, 0
    %v834 = vsel %vm492, %v367, 0
    %v836 = vsel %vm492, %v372, 0
    %v838 = vsel %vm492, %v377, 0
    %v840 = vsel %vm492, %v825, 0
    %v842 = vsel %vm492, %v827, 0
    %v844 = vsel %vm492, %v829, 0
    %v846 = vsel %vm492, %v831, 0
    %848 = vmatprep.subr.mxu0 0.0
    %849 = vmatpush1.xpose.msra.mxu0 0.0
    %850 = vmatprep.subr.mxu0 0.0
    %851 = vmatpush1.xpose.msra.mxu0 0.0
    %852 = vmatprep.subr.mxu0 0.0
    %853 = vmatpush1.xpose.msra.mxu0 0.0
    %854 = vmatprep.subr.mxu0 0.0
    %855 = vmatpush1.xpose.msra.mxu0 0.0
    %856 = vmatprep.subr.mxu0 0.0
    %857 = vmatpush1.xpose.msra.mxu0 0.0
    %858 = vmatprep.subr.mxu0 0.0
    %859 = vmatpush1.xpose.msra.mxu0 0.0
    %860 = vmatprep.subr.mxu0 0.0
    %861 = vmatpush1.xpose.msra.mxu0 0.0
    %862 = vmatprep.subr.mxu0 0.0
    %863 = vmatpush1.xpose.msra.mxu0 0.0
    %864 = vmatprep.subr.mxu0 0.0
    %865 = vmatpush1.xpose.msra.mxu0 0.0
    %866 = vmatprep.subr.mxu0 0.0
    %867 = vmatpush1.xpose.msra.mxu0 0.0
    %868 = vmatprep.subr.mxu0 0.0
    %869 = vmatpush1.xpose.msra.mxu0 0.0
    %870 = vmatprep.subr.mxu0 0.0
    %871 = vmatpush1.xpose.msra.mxu0 0.0
    %872 = vmatprep.subr.mxu0 0.0
    %873 = vmatpush1.xpose.msra.mxu0 %v846
    %874 = vmatprep.subr.mxu0 0.0
    %875 = vmatpush1.xpose.msra.mxu0 %v844
    %876 = vmatprep.subr.mxu0 0.0
    %877 = vmatpush1.xpose.msra.mxu0 %v842
    %878 = vmatprep.subr.mxu0 0.0
    %879 = vmatpush1.xpose.msra.mxu0 %v840
    %880 = vmatprep.subr.mxu0 0.0
    %881 = vmatpush2.xpose.msra.mxu0 0.0
    %882 = vmatprep.subr.mxu0 0.0
    %883 = vmatpush2.xpose.msra.mxu0 0.0
    %884 = vmatprep.subr.mxu0 0.0
    %885 = vmatpush2.xpose.msra.mxu0 0.0
    %886 = vmatprep.subr.mxu0 0.0
    %887 = vmatpush2.xpose.msra.mxu0 0.0
    %888 = vmatprep.subr.mxu0 0.0
    %889 = vmatpush2.xpose.msra.mxu0 0.0
    %890 = vmatprep.subr.mxu0 0.0
    %891 = vmatpush2.xpose.msra.mxu0 0.0
    %892 = vmatprep.subr.mxu0 0.0
    %893 = vmatpush2.xpose.msra.mxu0 0.0
    %894 = vmatprep.subr.mxu0 0.0
    %895 = vmatpush2.xpose.msra.mxu0 0.0
    %896 = vmatprep.subr.mxu0 0.0
    %897 = vmatpush2.xpose.msra.mxu0 0.0
    %898 = vmatprep.subr.mxu0 0.0
    %899 = vmatpush2.xpose.msra.mxu0 0.0
    %900 = vmatprep.subr.mxu0 0.0
    %901 = vmatpush2.xpose.msra.mxu0 0.0
    %902 = vmatprep.subr.mxu0 0.0
    %903 = vmatpush2.xpose.msra.mxu0 0.0
    %904 = vmatprep.subr.mxu0 0.0
    %905 = vmatpush2.xpose.msra.mxu0 0.0
    %906 = vmatprep.subr.mxu0 0.0
    %907 = vmatpush2.xpose.msra.mxu0 0.0
    %908 = vmatprep.subr.mxu0 0.0
    %909 = vmatpush2.xpose.msra.mxu0 0.0
    %910 = vmatprep.subr.mxu0 0.0
    %911 = vmatpush2.xpose.msra.mxu0 0.0
    %912 = vmatprep.mubr.f32.mxu0 0.0
    %913 = vmatmul.mubr.f32.gmra.mxu0 %v832
    %v914 = vpop.f32.mrf.mxu0
    %v915 = vadd.f32 %v476, %v914
    %v916 = vpop.f32.mrf.mxu0
    %917 = vmatprep.mubr.f32.mxu0 0.0
    %918 = vmatmul.mubr.f32.gmra.mxu0 %v834
    %v919 = vpop.f32.mrf.mxu0
    %v920 = vadd.f32 %v477, %v919
    %v921 = vpop.f32.mrf.mxu0
    %922 = vmatprep.mubr.f32.mxu0 0.0
    %923 = vmatmul.mubr.f32.gmra.mxu0 %v836
    %v924 = vpop.f32.mrf.mxu0
    %v925 = vadd.f32 %v478, %v924
    %v926 = vpop.f32.mrf.mxu0
    %927 = vmatprep.mubr.f32.mxu0 0.0
    %928 = vmatmul.mubr.f32.gmra.mxu0 %v838
    %v929 = vpop.f32.mrf.mxu0
    %v930 = vadd.f32 %v479, %v929
    %v931 = vpop.f32.mrf.mxu0
    %932 = vdwg.mxu0
    %937 = vrot.lane.b32.xlu0 %v382, 96
    %v938 = vpop.permute.xlu0 %937
    %939 = vrot.lane.b32.xlu0 %v387, 96
    %v940 = vpop.permute.xlu0 %939
    %941 = vrot.lane.b32.xlu0 %v392, 96
    %v942 = vpop.permute.xlu0 %941
    %943 = vrot.lane.b32.xlu0 %v397, 96
    %v944 = vpop.permute.xlu0 %943
    %v945 = vsel %vm492, %v382, 0
    %v947 = vsel %vm492, %v387, 0
    %v949 = vsel %vm492, %v392, 0
    %v951 = vsel %vm492, %v397, 0
    %v953 = vsel %vm492, %v938, 0
    %v955 = vsel %vm492, %v940, 0
    %v957 = vsel %vm492, %v942, 0
    %v959 = vsel %vm492, %v944, 0
    %961 = vmatprep.subr.mxu0 0.0
    %962 = vmatpush1.xpose.msra.mxu0 0.0
    %963 = vmatprep.subr.mxu0 0.0
    %964 = vmatpush1.xpose.msra.mxu0 0.0
    %965 = vmatprep.subr.mxu0 0.0
    %966 = vmatpush1.xpose.msra.mxu0 0.0
    %967 = vmatprep.subr.mxu0 0.0
    %968 = vmatpush1.xpose.msra.mxu0 0.0
    %969 = vmatprep.subr.mxu0 0.0
    %970 = vmatpush1.xpose.msra.mxu0 0.0
    %971 = vmatprep.subr.mxu0 0.0
    %972 = vmatpush1.xpose.msra.mxu0 0.0
    %973 = vmatprep.subr.mxu0 0.0
    %974 = vmatpush1.xpose.msra.mxu0 0.0
    %975 = vmatprep.subr.mxu0 0.0
    %976 = vmatpush1.xpose.msra.mxu0 0.0
    %977 = vmatprep.subr.mxu0 0.0
    %978 = vmatpush1.xpose.msra.mxu0 0.0
    %979 = vmatprep.subr.mxu0 0.0
    %980 = vmatpush1.xpose.msra.mxu0 0.0
    %981 = vmatprep.subr.mxu0 0.0
    %982 = vmatpush1.xpose.msra.mxu0 0.0
    %983 = vmatprep.subr.mxu0 0.0
    %984 = vmatpush1.xpose.msra.mxu0 0.0
    %985 = vmatprep.subr.mxu0 0.0
    %986 = vmatpush1.xpose.msra.mxu0 %v959
    %987 = vmatprep.subr.mxu0 0.0
    %988 = vmatpush1.xpose.msra.mxu0 %v957
    %989 = vmatprep.subr.mxu0 0.0
    %990 = vmatpush1.xpose.msra.mxu0 %v955
    %991 = vmatprep.subr.mxu0 0.0
    %992 = vmatpush1.xpose.msra.mxu0 %v953
    %993 = vmatprep.subr.mxu0 0.0
    %994 = vmatpush2.xpose.msra.mxu0 0.0
    %995 = vmatprep.subr.mxu0 0.0
    %996 = vmatpush2.xpose.msra.mxu0 0.0
    %997 = vmatprep.subr.mxu0 0.0
    %998 = vmatpush2.xpose.msra.mxu0 0.0
    %999 = vmatprep.subr.mxu0 0.0
    %1000 = vmatpush2.xpose.msra.mxu0 0.0
    %1001 = vmatprep.subr.mxu0 0.0
    %1002 = vmatpush2.xpose.msra.mxu0 0.0
    %1003 = vmatprep.subr.mxu0 0.0
    %1004 = vmatpush2.xpose.msra.mxu0 0.0
    %1005 = vmatprep.subr.mxu0 0.0
    %1006 = vmatpush2.xpose.msra.mxu0 0.0
    %1007 = vmatprep.subr.mxu0 0.0
    %1008 = vmatpush2.xpose.msra.mxu0 0.0
    %1009 = vmatprep.subr.mxu0 0.0
    %1010 = vmatpush2.xpose.msra.mxu0 0.0
    %1011 = vmatprep.subr.mxu0 0.0
    %1012 = vmatpush2.xpose.msra.mxu0 0.0
    %1013 = vmatprep.subr.mxu0 0.0
    %1014 = vmatpush2.xpose.msra.mxu0 0.0
    %1015 = vmatprep.subr.mxu0 0.0
    %1016 = vmatpush2.xpose.msra.mxu0 0.0
    %1017 = vmatprep.subr.mxu0 0.0
    %1018 = vmatpush2.xpose.msra.mxu0 0.0
    %1019 = vmatprep.subr.mxu0 0.0
    %1020 = vmatpush2.xpose.msra.mxu0 0.0
    %1021 = vmatprep.subr.mxu0 0.0
    %1022 = vmatpush2.xpose.msra.mxu0 0.0
    %1023 = vmatprep.subr.mxu0 0.0
    %1024 = vmatpush2.xpose.msra.mxu0 0.0
    %1025 = vmatprep.mubr.f32.mxu0 0.0
    %1026 = vmatmul.mubr.f32.gmra.mxu0 %v945
    %v1027 = vpop.f32.mrf.mxu0
    %v1028 = vadd.f32 %v476, %v1027
    %v1029 = vpop.f32.mrf.mxu0
    %1030 = vmatprep.mubr.f32.mxu0 0.0
    %1031 = vmatmul.mubr.f32.gmra.mxu0 %v947
    %v1032 = vpop.f32.mrf.mxu0
    %v1033 = vadd.f32 %v477, %v1032
    %v1034 = vpop.f32.mrf.mxu0
    %1035 = vmatprep.mubr.f32.mxu0 0.0
    %1036 = vmatmul.mubr.f32.gmra.mxu0 %v949
    %v1037 = vpop.f32.mrf.mxu0
    %v1038 = vadd.f32 %v478, %v1037
    %v1039 = vpop.f32.mrf.mxu0
    %1040 = vmatprep.mubr.f32.mxu0 0.0
    %1041 = vmatmul.mubr.f32.gmra.mxu0 %v951
    %v1042 = vpop.f32.mrf.mxu0
    %v1043 = vadd.f32 %v479, %v1042
    %v1044 = vpop.f32.mrf.mxu0
    %1045 = vdwg.mxu0
    %1050 = vrot.lane.b32.xlu0 %v402, 96
    %v1051 = vpop.permute.xlu0 %1050
    %1052 = vrot.lane.b32.xlu0 %v407, 96
    %v1053 = vpop.permute.xlu0 %1052
    %1054 = vrot.lane.b32.xlu0 %v412, 96
    %v1055 = vpop.permute.xlu0 %1054
    %1056 = vrot.lane.b32.xlu0 %v417, 96
    %v1057 = vpop.permute.xlu0 %1056
    %v1058 = vsel %vm492, %v402, 0
    %v1060 = vsel %vm492, %v407, 0
    %v1062 = vsel %vm492, %v412, 0
    %v1064 = vsel %vm492, %v417, 0
    %v1066 = vsel %vm492, %v1051, 0
    %v1068 = vsel %vm492, %v1053, 0
    %v1070 = vsel %vm492, %v1055, 0
    %v1072 = vsel %vm492, %v1057, 0
    %1074 = vmatprep.subr.mxu0 0.0
    %1075 = vmatpush1.xpose.msra.mxu0 0.0
    %1076 = vmatprep.subr.mxu0 0.0
    %1077 = vmatpush1.xpose.msra.mxu0 0.0
    %1078 = vmatprep.subr.mxu0 0.0
    %1079 = vmatpush1.xpose.msra.mxu0 0.0
    %1080 = vmatprep.subr.mxu0 0.0
    %1081 = vmatpush1.xpose.msra.mxu0 0.0
    %1082 = vmatprep.subr.mxu0 0.0
    %1083 = vmatpush1.xpose.msra.mxu0 0.0
    %1084 = vmatprep.subr.mxu0 0.0
    %1085 = vmatpush1.xpose.msra.mxu0 0.0
    %1086 = vmatprep.subr.mxu0 0.0
    %1087 = vmatpush1.xpose.msra.mxu0 0.0
    %1088 = vmatprep.subr.mxu0 0.0
    %1089 = vmatpush1.xpose.msra.mxu0 0.0
    %1090 = vmatprep.subr.mxu0 0.0
    %1091 = vmatpush1.xpose.msra.mxu0 0.0
    %1092 = vmatprep.subr.mxu0 0.0
    %1093 = vmatpush1.xpose.msra.mxu0 0.0
    %1094 = vmatprep.subr.mxu0 0.0
    %1095 = vmatpush1.xpose.msra.mxu0 0.0
    %1096 = vmatprep.subr.mxu0 0.0
    %1097 = vmatpush1.xpose.msra.mxu0 0.0
    %1098 = vmatprep.subr.mxu0 0.0
    %1099 = vmatpush1.xpose.msra.mxu0 %v1072
    %1100 = vmatprep.subr.mxu0 0.0
    %1101 = vmatpush1.xpose.msra.mxu0 %v1070
    %1102 = vmatprep.subr.mxu0 0.0
    %1103 = vmatpush1.xpose.msra.mxu0 %v1068
    %1104 = vmatprep.subr.mxu0 0.0
    %1105 = vmatpush1.xpose.msra.mxu0 %v1066
    %1106 = vmatprep.subr.mxu0 0.0
    %1107 = vmatpush2.xpose.msra.mxu0 0.0
    %1108 = vmatprep.subr.mxu0 0.0
    %1109 = vmatpush2.xpose.msra.mxu0 0.0
    %1110 = vmatprep.subr.mxu0 0.0
    %1111 = vmatpush2.xpose.msra.mxu0 0.0
    %1112 = vmatprep.subr.mxu0 0.0
    %1113 = vmatpush2.xpose.msra.mxu0 0.0
    %1114 = vmatprep.subr.mxu0 0.0
    %1115 = vmatpush2.xpose.msra.mxu0 0.0
    %1116 = vmatprep.subr.mxu0 0.0
    %1117 = vmatpush2.xpose.msra.mxu0 0.0
    %1118 = vmatprep.subr.mxu0 0.0
    %1119 = vmatpush2.xpose.msra.mxu0 0.0
    %1120 = vmatprep.subr.mxu0 0.0
    %1121 = vmatpush2.xpose.msra.mxu0 0.0
    %1122 = vmatprep.subr.mxu0 0.0
    %1123 = vmatpush2.xpose.msra.mxu0 0.0
    %1124 = vmatprep.subr.mxu0 0.0
    %1125 = vmatpush2.xpose.msra.mxu0 0.0
    %1126 = vmatprep.subr.mxu0 0.0
    %1127 = vmatpush2.xpose.msra.mxu0 0.0
    %1128 = vmatprep.subr.mxu0 0.0
    %1129 = vmatpush2.xpose.msra.mxu0 0.0
    %1130 = vmatprep.subr.mxu0 0.0
    %1131 = vmatpush2.xpose.msra.mxu0 0.0
    %1132 = vmatprep.subr.mxu0 0.0
    %1133 = vmatpush2.xpose.msra.mxu0 0.0
    %1134 = vmatprep.subr.mxu0 0.0
    %1135 = vmatpush2.xpose.msra.mxu0 0.0
    %1136 = vmatprep.subr.mxu0 0.0
    %1137 = vmatpush2.xpose.msra.mxu0 0.0
    %1138 = vmatprep.mubr.f32.mxu0 0.0
    %1139 = vmatmul.mubr.f32.gmra.mxu0 %v1058
    %v1140 = vpop.f32.mrf.mxu0
    %v1141 = vadd.f32 %v476, %v1140
    %v1142 = vpop.f32.mrf.mxu0
    %1143 = vmatprep.mubr.f32.mxu0 0.0
    %1144 = vmatmul.mubr.f32.gmra.mxu0 %v1060
    %v1145 = vpop.f32.mrf.mxu0
    %v1146 = vadd.f32 %v477, %v1145
    %v1147 = vpop.f32.mrf.mxu0
    %1148 = vmatprep.mubr.f32.mxu0 0.0
    %1149 = vmatmul.mubr.f32.gmra.mxu0 %v1062
    %v1150 = vpop.f32.mrf.mxu0
    %v1151 = vadd.f32 %v478, %v1150
    %v1152 = vpop.f32.mrf.mxu0
    %1153 = vmatprep.mubr.f32.mxu0 0.0
    %1154 = vmatmul.mubr.f32.gmra.mxu0 %v1064
    %v1155 = vpop.f32.mrf.mxu0
    %v1156 = vadd.f32 %v479, %v1155
    %v1157 = vpop.f32.mrf.mxu0
    %1158 = vdwg.mxu0
    %1163 = vrot.lane.b32.xlu0 %v422, 96
    %v1164 = vpop.permute.xlu0 %1163
    %1165 = vrot.lane.b32.xlu0 %v427, 96
    %v1166 = vpop.permute.xlu0 %1165
    %1167 = vrot.lane.b32.xlu0 %v432, 96
    %v1168 = vpop.permute.xlu0 %1167
    %1169 = vrot.lane.b32.xlu0 %v437, 96
    %v1170 = vpop.permute.xlu0 %1169
    %v1171 = vsel %vm492, %v422, 0
    %v1173 = vsel %vm492, %v427, 0
    %v1175 = vsel %vm492, %v432, 0
    %v1177 = vsel %vm492, %v437, 0
    %v1179 = vsel %vm492, %v1164, 0
    %v1181 = vsel %vm492, %v1166, 0
    %v1183 = vsel %vm492, %v1168, 0
    %v1185 = vsel %vm492, %v1170, 0
    %1187 = vmatprep.subr.mxu0 0.0
    %1188 = vmatpush1.xpose.msra.mxu0 0.0
    %1189 = vmatprep.subr.mxu0 0.0
    %1190 = vmatpush1.xpose.msra.mxu0 0.0
    %1191 = vmatprep.subr.mxu0 0.0
    %1192 = vmatpush1.xpose.msra.mxu0 0.0
    %1193 = vmatprep.subr.mxu0 0.0
    %1194 = vmatpush1.xpose.msra.mxu0 0.0
    %1195 = vmatprep.subr.mxu0 0.0
    %1196 = vmatpush1.xpose.msra.mxu0 0.0
    %1197 = vmatprep.subr.mxu0 0.0
    %1198 = vmatpush1.xpose.msra.mxu0 0.0
    %1199 = vmatprep.subr.mxu0 0.0
    %1200 = vmatpush1.xpose.msra.mxu0 0.0
    %1201 = vmatprep.subr.mxu0 0.0
    %1202 = vmatpush1.xpose.msra.mxu0 0.0
    %1203 = vmatprep.subr.mxu0 0.0
    %1204 = vmatpush1.xpose.msra.mxu0 0.0
    %1205 = vmatprep.subr.mxu0 0.0
    %1206 = vmatpush1.xpose.msra.mxu0 0.0
    %1207 = vmatprep.subr.mxu0 0.0
    %1208 = vmatpush1.xpose.msra.mxu0 0.0
    %1209 = vmatprep.subr.mxu0 0.0
    %1210 = vmatpush1.xpose.msra.mxu0 0.0
    %1211 = vmatprep.subr.mxu0 0.0
    %1212 = vmatpush1.xpose.msra.mxu0 %v1185
    %1213 = vmatprep.subr.mxu0 0.0
    %1214 = vmatpush1.xpose.msra.mxu0 %v1183
    %1215 = vmatprep.subr.mxu0 0.0
    %1216 = vmatpush1.xpose.msra.mxu0 %v1181
    %1217 = vmatprep.subr.mxu0 0.0
    %1218 = vmatpush1.xpose.msra.mxu0 %v1179
    %1219 = vmatprep.subr.mxu0 0.0
    %1220 = vmatpush2.xpose.msra.mxu0 0.0
    %1221 = vmatprep.subr.mxu0 0.0
    %1222 = vmatpush2.xpose.msra.mxu0 0.0
    %1223 = vmatprep.subr.mxu0 0.0
    %1224 = vmatpush2.xpose.msra.mxu0 0.0
    %1225 = vmatprep.subr.mxu0 0.0
    %1226 = vmatpush2.xpose.msra.mxu0 0.0
    %1227 = vmatprep.subr.mxu0 0.0
    %1228 = vmatpush2.xpose.msra.mxu0 0.0
    %1229 = vmatprep.subr.mxu0 0.0
    %1230 = vmatpush2.xpose.msra.mxu0 0.0
    %1231 = vmatprep.subr.mxu0 0.0
    %1232 = vmatpush2.xpose.msra.mxu0 0.0
    %1233 = vmatprep.subr.mxu0 0.0
    %1234 = vmatpush2.xpose.msra.mxu0 0.0
    %1235 = vmatprep.subr.mxu0 0.0
    %1236 = vmatpush2.xpose.msra.mxu0 0.0
    %1237 = vmatprep.subr.mxu0 0.0
    %1238 = vmatpush2.xpose.msra.mxu0 0.0
    %1239 = vmatprep.subr.mxu0 0.0
    %1240 = vmatpush2.xpose.msra.mxu0 0.0
    %1241 = vmatprep.subr.mxu0 0.0
    %1242 = vmatpush2.xpose.msra.mxu0 0.0
    %1243 = vmatprep.subr.mxu0 0.0
    %1244 = vmatpush2.xpose.msra.mxu0 0.0
    %1245 = vmatprep.subr.mxu0 0.0
    %1246 = vmatpush2.xpose.msra.mxu0 0.0
    %1247 = vmatprep.subr.mxu0 0.0
    %1248 = vmatpush2.xpose.msra.mxu0 0.0
    %1249 = vmatprep.subr.mxu0 0.0
    %1250 = vmatpush2.xpose.msra.mxu0 0.0
    %1251 = vmatprep.mubr.f32.mxu0 0.0
    %1252 = vmatmul.mubr.f32.gmra.mxu0 %v1171
    %v1253 = vpop.f32.mrf.mxu0
    %v1254 = vadd.f32 %v476, %v1253
    %v1255 = vpop.f32.mrf.mxu0
    %1256 = vmatprep.mubr.f32.mxu0 0.0
    %1257 = vmatmul.mubr.f32.gmra.mxu0 %v1173
    %v1258 = vpop.f32.mrf.mxu0
    %v1259 = vadd.f32 %v477, %v1258
    %v1260 = vpop.f32.mrf.mxu0
    %1261 = vmatprep.mubr.f32.mxu0 0.0
    %1262 = vmatmul.mubr.f32.gmra.mxu0 %v1175
    %v1263 = vpop.f32.mrf.mxu0
    %v1264 = vadd.f32 %v478, %v1263
    %v1265 = vpop.f32.mrf.mxu0
    %1266 = vmatprep.mubr.f32.mxu0 0.0
    %1267 = vmatmul.mubr.f32.gmra.mxu0 %v1177
    %v1268 = vpop.f32.mrf.mxu0
    %v1269 = vadd.f32 %v479, %v1268
    %v1270 = vpop.f32.mrf.mxu0
    %1271 = vdwg.mxu0
    %1276 = vrot.lane.b32.xlu0 %v442, 96
    %v1277 = vpop.permute.xlu0 %1276
    %1278 = vrot.lane.b32.xlu0 %v447, 96
    %v1279 = vpop.permute.xlu0 %1278
    %1280 = vrot.lane.b32.xlu0 %v452, 96
    %v1281 = vpop.permute.xlu0 %1280
    %1282 = vrot.lane.b32.xlu0 %v457, 96
    %v1283 = vpop.permute.xlu0 %1282
    %v1284 = vsel %vm492, %v442, 0
    %v1286 = vsel %vm492, %v447, 0
    %v1288 = vsel %vm492, %v452, 0
    %v1290 = vsel %vm492, %v457, 0
    %v1292 = vsel %vm492, %v1277, 0
    %v1294 = vsel %vm492, %v1279, 0
    %v1296 = vsel %vm492, %v1281, 0
    %v1298 = vsel %vm492, %v1283, 0
    %1300 = vmatprep.subr.mxu0 0.0
    %1301 = vmatpush1.xpose.msra.mxu0 0.0
    %1302 = vmatprep.subr.mxu0 0.0
    %1303 = vmatpush1.xpose.msra.mxu0 0.0
    %1304 = vmatprep.subr.mxu0 0.0
    %1305 = vmatpush1.xpose.msra.mxu0 0.0
    %1306 = vmatprep.subr.mxu0 0.0
    %1307 = vmatpush1.xpose.msra.mxu0 0.0
    %1308 = vmatprep.subr.mxu0 0.0
    %1309 = vmatpush1.xpose.msra.mxu0 0.0
    %1310 = vmatprep.subr.mxu0 0.0
    %1311 = vmatpush1.xpose.msra.mxu0 0.0
    %1312 = vmatprep.subr.mxu0 0.0
    %1313 = vmatpush1.xpose.msra.mxu0 0.0
    %1314 = vmatprep.subr.mxu0 0.0
    %1315 = vmatpush1.xpose.msra.mxu0 0.0
    %1316 = vmatprep.subr.mxu0 0.0
    %1317 = vmatpush1.xpose.msra.mxu0 0.0
    %1318 = vmatprep.subr.mxu0 0.0
    %1319 = vmatpush1.xpose.msra.mxu0 0.0
    %1320 = vmatprep.subr.mxu0 0.0
    %1321 = vmatpush1.xpose.msra.mxu0 0.0
    %1322 = vmatprep.subr.mxu0 0.0
    %1323 = vmatpush1.xpose.msra.mxu0 0.0
    %1324 = vmatprep.subr.mxu0 0.0
    %1325 = vmatpush1.xpose.msra.mxu0 %v1298
    %1326 = vmatprep.subr.mxu0 0.0
    %1327 = vmatpush1.xpose.msra.mxu0 %v1296
    %1328 = vmatprep.subr.mxu0 0.0
    %1329 = vmatpush1.xpose.msra.mxu0 %v1294
    %1330 = vmatprep.subr.mxu0 0.0
    %1331 = vmatpush1.xpose.msra.mxu0 %v1292
    %1332 = vmatprep.subr.mxu0 0.0
    %1333 = vmatpush2.xpose.msra.mxu0 0.0
    %1334 = vmatprep.subr.mxu0 0.0
    %1335 = vmatpush2.xpose.msra.mxu0 0.0
    %1336 = vmatprep.subr.mxu0 0.0
    %1337 = vmatpush2.xpose.msra.mxu0 0.0
    %1338 = vmatprep.subr.mxu0 0.0
    %1339 = vmatpush2.xpose.msra.mxu0 0.0
    %1340 = vmatprep.subr.mxu0 0.0
    %1341 = vmatpush2.xpose.msra.mxu0 0.0
    %1342 = vmatprep.subr.mxu0 0.0
    %1343 = vmatpush2.xpose.msra.mxu0 0.0
    %1344 = vmatprep.subr.mxu0 0.0
    %1345 = vmatpush2.xpose.msra.mxu0 0.0
    %1346 = vmatprep.subr.mxu0 0.0
    %1347 = vmatpush2.xpose.msra.mxu0 0.0
    %1348 = vmatprep.subr.mxu0 0.0
    %1349 = vmatpush2.xpose.msra.mxu0 0.0
    %1350 = vmatprep.subr.mxu0 0.0
    %1351 = vmatpush2.xpose.msra.mxu0 0.0
    %1352 = vmatprep.subr.mxu0 0.0
    %1353 = vmatpush2.xpose.msra.mxu0 0.0
    %1354 = vmatprep.subr.mxu0 0.0
    %1355 = vmatpush2.xpose.msra.mxu0 0.0
    %1356 = vmatprep.subr.mxu0 0.0
    %1357 = vmatpush2.xpose.msra.mxu0 0.0
    %1358 = vmatprep.subr.mxu0 0.0
    %1359 = vmatpush2.xpose.msra.mxu0 0.0
    %1360 = vmatprep.subr.mxu0 0.0
    %1361 = vmatpush2.xpose.msra.mxu0 0.0
    %1362 = vmatprep.subr.mxu0 0.0
    %1363 = vmatpush2.xpose.msra.mxu0 0.0
    %1364 = vmatprep.mubr.f32.mxu0 0.0
    %1365 = vmatmul.mubr.f32.gmra.mxu0 %v1284
    %v1366 = vpop.f32.mrf.mxu0
    %v1367 = vadd.f32 %v476, %v1366
    %v1368 = vpop.f32.mrf.mxu0
    %1369 = vmatprep.mubr.f32.mxu0 0.0
    %1370 = vmatmul.mubr.f32.gmra.mxu0 %v1286
    %v1371 = vpop.f32.mrf.mxu0
    %v1372 = vadd.f32 %v477, %v1371
    %v1373 = vpop.f32.mrf.mxu0
    %1374 = vmatprep.mubr.f32.mxu0 0.0
    %1375 = vmatmul.mubr.f32.gmra.mxu0 %v1288
    %v1376 = vpop.f32.mrf.mxu0
    %v1377 = vadd.f32 %v478, %v1376
    %v1378 = vpop.f32.mrf.mxu0
    %1379 = vmatprep.mubr.f32.mxu0 0.0
    %1380 = vmatmul.mubr.f32.gmra.mxu0 %v1290
    %v1381 = vpop.f32.mrf.mxu0
    %v1382 = vadd.f32 %v479, %v1381
    %v1383 = vpop.f32.mrf.mxu0
    %1384 = vdwg.mxu0
    %v1385 = vadd.f32 %v576, %v460
    %v1386 = vadd.f32 %v581, %v461
    %v1387 = vadd.f32 %v586, %v462
    %v1388 = vadd.f32 %v591, %v463
    %v1389 = vadd.f32 %v689, %v464
    %v1390 = vadd.f32 %v694, %v465
    %v1391 = vadd.f32 %v699, %v466
    %v1392 = vadd.f32 %v704, %v467
    %v1393 = vadd.f32 %v802, %v468
    %v1394 = vadd.f32 %v807, %v469
    %v1395 = vadd.f32 %v812, %v470
    %v1396 = vadd.f32 %v817, %v471
    %v1397 = vadd.f32 %v915, %v472
    %v1398 = vadd.f32 %v920, %v473
    %v1399 = vadd.f32 %v925, %v474
    %v1400 = vadd.f32 %v930, %v475
    %v1401 = vadd.f32 %v1028, %v460
    %v1402 = vadd.f32 %v1033, %v461
    %v1403 = vadd.f32 %v1038, %v462
    %v1404 = vadd.f32 %v1043, %v463
    %v1405 = vadd.f32 %v1141, %v464
    %v1406 = vadd.f32 %v1146, %v465
    %v1407 = vadd.f32 %v1151, %v466
    %v1408 = vadd.f32 %v1156, %v467
    %v1409 = vadd.f32 %v1254, %v468
    %v1410 = vadd.f32 %v1259, %v469
    %v1411 = vadd.f32 %v1264, %v470
    %v1412 = vadd.f32 %v1269, %v471
    %v1413 = vadd.f32 %v1367, %v472
    %v1414 = vadd.f32 %v1372, %v473
    %v1415 = vadd.f32 %v1377, %v474
    %v1416 = vadd.f32 %v1382, %v475
    %v1417 = vsel %vm138, %v1385, -inf
    %1418 = vmax.xlane.f32.xlu0 %v1417
    %v1419 = vpop.xlane.xlu0 %1418
    %v1420 = vsel %vm138, %v1386, -inf
    %1421 = vmax.xlane.f32.xlu0 %v1420
    %v1422 = vpop.xlane.xlu0 %1421
    %v1423 = vsel %vm138, %v1387, -inf
    %1424 = vmax.xlane.f32.xlu0 %v1423
    %v1425 = vpop.xlane.xlu0 %1424
    %v1426 = vsel %vm138, %v1388, -inf
    %1427 = vmax.xlane.f32.xlu0 %v1426
    %v1428 = vpop.xlane.xlu0 %1427
    %v1429 = vsel %vm138, %v1389, -inf
    %1430 = vmax.xlane.f32.xlu0 %v1429
    %v1431 = vpop.xlane.xlu0 %1430
    %v1432 = vsel %vm138, %v1390, -inf
    %1433 = vmax.xlane.f32.xlu0 %v1432
    %v1434 = vpop.xlane.xlu0 %1433
    %v1435 = vsel %vm138, %v1391, -inf
    %1436 = vmax.xlane.f32.xlu0 %v1435
    %v1437 = vpop.xlane.xlu0 %1436
    %v1438 = vsel %vm138, %v1392, -inf
    %1439 = vmax.xlane.f32.xlu0 %v1438
    %v1440 = vpop.xlane.xlu0 %1439
    %v1441 = vsel %vm138, %v1393, -inf
    %1442 = vmax.xlane.f32.xlu0 %v1441
    %v1443 = vpop.xlane.xlu0 %1442
    %v1444 = vsel %vm138, %v1394, -inf
    %1445 = vmax.xlane.f32.xlu0 %v1444
    %v1446 = vpop.xlane.xlu0 %1445
    %v1447 = vsel %vm138, %v1395, -inf
    %1448 = vmax.xlane.f32.xlu0 %v1447
    %v1449 = vpop.xlane.xlu0 %1448
    %v1450 = vsel %vm138, %v1396, -inf
    %1451 = vmax.xlane.f32.xlu0 %v1450
    %v1452 = vpop.xlane.xlu0 %1451
    %v1453 = vsel %vm138, %v1397, -inf
    %1454 = vmax.xlane.f32.xlu0 %v1453
    %v1455 = vpop.xlane.xlu0 %1454
    %v1456 = vsel %vm138, %v1398, -inf
    %1457 = vmax.xlane.f32.xlu0 %v1456
    %v1458 = vpop.xlane.xlu0 %1457
    %v1459 = vsel %vm138, %v1399, -inf
    %1460 = vmax.xlane.f32.xlu0 %v1459
    %v1461 = vpop.xlane.xlu0 %1460
    %v1462 = vsel %vm138, %v1400, -inf
    %1463 = vmax.xlane.f32.xlu0 %v1462
    %v1464 = vpop.xlane.xlu0 %1463
    %v1465 = vsel %vm138, %v1401, -inf
    %1466 = vmax.xlane.f32.xlu0 %v1465
    %v1467 = vpop.xlane.xlu0 %1466
    %v1468 = vsel %vm138, %v1402, -inf
    %1469 = vmax.xlane.f32.xlu0 %v1468
    %v1470 = vpop.xlane.xlu0 %1469
    %v1471 = vsel %vm138, %v1403, -inf
    %1472 = vmax.xlane.f32.xlu0 %v1471
    %v1473 = vpop.xlane.xlu0 %1472
    %v1474 = vsel %vm138, %v1404, -inf
    %1475 = vmax.xlane.f32.xlu0 %v1474
    %v1476 = vpop.xlane.xlu0 %1475
    %v1477 = vsel %vm138, %v1405, -inf
    %1478 = vmax.xlane.f32.xlu0 %v1477
    %v1479 = vpop.xlane.xlu0 %1478
    %v1480 = vsel %vm138, %v1406, -inf
    %1481 = vmax.xlane.f32.xlu0 %v1480
    %v1482 = vpop.xlane.xlu0 %1481
    %v1483 = vsel %vm138, %v1407, -inf
    %1484 = vmax.xlane.f32.xlu0 %v1483
    %v1485 = vpop.xlane.xlu0 %1484
    %v1486 = vsel %vm138, %v1408, -inf
    %1487 = vmax.xlane.f32.xlu0 %v1486
    %v1488 = vpop.xlane.xlu0 %1487
    %v1489 = vsel %vm138, %v1409, -inf
    %1490 = vmax.xlane.f32.xlu0 %v1489
    %v1491 = vpop.xlane.xlu0 %1490
    %v1492 = vsel %vm138, %v1410, -inf
    %1493 = vmax.xlane.f32.xlu0 %v1492
    %v1494 = vpop.xlane.xlu0 %1493
    %v1495 = vsel %vm138, %v1411, -inf
    %1496 = vmax.xlane.f32.xlu0 %v1495
    %v1497 = vpop.xlane.xlu0 %1496
    %v1498 = vsel %vm138, %v1412, -inf
    %1499 = vmax.xlane.f32.xlu0 %v1498
    %v1500 = vpop.xlane.xlu0 %1499
    %v1501 = vsel %vm138, %v1413, -inf
    %1502 = vmax.xlane.f32.xlu0 %v1501
    %v1503 = vpop.xlane.xlu0 %1502
    %v1504 = vsel %vm138, %v1414, -inf
    %1505 = vmax.xlane.f32.xlu0 %v1504
    %v1506 = vpop.xlane.xlu0 %1505
    %v1507 = vsel %vm138, %v1415, -inf
    %1508 = vmax.xlane.f32.xlu0 %v1507
    %v1509 = vpop.xlane.xlu0 %1508
    %v1510 = vsel %vm138, %v1416, -inf
    %1511 = vmax.xlane.f32.xlu0 %v1510
    %v1512 = vpop.xlane.xlu0 %1511
    %v1513 = vsub.f32 %v1385, %v1419
    %v1514 = vsub.f32 %v1386, %v1422
    %v1515 = vsub.f32 %v1387, %v1425
    %v1516 = vsub.f32 %v1388, %v1428
    %v1517 = vsub.f32 %v1389, %v1431
    %v1518 = vsub.f32 %v1390, %v1434
    %v1519 = vsub.f32 %v1391, %v1437
    %v1520 = vsub.f32 %v1392, %v1440
    %v1521 = vsub.f32 %v1393, %v1443
    %v1522 = vsub.f32 %v1394, %v1446
    %v1523 = vsub.f32 %v1395, %v1449
    %v1524 = vsub.f32 %v1396, %v1452
    %v1525 = vsub.f32 %v1397, %v1455
    %v1526 = vsub.f32 %v1398, %v1458
    %v1527 = vsub.f32 %v1399, %v1461
    %v1528 = vsub.f32 %v1400, %v1464
    %v1529 = vsub.f32 %v1401, %v1467
    %v1530 = vsub.f32 %v1402, %v1470
    %v1531 = vsub.f32 %v1403, %v1473
    %v1532 = vsub.f32 %v1404, %v1476
    %v1533 = vsub.f32 %v1405, %v1479
    %v1534 = vsub.f32 %v1406, %v1482
    %v1535 = vsub.f32 %v1407, %v1485
    %v1536 = vsub.f32 %v1408, %v1488
    %v1537 = vsub.f32 %v1409, %v1491
    %v1538 = vsub.f32 %v1410, %v1494
    %v1539 = vsub.f32 %v1411, %v1497
    %v1540 = vsub.f32 %v1412, %v1500
    %v1541 = vsub.f32 %v1413, %v1503
    %v1542 = vsub.f32 %v1414, %v1506
    %v1543 = vsub.f32 %v1415, %v1509
    %v1544 = vsub.f32 %v1416, %v1512
    %v1545 = vmul.f32 %v1513, 1.442695
    %v1546 = vpow.pop %v1545
    %v1547 = vmul.f32 %v1514, 1.442695
    %v1548 = vpow.pop %v1547
    %v1549 = vmul.f32 %v1515, 1.442695
    %v1550 = vpow.pop %v1549
    %v1551 = vmul.f32 %v1516, 1.442695
    %v1552 = vpow.pop %v1551
    %v1553 = vmul.f32 %v1517, 1.442695
    %v1554 = vpow.pop %v1553
    %v1555 = vmul.f32 %v1518, 1.442695
    %v1556 = vpow.pop %v1555
    %v1557 = vmul.f32 %v1519, 1.442695
    %v1558 = vpow.pop %v1557
    %v1559 = vmul.f32 %v1520, 1.442695
    %v1560 = vpow.pop %v1559
    %v1561 = vmul.f32 %v1521, 1.442695
    %v1562 = vpow.pop %v1561
    %v1563 = vmul.f32 %v1522, 1.442695
    %v1564 = vpow.pop %v1563
    %v1565 = vmul.f32 %v1523, 1.442695
    %v1566 = vpow.pop %v1565
    %v1567 = vmul.f32 %v1524, 1.442695
    %v1568 = vpow.pop %v1567
    %v1569 = vmul.f32 %v1525, 1.442695
    %v1570 = vpow.pop %v1569
    %v1571 = vmul.f32 %v1526, 1.442695
    %v1572 = vpow.pop %v1571
    %v1573 = vmul.f32 %v1527, 1.442695
    %v1574 = vpow.pop %v1573
    %v1575 = vmul.f32 %v1528, 1.442695
    %v1576 = vpow.pop %v1575
    %v1577 = vmul.f32 %v1529, 1.442695
    %v1578 = vpow.pop %v1577
    %v1579 = vmul.f32 %v1530, 1.442695
    %v1580 = vpow.pop %v1579
    %v1581 = vmul.f32 %v1531, 1.442695
    %v1582 = vpow.pop %v1581
    %v1583 = vmul.f32 %v1532, 1.442695
    %v1584 = vpow.pop %v1583
    %v1585 = vmul.f32 %v1533, 1.442695
    %v1586 = vpow.pop %v1585
    %v1587 = vmul.f32 %v1534, 1.442695
    %v1588 = vpow.pop %v1587
    %v1589 = vmul.f32 %v1535, 1.442695
    %v1590 = vpow.pop %v1589
    %v1591 = vmul.f32 %v1536, 1.442695
    %v1592 = vpow.pop %v1591
    %v1593 = vmul.f32 %v1537, 1.442695
    %v1594 = vpow.pop %v1593
    %v1595 = vmul.f32 %v1538, 1.442695
    %v1596 = vpow.pop %v1595
    %v1597 = vmul.f32 %v1539, 1.442695
    %v1598 = vpow.pop %v1597
    %v1599 = vmul.f32 %v1540, 1.442695
    %v1600 = vpow.pop %v1599
    %v1601 = vmul.f32 %v1541, 1.442695
    %v1602 = vpow.pop %v1601
    %v1603 = vmul.f32 %v1542, 1.442695
    %v1604 = vpow.pop %v1603
    %v1605 = vmul.f32 %v1543, 1.442695
    %v1606 = vpow.pop %v1605
    %v1607 = vmul.f32 %v1544, 1.442695
    %v1608 = vpow.pop %v1607
    %v1609 = vsel %vm138, %v1546, 0.0
    %1610 = vadd.xlane.f32.xlu0 %v1609
    %v1611 = vpop.xlane.xlu0 %1610
    %v1612 = vsel %vm138, %v1548, 0.0
    %1613 = vadd.xlane.f32.xlu0 %v1612
    %v1614 = vpop.xlane.xlu0 %1613
    %v1615 = vsel %vm138, %v1550, 0.0
    %1616 = vadd.xlane.f32.xlu0 %v1615
    %v1617 = vpop.xlane.xlu0 %1616
    %v1618 = vsel %vm138, %v1552, 0.0
    %1619 = vadd.xlane.f32.xlu0 %v1618
    %v1620 = vpop.xlane.xlu0 %1619
    %v1621 = vsel %vm138, %v1554, 0.0
    %1622 = vadd.xlane.f32.xlu0 %v1621
    %v1623 = vpop.xlane.xlu0 %1622
    %v1624 = vsel %vm138, %v1556, 0.0
    %1625 = vadd.xlane.f32.xlu0 %v1624
    %v1626 = vpop.xlane.xlu0 %1625
    %v1627 = vsel %vm138, %v1558, 0.0
    %1628 = vadd.xlane.f32.xlu0 %v1627
    %v1629 = vpop.xlane.xlu0 %1628
    %v1630 = vsel %vm138, %v1560, 0.0
    %1631 = vadd.xlane.f32.xlu0 %v1630
    %v1632 = vpop.xlane.xlu0 %1631
    %v1633 = vsel %vm138, %v1562, 0.0
    %1634 = vadd.xlane.f32.xlu0 %v1633
    %v1635 = vpop.xlane.xlu0 %1634
    %v1636 = vsel %vm138, %v1564, 0.0
    %1637 = vadd.xlane.f32.xlu0 %v1636
    %v1638 = vpop.xlane.xlu0 %1637
    %v1639 = vsel %vm138, %v1566, 0.0
    %1640 = vadd.xlane.f32.xlu0 %v1639
    %v1641 = vpop.xlane.xlu0 %1640
    %v1642 = vsel %vm138, %v1568, 0.0
    %1643 = vadd.xlane.f32.xlu0 %v1642
    %v1644 = vpop.xlane.xlu0 %1643
    %v1645 = vsel %vm138, %v1570, 0.0
    %1646 = vadd.xlane.f32.xlu0 %v1645
    %v1647 = vpop.xlane.xlu0 %1646
    %v1648 = vsel %vm138, %v1572, 0.0
    %1649 = vadd.xlane.f32.xlu0 %v1648
    %v1650 = vpop.xlane.xlu0 %1649
    %v1651 = vsel %vm138, %v1574, 0.0
    %1652 = vadd.xlane.f32.xlu0 %v1651
    %v1653 = vpop.xlane.xlu0 %1652
    %v1654 = vsel %vm138, %v1576, 0.0
    %1655 = vadd.xlane.f32.xlu0 %v1654
    %v1656 = vpop.xlane.xlu0 %1655
    %v1657 = vsel %vm138, %v1578, 0.0
    %1658 = vadd.xlane.f32.xlu0 %v1657
    %v1659 = vpop.xlane.xlu0 %1658
    %v1660 = vsel %vm138, %v1580, 0.0
    %1661 = vadd.xlane.f32.xlu0 %v1660
    %v1662 = vpop.xlane.xlu0 %1661
    %v1663 = vsel %vm138, %v1582, 0.0
    %1664 = vadd.xlane.f32.xlu0 %v1663
    %v1665 = vpop.xlane.xlu0 %1664
    %v1666 = vsel %vm138, %v1584, 0.0
    %1667 = vadd.xlane.f32.xlu0 %v1666
    %v1668 = vpop.xlane.xlu0 %1667
    %v1669 = vsel %vm138, %v1586, 0.0
    %1670 = vadd.xlane.f32.xlu0 %v1669
    %v1671 = vpop.xlane.xlu0 %1670
    %v1672 = vsel %vm138, %v1588, 0.0
    %1673 = vadd.xlane.f32.xlu0 %v1672
    %v1674 = vpop.xlane.xlu0 %1673
    %v1675 = vsel %vm138, %v1590, 0.0
    %1676 = vadd.xlane.f32.xlu0 %v1675
    %v1677 = vpop.xlane.xlu0 %1676
    %v1678 = vsel %vm138, %v1592, 0.0
    %1679 = vadd.xlane.f32.xlu0 %v1678
    %v1680 = vpop.xlane.xlu0 %1679
    %v1681 = vsel %vm138, %v1594, 0.0
    %1682 = vadd.xlane.f32.xlu0 %v1681
    %v1683 = vpop.xlane.xlu0 %1682
    %v1684 = vsel %vm138, %v1596, 0.0
    %1685 = vadd.xlane.f32.xlu0 %v1684
    %v1686 = vpop.xlane.xlu0 %1685
    %v1687 = vsel %vm138, %v1598, 0.0
    %1688 = vadd.xlane.f32.xlu0 %v1687
    %v1689 = vpop.xlane.xlu0 %1688
    %v1690 = vsel %vm138, %v1600, 0.0
    %1691 = vadd.xlane.f32.xlu0 %v1690
    %v1692 = vpop.xlane.xlu0 %1691
    %v1693 = vsel %vm138, %v1602, 0.0
    %1694 = vadd.xlane.f32.xlu0 %v1693
    %v1695 = vpop.xlane.xlu0 %1694
    %v1696 = vsel %vm138, %v1604, 0.0
    %1697 = vadd.xlane.f32.xlu0 %v1696
    %v1698 = vpop.xlane.xlu0 %1697
    %v1699 = vsel %vm138, %v1606, 0.0
    %1700 = vadd.xlane.f32.xlu0 %v1699
    %v1701 = vpop.xlane.xlu0 %1700
    %v1702 = vsel %vm138, %v1608, 0.0
    %1703 = vadd.xlane.f32.xlu0 %v1702
    %v1704 = vpop.xlane.xlu0 %1703
    %v1705 = vrcp.pop %v1611
    %v1706 = vrcp.pop %v1614
    %v1707 = vrcp.pop %v1617
    %v1708 = vrcp.pop %v1620
    %v1709 = vrcp.pop %v1623
    %v1710 = vrcp.pop %v1626
    %v1711 = vrcp.pop %v1629
    %v1712 = vrcp.pop %v1632
    %v1713 = vrcp.pop %v1635
    %v1714 = vrcp.pop %v1638
    %v1715 = vrcp.pop %v1641
    %v1716 = vrcp.pop %v1644
    %v1717 = vrcp.pop %v1647
    %v1718 = vrcp.pop %v1650
    %v1719 = vrcp.pop %v1653
    %v1720 = vrcp.pop %v1656
    %v1721 = vrcp.pop %v1659
    %v1722 = vrcp.pop %v1662
    %v1723 = vrcp.pop %v1665
    %v1724 = vrcp.pop %v1668
    %v1725 = vrcp.pop %v1671
    %v1726 = vrcp.pop %v1674
    %v1727 = vrcp.pop %v1677
    %v1728 = vrcp.pop %v1680
    %v1729 = vrcp.pop %v1683
    %v1730 = vrcp.pop %v1686
    %v1731 = vrcp.pop %v1689
    %v1732 = vrcp.pop %v1692
    %v1733 = vrcp.pop %v1695
    %v1734 = vrcp.pop %v1698
    %v1735 = vrcp.pop %v1701
    %v1736 = vrcp.pop %v1704
    %v1737 = vmul.f32 %v1546, %v1705
    %v1738 = vmul.f32 %v1548, %v1706
    %v1739 = vmul.f32 %v1550, %v1707
    %v1740 = vmul.f32 %v1552, %v1708
    %v1741 = vmul.f32 %v1554, %v1709
    %v1742 = vmul.f32 %v1556, %v1710
    %v1743 = vmul.f32 %v1558, %v1711
    %v1744 = vmul.f32 %v1560, %v1712
    %v1745 = vmul.f32 %v1562, %v1713
    %v1746 = vmul.f32 %v1564, %v1714
    %v1747 = vmul.f32 %v1566, %v1715
    %v1748 = vmul.f32 %v1568, %v1716
    %v1749 = vmul.f32 %v1570, %v1717
    %v1750 = vmul.f32 %v1572, %v1718
    %v1751 = vmul.f32 %v1574, %v1719
    %v1752 = vmul.f32 %v1576, %v1720
    %v1753 = vmul.f32 %v1578, %v1721
    %v1754 = vmul.f32 %v1580, %v1722
    %v1755 = vmul.f32 %v1582, %v1723
    %v1756 = vmul.f32 %v1584, %v1724
    %v1757 = vmul.f32 %v1586, %v1725
    %v1758 = vmul.f32 %v1588, %v1726
    %v1759 = vmul.f32 %v1590, %v1727
    %v1760 = vmul.f32 %v1592, %v1728
    %v1761 = vmul.f32 %v1594, %v1729
    %v1762 = vmul.f32 %v1596, %v1730
    %v1763 = vmul.f32 %v1598, %v1731
    %v1764 = vmul.f32 %v1600, %v1732
    %v1765 = vmul.f32 %v1602, %v1733
    %v1766 = vmul.f32 %v1604, %v1734
    %v1767 = vmul.f32 %v1606, %v1735
    %v1768 = vmul.f32 %v1608, %v1736
    %1769 = vrot.lane.b32.xlu0 %v302, 64
    %v1770 = vpop.permute.xlu0 %1769
    %1771 = vrot.lane.b32.xlu0 %v307, 64
    %v1772 = vpop.permute.xlu0 %1771
    %1773 = vrot.lane.b32.xlu0 %v312, 64
    %v1774 = vpop.permute.xlu0 %1773
    %1775 = vrot.lane.b32.xlu0 %v317, 64
    %v1776 = vpop.permute.xlu0 %1775
    %v1782 = vsel %vm138, %v1737, 0
    %v1785 = vsel %vm138, %v1738, 0
    %v1788 = vsel %vm138, %v1739, 0
    %v1791 = vsel %vm138, %v1740, 0
    %1793 = vmatprep.subr.mxu0 0.0
    %1794 = vmatpush1.msra.mxu0 0.0
    %1795 = vmatprep.subr.mxu0 0.0
    %1796 = vmatpush1.msra.mxu0 0.0
    %1797 = vmatprep.subr.mxu0 0.0
    %1798 = vmatpush1.msra.mxu0 0.0
    %1799 = vmatprep.subr.mxu0 0.0
    %1800 = vmatpush1.msra.mxu0 0.0
    %1801 = vmatprep.subr.mxu0 0.0
    %1802 = vmatpush1.msra.mxu0 0.0
    %1803 = vmatprep.subr.mxu0 0.0
    %1804 = vmatpush1.msra.mxu0 0.0
    %1805 = vmatprep.subr.mxu0 0.0
    %1806 = vmatpush1.msra.mxu0 0.0
    %1807 = vmatprep.subr.mxu0 0.0
    %1808 = vmatpush1.msra.mxu0 0.0
    %1809 = vmatprep.subr.mxu0 0.0
    %1810 = vmatpush1.msra.mxu0 0.0
    %1811 = vmatprep.subr.mxu0 0.0
    %1812 = vmatpush1.msra.mxu0 0.0
    %1813 = vmatprep.subr.mxu0 0.0
    %1814 = vmatpush1.msra.mxu0 0.0
    %1815 = vmatprep.subr.mxu0 0.0
    %1816 = vmatpush1.msra.mxu0 0.0
    %1817 = vmatprep.subr.mxu0 0.0
    %1818 = vmatpush1.msra.mxu0 %v1776
    %1819 = vmatprep.subr.mxu0 0.0
    %1820 = vmatpush1.msra.mxu0 %v1774
    %1821 = vmatprep.subr.mxu0 0.0
    %1822 = vmatpush1.msra.mxu0 %v1772
    %1823 = vmatprep.subr.mxu0 0.0
    %1824 = vmatpush1.msra.mxu0 %v1770
    %1825 = vmatprep.subr.mxu0 0.0
    %1826 = vmatpush2.msra.mxu0 0.0
    %1827 = vmatprep.subr.mxu0 0.0
    %1828 = vmatpush2.msra.mxu0 0.0
    %1829 = vmatprep.subr.mxu0 0.0
    %1830 = vmatpush2.msra.mxu0 0.0
    %1831 = vmatprep.subr.mxu0 0.0
    %1832 = vmatpush2.msra.mxu0 0.0
    %1833 = vmatprep.subr.mxu0 0.0
    %1834 = vmatpush2.msra.mxu0 0.0
    %1835 = vmatprep.subr.mxu0 0.0
    %1836 = vmatpush2.msra.mxu0 0.0
    %1837 = vmatprep.subr.mxu0 0.0
    %1838 = vmatpush2.msra.mxu0 0.0
    %1839 = vmatprep.subr.mxu0 0.0
    %1840 = vmatpush2.msra.mxu0 0.0
    %1841 = vmatprep.subr.mxu0 0.0
    %1842 = vmatpush2.msra.mxu0 0.0
    %1843 = vmatprep.subr.mxu0 0.0
    %1844 = vmatpush2.msra.mxu0 0.0
    %1845 = vmatprep.subr.mxu0 0.0
    %1846 = vmatpush2.msra.mxu0 0.0
    %1847 = vmatprep.subr.mxu0 0.0
    %1848 = vmatpush2.msra.mxu0 0.0
    %1849 = vmatprep.subr.mxu0 0.0
    %1850 = vmatpush2.msra.mxu0 0.0
    %1851 = vmatprep.subr.mxu0 0.0
    %1852 = vmatpush2.msra.mxu0 0.0
    %1853 = vmatprep.subr.mxu0 0.0
    %1854 = vmatpush2.msra.mxu0 0.0
    %1855 = vmatprep.subr.mxu0 0.0
    %1856 = vmatpush2.msra.mxu0 0.0
    %1857 = vmatprep.mubr.f32.mxu0 0.0
    %1858 = vmatmul.mubr.f32.gmra.mxu0 %v1782
    %v1859 = vpop.f32.mrf.mxu0
    %v1860 = vadd.f32 0.0, %v1859
    %v1861 = vpop.f32.mrf.mxu0
    %1862 = vmatprep.mubr.f32.mxu0 0.0
    %1863 = vmatmul.mubr.f32.gmra.mxu0 %v1785
    %v1864 = vpop.f32.mrf.mxu0
    %v1865 = vadd.f32 0.0, %v1864
    %v1866 = vpop.f32.mrf.mxu0
    %1867 = vmatprep.mubr.f32.mxu0 0.0
    %1868 = vmatmul.mubr.f32.gmra.mxu0 %v1788
    %v1869 = vpop.f32.mrf.mxu0
    %v1870 = vadd.f32 0.0, %v1869
    %v1871 = vpop.f32.mrf.mxu0
    %1872 = vmatprep.mubr.f32.mxu0 0.0
    %1873 = vmatmul.mubr.f32.gmra.mxu0 %v1791
    %v1874 = vpop.f32.mrf.mxu0
    %v1875 = vadd.f32 0.0, %v1874
    %v1876 = vpop.f32.mrf.mxu0
    %1877 = vdwg.mxu0
    %1878 = vrot.lane.b32.xlu0 %v322, 64
    %v1879 = vpop.permute.xlu0 %1878
    %1880 = vrot.lane.b32.xlu0 %v327, 64
    %v1881 = vpop.permute.xlu0 %1880
    %1882 = vrot.lane.b32.xlu0 %v332, 64
    %v1883 = vpop.permute.xlu0 %1882
    %1884 = vrot.lane.b32.xlu0 %v337, 64
    %v1885 = vpop.permute.xlu0 %1884
    %v1891 = vsel %vm138, %v1741, 0
    %v1894 = vsel %vm138, %v1742, 0
    %v1897 = vsel %vm138, %v1743, 0
    %v1900 = vsel %vm138, %v1744, 0
    %1902 = vmatprep.subr.mxu0 0.0
    %1903 = vmatpush1.msra.mxu0 0.0
    %1904 = vmatprep.subr.mxu0 0.0
    %1905 = vmatpush1.msra.mxu0 0.0
    %1906 = vmatprep.subr.mxu0 0.0
    %1907 = vmatpush1.msra.mxu0 0.0
    %1908 = vmatprep.subr.mxu0 0.0
    %1909 = vmatpush1.msra.mxu0 0.0
    %1910 = vmatprep.subr.mxu0 0.0
    %1911 = vmatpush1.msra.mxu0 0.0
    %1912 = vmatprep.subr.mxu0 0.0
    %1913 = vmatpush1.msra.mxu0 0.0
    %1914 = vmatprep.subr.mxu0 0.0
    %1915 = vmatpush1.msra.mxu0 0.0
    %1916 = vmatprep.subr.mxu0 0.0
    %1917 = vmatpush1.msra.mxu0 0.0
    %1918 = vmatprep.subr.mxu0 0.0
    %1919 = vmatpush1.msra.mxu0 0.0
    %1920 = vmatprep.subr.mxu0 0.0
    %1921 = vmatpush1.msra.mxu0 0.0
    %1922 = vmatprep.subr.mxu0 0.0
    %1923 = vmatpush1.msra.mxu0 0.0
    %1924 = vmatprep.subr.mxu0 0.0
    %1925 = vmatpush1.msra.mxu0 0.0
    %1926 = vmatprep.subr.mxu0 0.0
    %1927 = vmatpush1.msra.mxu0 %v1885
    %1928 = vmatprep.subr.mxu0 0.0
    %1929 = vmatpush1.msra.mxu0 %v1883
    %1930 = vmatprep.subr.mxu0 0.0
    %1931 = vmatpush1.msra.mxu0 %v1881
    %1932 = vmatprep.subr.mxu0 0.0
    %1933 = vmatpush1.msra.mxu0 %v1879
    %1934 = vmatprep.subr.mxu0 0.0
    %1935 = vmatpush2.msra.mxu0 0.0
    %1936 = vmatprep.subr.mxu0 0.0
    %1937 = vmatpush2.msra.mxu0 0.0
    %1938 = vmatprep.subr.mxu0 0.0
    %1939 = vmatpush2.msra.mxu0 0.0
    %1940 = vmatprep.subr.mxu0 0.0
    %1941 = vmatpush2.msra.mxu0 0.0
    %1942 = vmatprep.subr.mxu0 0.0
    %1943 = vmatpush2.msra.mxu0 0.0
    %1944 = vmatprep.subr.mxu0 0.0
    %1945 = vmatpush2.msra.mxu0 0.0
    %1946 = vmatprep.subr.mxu0 0.0
    %1947 = vmatpush2.msra.mxu0 0.0
    %1948 = vmatprep.subr.mxu0 0.0
    %1949 = vmatpush2.msra.mxu0 0.0
    %1950 = vmatprep.subr.mxu0 0.0
    %1951 = vmatpush2.msra.mxu0 0.0
    %1952 = vmatprep.subr.mxu0 0.0
    %1953 = vmatpush2.msra.mxu0 0.0
    %1954 = vmatprep.subr.mxu0 0.0
    %1955 = vmatpush2.msra.mxu0 0.0
    %1956 = vmatprep.subr.mxu0 0.0
    %1957 = vmatpush2.msra.mxu0 0.0
    %1958 = vmatprep.subr.mxu0 0.0
    %1959 = vmatpush2.msra.mxu0 0.0
    %1960 = vmatprep.subr.mxu0 0.0
    %1961 = vmatpush2.msra.mxu0 0.0
    %1962 = vmatprep.subr.mxu0 0.0
    %1963 = vmatpush2.msra.mxu0 0.0
    %1964 = vmatprep.subr.mxu0 0.0
    %1965 = vmatpush2.msra.mxu0 0.0
    %1966 = vmatprep.mubr.f32.mxu0 0.0
    %1967 = vmatmul.mubr.f32.gmra.mxu0 %v1891
    %v1968 = vpop.f32.mrf.mxu0
    %v1969 = vadd.f32 0.0, %v1968
    %v1970 = vpop.f32.mrf.mxu0
    %1971 = vmatprep.mubr.f32.mxu0 0.0
    %1972 = vmatmul.mubr.f32.gmra.mxu0 %v1894
    %v1973 = vpop.f32.mrf.mxu0
    %v1974 = vadd.f32 0.0, %v1973
    %v1975 = vpop.f32.mrf.mxu0
    %1976 = vmatprep.mubr.f32.mxu0 0.0
    %1977 = vmatmul.mubr.f32.gmra.mxu0 %v1897
    %v1978 = vpop.f32.mrf.mxu0
    %v1979 = vadd.f32 0.0, %v1978
    %v1980 = vpop.f32.mrf.mxu0
    %1981 = vmatprep.mubr.f32.mxu0 0.0
    %1982 = vmatmul.mubr.f32.gmra.mxu0 %v1900
    %v1983 = vpop.f32.mrf.mxu0
    %v1984 = vadd.f32 0.0, %v1983
    %v1985 = vpop.f32.mrf.mxu0
    %1986 = vdwg.mxu0
    %1987 = vrot.lane.b32.xlu0 %v342, 64
    %v1988 = vpop.permute.xlu0 %1987
    %1989 = vrot.lane.b32.xlu0 %v347, 64
    %v1990 = vpop.permute.xlu0 %1989
    %1991 = vrot.lane.b32.xlu0 %v352, 64
    %v1992 = vpop.permute.xlu0 %1991
    %1993 = vrot.lane.b32.xlu0 %v357, 64
    %v1994 = vpop.permute.xlu0 %1993
    %v2000 = vsel %vm138, %v1745, 0
    %v2003 = vsel %vm138, %v1746, 0
    %v2006 = vsel %vm138, %v1747, 0
    %v2009 = vsel %vm138, %v1748, 0
    %2011 = vmatprep.subr.mxu0 0.0
    %2012 = vmatpush1.msra.mxu0 0.0
    %2013 = vmatprep.subr.mxu0 0.0
    %2014 = vmatpush1.msra.mxu0 0.0
    %2015 = vmatprep.subr.mxu0 0.0
    %2016 = vmatpush1.msra.mxu0 0.0
    %2017 = vmatprep.subr.mxu0 0.0
    %2018 = vmatpush1.msra.mxu0 0.0
    %2019 = vmatprep.subr.mxu0 0.0
    %2020 = vmatpush1.msra.mxu0 0.0
    %2021 = vmatprep.subr.mxu0 0.0
    %2022 = vmatpush1.msra.mxu0 0.0
    %2023 = vmatprep.subr.mxu0 0.0
    %2024 = vmatpush1.msra.mxu0 0.0
    %2025 = vmatprep.subr.mxu0 0.0
    %2026 = vmatpush1.msra.mxu0 0.0
    %2027 = vmatprep.subr.mxu0 0.0
    %2028 = vmatpush1.msra.mxu0 0.0
    %2029 = vmatprep.subr.mxu0 0.0
    %2030 = vmatpush1.msra.mxu0 0.0
    %2031 = vmatprep.subr.mxu0 0.0
    %2032 = vmatpush1.msra.mxu0 0.0
    %2033 = vmatprep.subr.mxu0 0.0
    %2034 = vmatpush1.msra.mxu0 0.0
    %2035 = vmatprep.subr.mxu0 0.0
    %2036 = vmatpush1.msra.mxu0 %v1994
    %2037 = vmatprep.subr.mxu0 0.0
    %2038 = vmatpush1.msra.mxu0 %v1992
    %2039 = vmatprep.subr.mxu0 0.0
    %2040 = vmatpush1.msra.mxu0 %v1990
    %2041 = vmatprep.subr.mxu0 0.0
    %2042 = vmatpush1.msra.mxu0 %v1988
    %2043 = vmatprep.subr.mxu0 0.0
    %2044 = vmatpush2.msra.mxu0 0.0
    %2045 = vmatprep.subr.mxu0 0.0
    %2046 = vmatpush2.msra.mxu0 0.0
    %2047 = vmatprep.subr.mxu0 0.0
    %2048 = vmatpush2.msra.mxu0 0.0
    %2049 = vmatprep.subr.mxu0 0.0
    %2050 = vmatpush2.msra.mxu0 0.0
    %2051 = vmatprep.subr.mxu0 0.0
    %2052 = vmatpush2.msra.mxu0 0.0
    %2053 = vmatprep.subr.mxu0 0.0
    %2054 = vmatpush2.msra.mxu0 0.0
    %2055 = vmatprep.subr.mxu0 0.0
    %2056 = vmatpush2.msra.mxu0 0.0
    %2057 = vmatprep.subr.mxu0 0.0
    %2058 = vmatpush2.msra.mxu0 0.0
    %2059 = vmatprep.subr.mxu0 0.0
    %2060 = vmatpush2.msra.mxu0 0.0
    %2061 = vmatprep.subr.mxu0 0.0
    %2062 = vmatpush2.msra.mxu0 0.0
    %2063 = vmatprep.subr.mxu0 0.0
    %2064 = vmatpush2.msra.mxu0 0.0
    %2065 = vmatprep.subr.mxu0 0.0
    %2066 = vmatpush2.msra.mxu0 0.0
    %2067 = vmatprep.subr.mxu0 0.0
    %2068 = vmatpush2.msra.mxu0 0.0
    %2069 = vmatprep.subr.mxu0 0.0
    %2070 = vmatpush2.msra.mxu0 0.0
    %2071 = vmatprep.subr.mxu0 0.0
    %2072 = vmatpush2.msra.mxu0 0.0
    %2073 = vmatprep.subr.mxu0 0.0
    %2074 = vmatpush2.msra.mxu0 0.0
    %2075 = vmatprep.mubr.f32.mxu0 0.0
    %2076 = vmatmul.mubr.f32.gmra.mxu0 %v2000
    %v2077 = vpop.f32.mrf.mxu0
    %v2078 = vadd.f32 0.0, %v2077
    %v2079 = vpop.f32.mrf.mxu0
    %2080 = vmatprep.mubr.f32.mxu0 0.0
    %2081 = vmatmul.mubr.f32.gmra.mxu0 %v2003
    %v2082 = vpop.f32.mrf.mxu0
    %v2083 = vadd.f32 0.0, %v2082
    %v2084 = vpop.f32.mrf.mxu0
    %2085 = vmatprep.mubr.f32.mxu0 0.0
    %2086 = vmatmul.mubr.f32.gmra.mxu0 %v2006
    %v2087 = vpop.f32.mrf.mxu0
    %v2088 = vadd.f32 0.0, %v2087
    %v2089 = vpop.f32.mrf.mxu0
    %2090 = vmatprep.mubr.f32.mxu0 0.0
    %2091 = vmatmul.mubr.f32.gmra.mxu0 %v2009
    %v2092 = vpop.f32.mrf.mxu0
    %v2093 = vadd.f32 0.0, %v2092
    %v2094 = vpop.f32.mrf.mxu0
    %2095 = vdwg.mxu0
    %2096 = vrot.lane.b32.xlu0 %v362, 64
    %v2097 = vpop.permute.xlu0 %2096
    %2098 = vrot.lane.b32.xlu0 %v367, 64
    %v2099 = vpop.permute.xlu0 %2098
    %2100 = vrot.lane.b32.xlu0 %v372, 64
    %v2101 = vpop.permute.xlu0 %2100
    %2102 = vrot.lane.b32.xlu0 %v377, 64
    %v2103 = vpop.permute.xlu0 %2102
    %v2109 = vsel %vm138, %v1749, 0
    %v2112 = vsel %vm138, %v1750, 0
    %v2115 = vsel %vm138, %v1751, 0
    %v2118 = vsel %vm138, %v1752, 0
    %2120 = vmatprep.subr.mxu0 0.0
    %2121 = vmatpush1.msra.mxu0 0.0
    %2122 = vmatprep.subr.mxu0 0.0
    %2123 = vmatpush1.msra.mxu0 0.0
    %2124 = vmatprep.subr.mxu0 0.0
    %2125 = vmatpush1.msra.mxu0 0.0
    %2126 = vmatprep.subr.mxu0 0.0
    %2127 = vmatpush1.msra.mxu0 0.0
    %2128 = vmatprep.subr.mxu0 0.0
    %2129 = vmatpush1.msra.mxu0 0.0
    %2130 = vmatprep.subr.mxu0 0.0
    %2131 = vmatpush1.msra.mxu0 0.0
    %2132 = vmatprep.subr.mxu0 0.0
    %2133 = vmatpush1.msra.mxu0 0.0
    %2134 = vmatprep.subr.mxu0 0.0
    %2135 = vmatpush1.msra.mxu0 0.0
    %2136 = vmatprep.subr.mxu0 0.0
    %2137 = vmatpush1.msra.mxu0 0.0
    %2138 = vmatprep.subr.mxu0 0.0
    %2139 = vmatpush1.msra.mxu0 0.0
    %2140 = vmatprep.subr.mxu0 0.0
    %2141 = vmatpush1.msra.mxu0 0.0
    %2142 = vmatprep.subr.mxu0 0.0
    %2143 = vmatpush1.msra.mxu0 0.0
    %2144 = vmatprep.subr.mxu0 0.0
    %2145 = vmatpush1.msra.mxu0 %v2103
    %2146 = vmatprep.subr.mxu0 0.0
    %2147 = vmatpush1.msra.mxu0 %v2101
    %2148 = vmatprep.subr.mxu0 0.0
    %2149 = vmatpush1.msra.mxu0 %v2099
    %2150 = vmatprep.subr.mxu0 0.0
    %2151 = vmatpush1.msra.mxu0 %v2097
    %2152 = vmatprep.subr.mxu0 0.0
    %2153 = vmatpush2.msra.mxu0 0.0
    %2154 = vmatprep.subr.mxu0 0.0
    %2155 = vmatpush2.msra.mxu0 0.0
    %2156 = vmatprep.subr.mxu0 0.0
    %2157 = vmatpush2.msra.mxu0 0.0
    %2158 = vmatprep.subr.mxu0 0.0
    %2159 = vmatpush2.msra.mxu0 0.0
    %2160 = vmatprep.subr.mxu0 0.0
    %2161 = vmatpush2.msra.mxu0 0.0
    %2162 = vmatprep.subr.mxu0 0.0
    %2163 = vmatpush2.msra.mxu0 0.0
    %2164 = vmatprep.subr.mxu0 0.0
    %2165 = vmatpush2.msra.mxu0 0.0
    %2166 = vmatprep.subr.mxu0 0.0
    %2167 = vmatpush2.msra.mxu0 0.0
    %2168 = vmatprep.subr.mxu0 0.0
    %2169 = vmatpush2.msra.mxu0 0.0
    %2170 = vmatprep.subr.mxu0 0.0
    %2171 = vmatpush2.msra.mxu0 0.0
    %2172 = vmatprep.subr.mxu0 0.0
    %2173 = vmatpush2.msra.mxu0 0.0
    %2174 = vmatprep.subr.mxu0 0.0
    %2175 = vmatpush2.msra.mxu0 0.0
    %2176 = vmatprep.subr.mxu0 0.0
    %2177 = vmatpush2.msra.mxu0 0.0
    %2178 = vmatprep.subr.mxu0 0.0
    %2179 = vmatpush2.msra.mxu0 0.0
    %2180 = vmatprep.subr.mxu0 0.0
    %2181 = vmatpush2.msra.mxu0 0.0
    %2182 = vmatprep.subr.mxu0 0.0
    %2183 = vmatpush2.msra.mxu0 0.0
    %2184 = vmatprep.mubr.f32.mxu0 0.0
    %2185 = vmatmul.mubr.f32.gmra.mxu0 %v2109
    %v2186 = vpop.f32.mrf.mxu0
    %v2187 = vadd.f32 0.0, %v2186
    %v2188 = vpop.f32.mrf.mxu0
    %2189 = vmatprep.mubr.f32.mxu0 0.0
    %2190 = vmatmul.mubr.f32.gmra.mxu0 %v2112
    %v2191 = vpop.f32.mrf.mxu0
    %v2192 = vadd.f32 0.0, %v2191
    %v2193 = vpop.f32.mrf.mxu0
    %2194 = vmatprep.mubr.f32.mxu0 0.0
    %2195 = vmatmul.mubr.f32.gmra.mxu0 %v2115
    %v2196 = vpop.f32.mrf.mxu0
    %v2197 = vadd.f32 0.0, %v2196
    %v2198 = vpop.f32.mrf.mxu0
    %2199 = vmatprep.mubr.f32.mxu0 0.0
    %2200 = vmatmul.mubr.f32.gmra.mxu0 %v2118
    %v2201 = vpop.f32.mrf.mxu0
    %v2202 = vadd.f32 0.0, %v2201
    %v2203 = vpop.f32.mrf.mxu0
    %2204 = vdwg.mxu0
    %2205 = vrot.lane.b32.xlu0 %v382, 64
    %v2206 = vpop.permute.xlu0 %2205
    %2207 = vrot.lane.b32.xlu0 %v387, 64
    %v2208 = vpop.permute.xlu0 %2207
    %2209 = vrot.lane.b32.xlu0 %v392, 64
    %v2210 = vpop.permute.xlu0 %2209
    %2211 = vrot.lane.b32.xlu0 %v397, 64
    %v2212 = vpop.permute.xlu0 %2211
    %v2218 = vsel %vm138, %v1753, 0
    %v2221 = vsel %vm138, %v1754, 0
    %v2224 = vsel %vm138, %v1755, 0
    %v2227 = vsel %vm138, %v1756, 0
    %2229 = vmatprep.subr.mxu0 0.0
    %2230 = vmatpush1.msra.mxu0 0.0
    %2231 = vmatprep.subr.mxu0 0.0
    %2232 = vmatpush1.msra.mxu0 0.0
    %2233 = vmatprep.subr.mxu0 0.0
    %2234 = vmatpush1.msra.mxu0 0.0
    %2235 = vmatprep.subr.mxu0 0.0
    %2236 = vmatpush1.msra.mxu0 0.0
    %2237 = vmatprep.subr.mxu0 0.0
    %2238 = vmatpush1.msra.mxu0 0.0
    %2239 = vmatprep.subr.mxu0 0.0
    %2240 = vmatpush1.msra.mxu0 0.0
    %2241 = vmatprep.subr.mxu0 0.0
    %2242 = vmatpush1.msra.mxu0 0.0
    %2243 = vmatprep.subr.mxu0 0.0
    %2244 = vmatpush1.msra.mxu0 0.0
    %2245 = vmatprep.subr.mxu0 0.0
    %2246 = vmatpush1.msra.mxu0 0.0
    %2247 = vmatprep.subr.mxu0 0.0
    %2248 = vmatpush1.msra.mxu0 0.0
    %2249 = vmatprep.subr.mxu0 0.0
    %2250 = vmatpush1.msra.mxu0 0.0
    %2251 = vmatprep.subr.mxu0 0.0
    %2252 = vmatpush1.msra.mxu0 0.0
    %2253 = vmatprep.subr.mxu0 0.0
    %2254 = vmatpush1.msra.mxu0 %v2212
    %2255 = vmatprep.subr.mxu0 0.0
    %2256 = vmatpush1.msra.mxu0 %v2210
    %2257 = vmatprep.subr.mxu0 0.0
    %2258 = vmatpush1.msra.mxu0 %v2208
    %2259 = vmatprep.subr.mxu0 0.0
    %2260 = vmatpush1.msra.mxu0 %v2206
    %2261 = vmatprep.subr.mxu0 0.0
    %2262 = vmatpush2.msra.mxu0 0.0
    %2263 = vmatprep.subr.mxu0 0.0
    %2264 = vmatpush2.msra.mxu0 0.0
    %2265 = vmatprep.subr.mxu0 0.0
    %2266 = vmatpush2.msra.mxu0 0.0
    %2267 = vmatprep.subr.mxu0 0.0
    %2268 = vmatpush2.msra.mxu0 0.0
    %2269 = vmatprep.subr.mxu0 0.0
    %2270 = vmatpush2.msra.mxu0 0.0
    %2271 = vmatprep.subr.mxu0 0.0
    %2272 = vmatpush2.msra.mxu0 0.0
    %2273 = vmatprep.subr.mxu0 0.0
    %2274 = vmatpush2.msra.mxu0 0.0
    %2275 = vmatprep.subr.mxu0 0.0
    %2276 = vmatpush2.msra.mxu0 0.0
    %2277 = vmatprep.subr.mxu0 0.0
    %2278 = vmatpush2.msra.mxu0 0.0
    %2279 = vmatprep.subr.mxu0 0.0
    %2280 = vmatpush2.msra.mxu0 0.0
    %2281 = vmatprep.subr.mxu0 0.0
    %2282 = vmatpush2.msra.mxu0 0.0
    %2283 = vmatprep.subr.mxu0 0.0
    %2284 = vmatpush2.msra.mxu0 0.0
    %2285 = vmatprep.subr.mxu0 0.0
    %2286 = vmatpush2.msra.mxu0 0.0
    %2287 = vmatprep.subr.mxu0 0.0
    %2288 = vmatpush2.msra.mxu0 0.0
    %2289 = vmatprep.subr.mxu0 0.0
    %2290 = vmatpush2.msra.mxu0 0.0
    %2291 = vmatprep.subr.mxu0 0.0
    %2292 = vmatpush2.msra.mxu0 0.0
    %2293 = vmatprep.mubr.f32.mxu0 0.0
    %2294 = vmatmul.mubr.f32.gmra.mxu0 %v2218
    %v2295 = vpop.f32.mrf.mxu0
    %v2296 = vadd.f32 0.0, %v2295
    %v2297 = vpop.f32.mrf.mxu0
    %2298 = vmatprep.mubr.f32.mxu0 0.0
    %2299 = vmatmul.mubr.f32.gmra.mxu0 %v2221
    %v2300 = vpop.f32.mrf.mxu0
    %v2301 = vadd.f32 0.0, %v2300
    %v2302 = vpop.f32.mrf.mxu0
    %2303 = vmatprep.mubr.f32.mxu0 0.0
    %2304 = vmatmul.mubr.f32.gmra.mxu0 %v2224
    %v2305 = vpop.f32.mrf.mxu0
    %v2306 = vadd.f32 0.0, %v2305
    %v2307 = vpop.f32.mrf.mxu0
    %2308 = vmatprep.mubr.f32.mxu0 0.0
    %2309 = vmatmul.mubr.f32.gmra.mxu0 %v2227
    %v2310 = vpop.f32.mrf.mxu0
    %v2311 = vadd.f32 0.0, %v2310
    %v2312 = vpop.f32.mrf.mxu0
    %2313 = vdwg.mxu0
    %2314 = vrot.lane.b32.xlu0 %v402, 64
    %v2315 = vpop.permute.xlu0 %2314
    %2316 = vrot.lane.b32.xlu0 %v407, 64
    %v2317 = vpop.permute.xlu0 %2316
    %2318 = vrot.lane.b32.xlu0 %v412, 64
    %v2319 = vpop.permute.xlu0 %2318
    %2320 = vrot.lane.b32.xlu0 %v417, 64
    %v2321 = vpop.permute.xlu0 %2320
    %v2327 = vsel %vm138, %v1757, 0
    %v2330 = vsel %vm138, %v1758, 0
    %v2333 = vsel %vm138, %v1759, 0
    %v2336 = vsel %vm138, %v1760, 0
    %2338 = vmatprep.subr.mxu0 0.0
    %2339 = vmatpush1.msra.mxu0 0.0
    %2340 = vmatprep.subr.mxu0 0.0
    %2341 = vmatpush1.msra.mxu0 0.0
    %2342 = vmatprep.subr.mxu0 0.0
    %2343 = vmatpush1.msra.mxu0 0.0
    %2344 = vmatprep.subr.mxu0 0.0
    %2345 = vmatpush1.msra.mxu0 0.0
    %2346 = vmatprep.subr.mxu0 0.0
    %2347 = vmatpush1.msra.mxu0 0.0
    %2348 = vmatprep.subr.mxu0 0.0
    %2349 = vmatpush1.msra.mxu0 0.0
    %2350 = vmatprep.subr.mxu0 0.0
    %2351 = vmatpush1.msra.mxu0 0.0
    %2352 = vmatprep.subr.mxu0 0.0
    %2353 = vmatpush1.msra.mxu0 0.0
    %2354 = vmatprep.subr.mxu0 0.0
    %2355 = vmatpush1.msra.mxu0 0.0
    %2356 = vmatprep.subr.mxu0 0.0
    %2357 = vmatpush1.msra.mxu0 0.0
    %2358 = vmatprep.subr.mxu0 0.0
    %2359 = vmatpush1.msra.mxu0 0.0
    %2360 = vmatprep.subr.mxu0 0.0
    %2361 = vmatpush1.msra.mxu0 0.0
    %2362 = vmatprep.subr.mxu0 0.0
    %2363 = vmatpush1.msra.mxu0 %v2321
    %2364 = vmatprep.subr.mxu0 0.0
    %2365 = vmatpush1.msra.mxu0 %v2319
    %2366 = vmatprep.subr.mxu0 0.0
    %2367 = vmatpush1.msra.mxu0 %v2317
    %2368 = vmatprep.subr.mxu0 0.0
    %2369 = vmatpush1.msra.mxu0 %v2315
    %2370 = vmatprep.subr.mxu0 0.0
    %2371 = vmatpush2.msra.mxu0 0.0
    %2372 = vmatprep.subr.mxu0 0.0
    %2373 = vmatpush2.msra.mxu0 0.0
    %2374 = vmatprep.subr.mxu0 0.0
    %2375 = vmatpush2.msra.mxu0 0.0
    %2376 = vmatprep.subr.mxu0 0.0
    %2377 = vmatpush2.msra.mxu0 0.0
    %2378 = vmatprep.subr.mxu0 0.0
    %2379 = vmatpush2.msra.mxu0 0.0
    %2380 = vmatprep.subr.mxu0 0.0
    %2381 = vmatpush2.msra.mxu0 0.0
    %2382 = vmatprep.subr.mxu0 0.0
    %2383 = vmatpush2.msra.mxu0 0.0
    %2384 = vmatprep.subr.mxu0 0.0
    %2385 = vmatpush2.msra.mxu0 0.0
    %2386 = vmatprep.subr.mxu0 0.0
    %2387 = vmatpush2.msra.mxu0 0.0
    %2388 = vmatprep.subr.mxu0 0.0
    %2389 = vmatpush2.msra.mxu0 0.0
    %2390 = vmatprep.subr.mxu0 0.0
    %2391 = vmatpush2.msra.mxu0 0.0
    %2392 = vmatprep.subr.mxu0 0.0
    %2393 = vmatpush2.msra.mxu0 0.0
    %2394 = vmatprep.subr.mxu0 0.0
    %2395 = vmatpush2.msra.mxu0 0.0
    %2396 = vmatprep.subr.mxu0 0.0
    %2397 = vmatpush2.msra.mxu0 0.0
    %2398 = vmatprep.subr.mxu0 0.0
    %2399 = vmatpush2.msra.mxu0 0.0
    %2400 = vmatprep.subr.mxu0 0.0
    %2401 = vmatpush2.msra.mxu0 0.0
    %2402 = vmatprep.mubr.f32.mxu0 0.0
    %2403 = vmatmul.mubr.f32.gmra.mxu0 %v2327
    %v2404 = vpop.f32.mrf.mxu0
    %v2405 = vadd.f32 0.0, %v2404
    %v2406 = vpop.f32.mrf.mxu0
    %2407 = vmatprep.mubr.f32.mxu0 0.0
    %2408 = vmatmul.mubr.f32.gmra.mxu0 %v2330
    %v2409 = vpop.f32.mrf.mxu0
    %v2410 = vadd.f32 0.0, %v2409
    %v2411 = vpop.f32.mrf.mxu0
    %2412 = vmatprep.mubr.f32.mxu0 0.0
    %2413 = vmatmul.mubr.f32.gmra.mxu0 %v2333
    %v2414 = vpop.f32.mrf.mxu0
    %v2415 = vadd.f32 0.0, %v2414
    %v2416 = vpop.f32.mrf.mxu0
    %2417 = vmatprep.mubr.f32.mxu0 0.0
    %2418 = vmatmul.mubr.f32.gmra.mxu0 %v2336
    %v2419 = vpop.f32.mrf.mxu0
    %v2420 = vadd.f32 0.0, %v2419
    %v2421 = vpop.f32.mrf.mxu0
    %2422 = vdwg.mxu0
    %2423 = vrot.lane.b32.xlu0 %v422, 64
    %v2424 = vpop.permute.xlu0 %2423
    %2425 = vrot.lane.b32.xlu0 %v427, 64
    %v2426 = vpop.permute.xlu0 %2425
    %2427 = vrot.lane.b32.xlu0 %v432, 64
    %v2428 = vpop.permute.xlu0 %2427
    %2429 = vrot.lane.b32.xlu0 %v437, 64
    %v2430 = vpop.permute.xlu0 %2429
    %v2436 = vsel %vm138, %v1761, 0
    %v2439 = vsel %vm138, %v1762, 0
    %v2442 = vsel %vm138, %v1763, 0
    %v2445 = vsel %vm138, %v1764, 0
    %2447 = vmatprep.subr.mxu0 0.0
    %2448 = vmatpush1.msra.mxu0 0.0
    %2449 = vmatprep.subr.mxu0 0.0
    %2450 = vmatpush1.msra.mxu0 0.0
    %2451 = vmatprep.subr.mxu0 0.0
    %2452 = vmatpush1.msra.mxu0 0.0
    %2453 = vmatprep.subr.mxu0 0.0
    %2454 = vmatpush1.msra.mxu0 0.0
    %2455 = vmatprep.subr.mxu0 0.0
    %2456 = vmatpush1.msra.mxu0 0.0
    %2457 = vmatprep.subr.mxu0 0.0
    %2458 = vmatpush1.msra.mxu0 0.0
    %2459 = vmatprep.subr.mxu0 0.0
    %2460 = vmatpush1.msra.mxu0 0.0
    %2461 = vmatprep.subr.mxu0 0.0
    %2462 = vmatpush1.msra.mxu0 0.0
    %2463 = vmatprep.subr.mxu0 0.0
    %2464 = vmatpush1.msra.mxu0 0.0
    %2465 = vmatprep.subr.mxu0 0.0
    %2466 = vmatpush1.msra.mxu0 0.0
    %2467 = vmatprep.subr.mxu0 0.0
    %2468 = vmatpush1.msra.mxu0 0.0
    %2469 = vmatprep.subr.mxu0 0.0
    %2470 = vmatpush1.msra.mxu0 0.0
    %2471 = vmatprep.subr.mxu0 0.0
    %2472 = vmatpush1.msra.mxu0 %v2430
    %2473 = vmatprep.subr.mxu0 0.0
    %2474 = vmatpush1.msra.mxu0 %v2428
    %2475 = vmatprep.subr.mxu0 0.0
    %2476 = vmatpush1.msra.mxu0 %v2426
    %2477 = vmatprep.subr.mxu0 0.0
    %2478 = vmatpush1.msra.mxu0 %v2424
    %2479 = vmatprep.subr.mxu0 0.0
    %2480 = vmatpush2.msra.mxu0 0.0
    %2481 = vmatprep.subr.mxu0 0.0
    %2482 = vmatpush2.msra.mxu0 0.0
    %2483 = vmatprep.subr.mxu0 0.0
    %2484 = vmatpush2.msra.mxu0 0.0
    %2485 = vmatprep.subr.mxu0 0.0
    %2486 = vmatpush2.msra.mxu0 0.0
    %2487 = vmatprep.subr.mxu0 0.0
    %2488 = vmatpush2.msra.mxu0 0.0
    %2489 = vmatprep.subr.mxu0 0.0
    %2490 = vmatpush2.msra.mxu0 0.0
    %2491 = vmatprep.subr.mxu0 0.0
    %2492 = vmatpush2.msra.mxu0 0.0
    %2493 = vmatprep.subr.mxu0 0.0
    %2494 = vmatpush2.msra.mxu0 0.0
    %2495 = vmatprep.subr.mxu0 0.0
    %2496 = vmatpush2.msra.mxu0 0.0
    %2497 = vmatprep.subr.mxu0 0.0
    %2498 = vmatpush2.msra.mxu0 0.0
    %2499 = vmatprep.subr.mxu0 0.0
    %2500 = vmatpush2.msra.mxu0 0.0
    %2501 = vmatprep.subr.mxu0 0.0
    %2502 = vmatpush2.msra.mxu0 0.0
    %2503 = vmatprep.subr.mxu0 0.0
    %2504 = vmatpush2.msra.mxu0 0.0
    %2505 = vmatprep.subr.mxu0 0.0
    %2506 = vmatpush2.msra.mxu0 0.0
    %2507 = vmatprep.subr.mxu0 0.0
    %2508 = vmatpush2.msra.mxu0 0.0
    %2509 = vmatprep.subr.mxu0 0.0
    %2510 = vmatpush2.msra.mxu0 0.0
    %2511 = vmatprep.mubr.f32.mxu0 0.0
    %2512 = vmatmul.mubr.f32.gmra.mxu0 %v2436
    %v2513 = vpop.f32.mrf.mxu0
    %v2514 = vadd.f32 0.0, %v2513
    %v2515 = vpop.f32.mrf.mxu0
    %2516 = vmatprep.mubr.f32.mxu0 0.0
    %2517 = vmatmul.mubr.f32.gmra.mxu0 %v2439
    %v2518 = vpop.f32.mrf.mxu0
    %v2519 = vadd.f32 0.0, %v2518
    %v2520 = vpop.f32.mrf.mxu0
    %2521 = vmatprep.mubr.f32.mxu0 0.0
    %2522 = vmatmul.mubr.f32.gmra.mxu0 %v2442
    %v2523 = vpop.f32.mrf.mxu0
    %v2524 = vadd.f32 0.0, %v2523
    %v2525 = vpop.f32.mrf.mxu0
    %2526 = vmatprep.mubr.f32.mxu0 0.0
    %2527 = vmatmul.mubr.f32.gmra.mxu0 %v2445
    %v2528 = vpop.f32.mrf.mxu0
    %v2529 = vadd.f32 0.0, %v2528
    %v2530 = vpop.f32.mrf.mxu0
    %2531 = vdwg.mxu0
    %2532 = vrot.lane.b32.xlu0 %v442, 64
    %v2533 = vpop.permute.xlu0 %2532
    %2534 = vrot.lane.b32.xlu0 %v447, 64
    %v2535 = vpop.permute.xlu0 %2534
    %2536 = vrot.lane.b32.xlu0 %v452, 64
    %v2537 = vpop.permute.xlu0 %2536
    %2538 = vrot.lane.b32.xlu0 %v457, 64
    %v2539 = vpop.permute.xlu0 %2538
    %v2545 = vsel %vm138, %v1765, 0
    %v2548 = vsel %vm138, %v1766, 0
    %v2551 = vsel %vm138, %v1767, 0
    %v2554 = vsel %vm138, %v1768, 0
    %2556 = vmatprep.subr.mxu0 0.0
    %2557 = vmatpush1.msra.mxu0 0.0
    %2558 = vmatprep.subr.mxu0 0.0
    %2559 = vmatpush1.msra.mxu0 0.0
    %2560 = vmatprep.subr.mxu0 0.0
    %2561 = vmatpush1.msra.mxu0 0.0
    %2562 = vmatprep.subr.mxu0 0.0
    %2563 = vmatpush1.msra.mxu0 0.0
    %2564 = vmatprep.subr.mxu0 0.0
    %2565 = vmatpush1.msra.mxu0 0.0
    %2566 = vmatprep.subr.mxu0 0.0
    %2567 = vmatpush1.msra.mxu0 0.0
    %2568 = vmatprep.subr.mxu0 0.0
    %2569 = vmatpush1.msra.mxu0 0.0
    %2570 = vmatprep.subr.mxu0 0.0
    %2571 = vmatpush1.msra.mxu0 0.0
    %2572 = vmatprep.subr.mxu0 0.0
    %2573 = vmatpush1.msra.mxu0 0.0
    %2574 = vmatprep.subr.mxu0 0.0
    %2575 = vmatpush1.msra.mxu0 0.0
    %2576 = vmatprep.subr.mxu0 0.0
    %2577 = vmatpush1.msra.mxu0 0.0
    %2578 = vmatprep.subr.mxu0 0.0
    %2579 = vmatpush1.msra.mxu0 0.0
    %2580 = vmatprep.subr.mxu0 0.0
    %2581 = vmatpush1.msra.mxu0 %v2539
    %2582 = vmatprep.subr.mxu0 0.0
    %2583 = vmatpush1.msra.mxu0 %v2537
    %2584 = vmatprep.subr.mxu0 0.0
    %2585 = vmatpush1.msra.mxu0 %v2535
    %2586 = vmatprep.subr.mxu0 0.0
    %2587 = vmatpush1.msra.mxu0 %v2533
    %2588 = vmatprep.subr.mxu0 0.0
    %2589 = vmatpush2.msra.mxu0 0.0
    %2590 = vmatprep.subr.mxu0 0.0
    %2591 = vmatpush2.msra.mxu0 0.0
    %2592 = vmatprep.subr.mxu0 0.0
    %2593 = vmatpush2.msra.mxu0 0.0
    %2594 = vmatprep.subr.mxu0 0.0
    %2595 = vmatpush2.msra.mxu0 0.0
    %2596 = vmatprep.subr.mxu0 0.0
    %2597 = vmatpush2.msra.mxu0 0.0
    %2598 = vmatprep.subr.mxu0 0.0
    %2599 = vmatpush2.msra.mxu0 0.0
    %2600 = vmatprep.subr.mxu0 0.0
    %2601 = vmatpush2.msra.mxu0 0.0
    %2602 = vmatprep.subr.mxu0 0.0
    %2603 = vmatpush2.msra.mxu0 0.0
    %2604 = vmatprep.subr.mxu0 0.0
    %2605 = vmatpush2.msra.mxu0 0.0
    %2606 = vmatprep.subr.mxu0 0.0
    %2607 = vmatpush2.msra.mxu0 0.0
    %2608 = vmatprep.subr.mxu0 0.0
    %2609 = vmatpush2.msra.mxu0 0.0
    %2610 = vmatprep.subr.mxu0 0.0
    %2611 = vmatpush2.msra.mxu0 0.0
    %2612 = vmatprep.subr.mxu0 0.0
    %2613 = vmatpush2.msra.mxu0 0.0
    %2614 = vmatprep.subr.mxu0 0.0
    %2615 = vmatpush2.msra.mxu0 0.0
    %2616 = vmatprep.subr.mxu0 0.0
    %2617 = vmatpush2.msra.mxu0 0.0
    %2618 = vmatprep.subr.mxu0 0.0
    %2619 = vmatpush2.msra.mxu0 0.0
    %2620 = vmatprep.mubr.f32.mxu0 0.0
    %2621 = vmatmul.mubr.f32.gmra.mxu0 %v2545
    %v2622 = vpop.f32.mrf.mxu0
    %v2623 = vadd.f32 0.0, %v2622
    %v2624 = vpop.f32.mrf.mxu0
    %2625 = vmatprep.mubr.f32.mxu0 0.0
    %2626 = vmatmul.mubr.f32.gmra.mxu0 %v2548
    %v2627 = vpop.f32.mrf.mxu0
    %v2628 = vadd.f32 0.0, %v2627
    %v2629 = vpop.f32.mrf.mxu0
    %2630 = vmatprep.mubr.f32.mxu0 0.0
    %2631 = vmatmul.mubr.f32.gmra.mxu0 %v2551
    %v2632 = vpop.f32.mrf.mxu0
    %v2633 = vadd.f32 0.0, %v2632
    %v2634 = vpop.f32.mrf.mxu0
    %2635 = vmatprep.mubr.f32.mxu0 0.0
    %2636 = vmatmul.mubr.f32.gmra.mxu0 %v2554
    %v2637 = vpop.f32.mrf.mxu0
    %v2638 = vadd.f32 0.0, %v2637
    %v2639 = vpop.f32.mrf.mxu0
    %2640 = vdwg.mxu0
    %s2641 = scalar_lea.vmem [#allocation7], 32
    %v2642 = vld [vmem:[%s2641] sm:$0xff]
    %v2643 = vld [vmem:[%s2641 + $0x8] sm:$0xff]
    %v2644 = vld [vmem:[%s2641 + $0x10] sm:$0xff]
    %v2645 = vld [vmem:[%s2641 + $0x18] sm:$0xff]
    %2646 = vrot.lane.b32.xlu0 %v302, 120
    %v2647 = vpop.permute.xlu0 %2646
    %2648 = vrot.lane.b32.xlu0 %v307, 120
    %v2649 = vpop.permute.xlu0 %2648
    %2650 = vrot.lane.b32.xlu0 %v312, 120
    %v2651 = vpop.permute.xlu0 %2650
    %2652 = vrot.lane.b32.xlu0 %v317, 120
    %v2653 = vpop.permute.xlu0 %2652
    %2654 = vrot.lane.b32.xlu0 %v302, 88
    %v2655 = vpop.permute.xlu0 %2654
    %2656 = vrot.lane.b32.xlu0 %v307, 88
    %v2657 = vpop.permute.xlu0 %2656
    %2658 = vrot.lane.b32.xlu0 %v312, 88
    %v2659 = vpop.permute.xlu0 %2658
    %2660 = vrot.lane.b32.xlu0 %v317, 88
    %v2661 = vpop.permute.xlu0 %2660
    %v2662 = vsel %vm492, %v2647, 0
    %v2664 = vsel %vm492, %v2649, 0
    %v2666 = vsel %vm492, %v2651, 0
    %v2668 = vsel %vm492, %v2653, 0
    %v2670 = vsel %vm492, %v2655, 0
    %v2672 = vsel %vm492, %v2657, 0
    %v2674 = vsel %vm492, %v2659, 0
    %v2676 = vsel %vm492, %v2661, 0
    %2678 = vmatprep.subr.mxu0 0.0
    %2679 = vmatpush1.xpose.msra.mxu0 0.0
    %2680 = vmatprep.subr.mxu0 0.0
    %2681 = vmatpush1.xpose.msra.mxu0 0.0
    %2682 = vmatprep.subr.mxu0 0.0
    %2683 = vmatpush1.xpose.msra.mxu0 0.0
    %2684 = vmatprep.subr.mxu0 0.0
    %2685 = vmatpush1.xpose.msra.mxu0 0.0
    %2686 = vmatprep.subr.mxu0 0.0
    %2687 = vmatpush1.xpose.msra.mxu0 0.0
    %2688 = vmatprep.subr.mxu0 0.0
    %2689 = vmatpush1.xpose.msra.mxu0 0.0
    %2690 = vmatprep.subr.mxu0 0.0
    %2691 = vmatpush1.xpose.msra.mxu0 0.0
    %2692 = vmatprep.subr.mxu0 0.0
    %2693 = vmatpush1.xpose.msra.mxu0 0.0
    %2694 = vmatprep.subr.mxu0 0.0
    %2695 = vmatpush1.xpose.msra.mxu0 0.0
    %2696 = vmatprep.subr.mxu0 0.0
    %2697 = vmatpush1.xpose.msra.mxu0 0.0
    %2698 = vmatprep.subr.mxu0 0.0
    %2699 = vmatpush1.xpose.msra.mxu0 0.0
    %2700 = vmatprep.subr.mxu0 0.0
    %2701 = vmatpush1.xpose.msra.mxu0 0.0
    %2702 = vmatprep.subr.mxu0 0.0
    %2703 = vmatpush1.xpose.msra.mxu0 %v2676
    %2704 = vmatprep.subr.mxu0 0.0
    %2705 = vmatpush1.xpose.msra.mxu0 %v2674
    %2706 = vmatprep.subr.mxu0 0.0
    %2707 = vmatpush1.xpose.msra.mxu0 %v2672
    %2708 = vmatprep.subr.mxu0 0.0
    %2709 = vmatpush1.xpose.msra.mxu0 %v2670
    %2710 = vmatprep.subr.mxu0 0.0
    %2711 = vmatpush2.xpose.msra.mxu0 0.0
    %2712 = vmatprep.subr.mxu0 0.0
    %2713 = vmatpush2.xpose.msra.mxu0 0.0
    %2714 = vmatprep.subr.mxu0 0.0
    %2715 = vmatpush2.xpose.msra.mxu0 0.0
    %2716 = vmatprep.subr.mxu0 0.0
    %2717 = vmatpush2.xpose.msra.mxu0 0.0
    %2718 = vmatprep.subr.mxu0 0.0
    %2719 = vmatpush2.xpose.msra.mxu0 0.0
    %2720 = vmatprep.subr.mxu0 0.0
    %2721 = vmatpush2.xpose.msra.mxu0 0.0
    %2722 = vmatprep.subr.mxu0 0.0
    %2723 = vmatpush2.xpose.msra.mxu0 0.0
    %2724 = vmatprep.subr.mxu0 0.0
    %2725 = vmatpush2.xpose.msra.mxu0 0.0
    %2726 = vmatprep.subr.mxu0 0.0
    %2727 = vmatpush2.xpose.msra.mxu0 0.0
    %2728 = vmatprep.subr.mxu0 0.0
    %2729 = vmatpush2.xpose.msra.mxu0 0.0
    %2730 = vmatprep.subr.mxu0 0.0
    %2731 = vmatpush2.xpose.msra.mxu0 0.0
    %2732 = vmatprep.subr.mxu0 0.0
    %2733 = vmatpush2.xpose.msra.mxu0 0.0
    %2734 = vmatprep.subr.mxu0 0.0
    %2735 = vmatpush2.xpose.msra.mxu0 0.0
    %2736 = vmatprep.subr.mxu0 0.0
    %2737 = vmatpush2.xpose.msra.mxu0 0.0
    %2738 = vmatprep.subr.mxu0 0.0
    %2739 = vmatpush2.xpose.msra.mxu0 0.0
    %2740 = vmatprep.subr.mxu0 0.0
    %2741 = vmatpush2.xpose.msra.mxu0 0.0
    %2742 = vmatprep.mubr.f32.mxu0 0.0
    %2743 = vmatmul.mubr.f32.gmra.mxu0 %v2662
    %v2744 = vpop.f32.mrf.mxu0
    %v2745 = vadd.f32 %v2642, %v2744
    %v2746 = vpop.f32.mrf.mxu0
    %2747 = vmatprep.mubr.f32.mxu0 0.0
    %2748 = vmatmul.mubr.f32.gmra.mxu0 %v2664
    %v2749 = vpop.f32.mrf.mxu0
    %v2750 = vadd.f32 %v2643, %v2749
    %v2751 = vpop.f32.mrf.mxu0
    %2752 = vmatprep.mubr.f32.mxu0 0.0
    %2753 = vmatmul.mubr.f32.gmra.mxu0 %v2666
    %v2754 = vpop.f32.mrf.mxu0
    %v2755 = vadd.f32 %v2644, %v2754
    %v2756 = vpop.f32.mrf.mxu0
    %2757 = vmatprep.mubr.f32.mxu0 0.0
    %2758 = vmatmul.mubr.f32.gmra.mxu0 %v2668
    %v2759 = vpop.f32.mrf.mxu0
    %v2760 = vadd.f32 %v2645, %v2759
    %v2761 = vpop.f32.mrf.mxu0
    %2762 = vdwg.mxu0
    %2763 = vrot.lane.b32.xlu0 %v322, 120
    %v2764 = vpop.permute.xlu0 %2763
    %2765 = vrot.lane.b32.xlu0 %v327, 120
    %v2766 = vpop.permute.xlu0 %2765
    %2767 = vrot.lane.b32.xlu0 %v332, 120
    %v2768 = vpop.permute.xlu0 %2767
    %2769 = vrot.lane.b32.xlu0 %v337, 120
    %v2770 = vpop.permute.xlu0 %2769
    %2771 = vrot.lane.b32.xlu0 %v322, 88
    %v2772 = vpop.permute.xlu0 %2771
    %2773 = vrot.lane.b32.xlu0 %v327, 88
    %v2774 = vpop.permute.xlu0 %2773
    %2775 = vrot.lane.b32.xlu0 %v332, 88
    %v2776 = vpop.permute.xlu0 %2775
    %2777 = vrot.lane.b32.xlu0 %v337, 88
    %v2778 = vpop.permute.xlu0 %2777
    %v2779 = vsel %vm492, %v2764, 0
    %v2781 = vsel %vm492, %v2766, 0
    %v2783 = vsel %vm492, %v2768, 0
    %v2785 = vsel %vm492, %v2770, 0
    %v2787 = vsel %vm492, %v2772, 0
    %v2789 = vsel %vm492, %v2774, 0
    %v2791 = vsel %vm492, %v2776, 0
    %v2793 = vsel %vm492, %v2778, 0
    %2795 = vmatprep.subr.mxu0 0.0
    %2796 = vmatpush1.xpose.msra.mxu0 0.0
    %2797 = vmatprep.subr.mxu0 0.0
    %2798 = vmatpush1.xpose.msra.mxu0 0.0
    %2799 = vmatprep.subr.mxu0 0.0
    %2800 = vmatpush1.xpose.msra.mxu0 0.0
    %2801 = vmatprep.subr.mxu0 0.0
    %2802 = vmatpush1.xpose.msra.mxu0 0.0
    %2803 = vmatprep.subr.mxu0 0.0
    %2804 = vmatpush1.xpose.msra.mxu0 0.0
    %2805 = vmatprep.subr.mxu0 0.0
    %2806 = vmatpush1.xpose.msra.mxu0 0.0
    %2807 = vmatprep.subr.mxu0 0.0
    %2808 = vmatpush1.xpose.msra.mxu0 0.0
    %2809 = vmatprep.subr.mxu0 0.0
    %2810 = vmatpush1.xpose.msra.mxu0 0.0
    %2811 = vmatprep.subr.mxu0 0.0
    %2812 = vmatpush1.xpose.msra.mxu0 0.0
    %2813 = vmatprep.subr.mxu0 0.0
    %2814 = vmatpush1.xpose.msra.mxu0 0.0
    %2815 = vmatprep.subr.mxu0 0.0
    %2816 = vmatpush1.xpose.msra.mxu0 0.0
    %2817 = vmatprep.subr.mxu0 0.0
    %2818 = vmatpush1.xpose.msra.mxu0 0.0
    %2819 = vmatprep.subr.mxu0 0.0
    %2820 = vmatpush1.xpose.msra.mxu0 %v2793
    %2821 = vmatprep.subr.mxu0 0.0
    %2822 = vmatpush1.xpose.msra.mxu0 %v2791
    %2823 = vmatprep.subr.mxu0 0.0
    %2824 = vmatpush1.xpose.msra.mxu0 %v2789
    %2825 = vmatprep.subr.mxu0 0.0
    %2826 = vmatpush1.xpose.msra.mxu0 %v2787
    %2827 = vmatprep.subr.mxu0 0.0
    %2828 = vmatpush2.xpose.msra.mxu0 0.0
    %2829 = vmatprep.subr.mxu0 0.0
    %2830 = vmatpush2.xpose.msra.mxu0 0.0
    %2831 = vmatprep.subr.mxu0 0.0
    %2832 = vmatpush2.xpose.msra.mxu0 0.0
    %2833 = vmatprep.subr.mxu0 0.0
    %2834 = vmatpush2.xpose.msra.mxu0 0.0
    %2835 = vmatprep.subr.mxu0 0.0
    %2836 = vmatpush2.xpose.msra.mxu0 0.0
    %2837 = vmatprep.subr.mxu0 0.0
    %2838 = vmatpush2.xpose.msra.mxu0 0.0
    %2839 = vmatprep.subr.mxu0 0.0
    %2840 = vmatpush2.xpose.msra.mxu0 0.0
    %2841 = vmatprep.subr.mxu0 0.0
    %2842 = vmatpush2.xpose.msra.mxu0 0.0
    %2843 = vmatprep.subr.mxu0 0.0
    %2844 = vmatpush2.xpose.msra.mxu0 0.0
    %2845 = vmatprep.subr.mxu0 0.0
    %2846 = vmatpush2.xpose.msra.mxu0 0.0
    %2847 = vmatprep.subr.mxu0 0.0
    %2848 = vmatpush2.xpose.msra.mxu0 0.0
    %2849 = vmatprep.subr.mxu0 0.0
    %2850 = vmatpush2.xpose.msra.mxu0 0.0
    %2851 = vmatprep.subr.mxu0 0.0
    %2852 = vmatpush2.xpose.msra.mxu0 0.0
    %2853 = vmatprep.subr.mxu0 0.0
    %2854 = vmatpush2.xpose.msra.mxu0 0.0
    %2855 = vmatprep.subr.mxu0 0.0
    %2856 = vmatpush2.xpose.msra.mxu0 0.0
    %2857 = vmatprep.subr.mxu0 0.0
    %2858 = vmatpush2.xpose.msra.mxu0 0.0
    %2859 = vmatprep.mubr.f32.mxu0 0.0
    %2860 = vmatmul.mubr.f32.gmra.mxu0 %v2779
    %v2861 = vpop.f32.mrf.mxu0
    %v2862 = vadd.f32 %v2642, %v2861
    %v2863 = vpop.f32.mrf.mxu0
    %2864 = vmatprep.mubr.f32.mxu0 0.0
    %2865 = vmatmul.mubr.f32.gmra.mxu0 %v2781
    %v2866 = vpop.f32.mrf.mxu0
    %v2867 = vadd.f32 %v2643, %v2866
    %v2868 = vpop.f32.mrf.mxu0
    %2869 = vmatprep.mubr.f32.mxu0 0.0
    %2870 = vmatmul.mubr.f32.gmra.mxu0 %v2783
    %v2871 = vpop.f32.mrf.mxu0
    %v2872 = vadd.f32 %v2644, %v2871
    %v2873 = vpop.f32.mrf.mxu0
    %2874 = vmatprep.mubr.f32.mxu0 0.0
    %2875 = vmatmul.mubr.f32.gmra.mxu0 %v2785
    %v2876 = vpop.f32.mrf.mxu0
    %v2877 = vadd.f32 %v2645, %v2876
    %v2878 = vpop.f32.mrf.mxu0
    %2879 = vdwg.mxu0
    %2880 = vrot.lane.b32.xlu0 %v342, 120
    %v2881 = vpop.permute.xlu0 %2880
    %2882 = vrot.lane.b32.xlu0 %v347, 120
    %v2883 = vpop.permute.xlu0 %2882
    %2884 = vrot.lane.b32.xlu0 %v352, 120
    %v2885 = vpop.permute.xlu0 %2884
    %2886 = vrot.lane.b32.xlu0 %v357, 120
    %v2887 = vpop.permute.xlu0 %2886
    %2888 = vrot.lane.b32.xlu0 %v342, 88
    %v2889 = vpop.permute.xlu0 %2888
    %2890 = vrot.lane.b32.xlu0 %v347, 88
    %v2891 = vpop.permute.xlu0 %2890
    %2892 = vrot.lane.b32.xlu0 %v352, 88
    %v2893 = vpop.permute.xlu0 %2892
    %2894 = vrot.lane.b32.xlu0 %v357, 88
    %v2895 = vpop.permute.xlu0 %2894
    %v2896 = vsel %vm492, %v2881, 0
    %v2898 = vsel %vm492, %v2883, 0
    %v2900 = vsel %vm492, %v2885, 0
    %v2902 = vsel %vm492, %v2887, 0
    %v2904 = vsel %vm492, %v2889, 0
    %v2906 = vsel %vm492, %v2891, 0
    %v2908 = vsel %vm492, %v2893, 0
    %v2910 = vsel %vm492, %v2895, 0
    %2912 = vmatprep.subr.mxu0 0.0
    %2913 = vmatpush1.xpose.msra.mxu0 0.0
    %2914 = vmatprep.subr.mxu0 0.0
    %2915 = vmatpush1.xpose.msra.mxu0 0.0
    %2916 = vmatprep.subr.mxu0 0.0
    %2917 = vmatpush1.xpose.msra.mxu0 0.0
    %2918 = vmatprep.subr.mxu0 0.0
    %2919 = vmatpush1.xpose.msra.mxu0 0.0
    %2920 = vmatprep.subr.mxu0 0.0
    %2921 = vmatpush1.xpose.msra.mxu0 0.0
    %2922 = vmatprep.subr.mxu0 0.0
    %2923 = vmatpush1.xpose.msra.mxu0 0.0
    %2924 = vmatprep.subr.mxu0 0.0
    %2925 = vmatpush1.xpose.msra.mxu0 0.0
    %2926 = vmatprep.subr.mxu0 0.0
    %2927 = vmatpush1.xpose.msra.mxu0 0.0
    %2928 = vmatprep.subr.mxu0 0.0
    %2929 = vmatpush1.xpose.msra.mxu0 0.0
    %2930 = vmatprep.subr.mxu0 0.0
    %2931 = vmatpush1.xpose.msra.mxu0 0.0
    %2932 = vmatprep.subr.mxu0 0.0
    %2933 = vmatpush1.xpose.msra.mxu0 0.0
    %2934 = vmatprep.subr.mxu0 0.0
    %2935 = vmatpush1.xpose.msra.mxu0 0.0
    %2936 = vmatprep.subr.mxu0 0.0
    %2937 = vmatpush1.xpose.msra.mxu0 %v2910
    %2938 = vmatprep.subr.mxu0 0.0
    %2939 = vmatpush1.xpose.msra.mxu0 %v2908
    %2940 = vmatprep.subr.mxu0 0.0
    %2941 = vmatpush1.xpose.msra.mxu0 %v2906
    %2942 = vmatprep.subr.mxu0 0.0
    %2943 = vmatpush1.xpose.msra.mxu0 %v2904
    %2944 = vmatprep.subr.mxu0 0.0
    %2945 = vmatpush2.xpose.msra.mxu0 0.0
    %2946 = vmatprep.subr.mxu0 0.0
    %2947 = vmatpush2.xpose.msra.mxu0 0.0
    %2948 = vmatprep.subr.mxu0 0.0
    %2949 = vmatpush2.xpose.msra.mxu0 0.0
    %2950 = vmatprep.subr.mxu0 0.0
    %2951 = vmatpush2.xpose.msra.mxu0 0.0
    %2952 = vmatprep.subr.mxu0 0.0
    %2953 = vmatpush2.xpose.msra.mxu0 0.0
    %2954 = vmatprep.subr.mxu0 0.0
    %2955 = vmatpush2.xpose.msra.mxu0 0.0
    %2956 = vmatprep.subr.mxu0 0.0
    %2957 = vmatpush2.xpose.msra.mxu0 0.0
    %2958 = vmatprep.subr.mxu0 0.0
    %2959 = vmatpush2.xpose.msra.mxu0 0.0
    %2960 = vmatprep.subr.mxu0 0.0
    %2961 = vmatpush2.xpose.msra.mxu0 0.0
    %2962 = vmatprep.subr.mxu0 0.0
    %2963 = vmatpush2.xpose.msra.mxu0 0.0
    %2964 = vmatprep.subr.mxu0 0.0
    %2965 = vmatpush2.xpose.msra.mxu0 0.0
    %2966 = vmatprep.subr.mxu0 0.0
    %2967 = vmatpush2.xpose.msra.mxu0 0.0
    %2968 = vmatprep.subr.mxu0 0.0
    %2969 = vmatpush2.xpose.msra.mxu0 0.0
    %2970 = vmatprep.subr.mxu0 0.0
    %2971 = vmatpush2.xpose.msra.mxu0 0.0
    %2972 = vmatprep.subr.mxu0 0.0
    %2973 = vmatpush2.xpose.msra.mxu0 0.0
    %2974 = vmatprep.subr.mxu0 0.0
    %2975 = vmatpush2.xpose.msra.mxu0 0.0
    %2976 = vmatprep.mubr.f32.mxu0 0.0
    %2977 = vmatmul.mubr.f32.gmra.mxu0 %v2896
    %v2978 = vpop.f32.mrf.mxu0
    %v2979 = vadd.f32 %v2642, %v2978
    %v2980 = vpop.f32.mrf.mxu0
    %2981 = vmatprep.mubr.f32.mxu0 0.0
    %2982 = vmatmul.mubr.f32.gmra.mxu0 %v2898
    %v2983 = vpop.f32.mrf.mxu0
    %v2984 = vadd.f32 %v2643, %v2983
    %v2985 = vpop.f32.mrf.mxu0
    %2986 = vmatprep.mubr.f32.mxu0 0.0
    %2987 = vmatmul.mubr.f32.gmra.mxu0 %v2900
    %v2988 = vpop.f32.mrf.mxu0
    %v2989 = vadd.f32 %v2644, %v2988
    %v2990 = vpop.f32.mrf.mxu0
    %2991 = vmatprep.mubr.f32.mxu0 0.0
    %2992 = vmatmul.mubr.f32.gmra.mxu0 %v2902
    %v2993 = vpop.f32.mrf.mxu0
    %v2994 = vadd.f32 %v2645, %v2993
    %v2995 = vpop.f32.mrf.mxu0
    %2996 = vdwg.mxu0
    %2997 = vrot.lane.b32.xlu0 %v362, 120
    %v2998 = vpop.permute.xlu0 %2997
    %2999 = vrot.lane.b32.xlu0 %v367, 120
    %v3000 = vpop.permute.xlu0 %2999
    %3001 = vrot.lane.b32.xlu0 %v372, 120
    %v3002 = vpop.permute.xlu0 %3001
    %3003 = vrot.lane.b32.xlu0 %v377, 120
    %v3004 = vpop.permute.xlu0 %3003
    %3005 = vrot.lane.b32.xlu0 %v362, 88
    %v3006 = vpop.permute.xlu0 %3005
    %3007 = vrot.lane.b32.xlu0 %v367, 88
    %v3008 = vpop.permute.xlu0 %3007
    %3009 = vrot.lane.b32.xlu0 %v372, 88
    %v3010 = vpop.permute.xlu0 %3009
    %3011 = vrot.lane.b32.xlu0 %v377, 88
    %v3012 = vpop.permute.xlu0 %3011
    %v3013 = vsel %vm492, %v2998, 0
    %v3015 = vsel %vm492, %v3000, 0
    %v3017 = vsel %vm492, %v3002, 0
    %v3019 = vsel %vm492, %v3004, 0
    %v3021 = vsel %vm492, %v3006, 0
    %v3023 = vsel %vm492, %v3008, 0
    %v3025 = vsel %vm492, %v3010, 0
    %v3027 = vsel %vm492, %v3012, 0
    %3029 = vmatprep.subr.mxu0 0.0
    %3030 = vmatpush1.xpose.msra.mxu0 0.0
    %3031 = vmatprep.subr.mxu0 0.0
    %3032 = vmatpush1.xpose.msra.mxu0 0.0
    %3033 = vmatprep.subr.mxu0 0.0
    %3034 = vmatpush1.xpose.msra.mxu0 0.0
    %3035 = vmatprep.subr.mxu0 0.0
    %3036 = vmatpush1.xpose.msra.mxu0 0.0
    %3037 = vmatprep.subr.mxu0 0.0
    %3038 = vmatpush1.xpose.msra.mxu0 0.0
    %3039 = vmatprep.subr.mxu0 0.0
    %3040 = vmatpush1.xpose.msra.mxu0 0.0
    %3041 = vmatprep.subr.mxu0 0.0
    %3042 = vmatpush1.xpose.msra.mxu0 0.0
    %3043 = vmatprep.subr.mxu0 0.0
    %3044 = vmatpush1.xpose.msra.mxu0 0.0
    %3045 = vmatprep.subr.mxu0 0.0
    %3046 = vmatpush1.xpose.msra.mxu0 0.0
    %3047 = vmatprep.subr.mxu0 0.0
    %3048 = vmatpush1.xpose.msra.mxu0 0.0
    %3049 = vmatprep.subr.mxu0 0.0
    %3050 = vmatpush1.xpose.msra.mxu0 0.0
    %3051 = vmatprep.subr.mxu0 0.0
    %3052 = vmatpush1.xpose.msra.mxu0 0.0
    %3053 = vmatprep.subr.mxu0 0.0
    %3054 = vmatpush1.xpose.msra.mxu0 %v3027
    %3055 = vmatprep.subr.mxu0 0.0
    %3056 = vmatpush1.xpose.msra.mxu0 %v3025
    %3057 = vmatprep.subr.mxu0 0.0
    %3058 = vmatpush1.xpose.msra.mxu0 %v3023
    %3059 = vmatprep.subr.mxu0 0.0
    %3060 = vmatpush1.xpose.msra.mxu0 %v3021
    %3061 = vmatprep.subr.mxu0 0.0
    %3062 = vmatpush2.xpose.msra.mxu0 0.0
    %3063 = vmatprep.subr.mxu0 0.0
    %3064 = vmatpush2.xpose.msra.mxu0 0.0
    %3065 = vmatprep.subr.mxu0 0.0
    %3066 = vmatpush2.xpose.msra.mxu0 0.0
    %3067 = vmatprep.subr.mxu0 0.0
    %3068 = vmatpush2.xpose.msra.mxu0 0.0
    %3069 = vmatprep.subr.mxu0 0.0
    %3070 = vmatpush2.xpose.msra.mxu0 0.0
    %3071 = vmatprep.subr.mxu0 0.0
    %3072 = vmatpush2.xpose.msra.mxu0 0.0
    %3073 = vmatprep.subr.mxu0 0.0
    %3074 = vmatpush2.xpose.msra.mxu0 0.0
    %3075 = vmatprep.subr.mxu0 0.0
    %3076 = vmatpush2.xpose.msra.mxu0 0.0
    %3077 = vmatprep.subr.mxu0 0.0
    %3078 = vmatpush2.xpose.msra.mxu0 0.0
    %3079 = vmatprep.subr.mxu0 0.0
    %3080 = vmatpush2.xpose.msra.mxu0 0.0
    %3081 = vmatprep.subr.mxu0 0.0
    %3082 = vmatpush2.xpose.msra.mxu0 0.0
    %3083 = vmatprep.subr.mxu0 0.0
    %3084 = vmatpush2.xpose.msra.mxu0 0.0
    %3085 = vmatprep.subr.mxu0 0.0
    %3086 = vmatpush2.xpose.msra.mxu0 0.0
    %3087 = vmatprep.subr.mxu0 0.0
    %3088 = vmatpush2.xpose.msra.mxu0 0.0
    %3089 = vmatprep.subr.mxu0 0.0
    %3090 = vmatpush2.xpose.msra.mxu0 0.0
    %3091 = vmatprep.subr.mxu0 0.0
    %3092 = vmatpush2.xpose.msra.mxu0 0.0
    %3093 = vmatprep.mubr.f32.mxu0 0.0
    %3094 = vmatmul.mubr.f32.gmra.mxu0 %v3013
    %v3095 = vpop.f32.mrf.mxu0
    %v3096 = vadd.f32 %v2642, %v3095
    %v3097 = vpop.f32.mrf.mxu0
    %3098 = vmatprep.mubr.f32.mxu0 0.0
    %3099 = vmatmul.mubr.f32.gmra.mxu0 %v3015
    %v3100 = vpop.f32.mrf.mxu0
    %v3101 = vadd.f32 %v2643, %v3100
    %v3102 = vpop.f32.mrf.mxu0
    %3103 = vmatprep.mubr.f32.mxu0 0.0
    %3104 = vmatmul.mubr.f32.gmra.mxu0 %v3017
    %v3105 = vpop.f32.mrf.mxu0
    %v3106 = vadd.f32 %v2644, %v3105
    %v3107 = vpop.f32.mrf.mxu0
    %3108 = vmatprep.mubr.f32.mxu0 0.0
    %3109 = vmatmul.mubr.f32.gmra.mxu0 %v3019
    %v3110 = vpop.f32.mrf.mxu0
    %v3111 = vadd.f32 %v2645, %v3110
    %v3112 = vpop.f32.mrf.mxu0
    %3113 = vdwg.mxu0
    %3114 = vrot.lane.b32.xlu0 %v382, 120
    %v3115 = vpop.permute.xlu0 %3114
    %3116 = vrot.lane.b32.xlu0 %v387, 120
    %v3117 = vpop.permute.xlu0 %3116
    %3118 = vrot.lane.b32.xlu0 %v392, 120
    %v3119 = vpop.permute.xlu0 %3118
    %3120 = vrot.lane.b32.xlu0 %v397, 120
    %v3121 = vpop.permute.xlu0 %3120
    %3122 = vrot.lane.b32.xlu0 %v382, 88
    %v3123 = vpop.permute.xlu0 %3122
    %3124 = vrot.lane.b32.xlu0 %v387, 88
    %v3125 = vpop.permute.xlu0 %3124
    %3126 = vrot.lane.b32.xlu0 %v392, 88
    %v3127 = vpop.permute.xlu0 %3126
    %3128 = vrot.lane.b32.xlu0 %v397, 88
    %v3129 = vpop.permute.xlu0 %3128
    %v3130 = vsel %vm492, %v3115, 0
    %v3132 = vsel %vm492, %v3117, 0
    %v3134 = vsel %vm492, %v3119, 0
    %v3136 = vsel %vm492, %v3121, 0
    %v3138 = vsel %vm492, %v3123, 0
    %v3140 = vsel %vm492, %v3125, 0
    %v3142 = vsel %vm492, %v3127, 0
    %v3144 = vsel %vm492, %v3129, 0
    %3146 = vmatprep.subr.mxu0 0.0
    %3147 = vmatpush1.xpose.msra.mxu0 0.0
    %3148 = vmatprep.subr.mxu0 0.0
    %3149 = vmatpush1.xpose.msra.mxu0 0.0
    %3150 = vmatprep.subr.mxu0 0.0
    %3151 = vmatpush1.xpose.msra.mxu0 0.0
    %3152 = vmatprep.subr.mxu0 0.0
    %3153 = vmatpush1.xpose.msra.mxu0 0.0
    %3154 = vmatprep.subr.mxu0 0.0
    %3155 = vmatpush1.xpose.msra.mxu0 0.0
    %3156 = vmatprep.subr.mxu0 0.0
    %3157 = vmatpush1.xpose.msra.mxu0 0.0
    %3158 = vmatprep.subr.mxu0 0.0
    %3159 = vmatpush1.xpose.msra.mxu0 0.0
    %3160 = vmatprep.subr.mxu0 0.0
    %3161 = vmatpush1.xpose.msra.mxu0 0.0
    %3162 = vmatprep.subr.mxu0 0.0
    %3163 = vmatpush1.xpose.msra.mxu0 0.0
    %3164 = vmatprep.subr.mxu0 0.0
    %3165 = vmatpush1.xpose.msra.mxu0 0.0
    %3166 = vmatprep.subr.mxu0 0.0
    %3167 = vmatpush1.xpose.msra.mxu0 0.0
    %3168 = vmatprep.subr.mxu0 0.0
    %3169 = vmatpush1.xpose.msra.mxu0 0.0
    %3170 = vmatprep.subr.mxu0 0.0
    %3171 = vmatpush1.xpose.msra.mxu0 %v3144
    %3172 = vmatprep.subr.mxu0 0.0
    %3173 = vmatpush1.xpose.msra.mxu0 %v3142
    %3174 = vmatprep.subr.mxu0 0.0
    %3175 = vmatpush1.xpose.msra.mxu0 %v3140
    %3176 = vmatprep.subr.mxu0 0.0
    %3177 = vmatpush1.xpose.msra.mxu0 %v3138
    %3178 = vmatprep.subr.mxu0 0.0
    %3179 = vmatpush2.xpose.msra.mxu0 0.0
    %3180 = vmatprep.subr.mxu0 0.0
    %3181 = vmatpush2.xpose.msra.mxu0 0.0
    %3182 = vmatprep.subr.mxu0 0.0
    %3183 = vmatpush2.xpose.msra.mxu0 0.0
    %3184 = vmatprep.subr.mxu0 0.0
    %3185 = vmatpush2.xpose.msra.mxu0 0.0
    %3186 = vmatprep.subr.mxu0 0.0
    %3187 = vmatpush2.xpose.msra.mxu0 0.0
    %3188 = vmatprep.subr.mxu0 0.0
    %3189 = vmatpush2.xpose.msra.mxu0 0.0
    %3190 = vmatprep.subr.mxu0 0.0
    %3191 = vmatpush2.xpose.msra.mxu0 0.0
    %3192 = vmatprep.subr.mxu0 0.0
    %3193 = vmatpush2.xpose.msra.mxu0 0.0
    %3194 = vmatprep.subr.mxu0 0.0
    %3195 = vmatpush2.xpose.msra.mxu0 0.0
    %3196 = vmatprep.subr.mxu0 0.0
    %3197 = vmatpush2.xpose.msra.mxu0 0.0
    %3198 = vmatprep.subr.mxu0 0.0
    %3199 = vmatpush2.xpose.msra.mxu0 0.0
    %3200 = vmatprep.subr.mxu0 0.0
    %3201 = vmatpush2.xpose.msra.mxu0 0.0
    %3202 = vmatprep.subr.mxu0 0.0
    %3203 = vmatpush2.xpose.msra.mxu0 0.0
    %3204 = vmatprep.subr.mxu0 0.0
    %3205 = vmatpush2.xpose.msra.mxu0 0.0
    %3206 = vmatprep.subr.mxu0 0.0
    %3207 = vmatpush2.xpose.msra.mxu0 0.0
    %3208 = vmatprep.subr.mxu0 0.0
    %3209 = vmatpush2.xpose.msra.mxu0 0.0
    %3210 = vmatprep.mubr.f32.mxu0 0.0
    %3211 = vmatmul.mubr.f32.gmra.mxu0 %v3130
    %v3212 = vpop.f32.mrf.mxu0
    %v3213 = vadd.f32 %v2642, %v3212
    %v3214 = vpop.f32.mrf.mxu0
    %3215 = vmatprep.mubr.f32.mxu0 0.0
    %3216 = vmatmul.mubr.f32.gmra.mxu0 %v3132
    %v3217 = vpop.f32.mrf.mxu0
    %v3218 = vadd.f32 %v2643, %v3217
    %v3219 = vpop.f32.mrf.mxu0
    %3220 = vmatprep.mubr.f32.mxu0 0.0
    %3221 = vmatmul.mubr.f32.gmra.mxu0 %v3134
    %v3222 = vpop.f32.mrf.mxu0
    %v3223 = vadd.f32 %v2644, %v3222
    %v3224 = vpop.f32.mrf.mxu0
    %3225 = vmatprep.mubr.f32.mxu0 0.0
    %3226 = vmatmul.mubr.f32.gmra.mxu0 %v3136
    %v3227 = vpop.f32.mrf.mxu0
    %v3228 = vadd.f32 %v2645, %v3227
    %v3229 = vpop.f32.mrf.mxu0
    %3230 = vdwg.mxu0
    %3231 = vrot.lane.b32.xlu0 %v402, 120
    %v3232 = vpop.permute.xlu0 %3231
    %3233 = vrot.lane.b32.xlu0 %v407, 120
    %v3234 = vpop.permute.xlu0 %3233
    %3235 = vrot.lane.b32.xlu0 %v412, 120
    %v3236 = vpop.permute.xlu0 %3235
    %3237 = vrot.lane.b32.xlu0 %v417, 120
    %v3238 = vpop.permute.xlu0 %3237
    %3239 = vrot.lane.b32.xlu0 %v402, 88
    %v3240 = vpop.permute.xlu0 %3239
    %3241 = vrot.lane.b32.xlu0 %v407, 88
    %v3242 = vpop.permute.xlu0 %3241
    %3243 = vrot.lane.b32.xlu0 %v412, 88
    %v3244 = vpop.permute.xlu0 %3243
    %3245 = vrot.lane.b32.xlu0 %v417, 88
    %v3246 = vpop.permute.xlu0 %3245
    %v3247 = vsel %vm492, %v3232, 0
    %v3249 = vsel %vm492, %v3234, 0
    %v3251 = vsel %vm492, %v3236, 0
    %v3253 = vsel %vm492, %v3238, 0
    %v3255 = vsel %vm492, %v3240, 0
    %v3257 = vsel %vm492, %v3242, 0
    %v3259 = vsel %vm492, %v3244, 0
    %v3261 = vsel %vm492, %v3246, 0
    %3263 = vmatprep.subr.mxu0 0.0
    %3264 = vmatpush1.xpose.msra.mxu0 0.0
    %3265 = vmatprep.subr.mxu0 0.0
    %3266 = vmatpush1.xpose.msra.mxu0 0.0
    %3267 = vmatprep.subr.mxu0 0.0
    %3268 = vmatpush1.xpose.msra.mxu0 0.0
    %3269 = vmatprep.subr.mxu0 0.0
    %3270 = vmatpush1.xpose.msra.mxu0 0.0
    %3271 = vmatprep.subr.mxu0 0.0
    %3272 = vmatpush1.xpose.msra.mxu0 0.0
    %3273 = vmatprep.subr.mxu0 0.0
    %3274 = vmatpush1.xpose.msra.mxu0 0.0
    %3275 = vmatprep.subr.mxu0 0.0
    %3276 = vmatpush1.xpose.msra.mxu0 0.0
    %3277 = vmatprep.subr.mxu0 0.0
    %3278 = vmatpush1.xpose.msra.mxu0 0.0
    %3279 = vmatprep.subr.mxu0 0.0
    %3280 = vmatpush1.xpose.msra.mxu0 0.0
    %3281 = vmatprep.subr.mxu0 0.0
    %3282 = vmatpush1.xpose.msra.mxu0 0.0
    %3283 = vmatprep.subr.mxu0 0.0
    %3284 = vmatpush1.xpose.msra.mxu0 0.0
    %3285 = vmatprep.subr.mxu0 0.0
    %3286 = vmatpush1.xpose.msra.mxu0 0.0
    %3287 = vmatprep.subr.mxu0 0.0
    %3288 = vmatpush1.xpose.msra.mxu0 %v3261
    %3289 = vmatprep.subr.mxu0 0.0
    %3290 = vmatpush1.xpose.msra.mxu0 %v3259
    %3291 = vmatprep.subr.mxu0 0.0
    %3292 = vmatpush1.xpose.msra.mxu0 %v3257
    %3293 = vmatprep.subr.mxu0 0.0
    %3294 = vmatpush1.xpose.msra.mxu0 %v3255
    %3295 = vmatprep.subr.mxu0 0.0
    %3296 = vmatpush2.xpose.msra.mxu0 0.0
    %3297 = vmatprep.subr.mxu0 0.0
    %3298 = vmatpush2.xpose.msra.mxu0 0.0
    %3299 = vmatprep.subr.mxu0 0.0
    %3300 = vmatpush2.xpose.msra.mxu0 0.0
    %3301 = vmatprep.subr.mxu0 0.0
    %3302 = vmatpush2.xpose.msra.mxu0 0.0
    %3303 = vmatprep.subr.mxu0 0.0
    %3304 = vmatpush2.xpose.msra.mxu0 0.0
    %3305 = vmatprep.subr.mxu0 0.0
    %3306 = vmatpush2.xpose.msra.mxu0 0.0
    %3307 = vmatprep.subr.mxu0 0.0
    %3308 = vmatpush2.xpose.msra.mxu0 0.0
    %3309 = vmatprep.subr.mxu0 0.0
    %3310 = vmatpush2.xpose.msra.mxu0 0.0
    %3311 = vmatprep.subr.mxu0 0.0
    %3312 = vmatpush2.xpose.msra.mxu0 0.0
    %3313 = vmatprep.subr.mxu0 0.0
    %3314 = vmatpush2.xpose.msra.mxu0 0.0
    %3315 = vmatprep.subr.mxu0 0.0
    %3316 = vmatpush2.xpose.msra.mxu0 0.0
    %3317 = vmatprep.subr.mxu0 0.0
    %3318 = vmatpush2.xpose.msra.mxu0 0.0
    %3319 = vmatprep.subr.mxu0 0.0
    %3320 = vmatpush2.xpose.msra.mxu0 0.0
    %3321 = vmatprep.subr.mxu0 0.0
    %3322 = vmatpush2.xpose.msra.mxu0 0.0
    %3323 = vmatprep.subr.mxu0 0.0
    %3324 = vmatpush2.xpose.msra.mxu0 0.0
    %3325 = vmatprep.subr.mxu0 0.0
    %3326 = vmatpush2.xpose.msra.mxu0 0.0
    %3327 = vmatprep.mubr.f32.mxu0 0.0
    %3328 = vmatmul.mubr.f32.gmra.mxu0 %v3247
    %v3329 = vpop.f32.mrf.mxu0
    %v3330 = vadd.f32 %v2642, %v3329
    %v3331 = vpop.f32.mrf.mxu0
    %3332 = vmatprep.mubr.f32.mxu0 0.0
    %3333 = vmatmul.mubr.f32.gmra.mxu0 %v3249
    %v3334 = vpop.f32.mrf.mxu0
    %v3335 = vadd.f32 %v2643, %v3334
    %v3336 = vpop.f32.mrf.mxu0
    %3337 = vmatprep.mubr.f32.mxu0 0.0
    %3338 = vmatmul.mubr.f32.gmra.mxu0 %v3251
    %v3339 = vpop.f32.mrf.mxu0
    %v3340 = vadd.f32 %v2644, %v3339
    %v3341 = vpop.f32.mrf.mxu0
    %3342 = vmatprep.mubr.f32.mxu0 0.0
    %3343 = vmatmul.mubr.f32.gmra.mxu0 %v3253
    %v3344 = vpop.f32.mrf.mxu0
    %v3345 = vadd.f32 %v2645, %v3344
    %v3346 = vpop.f32.mrf.mxu0
    %3347 = vdwg.mxu0
    %3348 = vrot.lane.b32.xlu0 %v422, 120
    %v3349 = vpop.permute.xlu0 %3348
    %3350 = vrot.lane.b32.xlu0 %v427, 120
    %v3351 = vpop.permute.xlu0 %3350
    %3352 = vrot.lane.b32.xlu0 %v432, 120
    %v3353 = vpop.permute.xlu0 %3352
    %3354 = vrot.lane.b32.xlu0 %v437, 120
    %v3355 = vpop.permute.xlu0 %3354
    %3356 = vrot.lane.b32.xlu0 %v422, 88
    %v3357 = vpop.permute.xlu0 %3356
    %3358 = vrot.lane.b32.xlu0 %v427, 88
    %v3359 = vpop.permute.xlu0 %3358
    %3360 = vrot.lane.b32.xlu0 %v432, 88
    %v3361 = vpop.permute.xlu0 %3360
    %3362 = vrot.lane.b32.xlu0 %v437, 88
    %v3363 = vpop.permute.xlu0 %3362
    %v3364 = vsel %vm492, %v3349, 0
    %v3366 = vsel %vm492, %v3351, 0
    %v3368 = vsel %vm492, %v3353, 0
    %v3370 = vsel %vm492, %v3355, 0
    %v3372 = vsel %vm492, %v3357, 0
    %v3374 = vsel %vm492, %v3359, 0
    %v3376 = vsel %vm492, %v3361, 0
    %v3378 = vsel %vm492, %v3363, 0
    %3380 = vmatprep.subr.mxu0 0.0
    %3381 = vmatpush1.xpose.msra.mxu0 0.0
    %3382 = vmatprep.subr.mxu0 0.0
    %3383 = vmatpush1.xpose.msra.mxu0 0.0
    %3384 = vmatprep.subr.mxu0 0.0
    %3385 = vmatpush1.xpose.msra.mxu0 0.0
    %3386 = vmatprep.subr.mxu0 0.0
    %3387 = vmatpush1.xpose.msra.mxu0 0.0
    %3388 = vmatprep.subr.mxu0 0.0
    %3389 = vmatpush1.xpose.msra.mxu0 0.0
    %3390 = vmatprep.subr.mxu0 0.0
    %3391 = vmatpush1.xpose.msra.mxu0 0.0
    %3392 = vmatprep.subr.mxu0 0.0
    %3393 = vmatpush1.xpose.msra.mxu0 0.0
    %3394 = vmatprep.subr.mxu0 0.0
    %3395 = vmatpush1.xpose.msra.mxu0 0.0
    %3396 = vmatprep.subr.mxu0 0.0
    %3397 = vmatpush1.xpose.msra.mxu0 0.0
    %3398 = vmatprep.subr.mxu0 0.0
    %3399 = vmatpush1.xpose.msra.mxu0 0.0
    %3400 = vmatprep.subr.mxu0 0.0
    %3401 = vmatpush1.xpose.msra.mxu0 0.0
    %3402 = vmatprep.subr.mxu0 0.0
    %3403 = vmatpush1.xpose.msra.mxu0 0.0
    %3404 = vmatprep.subr.mxu0 0.0
    %3405 = vmatpush1.xpose.msra.mxu0 %v3378
    %3406 = vmatprep.subr.mxu0 0.0
    %3407 = vmatpush1.xpose.msra.mxu0 %v3376
    %3408 = vmatprep.subr.mxu0 0.0
    %3409 = vmatpush1.xpose.msra.mxu0 %v3374
    %3410 = vmatprep.subr.mxu0 0.0
    %3411 = vmatpush1.xpose.msra.mxu0 %v3372
    %3412 = vmatprep.subr.mxu0 0.0
    %3413 = vmatpush2.xpose.msra.mxu0 0.0
    %3414 = vmatprep.subr.mxu0 0.0
    %3415 = vmatpush2.xpose.msra.mxu0 0.0
    %3416 = vmatprep.subr.mxu0 0.0
    %3417 = vmatpush2.xpose.msra.mxu0 0.0
    %3418 = vmatprep.subr.mxu0 0.0
    %3419 = vmatpush2.xpose.msra.mxu0 0.0
    %3420 = vmatprep.subr.mxu0 0.0
    %3421 = vmatpush2.xpose.msra.mxu0 0.0
    %3422 = vmatprep.subr.mxu0 0.0
    %3423 = vmatpush2.xpose.msra.mxu0 0.0
    %3424 = vmatprep.subr.mxu0 0.0
    %3425 = vmatpush2.xpose.msra.mxu0 0.0
    %3426 = vmatprep.subr.mxu0 0.0
    %3427 = vmatpush2.xpose.msra.mxu0 0.0
    %3428 = vmatprep.subr.mxu0 0.0
    %3429 = vmatpush2.xpose.msra.mxu0 0.0
    %3430 = vmatprep.subr.mxu0 0.0
    %3431 = vmatpush2.xpose.msra.mxu0 0.0
    %3432 = vmatprep.subr.mxu0 0.0
    %3433 = vmatpush2.xpose.msra.mxu0 0.0
    %3434 = vmatprep.subr.mxu0 0.0
    %3435 = vmatpush2.xpose.msra.mxu0 0.0
    %3436 = vmatprep.subr.mxu0 0.0
    %3437 = vmatpush2.xpose.msra.mxu0 0.0
    %3438 = vmatprep.subr.mxu0 0.0
    %3439 = vmatpush2.xpose.msra.mxu0 0.0
    %3440 = vmatprep.subr.mxu0 0.0
    %3441 = vmatpush2.xpose.msra.mxu0 0.0
    %3442 = vmatprep.subr.mxu0 0.0
    %3443 = vmatpush2.xpose.msra.mxu0 0.0
    %3444 = vmatprep.mubr.f32.mxu0 0.0
    %3445 = vmatmul.mubr.f32.gmra.mxu0 %v3364
    %v3446 = vpop.f32.mrf.mxu0
    %v3447 = vadd.f32 %v2642, %v3446
    %v3448 = vpop.f32.mrf.mxu0
    %3449 = vmatprep.mubr.f32.mxu0 0.0
    %3450 = vmatmul.mubr.f32.gmra.mxu0 %v3366
    %v3451 = vpop.f32.mrf.mxu0
    %v3452 = vadd.f32 %v2643, %v3451
    %v3453 = vpop.f32.mrf.mxu0
    %3454 = vmatprep.mubr.f32.mxu0 0.0
    %3455 = vmatmul.mubr.f32.gmra.mxu0 %v3368
    %v3456 = vpop.f32.mrf.mxu0
    %v3457 = vadd.f32 %v2644, %v3456
    %v3458 = vpop.f32.mrf.mxu0
    %3459 = vmatprep.mubr.f32.mxu0 0.0
    %3460 = vmatmul.mubr.f32.gmra.mxu0 %v3370
    %v3461 = vpop.f32.mrf.mxu0
    %v3462 = vadd.f32 %v2645, %v3461
    %v3463 = vpop.f32.mrf.mxu0
    %3464 = vdwg.mxu0
    %3465 = vrot.lane.b32.xlu0 %v442, 120
    %v3466 = vpop.permute.xlu0 %3465
    %3467 = vrot.lane.b32.xlu0 %v447, 120
    %v3468 = vpop.permute.xlu0 %3467
    %3469 = vrot.lane.b32.xlu0 %v452, 120
    %v3470 = vpop.permute.xlu0 %3469
    %3471 = vrot.lane.b32.xlu0 %v457, 120
    %v3472 = vpop.permute.xlu0 %3471
    %3473 = vrot.lane.b32.xlu0 %v442, 88
    %v3474 = vpop.permute.xlu0 %3473
    %3475 = vrot.lane.b32.xlu0 %v447, 88
    %v3476 = vpop.permute.xlu0 %3475
    %3477 = vrot.lane.b32.xlu0 %v452, 88
    %v3478 = vpop.permute.xlu0 %3477
    %3479 = vrot.lane.b32.xlu0 %v457, 88
    %v3480 = vpop.permute.xlu0 %3479
    %v3481 = vsel %vm492, %v3466, 0
    %v3483 = vsel %vm492, %v3468, 0
    %v3485 = vsel %vm492, %v3470, 0
    %v3487 = vsel %vm492, %v3472, 0
    %v3489 = vsel %vm492, %v3474, 0
    %v3491 = vsel %vm492, %v3476, 0
    %v3493 = vsel %vm492, %v3478, 0
    %v3495 = vsel %vm492, %v3480, 0
    %3497 = vmatprep.subr.mxu0 0.0
    %3498 = vmatpush1.xpose.msra.mxu0 0.0
    %3499 = vmatprep.subr.mxu0 0.0
    %3500 = vmatpush1.xpose.msra.mxu0 0.0
    %3501 = vmatprep.subr.mxu0 0.0
    %3502 = vmatpush1.xpose.msra.mxu0 0.0
    %3503 = vmatprep.subr.mxu0 0.0
    %3504 = vmatpush1.xpose.msra.mxu0 0.0
    %3505 = vmatprep.subr.mxu0 0.0
    %3506 = vmatpush1.xpose.msra.mxu0 0.0
    %3507 = vmatprep.subr.mxu0 0.0
    %3508 = vmatpush1.xpose.msra.mxu0 0.0
    %3509 = vmatprep.subr.mxu0 0.0
    %3510 = vmatpush1.xpose.msra.mxu0 0.0
    %3511 = vmatprep.subr.mxu0 0.0
    %3512 = vmatpush1.xpose.msra.mxu0 0.0
    %3513 = vmatprep.subr.mxu0 0.0
    %3514 = vmatpush1.xpose.msra.mxu0 0.0
    %3515 = vmatprep.subr.mxu0 0.0
    %3516 = vmatpush1.xpose.msra.mxu0 0.0
    %3517 = vmatprep.subr.mxu0 0.0
    %3518 = vmatpush1.xpose.msra.mxu0 0.0
    %3519 = vmatprep.subr.mxu0 0.0
    %3520 = vmatpush1.xpose.msra.mxu0 0.0
    %3521 = vmatprep.subr.mxu0 0.0
    %3522 = vmatpush1.xpose.msra.mxu0 %v3495
    %3523 = vmatprep.subr.mxu0 0.0
    %3524 = vmatpush1.xpose.msra.mxu0 %v3493
    %3525 = vmatprep.subr.mxu0 0.0
    %3526 = vmatpush1.xpose.msra.mxu0 %v3491
    %3527 = vmatprep.subr.mxu0 0.0
    %3528 = vmatpush1.xpose.msra.mxu0 %v3489
    %3529 = vmatprep.subr.mxu0 0.0
    %3530 = vmatpush2.xpose.msra.mxu0 0.0
    %3531 = vmatprep.subr.mxu0 0.0
    %3532 = vmatpush2.xpose.msra.mxu0 0.0
    %3533 = vmatprep.subr.mxu0 0.0
    %3534 = vmatpush2.xpose.msra.mxu0 0.0
    %3535 = vmatprep.subr.mxu0 0.0
    %3536 = vmatpush2.xpose.msra.mxu0 0.0
    %3537 = vmatprep.subr.mxu0 0.0
    %3538 = vmatpush2.xpose.msra.mxu0 0.0
    %3539 = vmatprep.subr.mxu0 0.0
    %3540 = vmatpush2.xpose.msra.mxu0 0.0
    %3541 = vmatprep.subr.mxu0 0.0
    %3542 = vmatpush2.xpose.msra.mxu0 0.0
    %3543 = vmatprep.subr.mxu0 0.0
    %3544 = vmatpush2.xpose.msra.mxu0 0.0
    %3545 = vmatprep.subr.mxu0 0.0
    %3546 = vmatpush2.xpose.msra.mxu0 0.0
    %3547 = vmatprep.subr.mxu0 0.0
    %3548 = vmatpush2.xpose.msra.mxu0 0.0
    %3549 = vmatprep.subr.mxu0 0.0
    %3550 = vmatpush2.xpose.msra.mxu0 0.0
    %3551 = vmatprep.subr.mxu0 0.0
    %3552 = vmatpush2.xpose.msra.mxu0 0.0
    %3553 = vmatprep.subr.mxu0 0.0
    %3554 = vmatpush2.xpose.msra.mxu0 0.0
    %3555 = vmatprep.subr.mxu0 0.0
    %3556 = vmatpush2.xpose.msra.mxu0 0.0
    %3557 = vmatprep.subr.mxu0 0.0
    %3558 = vmatpush2.xpose.msra.mxu0 0.0
    %3559 = vmatprep.subr.mxu0 0.0
    %3560 = vmatpush2.xpose.msra.mxu0 0.0
    %3561 = vmatprep.mubr.f32.mxu0 0.0
    %3562 = vmatmul.mubr.f32.gmra.mxu0 %v3481
    %v3563 = vpop.f32.mrf.mxu0
    %v3564 = vadd.f32 %v2642, %v3563
    %v3565 = vpop.f32.mrf.mxu0
    %3566 = vmatprep.mubr.f32.mxu0 0.0
    %3567 = vmatmul.mubr.f32.gmra.mxu0 %v3483
    %v3568 = vpop.f32.mrf.mxu0
    %v3569 = vadd.f32 %v2643, %v3568
    %v3570 = vpop.f32.mrf.mxu0
    %3571 = vmatprep.mubr.f32.mxu0 0.0
    %3572 = vmatmul.mubr.f32.gmra.mxu0 %v3485
    %v3573 = vpop.f32.mrf.mxu0
    %v3574 = vadd.f32 %v2644, %v3573
    %v3575 = vpop.f32.mrf.mxu0
    %3576 = vmatprep.mubr.f32.mxu0 0.0
    %3577 = vmatmul.mubr.f32.gmra.mxu0 %v3487
    %v3578 = vpop.f32.mrf.mxu0
    %v3579 = vadd.f32 %v2645, %v3578
    %v3580 = vpop.f32.mrf.mxu0
    %3581 = vdwg.mxu0
    %v3582 = vadd.f32 %v2745, %v460
    %v3583 = vadd.f32 %v2750, %v461
    %v3584 = vadd.f32 %v2755, %v462
    %v3585 = vadd.f32 %v2760, %v463
    %v3586 = vadd.f32 %v2862, %v464
    %v3587 = vadd.f32 %v2867, %v465
    %v3588 = vadd.f32 %v2872, %v466
    %v3589 = vadd.f32 %v2877, %v467
    %v3590 = vadd.f32 %v2979, %v468
    %v3591 = vadd.f32 %v2984, %v469
    %v3592 = vadd.f32 %v2989, %v470
    %v3593 = vadd.f32 %v2994, %v471
    %v3594 = vadd.f32 %v3096, %v472
    %v3595 = vadd.f32 %v3101, %v473
    %v3596 = vadd.f32 %v3106, %v474
    %v3597 = vadd.f32 %v3111, %v475
    %v3598 = vadd.f32 %v3213, %v460
    %v3599 = vadd.f32 %v3218, %v461
    %v3600 = vadd.f32 %v3223, %v462
    %v3601 = vadd.f32 %v3228, %v463
    %v3602 = vadd.f32 %v3330, %v464
    %v3603 = vadd.f32 %v3335, %v465
    %v3604 = vadd.f32 %v3340, %v466
    %v3605 = vadd.f32 %v3345, %v467
    %v3606 = vadd.f32 %v3447, %v468
    %v3607 = vadd.f32 %v3452, %v469
    %v3608 = vadd.f32 %v3457, %v470
    %v3609 = vadd.f32 %v3462, %v471
    %v3610 = vadd.f32 %v3564, %v472
    %v3611 = vadd.f32 %v3569, %v473
    %v3612 = vadd.f32 %v3574, %v474
    %v3613 = vadd.f32 %v3579, %v475
    %v3614 = vsel %vm138, %v3582, -inf
    %3615 = vmax.xlane.f32.xlu0 %v3614
    %v3616 = vpop.xlane.xlu0 %3615
    %v3617 = vsel %vm138, %v3583, -inf
    %3618 = vmax.xlane.f32.xlu0 %v3617
    %v3619 = vpop.xlane.xlu0 %3618
    %v3620 = vsel %vm138, %v3584, -inf
    %3621 = vmax.xlane.f32.xlu0 %v3620
    %v3622 = vpop.xlane.xlu0 %3621
    %v3623 = vsel %vm138, %v3585, -inf
    %3624 = vmax.xlane.f32.xlu0 %v3623
    %v3625 = vpop.xlane.xlu0 %3624
    %v3626 = vsel %vm138, %v3586, -inf
    %3627 = vmax.xlane.f32.xlu0 %v3626
    %v3628 = vpop.xlane.xlu0 %3627
    %v3629 = vsel %vm138, %v3587, -inf
    %3630 = vmax.xlane.f32.xlu0 %v3629
    %v3631 = vpop.xlane.xlu0 %3630
    %v3632 = vsel %vm138, %v3588, -inf
    %3633 = vmax.xlane.f32.xlu0 %v3632
    %v3634 = vpop.xlane.xlu0 %3633
    %v3635 = vsel %vm138, %v3589, -inf
    %3636 = vmax.xlane.f32.xlu0 %v3635
    %v3637 = vpop.xlane.xlu0 %3636
    %v3638 = vsel %vm138, %v3590, -inf
    %3639 = vmax.xlane.f32.xlu0 %v3638
    %v3640 = vpop.xlane.xlu0 %3639
    %v3641 = vsel %vm138, %v3591, -inf
    %3642 = vmax.xlane.f32.xlu0 %v3641
    %v3643 = vpop.xlane.xlu0 %3642
    %v3644 = vsel %vm138, %v3592, -inf
    %3645 = vmax.xlane.f32.xlu0 %v3644
    %v3646 = vpop.xlane.xlu0 %3645
    %v3647 = vsel %vm138, %v3593, -inf
    %3648 = vmax.xlane.f32.xlu0 %v3647
    %v3649 = vpop.xlane.xlu0 %3648
    %v3650 = vsel %vm138, %v3594, -inf
    %3651 = vmax.xlane.f32.xlu0 %v3650
    %v3652 = vpop.xlane.xlu0 %3651
    %v3653 = vsel %vm138, %v3595, -inf
    %3654 = vmax.xlane.f32.xlu0 %v3653
    %v3655 = vpop.xlane.xlu0 %3654
    %v3656 = vsel %vm138, %v3596, -inf
    %3657 = vmax.xlane.f32.xlu0 %v3656
    %v3658 = vpop.xlane.xlu0 %3657
    %v3659 = vsel %vm138, %v3597, -inf
    %3660 = vmax.xlane.f32.xlu0 %v3659
    %v3661 = vpop.xlane.xlu0 %3660
    %v3662 = vsel %vm138, %v3598, -inf
    %3663 = vmax.xlane.f32.xlu0 %v3662
    %v3664 = vpop.xlane.xlu0 %3663
    %v3665 = vsel %vm138, %v3599, -inf
    %3666 = vmax.xlane.f32.xlu0 %v3665
    %v3667 = vpop.xlane.xlu0 %3666
    %v3668 = vsel %vm138, %v3600, -inf
    %3669 = vmax.xlane.f32.xlu0 %v3668
    %v3670 = vpop.xlane.xlu0 %3669
    %v3671 = vsel %vm138, %v3601, -inf
    %3672 = vmax.xlane.f32.xlu0 %v3671
    %v3673 = vpop.xlane.xlu0 %3672
    %v3674 = vsel %vm138, %v3602, -inf
    %3675 = vmax.xlane.f32.xlu0 %v3674
    %v3676 = vpop.xlane.xlu0 %3675
    %v3677 = vsel %vm138, %v3603, -inf
    %3678 = vmax.xlane.f32.xlu0 %v3677
    %v3679 = vpop.xlane.xlu0 %3678
    %v3680 = vsel %vm138, %v3604, -inf
    %3681 = vmax.xlane.f32.xlu0 %v3680
    %v3682 = vpop.xlane.xlu0 %3681
    %v3683 = vsel %vm138, %v3605, -inf
    %3684 = vmax.xlane.f32.xlu0 %v3683
    %v3685 = vpop.xlane.xlu0 %3684
    %v3686 = vsel %vm138, %v3606, -inf
    %3687 = vmax.xlane.f32.xlu0 %v3686
    %v3688 = vpop.xlane.xlu0 %3687
    %v3689 = vsel %vm138, %v3607, -inf
    %3690 = vmax.xlane.f32.xlu0 %v3689
    %v3691 = vpop.xlane.xlu0 %3690
    %v3692 = vsel %vm138, %v3608, -inf
    %3693 = vmax.xlane.f32.xlu0 %v3692
    %v3694 = vpop.xlane.xlu0 %3693
    %v3695 = vsel %vm138, %v3609, -inf
    %3696 = vmax.xlane.f32.xlu0 %v3695
    %v3697 = vpop.xlane.xlu0 %3696
    %v3698 = vsel %vm138, %v3610, -inf
    %3699 = vmax.xlane.f32.xlu0 %v3698
    %v3700 = vpop.xlane.xlu0 %3699
    %v3701 = vsel %vm138, %v3611, -inf
    %3702 = vmax.xlane.f32.xlu0 %v3701
    %v3703 = vpop.xlane.xlu0 %3702
    %v3704 = vsel %vm138, %v3612, -inf
    %3705 = vmax.xlane.f32.xlu0 %v3704
    %v3706 = vpop.xlane.xlu0 %3705
    %v3707 = vsel %vm138, %v3613, -inf
    %3708 = vmax.xlane.f32.xlu0 %v3707
    %v3709 = vpop.xlane.xlu0 %3708
    %v3710 = vsub.f32 %v3582, %v3616
    %v3711 = vsub.f32 %v3583, %v3619
    %v3712 = vsub.f32 %v3584, %v3622
    %v3713 = vsub.f32 %v3585, %v3625
    %v3714 = vsub.f32 %v3586, %v3628
    %v3715 = vsub.f32 %v3587, %v3631
    %v3716 = vsub.f32 %v3588, %v3634
    %v3717 = vsub.f32 %v3589, %v3637
    %v3718 = vsub.f32 %v3590, %v3640
    %v3719 = vsub.f32 %v3591, %v3643
    %v3720 = vsub.f32 %v3592, %v3646
    %v3721 = vsub.f32 %v3593, %v3649
    %v3722 = vsub.f32 %v3594, %v3652
    %v3723 = vsub.f32 %v3595, %v3655
    %v3724 = vsub.f32 %v3596, %v3658
    %v3725 = vsub.f32 %v3597, %v3661
    %v3726 = vsub.f32 %v3598, %v3664
    %v3727 = vsub.f32 %v3599, %v3667
    %v3728 = vsub.f32 %v3600, %v3670
    %v3729 = vsub.f32 %v3601, %v3673
    %v3730 = vsub.f32 %v3602, %v3676
    %v3731 = vsub.f32 %v3603, %v3679
    %v3732 = vsub.f32 %v3604, %v3682
    %v3733 = vsub.f32 %v3605, %v3685
    %v3734 = vsub.f32 %v3606, %v3688
    %v3735 = vsub.f32 %v3607, %v3691
    %v3736 = vsub.f32 %v3608, %v3694
    %v3737 = vsub.f32 %v3609, %v3697
    %v3738 = vsub.f32 %v3610, %v3700
    %v3739 = vsub.f32 %v3611, %v3703
    %v3740 = vsub.f32 %v3612, %v3706
    %v3741 = vsub.f32 %v3613, %v3709
    %v3742 = vmul.f32 %v3710, 1.442695
    %v3743 = vpow.pop %v3742
    %v3744 = vmul.f32 %v3711, 1.442695
    %v3745 = vpow.pop %v3744
    %v3746 = vmul.f32 %v3712, 1.442695
    %v3747 = vpow.pop %v3746
    %v3748 = vmul.f32 %v3713, 1.442695
    %v3749 = vpow.pop %v3748
    %v3750 = vmul.f32 %v3714, 1.442695
    %v3751 = vpow.pop %v3750
    %v3752 = vmul.f32 %v3715, 1.442695
    %v3753 = vpow.pop %v3752
    %v3754 = vmul.f32 %v3716, 1.442695
    %v3755 = vpow.pop %v3754
    %v3756 = vmul.f32 %v3717, 1.442695
    %v3757 = vpow.pop %v3756
    %v3758 = vmul.f32 %v3718, 1.442695
    %v3759 = vpow.pop %v3758
    %v3760 = vmul.f32 %v3719, 1.442695
    %v3761 = vpow.pop %v3760
    %v3762 = vmul.f32 %v3720, 1.442695
    %v3763 = vpow.pop %v3762
    %v3764 = vmul.f32 %v3721, 1.442695
    %v3765 = vpow.pop %v3764
    %v3766 = vmul.f32 %v3722, 1.442695
    %v3767 = vpow.pop %v3766
    %v3768 = vmul.f32 %v3723, 1.442695
    %v3769 = vpow.pop %v3768
    %v3770 = vmul.f32 %v3724, 1.442695
    %v3771 = vpow.pop %v3770
    %v3772 = vmul.f32 %v3725, 1.442695
    %v3773 = vpow.pop %v3772
    %v3774 = vmul.f32 %v3726, 1.442695
    %v3775 = vpow.pop %v3774
    %v3776 = vmul.f32 %v3727, 1.442695
    %v3777 = vpow.pop %v3776
    %v3778 = vmul.f32 %v3728, 1.442695
    %v3779 = vpow.pop %v3778
    %v3780 = vmul.f32 %v3729, 1.442695
    %v3781 = vpow.pop %v3780
    %v3782 = vmul.f32 %v3730, 1.442695
    %v3783 = vpow.pop %v3782
    %v3784 = vmul.f32 %v3731, 1.442695
    %v3785 = vpow.pop %v3784
    %v3786 = vmul.f32 %v3732, 1.442695
    %v3787 = vpow.pop %v3786
    %v3788 = vmul.f32 %v3733, 1.442695
    %v3789 = vpow.pop %v3788
    %v3790 = vmul.f32 %v3734, 1.442695
    %v3791 = vpow.pop %v3790
    %v3792 = vmul.f32 %v3735, 1.442695
    %v3793 = vpow.pop %v3792
    %v3794 = vmul.f32 %v3736, 1.442695
    %v3795 = vpow.pop %v3794
    %v3796 = vmul.f32 %v3737, 1.442695
    %v3797 = vpow.pop %v3796
    %v3798 = vmul.f32 %v3738, 1.442695
    %v3799 = vpow.pop %v3798
    %v3800 = vmul.f32 %v3739, 1.442695
    %v3801 = vpow.pop %v3800
    %v3802 = vmul.f32 %v3740, 1.442695
    %v3803 = vpow.pop %v3802
    %v3804 = vmul.f32 %v3741, 1.442695
    %v3805 = vpow.pop %v3804
    %v3806 = vsel %vm138, %v3743, 0.0
    %3807 = vadd.xlane.f32.xlu0 %v3806
    %v3808 = vpop.xlane.xlu0 %3807
    %v3809 = vsel %vm138, %v3745, 0.0
    %3810 = vadd.xlane.f32.xlu0 %v3809
    %v3811 = vpop.xlane.xlu0 %3810
    %v3812 = vsel %vm138, %v3747, 0.0
    %3813 = vadd.xlane.f32.xlu0 %v3812
    %v3814 = vpop.xlane.xlu0 %3813
    %v3815 = vsel %vm138, %v3749, 0.0
    %3816 = vadd.xlane.f32.xlu0 %v3815
    %v3817 = vpop.xlane.xlu0 %3816
    %v3818 = vsel %vm138, %v3751, 0.0
    %3819 = vadd.xlane.f32.xlu0 %v3818
    %v3820 = vpop.xlane.xlu0 %3819
    %v3821 = vsel %vm138, %v3753, 0.0
    %3822 = vadd.xlane.f32.xlu0 %v3821
    %v3823 = vpop.xlane.xlu0 %3822
    %v3824 = vsel %vm138, %v3755, 0.0
    %3825 = vadd.xlane.f32.xlu0 %v3824
    %v3826 = vpop.xlane.xlu0 %3825
    %v3827 = vsel %vm138, %v3757, 0.0
    %3828 = vadd.xlane.f32.xlu0 %v3827
    %v3829 = vpop.xlane.xlu0 %3828
    %v3830 = vsel %vm138, %v3759, 0.0
    %3831 = vadd.xlane.f32.xlu0 %v3830
    %v3832 = vpop.xlane.xlu0 %3831
    %v3833 = vsel %vm138, %v3761, 0.0
    %3834 = vadd.xlane.f32.xlu0 %v3833
    %v3835 = vpop.xlane.xlu0 %3834
    %v3836 = vsel %vm138, %v3763, 0.0
    %3837 = vadd.xlane.f32.xlu0 %v3836
    %v3838 = vpop.xlane.xlu0 %3837
    %v3839 = vsel %vm138, %v3765, 0.0
    %3840 = vadd.xlane.f32.xlu0 %v3839
    %v3841 = vpop.xlane.xlu0 %3840
    %v3842 = vsel %vm138, %v3767, 0.0
    %3843 = vadd.xlane.f32.xlu0 %v3842
    %v3844 = vpop.xlane.xlu0 %3843
    %v3845 = vsel %vm138, %v3769, 0.0
    %3846 = vadd.xlane.f32.xlu0 %v3845
    %v3847 = vpop.xlane.xlu0 %3846
    %v3848 = vsel %vm138, %v3771, 0.0
    %3849 = vadd.xlane.f32.xlu0 %v3848
    %v3850 = vpop.xlane.xlu0 %3849
    %v3851 = vsel %vm138, %v3773, 0.0
    %3852 = vadd.xlane.f32.xlu0 %v3851
    %v3853 = vpop.xlane.xlu0 %3852
    %v3854 = vsel %vm138, %v3775, 0.0
    %3855 = vadd.xlane.f32.xlu0 %v3854
    %v3856 = vpop.xlane.xlu0 %3855
    %v3857 = vsel %vm138, %v3777, 0.0
    %3858 = vadd.xlane.f32.xlu0 %v3857
    %v3859 = vpop.xlane.xlu0 %3858
    %v3860 = vsel %vm138, %v3779, 0.0
    %3861 = vadd.xlane.f32.xlu0 %v3860
    %v3862 = vpop.xlane.xlu0 %3861
    %v3863 = vsel %vm138, %v3781, 0.0
    %3864 = vadd.xlane.f32.xlu0 %v3863
    %v3865 = vpop.xlane.xlu0 %3864
    %v3866 = vsel %vm138, %v3783, 0.0
    %3867 = vadd.xlane.f32.xlu0 %v3866
    %v3868 = vpop.xlane.xlu0 %3867
    %v3869 = vsel %vm138, %v3785, 0.0
    %3870 = vadd.xlane.f32.xlu0 %v3869
    %v3871 = vpop.xlane.xlu0 %3870
    %v3872 = vsel %vm138, %v3787, 0.0
    %3873 = vadd.xlane.f32.xlu0 %v3872
    %v3874 = vpop.xlane.xlu0 %3873
    %v3875 = vsel %vm138, %v3789, 0.0
    %3876 = vadd.xlane.f32.xlu0 %v3875
    %v3877 = vpop.xlane.xlu0 %3876
    %v3878 = vsel %vm138, %v3791, 0.0
    %3879 = vadd.xlane.f32.xlu0 %v3878
    %v3880 = vpop.xlane.xlu0 %3879
    %v3881 = vsel %vm138, %v3793, 0.0
    %3882 = vadd.xlane.f32.xlu0 %v3881
    %v3883 = vpop.xlane.xlu0 %3882
    %v3884 = vsel %vm138, %v3795, 0.0
    %3885 = vadd.xlane.f32.xlu0 %v3884
    %v3886 = vpop.xlane.xlu0 %3885
    %v3887 = vsel %vm138, %v3797, 0.0
    %3888 = vadd.xlane.f32.xlu0 %v3887
    %v3889 = vpop.xlane.xlu0 %3888
    %v3890 = vsel %vm138, %v3799, 0.0
    %3891 = vadd.xlane.f32.xlu0 %v3890
    %v3892 = vpop.xlane.xlu0 %3891
    %v3893 = vsel %vm138, %v3801, 0.0
    %3894 = vadd.xlane.f32.xlu0 %v3893
    %v3895 = vpop.xlane.xlu0 %3894
    %v3896 = vsel %vm138, %v3803, 0.0
    %3897 = vadd.xlane.f32.xlu0 %v3896
    %v3898 = vpop.xlane.xlu0 %3897
    %v3899 = vsel %vm138, %v3805, 0.0
    %3900 = vadd.xlane.f32.xlu0 %v3899
    %v3901 = vpop.xlane.xlu0 %3900
    %v3902 = vrcp.pop %v3808
    %v3903 = vrcp.pop %v3811
    %v3904 = vrcp.pop %v3814
    %v3905 = vrcp.pop %v3817
    %v3906 = vrcp.pop %v3820
    %v3907 = vrcp.pop %v3823
    %v3908 = vrcp.pop %v3826
    %v3909 = vrcp.pop %v3829
    %v3910 = vrcp.pop %v3832
    %v3911 = vrcp.pop %v3835
    %v3912 = vrcp.pop %v3838
    %v3913 = vrcp.pop %v3841
    %v3914 = vrcp.pop %v3844
    %v3915 = vrcp.pop %v3847
    %v3916 = vrcp.pop %v3850
    %v3917 = vrcp.pop %v3853
    %v3918 = vrcp.pop %v3856
    %v3919 = vrcp.pop %v3859
    %v3920 = vrcp.pop %v3862
    %v3921 = vrcp.pop %v3865
    %v3922 = vrcp.pop %v3868
    %v3923 = vrcp.pop %v3871
    %v3924 = vrcp.pop %v3874
    %v3925 = vrcp.pop %v3877
    %v3926 = vrcp.pop %v3880
    %v3927 = vrcp.pop %v3883
    %v3928 = vrcp.pop %v3886
    %v3929 = vrcp.pop %v3889
    %v3930 = vrcp.pop %v3892
    %v3931 = vrcp.pop %v3895
    %v3932 = vrcp.pop %v3898
    %v3933 = vrcp.pop %v3901
    %v3934 = vmul.f32 %v3743, %v3902
    %v3935 = vmul.f32 %v3745, %v3903
    %v3936 = vmul.f32 %v3747, %v3904
    %v3937 = vmul.f32 %v3749, %v3905
    %v3938 = vmul.f32 %v3751, %v3906
    %v3939 = vmul.f32 %v3753, %v3907
    %v3940 = vmul.f32 %v3755, %v3908
    %v3941 = vmul.f32 %v3757, %v3909
    %v3942 = vmul.f32 %v3759, %v3910
    %v3943 = vmul.f32 %v3761, %v3911
    %v3944 = vmul.f32 %v3763, %v3912
    %v3945 = vmul.f32 %v3765, %v3913
    %v3946 = vmul.f32 %v3767, %v3914
    %v3947 = vmul.f32 %v3769, %v3915
    %v3948 = vmul.f32 %v3771, %v3916
    %v3949 = vmul.f32 %v3773, %v3917
    %v3950 = vmul.f32 %v3775, %v3918
    %v3951 = vmul.f32 %v3777, %v3919
    %v3952 = vmul.f32 %v3779, %v3920
    %v3953 = vmul.f32 %v3781, %v3921
    %v3954 = vmul.f32 %v3783, %v3922
    %v3955 = vmul.f32 %v3785, %v3923
    %v3956 = vmul.f32 %v3787, %v3924
    %v3957 = vmul.f32 %v3789, %v3925
    %v3958 = vmul.f32 %v3791, %v3926
    %v3959 = vmul.f32 %v3793, %v3927
    %v3960 = vmul.f32 %v3795, %v3928
    %v3961 = vmul.f32 %v3797, %v3929
    %v3962 = vmul.f32 %v3799, %v3930
    %v3963 = vmul.f32 %v3801, %v3931
    %v3964 = vmul.f32 %v3803, %v3932
    %v3965 = vmul.f32 %v3805, %v3933
    %3966 = vrot.lane.b32.xlu0 %v302, 56
    %v3967 = vpop.permute.xlu0 %3966
    %3968 = vrot.lane.b32.xlu0 %v307, 56
    %v3969 = vpop.permute.xlu0 %3968
    %3970 = vrot.lane.b32.xlu0 %v312, 56
    %v3971 = vpop.permute.xlu0 %3970
    %3972 = vrot.lane.b32.xlu0 %v317, 56
    %v3973 = vpop.permute.xlu0 %3972
    %v3979 = vsel %vm138, %v3934, 0
    %v3982 = vsel %vm138, %v3935, 0
    %v3985 = vsel %vm138, %v3936, 0
    %v3988 = vsel %vm138, %v3937, 0
    %3990 = vmatprep.subr.mxu0 0.0
    %3991 = vmatpush1.msra.mxu0 0.0
    %3992 = vmatprep.subr.mxu0 0.0
    %3993 = vmatpush1.msra.mxu0 0.0
    %3994 = vmatprep.subr.mxu0 0.0
    %3995 = vmatpush1.msra.mxu0 0.0
    %3996 = vmatprep.subr.mxu0 0.0
    %3997 = vmatpush1.msra.mxu0 0.0
    %3998 = vmatprep.subr.mxu0 0.0
    %3999 = vmatpush1.msra.mxu0 0.0
    %4000 = vmatprep.subr.mxu0 0.0
    %4001 = vmatpush1.msra.mxu0 0.0
    %4002 = vmatprep.subr.mxu0 0.0
    %4003 = vmatpush1.msra.mxu0 0.0
    %4004 = vmatprep.subr.mxu0 0.0
    %4005 = vmatpush1.msra.mxu0 0.0
    %4006 = vmatprep.subr.mxu0 0.0
    %4007 = vmatpush1.msra.mxu0 0.0
    %4008 = vmatprep.subr.mxu0 0.0
    %4009 = vmatpush1.msra.mxu0 0.0
    %4010 = vmatprep.subr.mxu0 0.0
    %4011 = vmatpush1.msra.mxu0 0.0
    %4012 = vmatprep.subr.mxu0 0.0
    %4013 = vmatpush1.msra.mxu0 0.0
    %4014 = vmatprep.subr.mxu0 0.0
    %4015 = vmatpush1.msra.mxu0 %v3973
    %4016 = vmatprep.subr.mxu0 0.0
    %4017 = vmatpush1.msra.mxu0 %v3971
    %4018 = vmatprep.subr.mxu0 0.0
    %4019 = vmatpush1.msra.mxu0 %v3969
    %4020 = vmatprep.subr.mxu0 0.0
    %4021 = vmatpush1.msra.mxu0 %v3967
    %4022 = vmatprep.subr.mxu0 0.0
    %4023 = vmatpush2.msra.mxu0 0.0
    %4024 = vmatprep.subr.mxu0 0.0
    %4025 = vmatpush2.msra.mxu0 0.0
    %4026 = vmatprep.subr.mxu0 0.0
    %4027 = vmatpush2.msra.mxu0 0.0
    %4028 = vmatprep.subr.mxu0 0.0
    %4029 = vmatpush2.msra.mxu0 0.0
    %4030 = vmatprep.subr.mxu0 0.0
    %4031 = vmatpush2.msra.mxu0 0.0
    %4032 = vmatprep.subr.mxu0 0.0
    %4033 = vmatpush2.msra.mxu0 0.0
    %4034 = vmatprep.subr.mxu0 0.0
    %4035 = vmatpush2.msra.mxu0 0.0
    %4036 = vmatprep.subr.mxu0 0.0
    %4037 = vmatpush2.msra.mxu0 0.0
    %4038 = vmatprep.subr.mxu0 0.0
    %4039 = vmatpush2.msra.mxu0 0.0
    %4040 = vmatprep.subr.mxu0 0.0
    %4041 = vmatpush2.msra.mxu0 0.0
    %4042 = vmatprep.subr.mxu0 0.0
    %4043 = vmatpush2.msra.mxu0 0.0
    %4044 = vmatprep.subr.mxu0 0.0
    %4045 = vmatpush2.msra.mxu0 0.0
    %4046 = vmatprep.subr.mxu0 0.0
    %4047 = vmatpush2.msra.mxu0 0.0
    %4048 = vmatprep.subr.mxu0 0.0
    %4049 = vmatpush2.msra.mxu0 0.0
    %4050 = vmatprep.subr.mxu0 0.0
    %4051 = vmatpush2.msra.mxu0 0.0
    %4052 = vmatprep.subr.mxu0 0.0
    %4053 = vmatpush2.msra.mxu0 0.0
    %4054 = vmatprep.mubr.f32.mxu0 0.0
    %4055 = vmatmul.mubr.f32.gmra.mxu0 %v3979
    %v4056 = vpop.f32.mrf.mxu0
    %v4057 = vadd.f32 0.0, %v4056
    %v4058 = vpop.f32.mrf.mxu0
    %4059 = vmatprep.mubr.f32.mxu0 0.0
    %4060 = vmatmul.mubr.f32.gmra.mxu0 %v3982
    %v4061 = vpop.f32.mrf.mxu0
    %v4062 = vadd.f32 0.0, %v4061
    %v4063 = vpop.f32.mrf.mxu0
    %4064 = vmatprep.mubr.f32.mxu0 0.0
    %4065 = vmatmul.mubr.f32.gmra.mxu0 %v3985
    %v4066 = vpop.f32.mrf.mxu0
    %v4067 = vadd.f32 0.0, %v4066
    %v4068 = vpop.f32.mrf.mxu0
    %4069 = vmatprep.mubr.f32.mxu0 0.0
    %4070 = vmatmul.mubr.f32.gmra.mxu0 %v3988
    %v4071 = vpop.f32.mrf.mxu0
    %v4072 = vadd.f32 0.0, %v4071
    %v4073 = vpop.f32.mrf.mxu0
    %4074 = vdwg.mxu0
    %4075 = vrot.lane.b32.xlu0 %v322, 56
    %v4076 = vpop.permute.xlu0 %4075
    %4077 = vrot.lane.b32.xlu0 %v327, 56
    %v4078 = vpop.permute.xlu0 %4077
    %4079 = vrot.lane.b32.xlu0 %v332, 56
    %v4080 = vpop.permute.xlu0 %4079
    %4081 = vrot.lane.b32.xlu0 %v337, 56
    %v4082 = vpop.permute.xlu0 %4081
    %v4088 = vsel %vm138, %v3938, 0
    %v4091 = vsel %vm138, %v3939, 0
    %v4094 = vsel %vm138, %v3940, 0
    %v4097 = vsel %vm138, %v3941, 0
    %4099 = vmatprep.subr.mxu0 0.0
    %4100 = vmatpush1.msra.mxu0 0.0
    %4101 = vmatprep.subr.mxu0 0.0
    %4102 = vmatpush1.msra.mxu0 0.0
    %4103 = vmatprep.subr.mxu0 0.0
    %4104 = vmatpush1.msra.mxu0 0.0
    %4105 = vmatprep.subr.mxu0 0.0
    %4106 = vmatpush1.msra.mxu0 0.0
    %4107 = vmatprep.subr.mxu0 0.0
    %4108 = vmatpush1.msra.mxu0 0.0
    %4109 = vmatprep.subr.mxu0 0.0
    %4110 = vmatpush1.msra.mxu0 0.0
    %4111 = vmatprep.subr.mxu0 0.0
    %4112 = vmatpush1.msra.mxu0 0.0
    %4113 = vmatprep.subr.mxu0 0.0
    %4114 = vmatpush1.msra.mxu0 0.0
    %4115 = vmatprep.subr.mxu0 0.0
    %4116 = vmatpush1.msra.mxu0 0.0
    %4117 = vmatprep.subr.mxu0 0.0
    %4118 = vmatpush1.msra.mxu0 0.0
    %4119 = vmatprep.subr.mxu0 0.0
    %4120 = vmatpush1.msra.mxu0 0.0
    %4121 = vmatprep.subr.mxu0 0.0
    %4122 = vmatpush1.msra.mxu0 0.0
    %4123 = vmatprep.subr.mxu0 0.0
    %4124 = vmatpush1.msra.mxu0 %v4082
    %4125 = vmatprep.subr.mxu0 0.0
    %4126 = vmatpush1.msra.mxu0 %v4080
    %4127 = vmatprep.subr.mxu0 0.0
    %4128 = vmatpush1.msra.mxu0 %v4078
    %4129 = vmatprep.subr.mxu0 0.0
    %4130 = vmatpush1.msra.mxu0 %v4076
    %4131 = vmatprep.subr.mxu0 0.0
    %4132 = vmatpush2.msra.mxu0 0.0
    %4133 = vmatprep.subr.mxu0 0.0
    %4134 = vmatpush2.msra.mxu0 0.0
    %4135 = vmatprep.subr.mxu0 0.0
    %4136 = vmatpush2.msra.mxu0 0.0
    %4137 = vmatprep.subr.mxu0 0.0
    %4138 = vmatpush2.msra.mxu0 0.0
    %4139 = vmatprep.subr.mxu0 0.0
    %4140 = vmatpush2.msra.mxu0 0.0
    %4141 = vmatprep.subr.mxu0 0.0
    %4142 = vmatpush2.msra.mxu0 0.0
    %4143 = vmatprep.subr.mxu0 0.0
    %4144 = vmatpush2.msra.mxu0 0.0
    %4145 = vmatprep.subr.mxu0 0.0
    %4146 = vmatpush2.msra.mxu0 0.0
    %4147 = vmatprep.subr.mxu0 0.0
    %4148 = vmatpush2.msra.mxu0 0.0
    %4149 = vmatprep.subr.mxu0 0.0
    %4150 = vmatpush2.msra.mxu0 0.0
    %4151 = vmatprep.subr.mxu0 0.0
    %4152 = vmatpush2.msra.mxu0 0.0
    %4153 = vmatprep.subr.mxu0 0.0
    %4154 = vmatpush2.msra.mxu0 0.0
    %4155 = vmatprep.subr.mxu0 0.0
    %4156 = vmatpush2.msra.mxu0 0.0
    %4157 = vmatprep.subr.mxu0 0.0
    %4158 = vmatpush2.msra.mxu0 0.0
    %4159 = vmatprep.subr.mxu0 0.0
    %4160 = vmatpush2.msra.mxu0 0.0
    %4161 = vmatprep.subr.mxu0 0.0
    %4162 = vmatpush2.msra.mxu0 0.0
    %4163 = vmatprep.mubr.f32.mxu0 0.0
    %4164 = vmatmul.mubr.f32.gmra.mxu0 %v4088
    %v4165 = vpop.f32.mrf.mxu0
    %v4166 = vadd.f32 0.0, %v4165
    %v4167 = vpop.f32.mrf.mxu0
    %4168 = vmatprep.mubr.f32.mxu0 0.0
    %4169 = vmatmul.mubr.f32.gmra.mxu0 %v4091
    %v4170 = vpop.f32.mrf.mxu0
    %v4171 = vadd.f32 0.0, %v4170
    %v4172 = vpop.f32.mrf.mxu0
    %4173 = vmatprep.mubr.f32.mxu0 0.0
    %4174 = vmatmul.mubr.f32.gmra.mxu0 %v4094
    %v4175 = vpop.f32.mrf.mxu0
    %v4176 = vadd.f32 0.0, %v4175
    %v4177 = vpop.f32.mrf.mxu0
    %4178 = vmatprep.mubr.f32.mxu0 0.0
    %4179 = vmatmul.mubr.f32.gmra.mxu0 %v4097
    %v4180 = vpop.f32.mrf.mxu0
    %v4181 = vadd.f32 0.0, %v4180
    %v4182 = vpop.f32.mrf.mxu0
    %4183 = vdwg.mxu0
    %4184 = vrot.lane.b32.xlu0 %v342, 56
    %v4185 = vpop.permute.xlu0 %4184
    %4186 = vrot.lane.b32.xlu0 %v347, 56
    %v4187 = vpop.permute.xlu0 %4186
    %4188 = vrot.lane.b32.xlu0 %v352, 56
    %v4189 = vpop.permute.xlu0 %4188
    %4190 = vrot.lane.b32.xlu0 %v357, 56
    %v4191 = vpop.permute.xlu0 %4190
    %v4197 = vsel %vm138, %v3942, 0
    %v4200 = vsel %vm138, %v3943, 0
    %v4203 = vsel %vm138, %v3944, 0
    %v4206 = vsel %vm138, %v3945, 0
    %4208 = vmatprep.subr.mxu0 0.0
    %4209 = vmatpush1.msra.mxu0 0.0
    %4210 = vmatprep.subr.mxu0 0.0
    %4211 = vmatpush1.msra.mxu0 0.0
    %4212 = vmatprep.subr.mxu0 0.0
    %4213 = vmatpush1.msra.mxu0 0.0
    %4214 = vmatprep.subr.mxu0 0.0
    %4215 = vmatpush1.msra.mxu0 0.0
    %4216 = vmatprep.subr.mxu0 0.0
    %4217 = vmatpush1.msra.mxu0 0.0
    %4218 = vmatprep.subr.mxu0 0.0
    %4219 = vmatpush1.msra.mxu0 0.0
    %4220 = vmatprep.subr.mxu0 0.0
    %4221 = vmatpush1.msra.mxu0 0.0
    %4222 = vmatprep.subr.mxu0 0.0
    %4223 = vmatpush1.msra.mxu0 0.0
    %4224 = vmatprep.subr.mxu0 0.0
    %4225 = vmatpush1.msra.mxu0 0.0
    %4226 = vmatprep.subr.mxu0 0.0
    %4227 = vmatpush1.msra.mxu0 0.0
    %4228 = vmatprep.subr.mxu0 0.0
    %4229 = vmatpush1.msra.mxu0 0.0
    %4230 = vmatprep.subr.mxu0 0.0
    %4231 = vmatpush1.msra.mxu0 0.0
    %4232 = vmatprep.subr.mxu0 0.0
    %4233 = vmatpush1.msra.mxu0 %v4191
    %4234 = vmatprep.subr.mxu0 0.0
    %4235 = vmatpush1.msra.mxu0 %v4189
    %4236 = vmatprep.subr.mxu0 0.0
    %4237 = vmatpush1.msra.mxu0 %v4187
    %4238 = vmatprep.subr.mxu0 0.0
    %4239 = vmatpush1.msra.mxu0 %v4185
    %4240 = vmatprep.subr.mxu0 0.0
    %4241 = vmatpush2.msra.mxu0 0.0
    %4242 = vmatprep.subr.mxu0 0.0
    %4243 = vmatpush2.msra.mxu0 0.0
    %4244 = vmatprep.subr.mxu0 0.0
    %4245 = vmatpush2.msra.mxu0 0.0
    %4246 = vmatprep.subr.mxu0 0.0
    %4247 = vmatpush2.msra.mxu0 0.0
    %4248 = vmatprep.subr.mxu0 0.0
    %4249 = vmatpush2.msra.mxu0 0.0
    %4250 = vmatprep.subr.mxu0 0.0
    %4251 = vmatpush2.msra.mxu0 0.0
    %4252 = vmatprep.subr.mxu0 0.0
    %4253 = vmatpush2.msra.mxu0 0.0
    %4254 = vmatprep.subr.mxu0 0.0
    %4255 = vmatpush2.msra.mxu0 0.0
    %4256 = vmatprep.subr.mxu0 0.0
    %4257 = vmatpush2.msra.mxu0 0.0
    %4258 = vmatprep.subr.mxu0 0.0
    %4259 = vmatpush2.msra.mxu0 0.0
    %4260 = vmatprep.subr.mxu0 0.0
    %4261 = vmatpush2.msra.mxu0 0.0
    %4262 = vmatprep.subr.mxu0 0.0
    %4263 = vmatpush2.msra.mxu0 0.0
    %4264 = vmatprep.subr.mxu0 0.0
    %4265 = vmatpush2.msra.mxu0 0.0
    %4266 = vmatprep.subr.mxu0 0.0
    %4267 = vmatpush2.msra.mxu0 0.0
    %4268 = vmatprep.subr.mxu0 0.0
    %4269 = vmatpush2.msra.mxu0 0.0
    %4270 = vmatprep.subr.mxu0 0.0
    %4271 = vmatpush2.msra.mxu0 0.0
    %4272 = vmatprep.mubr.f32.mxu0 0.0
    %4273 = vmatmul.mubr.f32.gmra.mxu0 %v4197
    %v4274 = vpop.f32.mrf.mxu0
    %v4275 = vadd.f32 0.0, %v4274
    %v4276 = vpop.f32.mrf.mxu0
    %4277 = vmatprep.mubr.f32.mxu0 0.0
    %4278 = vmatmul.mubr.f32.gmra.mxu0 %v4200
    %v4279 = vpop.f32.mrf.mxu0
    %v4280 = vadd.f32 0.0, %v4279
    %v4281 = vpop.f32.mrf.mxu0
    %4282 = vmatprep.mubr.f32.mxu0 0.0
    %4283 = vmatmul.mubr.f32.gmra.mxu0 %v4203
    %v4284 = vpop.f32.mrf.mxu0
    %v4285 = vadd.f32 0.0, %v4284
    %v4286 = vpop.f32.mrf.mxu0
    %4287 = vmatprep.mubr.f32.mxu0 0.0
    %4288 = vmatmul.mubr.f32.gmra.mxu0 %v4206
    %v4289 = vpop.f32.mrf.mxu0
    %v4290 = vadd.f32 0.0, %v4289
    %v4291 = vpop.f32.mrf.mxu0
    %4292 = vdwg.mxu0
    %4293 = vrot.lane.b32.xlu0 %v362, 56
    %v4294 = vpop.permute.xlu0 %4293
    %4295 = vrot.lane.b32.xlu0 %v367, 56
    %v4296 = vpop.permute.xlu0 %4295
    %4297 = vrot.lane.b32.xlu0 %v372, 56
    %v4298 = vpop.permute.xlu0 %4297
    %4299 = vrot.lane.b32.xlu0 %v377, 56
    %v4300 = vpop.permute.xlu0 %4299
    %v4306 = vsel %vm138, %v3946, 0
    %v4309 = vsel %vm138, %v3947, 0
    %v4312 = vsel %vm138, %v3948, 0
    %v4315 = vsel %vm138, %v3949, 0
    %4317 = vmatprep.subr.mxu0 0.0
    %4318 = vmatpush1.msra.mxu0 0.0
    %4319 = vmatprep.subr.mxu0 0.0
    %4320 = vmatpush1.msra.mxu0 0.0
    %4321 = vmatprep.subr.mxu0 0.0
    %4322 = vmatpush1.msra.mxu0 0.0
    %4323 = vmatprep.subr.mxu0 0.0
    %4324 = vmatpush1.msra.mxu0 0.0
    %4325 = vmatprep.subr.mxu0 0.0
    %4326 = vmatpush1.msra.mxu0 0.0
    %4327 = vmatprep.subr.mxu0 0.0
    %4328 = vmatpush1.msra.mxu0 0.0
    %4329 = vmatprep.subr.mxu0 0.0
    %4330 = vmatpush1.msra.mxu0 0.0
    %4331 = vmatprep.subr.mxu0 0.0
    %4332 = vmatpush1.msra.mxu0 0.0
    %4333 = vmatprep.subr.mxu0 0.0
    %4334 = vmatpush1.msra.mxu0 0.0
    %4335 = vmatprep.subr.mxu0 0.0
    %4336 = vmatpush1.msra.mxu0 0.0
    %4337 = vmatprep.subr.mxu0 0.0
    %4338 = vmatpush1.msra.mxu0 0.0
    %4339 = vmatprep.subr.mxu0 0.0
    %4340 = vmatpush1.msra.mxu0 0.0
    %4341 = vmatprep.subr.mxu0 0.0
    %4342 = vmatpush1.msra.mxu0 %v4300
    %4343 = vmatprep.subr.mxu0 0.0
    %4344 = vmatpush1.msra.mxu0 %v4298
    %4345 = vmatprep.subr.mxu0 0.0
    %4346 = vmatpush1.msra.mxu0 %v4296
    %4347 = vmatprep.subr.mxu0 0.0
    %4348 = vmatpush1.msra.mxu0 %v4294
    %4349 = vmatprep.subr.mxu0 0.0
    %4350 = vmatpush2.msra.mxu0 0.0
    %4351 = vmatprep.subr.mxu0 0.0
    %4352 = vmatpush2.msra.mxu0 0.0
    %4353 = vmatprep.subr.mxu0 0.0
    %4354 = vmatpush2.msra.mxu0 0.0
    %4355 = vmatprep.subr.mxu0 0.0
    %4356 = vmatpush2.msra.mxu0 0.0
    %4357 = vmatprep.subr.mxu0 0.0
    %4358 = vmatpush2.msra.mxu0 0.0
    %4359 = vmatprep.subr.mxu0 0.0
    %4360 = vmatpush2.msra.mxu0 0.0
    %4361 = vmatprep.subr.mxu0 0.0
    %4362 = vmatpush2.msra.mxu0 0.0
    %4363 = vmatprep.subr.mxu0 0.0
    %4364 = vmatpush2.msra.mxu0 0.0
    %4365 = vmatprep.subr.mxu0 0.0
    %4366 = vmatpush2.msra.mxu0 0.0
    %4367 = vmatprep.subr.mxu0 0.0
    %4368 = vmatpush2.msra.mxu0 0.0
    %4369 = vmatprep.subr.mxu0 0.0
    %4370 = vmatpush2.msra.mxu0 0.0
    %4371 = vmatprep.subr.mxu0 0.0
    %4372 = vmatpush2.msra.mxu0 0.0
    %4373 = vmatprep.subr.mxu0 0.0
    %4374 = vmatpush2.msra.mxu0 0.0
    %4375 = vmatprep.subr.mxu0 0.0
    %4376 = vmatpush2.msra.mxu0 0.0
    %4377 = vmatprep.subr.mxu0 0.0
    %4378 = vmatpush2.msra.mxu0 0.0
    %4379 = vmatprep.subr.mxu0 0.0
    %4380 = vmatpush2.msra.mxu0 0.0
    %4381 = vmatprep.mubr.f32.mxu0 0.0
    %4382 = vmatmul.mubr.f32.gmra.mxu0 %v4306
    %v4383 = vpop.f32.mrf.mxu0
    %v4384 = vadd.f32 0.0, %v4383
    %v4385 = vpop.f32.mrf.mxu0
    %4386 = vmatprep.mubr.f32.mxu0 0.0
    %4387 = vmatmul.mubr.f32.gmra.mxu0 %v4309
    %v4388 = vpop.f32.mrf.mxu0
    %v4389 = vadd.f32 0.0, %v4388
    %v4390 = vpop.f32.mrf.mxu0
    %4391 = vmatprep.mubr.f32.mxu0 0.0
    %4392 = vmatmul.mubr.f32.gmra.mxu0 %v4312
    %v4393 = vpop.f32.mrf.mxu0
    %v4394 = vadd.f32 0.0, %v4393
    %v4395 = vpop.f32.mrf.mxu0
    %4396 = vmatprep.mubr.f32.mxu0 0.0
    %4397 = vmatmul.mubr.f32.gmra.mxu0 %v4315
    %v4398 = vpop.f32.mrf.mxu0
    %v4399 = vadd.f32 0.0, %v4398
    %v4400 = vpop.f32.mrf.mxu0
    %4401 = vdwg.mxu0
    %4402 = vrot.lane.b32.xlu0 %v382, 56
    %v4403 = vpop.permute.xlu0 %4402
    %4404 = vrot.lane.b32.xlu0 %v387, 56
    %v4405 = vpop.permute.xlu0 %4404
    %4406 = vrot.lane.b32.xlu0 %v392, 56
    %v4407 = vpop.permute.xlu0 %4406
    %4408 = vrot.lane.b32.xlu0 %v397, 56
    %v4409 = vpop.permute.xlu0 %4408
    %v4415 = vsel %vm138, %v3950, 0
    %v4418 = vsel %vm138, %v3951, 0
    %v4421 = vsel %vm138, %v3952, 0
    %v4424 = vsel %vm138, %v3953, 0
    %4426 = vmatprep.subr.mxu0 0.0
    %4427 = vmatpush1.msra.mxu0 0.0
    %4428 = vmatprep.subr.mxu0 0.0
    %4429 = vmatpush1.msra.mxu0 0.0
    %4430 = vmatprep.subr.mxu0 0.0
    %4431 = vmatpush1.msra.mxu0 0.0
    %4432 = vmatprep.subr.mxu0 0.0
    %4433 = vmatpush1.msra.mxu0 0.0
    %4434 = vmatprep.subr.mxu0 0.0
    %4435 = vmatpush1.msra.mxu0 0.0
    %4436 = vmatprep.subr.mxu0 0.0
    %4437 = vmatpush1.msra.mxu0 0.0
    %4438 = vmatprep.subr.mxu0 0.0
    %4439 = vmatpush1.msra.mxu0 0.0
    %4440 = vmatprep.subr.mxu0 0.0
    %4441 = vmatpush1.msra.mxu0 0.0
    %4442 = vmatprep.subr.mxu0 0.0
    %4443 = vmatpush1.msra.mxu0 0.0
    %4444 = vmatprep.subr.mxu0 0.0
    %4445 = vmatpush1.msra.mxu0 0.0
    %4446 = vmatprep.subr.mxu0 0.0
    %4447 = vmatpush1.msra.mxu0 0.0
    %4448 = vmatprep.subr.mxu0 0.0
    %4449 = vmatpush1.msra.mxu0 0.0
    %4450 = vmatprep.subr.mxu0 0.0
    %4451 = vmatpush1.msra.mxu0 %v4409
    %4452 = vmatprep.subr.mxu0 0.0
    %4453 = vmatpush1.msra.mxu0 %v4407
    %4454 = vmatprep.subr.mxu0 0.0
    %4455 = vmatpush1.msra.mxu0 %v4405
    %4456 = vmatprep.subr.mxu0 0.0
    %4457 = vmatpush1.msra.mxu0 %v4403
    %4458 = vmatprep.subr.mxu0 0.0
    %4459 = vmatpush2.msra.mxu0 0.0
    %4460 = vmatprep.subr.mxu0 0.0
    %4461 = vmatpush2.msra.mxu0 0.0
    %4462 = vmatprep.subr.mxu0 0.0
    %4463 = vmatpush2.msra.mxu0 0.0
    %4464 = vmatprep.subr.mxu0 0.0
    %4465 = vmatpush2.msra.mxu0 0.0
    %4466 = vmatprep.subr.mxu0 0.0
    %4467 = vmatpush2.msra.mxu0 0.0
    %4468 = vmatprep.subr.mxu0 0.0
    %4469 = vmatpush2.msra.mxu0 0.0
    %4470 = vmatprep.subr.mxu0 0.0
    %4471 = vmatpush2.msra.mxu0 0.0
    %4472 = vmatprep.subr.mxu0 0.0
    %4473 = vmatpush2.msra.mxu0 0.0
    %4474 = vmatprep.subr.mxu0 0.0
    %4475 = vmatpush2.msra.mxu0 0.0
    %4476 = vmatprep.subr.mxu0 0.0
    %4477 = vmatpush2.msra.mxu0 0.0
    %4478 = vmatprep.subr.mxu0 0.0
    %4479 = vmatpush2.msra.mxu0 0.0
    %4480 = vmatprep.subr.mxu0 0.0
    %4481 = vmatpush2.msra.mxu0 0.0
    %4482 = vmatprep.subr.mxu0 0.0
    %4483 = vmatpush2.msra.mxu0 0.0
    %4484 = vmatprep.subr.mxu0 0.0
    %4485 = vmatpush2.msra.mxu0 0.0
    %4486 = vmatprep.subr.mxu0 0.0
    %4487 = vmatpush2.msra.mxu0 0.0
    %4488 = vmatprep.subr.mxu0 0.0
    %4489 = vmatpush2.msra.mxu0 0.0
    %4490 = vmatprep.mubr.f32.mxu0 0.0
    %4491 = vmatmul.mubr.f32.gmra.mxu0 %v4415
    %v4492 = vpop.f32.mrf.mxu0
    %v4493 = vadd.f32 0.0, %v4492
    %v4494 = vpop.f32.mrf.mxu0
    %4495 = vmatprep.mubr.f32.mxu0 0.0
    %4496 = vmatmul.mubr.f32.gmra.mxu0 %v4418
    %v4497 = vpop.f32.mrf.mxu0
    %v4498 = vadd.f32 0.0, %v4497
    %v4499 = vpop.f32.mrf.mxu0
    %4500 = vmatprep.mubr.f32.mxu0 0.0
    %4501 = vmatmul.mubr.f32.gmra.mxu0 %v4421
    %v4502 = vpop.f32.mrf.mxu0
    %v4503 = vadd.f32 0.0, %v4502
    %v4504 = vpop.f32.mrf.mxu0
    %4505 = vmatprep.mubr.f32.mxu0 0.0
    %4506 = vmatmul.mubr.f32.gmra.mxu0 %v4424
    %v4507 = vpop.f32.mrf.mxu0
    %v4508 = vadd.f32 0.0, %v4507
    %v4509 = vpop.f32.mrf.mxu0
    %4510 = vdwg.mxu0
    %4511 = vrot.lane.b32.xlu0 %v402, 56
    %v4512 = vpop.permute.xlu0 %4511
    %4513 = vrot.lane.b32.xlu0 %v407, 56
    %v4514 = vpop.permute.xlu0 %4513
    %4515 = vrot.lane.b32.xlu0 %v412, 56
    %v4516 = vpop.permute.xlu0 %4515
    %4517 = vrot.lane.b32.xlu0 %v417, 56
    %v4518 = vpop.permute.xlu0 %4517
    %v4524 = vsel %vm138, %v3954, 0
    %v4527 = vsel %vm138, %v3955, 0
    %v4530 = vsel %vm138, %v3956, 0
    %v4533 = vsel %vm138, %v3957, 0
    %4535 = vmatprep.subr.mxu0 0.0
    %4536 = vmatpush1.msra.mxu0 0.0
    %4537 = vmatprep.subr.mxu0 0.0
    %4538 = vmatpush1.msra.mxu0 0.0
    %4539 = vmatprep.subr.mxu0 0.0
    %4540 = vmatpush1.msra.mxu0 0.0
    %4541 = vmatprep.subr.mxu0 0.0
    %4542 = vmatpush1.msra.mxu0 0.0
    %4543 = vmatprep.subr.mxu0 0.0
    %4544 = vmatpush1.msra.mxu0 0.0
    %4545 = vmatprep.subr.mxu0 0.0
    %4546 = vmatpush1.msra.mxu0 0.0
    %4547 = vmatprep.subr.mxu0 0.0
    %4548 = vmatpush1.msra.mxu0 0.0
    %4549 = vmatprep.subr.mxu0 0.0
    %4550 = vmatpush1.msra.mxu0 0.0
    %4551 = vmatprep.subr.mxu0 0.0
    %4552 = vmatpush1.msra.mxu0 0.0
    %4553 = vmatprep.subr.mxu0 0.0
    %4554 = vmatpush1.msra.mxu0 0.0
    %4555 = vmatprep.subr.mxu0 0.0
    %4556 = vmatpush1.msra.mxu0 0.0
    %4557 = vmatprep.subr.mxu0 0.0
    %4558 = vmatpush1.msra.mxu0 0.0
    %4559 = vmatprep.subr.mxu0 0.0
    %4560 = vmatpush1.msra.mxu0 %v4518
    %4561 = vmatprep.subr.mxu0 0.0
    %4562 = vmatpush1.msra.mxu0 %v4516
    %4563 = vmatprep.subr.mxu0 0.0
    %4564 = vmatpush1.msra.mxu0 %v4514
    %4565 = vmatprep.subr.mxu0 0.0
    %4566 = vmatpush1.msra.mxu0 %v4512
    %4567 = vmatprep.subr.mxu0 0.0
    %4568 = vmatpush2.msra.mxu0 0.0
    %4569 = vmatprep.subr.mxu0 0.0
    %4570 = vmatpush2.msra.mxu0 0.0
    %4571 = vmatprep.subr.mxu0 0.0
    %4572 = vmatpush2.msra.mxu0 0.0
    %4573 = vmatprep.subr.mxu0 0.0
    %4574 = vmatpush2.msra.mxu0 0.0
    %4575 = vmatprep.subr.mxu0 0.0
    %4576 = vmatpush2.msra.mxu0 0.0
    %4577 = vmatprep.subr.mxu0 0.0
    %4578 = vmatpush2.msra.mxu0 0.0
    %4579 = vmatprep.subr.mxu0 0.0
    %4580 = vmatpush2.msra.mxu0 0.0
    %4581 = vmatprep.subr.mxu0 0.0
    %4582 = vmatpush2.msra.mxu0 0.0
    %4583 = vmatprep.subr.mxu0 0.0
    %4584 = vmatpush2.msra.mxu0 0.0
    %4585 = vmatprep.subr.mxu0 0.0
    %4586 = vmatpush2.msra.mxu0 0.0
    %4587 = vmatprep.subr.mxu0 0.0
    %4588 = vmatpush2.msra.mxu0 0.0
    %4589 = vmatprep.subr.mxu0 0.0
    %4590 = vmatpush2.msra.mxu0 0.0
    %4591 = vmatprep.subr.mxu0 0.0
    %4592 = vmatpush2.msra.mxu0 0.0
    %4593 = vmatprep.subr.mxu0 0.0
    %4594 = vmatpush2.msra.mxu0 0.0
    %4595 = vmatprep.subr.mxu0 0.0
    %4596 = vmatpush2.msra.mxu0 0.0
    %4597 = vmatprep.subr.mxu0 0.0
    %4598 = vmatpush2.msra.mxu0 0.0
    %4599 = vmatprep.mubr.f32.mxu0 0.0
    %4600 = vmatmul.mubr.f32.gmra.mxu0 %v4524
    %v4601 = vpop.f32.mrf.mxu0
    %v4602 = vadd.f32 0.0, %v4601
    %v4603 = vpop.f32.mrf.mxu0
    %4604 = vmatprep.mubr.f32.mxu0 0.0
    %4605 = vmatmul.mubr.f32.gmra.mxu0 %v4527
    %v4606 = vpop.f32.mrf.mxu0
    %v4607 = vadd.f32 0.0, %v4606
    %v4608 = vpop.f32.mrf.mxu0
    %4609 = vmatprep.mubr.f32.mxu0 0.0
    %4610 = vmatmul.mubr.f32.gmra.mxu0 %v4530
    %v4611 = vpop.f32.mrf.mxu0
    %v4612 = vadd.f32 0.0, %v4611
    %v4613 = vpop.f32.mrf.mxu0
    %4614 = vmatprep.mubr.f32.mxu0 0.0
    %4615 = vmatmul.mubr.f32.gmra.mxu0 %v4533
    %v4616 = vpop.f32.mrf.mxu0
    %v4617 = vadd.f32 0.0, %v4616
    %v4618 = vpop.f32.mrf.mxu0
    %4619 = vdwg.mxu0
    %4620 = vrot.lane.b32.xlu0 %v422, 56
    %v4621 = vpop.permute.xlu0 %4620
    %4622 = vrot.lane.b32.xlu0 %v427, 56
    %v4623 = vpop.permute.xlu0 %4622
    %4624 = vrot.lane.b32.xlu0 %v432, 56
    %v4625 = vpop.permute.xlu0 %4624
    %4626 = vrot.lane.b32.xlu0 %v437, 56
    %v4627 = vpop.permute.xlu0 %4626
    %v4633 = vsel %vm138, %v3958, 0
    %v4636 = vsel %vm138, %v3959, 0
    %v4639 = vsel %vm138, %v3960, 0
    %v4642 = vsel %vm138, %v3961, 0
    %4644 = vmatprep.subr.mxu0 0.0
    %4645 = vmatpush1.msra.mxu0 0.0
    %4646 = vmatprep.subr.mxu0 0.0
    %4647 = vmatpush1.msra.mxu0 0.0
    %4648 = vmatprep.subr.mxu0 0.0
    %4649 = vmatpush1.msra.mxu0 0.0
    %4650 = vmatprep.subr.mxu0 0.0
    %4651 = vmatpush1.msra.mxu0 0.0
    %4652 = vmatprep.subr.mxu0 0.0
    %4653 = vmatpush1.msra.mxu0 0.0
    %4654 = vmatprep.subr.mxu0 0.0
    %4655 = vmatpush1.msra.mxu0 0.0
    %4656 = vmatprep.subr.mxu0 0.0
    %4657 = vmatpush1.msra.mxu0 0.0
    %4658 = vmatprep.subr.mxu0 0.0
    %4659 = vmatpush1.msra.mxu0 0.0
    %4660 = vmatprep.subr.mxu0 0.0
    %4661 = vmatpush1.msra.mxu0 0.0
    %4662 = vmatprep.subr.mxu0 0.0
    %4663 = vmatpush1.msra.mxu0 0.0
    %4664 = vmatprep.subr.mxu0 0.0
    %4665 = vmatpush1.msra.mxu0 0.0
    %4666 = vmatprep.subr.mxu0 0.0
    %4667 = vmatpush1.msra.mxu0 0.0
    %4668 = vmatprep.subr.mxu0 0.0
    %4669 = vmatpush1.msra.mxu0 %v4627
    %4670 = vmatprep.subr.mxu0 0.0
    %4671 = vmatpush1.msra.mxu0 %v4625
    %4672 = vmatprep.subr.mxu0 0.0
    %4673 = vmatpush1.msra.mxu0 %v4623
    %4674 = vmatprep.subr.mxu0 0.0
    %4675 = vmatpush1.msra.mxu0 %v4621
    %4676 = vmatprep.subr.mxu0 0.0
    %4677 = vmatpush2.msra.mxu0 0.0
    %4678 = vmatprep.subr.mxu0 0.0
    %4679 = vmatpush2.msra.mxu0 0.0
    %4680 = vmatprep.subr.mxu0 0.0
    %4681 = vmatpush2.msra.mxu0 0.0
    %4682 = vmatprep.subr.mxu0 0.0
    %4683 = vmatpush2.msra.mxu0 0.0
    %4684 = vmatprep.subr.mxu0 0.0
    %4685 = vmatpush2.msra.mxu0 0.0
    %4686 = vmatprep.subr.mxu0 0.0
    %4687 = vmatpush2.msra.mxu0 0.0
    %4688 = vmatprep.subr.mxu0 0.0
    %4689 = vmatpush2.msra.mxu0 0.0
    %4690 = vmatprep.subr.mxu0 0.0
    %4691 = vmatpush2.msra.mxu0 0.0
    %4692 = vmatprep.subr.mxu0 0.0
    %4693 = vmatpush2.msra.mxu0 0.0
    %4694 = vmatprep.subr.mxu0 0.0
    %4695 = vmatpush2.msra.mxu0 0.0
    %4696 = vmatprep.subr.mxu0 0.0
    %4697 = vmatpush2.msra.mxu0 0.0
    %4698 = vmatprep.subr.mxu0 0.0
    %4699 = vmatpush2.msra.mxu0 0.0
    %4700 = vmatprep.subr.mxu0 0.0
    %4701 = vmatpush2.msra.mxu0 0.0
    %4702 = vmatprep.subr.mxu0 0.0
    %4703 = vmatpush2.msra.mxu0 0.0
    %4704 = vmatprep.subr.mxu0 0.0
    %4705 = vmatpush2.msra.mxu0 0.0
    %4706 = vmatprep.subr.mxu0 0.0
    %4707 = vmatpush2.msra.mxu0 0.0
    %4708 = vmatprep.mubr.f32.mxu0 0.0
    %4709 = vmatmul.mubr.f32.gmra.mxu0 %v4633
    %v4710 = vpop.f32.mrf.mxu0
    %v4711 = vadd.f32 0.0, %v4710
    %v4712 = vpop.f32.mrf.mxu0
    %4713 = vmatprep.mubr.f32.mxu0 0.0
    %4714 = vmatmul.mubr.f32.gmra.mxu0 %v4636
    %v4715 = vpop.f32.mrf.mxu0
    %v4716 = vadd.f32 0.0, %v4715
    %v4717 = vpop.f32.mrf.mxu0
    %4718 = vmatprep.mubr.f32.mxu0 0.0
    %4719 = vmatmul.mubr.f32.gmra.mxu0 %v4639
    %v4720 = vpop.f32.mrf.mxu0
    %v4721 = vadd.f32 0.0, %v4720
    %v4722 = vpop.f32.mrf.mxu0
    %4723 = vmatprep.mubr.f32.mxu0 0.0
    %4724 = vmatmul.mubr.f32.gmra.mxu0 %v4642
    %v4725 = vpop.f32.mrf.mxu0
    %v4726 = vadd.f32 0.0, %v4725
    %v4727 = vpop.f32.mrf.mxu0
    %4728 = vdwg.mxu0
    %4729 = vrot.lane.b32.xlu0 %v442, 56
    %v4730 = vpop.permute.xlu0 %4729
    %4731 = vrot.lane.b32.xlu0 %v447, 56
    %v4732 = vpop.permute.xlu0 %4731
    %4733 = vrot.lane.b32.xlu0 %v452, 56
    %v4734 = vpop.permute.xlu0 %4733
    %4735 = vrot.lane.b32.xlu0 %v457, 56
    %v4736 = vpop.permute.xlu0 %4735
    %v4742 = vsel %vm138, %v3962, 0
    %v4745 = vsel %vm138, %v3963, 0
    %v4748 = vsel %vm138, %v3964, 0
    %v4751 = vsel %vm138, %v3965, 0
    %4753 = vmatprep.subr.mxu0 0.0
    %4754 = vmatpush1.msra.mxu0 0.0
    %4755 = vmatprep.subr.mxu0 0.0
    %4756 = vmatpush1.msra.mxu0 0.0
    %4757 = vmatprep.subr.mxu0 0.0
    %4758 = vmatpush1.msra.mxu0 0.0
    %4759 = vmatprep.subr.mxu0 0.0
    %4760 = vmatpush1.msra.mxu0 0.0
    %4761 = vmatprep.subr.mxu0 0.0
    %4762 = vmatpush1.msra.mxu0 0.0
    %4763 = vmatprep.subr.mxu0 0.0
    %4764 = vmatpush1.msra.mxu0 0.0
    %4765 = vmatprep.subr.mxu0 0.0
    %4766 = vmatpush1.msra.mxu0 0.0
    %4767 = vmatprep.subr.mxu0 0.0
    %4768 = vmatpush1.msra.mxu0 0.0
    %4769 = vmatprep.subr.mxu0 0.0
    %4770 = vmatpush1.msra.mxu0 0.0
    %4771 = vmatprep.subr.mxu0 0.0
    %4772 = vmatpush1.msra.mxu0 0.0
    %4773 = vmatprep.subr.mxu0 0.0
    %4774 = vmatpush1.msra.mxu0 0.0
    %4775 = vmatprep.subr.mxu0 0.0
    %4776 = vmatpush1.msra.mxu0 0.0
    %4777 = vmatprep.subr.mxu0 0.0
    %4778 = vmatpush1.msra.mxu0 %v4736
    %4779 = vmatprep.subr.mxu0 0.0
    %4780 = vmatpush1.msra.mxu0 %v4734
    %4781 = vmatprep.subr.mxu0 0.0
    %4782 = vmatpush1.msra.mxu0 %v4732
    %4783 = vmatprep.subr.mxu0 0.0
    %4784 = vmatpush1.msra.mxu0 %v4730
    %4785 = vmatprep.subr.mxu0 0.0
    %4786 = vmatpush2.msra.mxu0 0.0
    %4787 = vmatprep.subr.mxu0 0.0
    %4788 = vmatpush2.msra.mxu0 0.0
    %4789 = vmatprep.subr.mxu0 0.0
    %4790 = vmatpush2.msra.mxu0 0.0
    %4791 = vmatprep.subr.mxu0 0.0
    %4792 = vmatpush2.msra.mxu0 0.0
    %4793 = vmatprep.subr.mxu0 0.0
    %4794 = vmatpush2.msra.mxu0 0.0
    %4795 = vmatprep.subr.mxu0 0.0
    %4796 = vmatpush2.msra.mxu0 0.0
    %4797 = vmatprep.subr.mxu0 0.0
    %4798 = vmatpush2.msra.mxu0 0.0
    %4799 = vmatprep.subr.mxu0 0.0
    %4800 = vmatpush2.msra.mxu0 0.0
    %4801 = vmatprep.subr.mxu0 0.0
    %4802 = vmatpush2.msra.mxu0 0.0
    %4803 = vmatprep.subr.mxu0 0.0
    %4804 = vmatpush2.msra.mxu0 0.0
    %4805 = vmatprep.subr.mxu0 0.0
    %4806 = vmatpush2.msra.mxu0 0.0
    %4807 = vmatprep.subr.mxu0 0.0
    %4808 = vmatpush2.msra.mxu0 0.0
    %4809 = vmatprep.subr.mxu0 0.0
    %4810 = vmatpush2.msra.mxu0 0.0
    %4811 = vmatprep.subr.mxu0 0.0
    %4812 = vmatpush2.msra.mxu0 0.0
    %4813 = vmatprep.subr.mxu0 0.0
    %4814 = vmatpush2.msra.mxu0 0.0
    %4815 = vmatprep.subr.mxu0 0.0
    %4816 = vmatpush2.msra.mxu0 0.0
    %4817 = vmatprep.mubr.f32.mxu0 0.0
    %4818 = vmatmul.mubr.f32.gmra.mxu0 %v4742
    %v4819 = vpop.f32.mrf.mxu0
    %v4820 = vadd.f32 0.0, %v4819
    %v4821 = vpop.f32.mrf.mxu0
    %4822 = vmatprep.mubr.f32.mxu0 0.0
    %4823 = vmatmul.mubr.f32.gmra.mxu0 %v4745
    %v4824 = vpop.f32.mrf.mxu0
    %v4825 = vadd.f32 0.0, %v4824
    %v4826 = vpop.f32.mrf.mxu0
    %4827 = vmatprep.mubr.f32.mxu0 0.0
    %4828 = vmatmul.mubr.f32.gmra.mxu0 %v4748
    %v4829 = vpop.f32.mrf.mxu0
    %v4830 = vadd.f32 0.0, %v4829
    %v4831 = vpop.f32.mrf.mxu0
    %4832 = vmatprep.mubr.f32.mxu0 0.0
    %4833 = vmatmul.mubr.f32.gmra.mxu0 %v4751
    %v4834 = vpop.f32.mrf.mxu0
    %v4835 = vadd.f32 0.0, %v4834
    %v4836 = vpop.f32.mrf.mxu0
    %4837 = vdwg.mxu0
    %s4838 = scalar_lea.vmem [#allocation7], 64
    %v4839 = vld [vmem:[%s4838] sm:$0xff]
    %v4840 = vld [vmem:[%s4838 + $0x8] sm:$0xff]
    %v4841 = vld [vmem:[%s4838 + $0x10] sm:$0xff]
    %v4842 = vld [vmem:[%s4838 + $0x18] sm:$0xff]
    %4843 = vrot.lane.b32.xlu0 %v302, 112
    %v4844 = vpop.permute.xlu0 %4843
    %4845 = vrot.lane.b32.xlu0 %v307, 112
    %v4846 = vpop.permute.xlu0 %4845
    %4847 = vrot.lane.b32.xlu0 %v312, 112
    %v4848 = vpop.permute.xlu0 %4847
    %4849 = vrot.lane.b32.xlu0 %v317, 112
    %v4850 = vpop.permute.xlu0 %4849
    %4851 = vrot.lane.b32.xlu0 %v302, 80
    %v4852 = vpop.permute.xlu0 %4851
    %4853 = vrot.lane.b32.xlu0 %v307, 80
    %v4854 = vpop.permute.xlu0 %4853
    %4855 = vrot.lane.b32.xlu0 %v312, 80
    %v4856 = vpop.permute.xlu0 %4855
    %4857 = vrot.lane.b32.xlu0 %v317, 80
    %v4858 = vpop.permute.xlu0 %4857
    %v4859 = vsel %vm492, %v4844, 0
    %v4861 = vsel %vm492, %v4846, 0
    %v4863 = vsel %vm492, %v4848, 0
    %v4865 = vsel %vm492, %v4850, 0
    %v4867 = vsel %vm492, %v4852, 0
    %v4869 = vsel %vm492, %v4854, 0
    %v4871 = vsel %vm492, %v4856, 0
    %v4873 = vsel %vm492, %v4858, 0
    %4875 = vmatprep.subr.mxu0 0.0
    %4876 = vmatpush1.xpose.msra.mxu0 0.0
    %4877 = vmatprep.subr.mxu0 0.0
    %4878 = vmatpush1.xpose.msra.mxu0 0.0
    %4879 = vmatprep.subr.mxu0 0.0
    %4880 = vmatpush1.xpose.msra.mxu0 0.0
    %4881 = vmatprep.subr.mxu0 0.0
    %4882 = vmatpush1.xpose.msra.mxu0 0.0
    %4883 = vmatprep.subr.mxu0 0.0
    %4884 = vmatpush1.xpose.msra.mxu0 0.0
    %4885 = vmatprep.subr.mxu0 0.0
    %4886 = vmatpush1.xpose.msra.mxu0 0.0
    %4887 = vmatprep.subr.mxu0 0.0
    %4888 = vmatpush1.xpose.msra.mxu0 0.0
    %4889 = vmatprep.subr.mxu0 0.0
    %4890 = vmatpush1.xpose.msra.mxu0 0.0
    %4891 = vmatprep.subr.mxu0 0.0
    %4892 = vmatpush1.xpose.msra.mxu0 0.0
    %4893 = vmatprep.subr.mxu0 0.0
    %4894 = vmatpush1.xpose.msra.mxu0 0.0
    %4895 = vmatprep.subr.mxu0 0.0
    %4896 = vmatpush1.xpose.msra.mxu0 0.0
    %4897 = vmatprep.subr.mxu0 0.0
    %4898 = vmatpush1.xpose.msra.mxu0 0.0
    %4899 = vmatprep.subr.mxu0 0.0
    %4900 = vmatpush1.xpose.msra.mxu0 %v4873
    %4901 = vmatprep.subr.mxu0 0.0
    %4902 = vmatpush1.xpose.msra.mxu0 %v4871
    %4903 = vmatprep.subr.mxu0 0.0
    %4904 = vmatpush1.xpose.msra.mxu0 %v4869
    %4905 = vmatprep.subr.mxu0 0.0
    %4906 = vmatpush1.xpose.msra.mxu0 %v4867
    %4907 = vmatprep.subr.mxu0 0.0
    %4908 = vmatpush2.xpose.msra.mxu0 0.0
    %4909 = vmatprep.subr.mxu0 0.0
    %4910 = vmatpush2.xpose.msra.mxu0 0.0
    %4911 = vmatprep.subr.mxu0 0.0
    %4912 = vmatpush2.xpose.msra.mxu0 0.0
    %4913 = vmatprep.subr.mxu0 0.0
    %4914 = vmatpush2.xpose.msra.mxu0 0.0
    %4915 = vmatprep.subr.mxu0 0.0
    %4916 = vmatpush2.xpose.msra.mxu0 0.0
    %4917 = vmatprep.subr.mxu0 0.0
    %4918 = vmatpush2.xpose.msra.mxu0 0.0
    %4919 = vmatprep.subr.mxu0 0.0
    %4920 = vmatpush2.xpose.msra.mxu0 0.0
    %4921 = vmatprep.subr.mxu0 0.0
    %4922 = vmatpush2.xpose.msra.mxu0 0.0
    %4923 = vmatprep.subr.mxu0 0.0
    %4924 = vmatpush2.xpose.msra.mxu0 0.0
    %4925 = vmatprep.subr.mxu0 0.0
    %4926 = vmatpush2.xpose.msra.mxu0 0.0
    %4927 = vmatprep.subr.mxu0 0.0
    %4928 = vmatpush2.xpose.msra.mxu0 0.0
    %4929 = vmatprep.subr.mxu0 0.0
    %4930 = vmatpush2.xpose.msra.mxu0 0.0
    %4931 = vmatprep.subr.mxu0 0.0
    %4932 = vmatpush2.xpose.msra.mxu0 0.0
    %4933 = vmatprep.subr.mxu0 0.0
    %4934 = vmatpush2.xpose.msra.mxu0 0.0
    %4935 = vmatprep.subr.mxu0 0.0
    %4936 = vmatpush2.xpose.msra.mxu0 0.0
    %4937 = vmatprep.subr.mxu0 0.0
    %4938 = vmatpush2.xpose.msra.mxu0 0.0
    %4939 = vmatprep.mubr.f32.mxu0 0.0
    %4940 = vmatmul.mubr.f32.gmra.mxu0 %v4859
    %v4941 = vpop.f32.mrf.mxu0
    %v4942 = vadd.f32 %v4839, %v4941
    %v4943 = vpop.f32.mrf.mxu0
    %4944 = vmatprep.mubr.f32.mxu0 0.0
    %4945 = vmatmul.mubr.f32.gmra.mxu0 %v4861
    %v4946 = vpop.f32.mrf.mxu0
    %v4947 = vadd.f32 %v4840, %v4946
    %v4948 = vpop.f32.mrf.mxu0
    %4949 = vmatprep.mubr.f32.mxu0 0.0
    %4950 = vmatmul.mubr.f32.gmra.mxu0 %v4863
    %v4951 = vpop.f32.mrf.mxu0
    %v4952 = vadd.f32 %v4841, %v4951
    %v4953 = vpop.f32.mrf.mxu0
    %4954 = vmatprep.mubr.f32.mxu0 0.0
    %4955 = vmatmul.mubr.f32.gmra.mxu0 %v4865
    %v4956 = vpop.f32.mrf.mxu0
    %v4957 = vadd.f32 %v4842, %v4956
    %v4958 = vpop.f32.mrf.mxu0
    %4959 = vdwg.mxu0
    %4960 = vrot.lane.b32.xlu0 %v322, 112
    %v4961 = vpop.permute.xlu0 %4960
    %4962 = vrot.lane.b32.xlu0 %v327, 112
    %v4963 = vpop.permute.xlu0 %4962
    %4964 = vrot.lane.b32.xlu0 %v332, 112
    %v4965 = vpop.permute.xlu0 %4964
    %4966 = vrot.lane.b32.xlu0 %v337, 112
    %v4967 = vpop.permute.xlu0 %4966
    %4968 = vrot.lane.b32.xlu0 %v322, 80
    %v4969 = vpop.permute.xlu0 %4968
    %4970 = vrot.lane.b32.xlu0 %v327, 80
    %v4971 = vpop.permute.xlu0 %4970
    %4972 = vrot.lane.b32.xlu0 %v332, 80
    %v4973 = vpop.permute.xlu0 %4972
    %4974 = vrot.lane.b32.xlu0 %v337, 80
    %v4975 = vpop.permute.xlu0 %4974
    %v4976 = vsel %vm492, %v4961, 0
    %v4978 = vsel %vm492, %v4963, 0
    %v4980 = vsel %vm492, %v4965, 0
    %v4982 = vsel %vm492, %v4967, 0
    %v4984 = vsel %vm492, %v4969, 0
    %v4986 = vsel %vm492, %v4971, 0
    %v4988 = vsel %vm492, %v4973, 0
    %v4990 = vsel %vm492, %v4975, 0
    %4992 = vmatprep.subr.mxu0 0.0
    %4993 = vmatpush1.xpose.msra.mxu0 0.0
    %4994 = vmatprep.subr.mxu0 0.0
    %4995 = vmatpush1.xpose.msra.mxu0 0.0
    %4996 = vmatprep.subr.mxu0 0.0
    %4997 = vmatpush1.xpose.msra.mxu0 0.0
    %4998 = vmatprep.subr.mxu0 0.0
    %4999 = vmatpush1.xpose.msra.mxu0 0.0
    %5000 = vmatprep.subr.mxu0 0.0
    %5001 = vmatpush1.xpose.msra.mxu0 0.0
    %5002 = vmatprep.subr.mxu0 0.0
    %5003 = vmatpush1.xpose.msra.mxu0 0.0
    %5004 = vmatprep.subr.mxu0 0.0
    %5005 = vmatpush1.xpose.msra.mxu0 0.0
    %5006 = vmatprep.subr.mxu0 0.0
    %5007 = vmatpush1.xpose.msra.mxu0 0.0
    %5008 = vmatprep.subr.mxu0 0.0
    %5009 = vmatpush1.xpose.msra.mxu0 0.0
    %5010 = vmatprep.subr.mxu0 0.0
    %5011 = vmatpush1.xpose.msra.mxu0 0.0
    %5012 = vmatprep.subr.mxu0 0.0
    %5013 = vmatpush1.xpose.msra.mxu0 0.0
    %5014 = vmatprep.subr.mxu0 0.0
    %5015 = vmatpush1.xpose.msra.mxu0 0.0
    %5016 = vmatprep.subr.mxu0 0.0
    %5017 = vmatpush1.xpose.msra.mxu0 %v4990
    %5018 = vmatprep.subr.mxu0 0.0
    %5019 = vmatpush1.xpose.msra.mxu0 %v4988
    %5020 = vmatprep.subr.mxu0 0.0
    %5021 = vmatpush1.xpose.msra.mxu0 %v4986
    %5022 = vmatprep.subr.mxu0 0.0
    %5023 = vmatpush1.xpose.msra.mxu0 %v4984
    %5024 = vmatprep.subr.mxu0 0.0
    %5025 = vmatpush2.xpose.msra.mxu0 0.0
    %5026 = vmatprep.subr.mxu0 0.0
    %5027 = vmatpush2.xpose.msra.mxu0 0.0
    %5028 = vmatprep.subr.mxu0 0.0
    %5029 = vmatpush2.xpose.msra.mxu0 0.0
    %5030 = vmatprep.subr.mxu0 0.0
    %5031 = vmatpush2.xpose.msra.mxu0 0.0
    %5032 = vmatprep.subr.mxu0 0.0
    %5033 = vmatpush2.xpose.msra.mxu0 0.0
    %5034 = vmatprep.subr.mxu0 0.0
    %5035 = vmatpush2.xpose.msra.mxu0 0.0
    %5036 = vmatprep.subr.mxu0 0.0
    %5037 = vmatpush2.xpose.msra.mxu0 0.0
    %5038 = vmatprep.subr.mxu0 0.0
    %5039 = vmatpush2.xpose.msra.mxu0 0.0
    %5040 = vmatprep.subr.mxu0 0.0
    %5041 = vmatpush2.xpose.msra.mxu0 0.0
    %5042 = vmatprep.subr.mxu0 0.0
    %5043 = vmatpush2.xpose.msra.mxu0 0.0
    %5044 = vmatprep.subr.mxu0 0.0
    %5045 = vmatpush2.xpose.msra.mxu0 0.0
    %5046 = vmatprep.subr.mxu0 0.0
    %5047 = vmatpush2.xpose.msra.mxu0 0.0
    %5048 = vmatprep.subr.mxu0 0.0
    %5049 = vmatpush2.xpose.msra.mxu0 0.0
    %5050 = vmatprep.subr.mxu0 0.0
    %5051 = vmatpush2.xpose.msra.mxu0 0.0
    %5052 = vmatprep.subr.mxu0 0.0
    %5053 = vmatpush2.xpose.msra.mxu0 0.0
    %5054 = vmatprep.subr.mxu0 0.0
    %5055 = vmatpush2.xpose.msra.mxu0 0.0
    %5056 = vmatprep.mubr.f32.mxu0 0.0
    %5057 = vmatmul.mubr.f32.gmra.mxu0 %v4976
    %v5058 = vpop.f32.mrf.mxu0
    %v5059 = vadd.f32 %v4839, %v5058
    %v5060 = vpop.f32.mrf.mxu0
    %5061 = vmatprep.mubr.f32.mxu0 0.0
    %5062 = vmatmul.mubr.f32.gmra.mxu0 %v4978
    %v5063 = vpop.f32.mrf.mxu0
    %v5064 = vadd.f32 %v4840, %v5063
    %v5065 = vpop.f32.mrf.mxu0
    %5066 = vmatprep.mubr.f32.mxu0 0.0
    %5067 = vmatmul.mubr.f32.gmra.mxu0 %v4980
    %v5068 = vpop.f32.mrf.mxu0
    %v5069 = vadd.f32 %v4841, %v5068
    %v5070 = vpop.f32.mrf.mxu0
    %5071 = vmatprep.mubr.f32.mxu0 0.0
    %5072 = vmatmul.mubr.f32.gmra.mxu0 %v4982
    %v5073 = vpop.f32.mrf.mxu0
    %v5074 = vadd.f32 %v4842, %v5073
    %v5075 = vpop.f32.mrf.mxu0
    %5076 = vdwg.mxu0
    %5077 = vrot.lane.b32.xlu0 %v342, 112
    %v5078 = vpop.permute.xlu0 %5077
    %5079 = vrot.lane.b32.xlu0 %v347, 112
    %v5080 = vpop.permute.xlu0 %5079
    %5081 = vrot.lane.b32.xlu0 %v352, 112
    %v5082 = vpop.permute.xlu0 %5081
    %5083 = vrot.lane.b32.xlu0 %v357, 112
    %v5084 = vpop.permute.xlu0 %5083
    %5085 = vrot.lane.b32.xlu0 %v342, 80
    %v5086 = vpop.permute.xlu0 %5085
    %5087 = vrot.lane.b32.xlu0 %v347, 80
    %v5088 = vpop.permute.xlu0 %5087
    %5089 = vrot.lane.b32.xlu0 %v352, 80
    %v5090 = vpop.permute.xlu0 %5089
    %5091 = vrot.lane.b32.xlu0 %v357, 80
    %v5092 = vpop.permute.xlu0 %5091
    %v5093 = vsel %vm492, %v5078, 0
    %v5095 = vsel %vm492, %v5080, 0
    %v5097 = vsel %vm492, %v5082, 0
    %v5099 = vsel %vm492, %v5084, 0
    %v5101 = vsel %vm492, %v5086, 0
    %v5103 = vsel %vm492, %v5088, 0
    %v5105 = vsel %vm492, %v5090, 0
    %v5107 = vsel %vm492, %v5092, 0
    %5109 = vmatprep.subr.mxu0 0.0
    %5110 = vmatpush1.xpose.msra.mxu0 0.0
    %5111 = vmatprep.subr.mxu0 0.0
    %5112 = vmatpush1.xpose.msra.mxu0 0.0
    %5113 = vmatprep.subr.mxu0 0.0
    %5114 = vmatpush1.xpose.msra.mxu0 0.0
    %5115 = vmatprep.subr.mxu0 0.0
    %5116 = vmatpush1.xpose.msra.mxu0 0.0
    %5117 = vmatprep.subr.mxu0 0.0
    %5118 = vmatpush1.xpose.msra.mxu0 0.0
    %5119 = vmatprep.subr.mxu0 0.0
    %5120 = vmatpush1.xpose.msra.mxu0 0.0
    %5121 = vmatprep.subr.mxu0 0.0
    %5122 = vmatpush1.xpose.msra.mxu0 0.0
    %5123 = vmatprep.subr.mxu0 0.0
    %5124 = vmatpush1.xpose.msra.mxu0 0.0
    %5125 = vmatprep.subr.mxu0 0.0
    %5126 = vmatpush1.xpose.msra.mxu0 0.0
    %5127 = vmatprep.subr.mxu0 0.0
    %5128 = vmatpush1.xpose.msra.mxu0 0.0
    %5129 = vmatprep.subr.mxu0 0.0
    %5130 = vmatpush1.xpose.msra.mxu0 0.0
    %5131 = vmatprep.subr.mxu0 0.0
    %5132 = vmatpush1.xpose.msra.mxu0 0.0
    %5133 = vmatprep.subr.mxu0 0.0
    %5134 = vmatpush1.xpose.msra.mxu0 %v5107
    %5135 = vmatprep.subr.mxu0 0.0
    %5136 = vmatpush1.xpose.msra.mxu0 %v5105
    %5137 = vmatprep.subr.mxu0 0.0
    %5138 = vmatpush1.xpose.msra.mxu0 %v5103
    %5139 = vmatprep.subr.mxu0 0.0
    %5140 = vmatpush1.xpose.msra.mxu0 %v5101
    %5141 = vmatprep.subr.mxu0 0.0
    %5142 = vmatpush2.xpose.msra.mxu0 0.0
    %5143 = vmatprep.subr.mxu0 0.0
    %5144 = vmatpush2.xpose.msra.mxu0 0.0
    %5145 = vmatprep.subr.mxu0 0.0
    %5146 = vmatpush2.xpose.msra.mxu0 0.0
    %5147 = vmatprep.subr.mxu0 0.0
    %5148 = vmatpush2.xpose.msra.mxu0 0.0
    %5149 = vmatprep.subr.mxu0 0.0
    %5150 = vmatpush2.xpose.msra.mxu0 0.0
    %5151 = vmatprep.subr.mxu0 0.0
    %5152 = vmatpush2.xpose.msra.mxu0 0.0
    %5153 = vmatprep.subr.mxu0 0.0
    %5154 = vmatpush2.xpose.msra.mxu0 0.0
    %5155 = vmatprep.subr.mxu0 0.0
    %5156 = vmatpush2.xpose.msra.mxu0 0.0
    %5157 = vmatprep.subr.mxu0 0.0
    %5158 = vmatpush2.xpose.msra.mxu0 0.0
    %5159 = vmatprep.subr.mxu0 0.0
    %5160 = vmatpush2.xpose.msra.mxu0 0.0
    %5161 = vmatprep.subr.mxu0 0.0
    %5162 = vmatpush2.xpose.msra.mxu0 0.0
    %5163 = vmatprep.subr.mxu0 0.0
    %5164 = vmatpush2.xpose.msra.mxu0 0.0
    %5165 = vmatprep.subr.mxu0 0.0
    %5166 = vmatpush2.xpose.msra.mxu0 0.0
    %5167 = vmatprep.subr.mxu0 0.0
    %5168 = vmatpush2.xpose.msra.mxu0 0.0
    %5169 = vmatprep.subr.mxu0 0.0
    %5170 = vmatpush2.xpose.msra.mxu0 0.0
    %5171 = vmatprep.subr.mxu0 0.0
    %5172 = vmatpush2.xpose.msra.mxu0 0.0
    %5173 = vmatprep.mubr.f32.mxu0 0.0
    %5174 = vmatmul.mubr.f32.gmra.mxu0 %v5093
    %v5175 = vpop.f32.mrf.mxu0
    %v5176 = vadd.f32 %v4839, %v5175
    %v5177 = vpop.f32.mrf.mxu0
    %5178 = vmatprep.mubr.f32.mxu0 0.0
    %5179 = vmatmul.mubr.f32.gmra.mxu0 %v5095
    %v5180 = vpop.f32.mrf.mxu0
    %v5181 = vadd.f32 %v4840, %v5180
    %v5182 = vpop.f32.mrf.mxu0
    %5183 = vmatprep.mubr.f32.mxu0 0.0
    %5184 = vmatmul.mubr.f32.gmra.mxu0 %v5097
    %v5185 = vpop.f32.mrf.mxu0
    %v5186 = vadd.f32 %v4841, %v5185
    %v5187 = vpop.f32.mrf.mxu0
    %5188 = vmatprep.mubr.f32.mxu0 0.0
    %5189 = vmatmul.mubr.f32.gmra.mxu0 %v5099
    %v5190 = vpop.f32.mrf.mxu0
    %v5191 = vadd.f32 %v4842, %v5190
    %v5192 = vpop.f32.mrf.mxu0
    %5193 = vdwg.mxu0
    %5194 = vrot.lane.b32.xlu0 %v362, 112
    %v5195 = vpop.permute.xlu0 %5194
    %5196 = vrot.lane.b32.xlu0 %v367, 112
    %v5197 = vpop.permute.xlu0 %5196
    %5198 = vrot.lane.b32.xlu0 %v372, 112
    %v5199 = vpop.permute.xlu0 %5198
    %5200 = vrot.lane.b32.xlu0 %v377, 112
    %v5201 = vpop.permute.xlu0 %5200
    %5202 = vrot.lane.b32.xlu0 %v362, 80
    %v5203 = vpop.permute.xlu0 %5202
    %5204 = vrot.lane.b32.xlu0 %v367, 80
    %v5205 = vpop.permute.xlu0 %5204
    %5206 = vrot.lane.b32.xlu0 %v372, 80
    %v5207 = vpop.permute.xlu0 %5206
    %5208 = vrot.lane.b32.xlu0 %v377, 80
    %v5209 = vpop.permute.xlu0 %5208
    %v5210 = vsel %vm492, %v5195, 0
    %v5212 = vsel %vm492, %v5197, 0
    %v5214 = vsel %vm492, %v5199, 0
    %v5216 = vsel %vm492, %v5201, 0
    %v5218 = vsel %vm492, %v5203, 0
    %v5220 = vsel %vm492, %v5205, 0
    %v5222 = vsel %vm492, %v5207, 0
    %v5224 = vsel %vm492, %v5209, 0
    %5226 = vmatprep.subr.mxu0 0.0
    %5227 = vmatpush1.xpose.msra.mxu0 0.0
    %5228 = vmatprep.subr.mxu0 0.0
    %5229 = vmatpush1.xpose.msra.mxu0 0.0
    %5230 = vmatprep.subr.mxu0 0.0
    %5231 = vmatpush1.xpose.msra.mxu0 0.0
    %5232 = vmatprep.subr.mxu0 0.0
    %5233 = vmatpush1.xpose.msra.mxu0 0.0
    %5234 = vmatprep.subr.mxu0 0.0
    %5235 = vmatpush1.xpose.msra.mxu0 0.0
    %5236 = vmatprep.subr.mxu0 0.0
    %5237 = vmatpush1.xpose.msra.mxu0 0.0
    %5238 = vmatprep.subr.mxu0 0.0
    %5239 = vmatpush1.xpose.msra.mxu0 0.0
    %5240 = vmatprep.subr.mxu0 0.0
    %5241 = vmatpush1.xpose.msra.mxu0 0.0
    %5242 = vmatprep.subr.mxu0 0.0
    %5243 = vmatpush1.xpose.msra.mxu0 0.0
    %5244 = vmatprep.subr.mxu0 0.0
    %5245 = vmatpush1.xpose.msra.mxu0 0.0
    %5246 = vmatprep.subr.mxu0 0.0
    %5247 = vmatpush1.xpose.msra.mxu0 0.0
    %5248 = vmatprep.subr.mxu0 0.0
    %5249 = vmatpush1.xpose.msra.mxu0 0.0
    %5250 = vmatprep.subr.mxu0 0.0
    %5251 = vmatpush1.xpose.msra.mxu0 %v5224
    %5252 = vmatprep.subr.mxu0 0.0
    %5253 = vmatpush1.xpose.msra.mxu0 %v5222
    %5254 = vmatprep.subr.mxu0 0.0
    %5255 = vmatpush1.xpose.msra.mxu0 %v5220
    %5256 = vmatprep.subr.mxu0 0.0
    %5257 = vmatpush1.xpose.msra.mxu0 %v5218
    %5258 = vmatprep.subr.mxu0 0.0
    %5259 = vmatpush2.xpose.msra.mxu0 0.0
    %5260 = vmatprep.subr.mxu0 0.0
    %5261 = vmatpush2.xpose.msra.mxu0 0.0
    %5262 = vmatprep.subr.mxu0 0.0
    %5263 = vmatpush2.xpose.msra.mxu0 0.0
    %5264 = vmatprep.subr.mxu0 0.0
    %5265 = vmatpush2.xpose.msra.mxu0 0.0
    %5266 = vmatprep.subr.mxu0 0.0
    %5267 = vmatpush2.xpose.msra.mxu0 0.0
    %5268 = vmatprep.subr.mxu0 0.0
    %5269 = vmatpush2.xpose.msra.mxu0 0.0
    %5270 = vmatprep.subr.mxu0 0.0
    %5271 = vmatpush2.xpose.msra.mxu0 0.0
    %5272 = vmatprep.subr.mxu0 0.0
    %5273 = vmatpush2.xpose.msra.mxu0 0.0
    %5274 = vmatprep.subr.mxu0 0.0
    %5275 = vmatpush2.xpose.msra.mxu0 0.0
    %5276 = vmatprep.subr.mxu0 0.0
    %5277 = vmatpush2.xpose.msra.mxu0 0.0
    %5278 = vmatprep.subr.mxu0 0.0
    %5279 = vmatpush2.xpose.msra.mxu0 0.0
    %5280 = vmatprep.subr.mxu0 0.0
    %5281 = vmatpush2.xpose.msra.mxu0 0.0
    %5282 = vmatprep.subr.mxu0 0.0
    %5283 = vmatpush2.xpose.msra.mxu0 0.0
    %5284 = vmatprep.subr.mxu0 0.0
    %5285 = vmatpush2.xpose.msra.mxu0 0.0
    %5286 = vmatprep.subr.mxu0 0.0
    %5287 = vmatpush2.xpose.msra.mxu0 0.0
    %5288 = vmatprep.subr.mxu0 0.0
    %5289 = vmatpush2.xpose.msra.mxu0 0.0
    %5290 = vmatprep.mubr.f32.mxu0 0.0
    %5291 = vmatmul.mubr.f32.gmra.mxu0 %v5210
    %v5292 = vpop.f32.mrf.mxu0
    %v5293 = vadd.f32 %v4839, %v5292
    %v5294 = vpop.f32.mrf.mxu0
    %5295 = vmatprep.mubr.f32.mxu0 0.0
    %5296 = vmatmul.mubr.f32.gmra.mxu0 %v5212
    %v5297 = vpop.f32.mrf.mxu0
    %v5298 = vadd.f32 %v4840, %v5297
    %v5299 = vpop.f32.mrf.mxu0
    %5300 = vmatprep.mubr.f32.mxu0 0.0
    %5301 = vmatmul.mubr.f32.gmra.mxu0 %v5214
    %v5302 = vpop.f32.mrf.mxu0
    %v5303 = vadd.f32 %v4841, %v5302
    %v5304 = vpop.f32.mrf.mxu0
    %5305 = vmatprep.mubr.f32.mxu0 0.0
    %5306 = vmatmul.mubr.f32.gmra.mxu0 %v5216
    %v5307 = vpop.f32.mrf.mxu0
    %v5308 = vadd.f32 %v4842, %v5307
    %v5309 = vpop.f32.mrf.mxu0
    %5310 = vdwg.mxu0
    %5311 = vrot.lane.b32.xlu0 %v382, 112
    %v5312 = vpop.permute.xlu0 %5311
    %5313 = vrot.lane.b32.xlu0 %v387, 112
    %v5314 = vpop.permute.xlu0 %5313
    %5315 = vrot.lane.b32.xlu0 %v392, 112
    %v5316 = vpop.permute.xlu0 %5315
    %5317 = vrot.lane.b32.xlu0 %v397, 112
    %v5318 = vpop.permute.xlu0 %5317
    %5319 = vrot.lane.b32.xlu0 %v382, 80
    %v5320 = vpop.permute.xlu0 %5319
    %5321 = vrot.lane.b32.xlu0 %v387, 80
    %v5322 = vpop.permute.xlu0 %5321
    %5323 = vrot.lane.b32.xlu0 %v392, 80
    %v5324 = vpop.permute.xlu0 %5323
    %5325 = vrot.lane.b32.xlu0 %v397, 80
    %v5326 = vpop.permute.xlu0 %5325
    %v5327 = vsel %vm492, %v5312, 0
    %v5329 = vsel %vm492, %v5314, 0
    %v5331 = vsel %vm492, %v5316, 0
    %v5333 = vsel %vm492, %v5318, 0
    %v5335 = vsel %vm492, %v5320, 0
    %v5337 = vsel %vm492, %v5322, 0
    %v5339 = vsel %vm492, %v5324, 0
    %v5341 = vsel %vm492, %v5326, 0
    %5343 = vmatprep.subr.mxu0 0.0
    %5344 = vmatpush1.xpose.msra.mxu0 0.0
    %5345 = vmatprep.subr.mxu0 0.0
    %5346 = vmatpush1.xpose.msra.mxu0 0.0
    %5347 = vmatprep.subr.mxu0 0.0
    %5348 = vmatpush1.xpose.msra.mxu0 0.0
    %5349 = vmatprep.subr.mxu0 0.0
    %5350 = vmatpush1.xpose.msra.mxu0 0.0
    %5351 = vmatprep.subr.mxu0 0.0
    %5352 = vmatpush1.xpose.msra.mxu0 0.0
    %5353 = vmatprep.subr.mxu0 0.0
    %5354 = vmatpush1.xpose.msra.mxu0 0.0
    %5355 = vmatprep.subr.mxu0 0.0
    %5356 = vmatpush1.xpose.msra.mxu0 0.0
    %5357 = vmatprep.subr.mxu0 0.0
    %5358 = vmatpush1.xpose.msra.mxu0 0.0
    %5359 = vmatprep.subr.mxu0 0.0
    %5360 = vmatpush1.xpose.msra.mxu0 0.0
    %5361 = vmatprep.subr.mxu0 0.0
    %5362 = vmatpush1.xpose.msra.mxu0 0.0
    %5363 = vmatprep.subr.mxu0 0.0
    %5364 = vmatpush1.xpose.msra.mxu0 0.0
    %5365 = vmatprep.subr.mxu0 0.0
    %5366 = vmatpush1.xpose.msra.mxu0 0.0
    %5367 = vmatprep.subr.mxu0 0.0
    %5368 = vmatpush1.xpose.msra.mxu0 %v5341
    %5369 = vmatprep.subr.mxu0 0.0
    %5370 = vmatpush1.xpose.msra.mxu0 %v5339
    %5371 = vmatprep.subr.mxu0 0.0
    %5372 = vmatpush1.xpose.msra.mxu0 %v5337
    %5373 = vmatprep.subr.mxu0 0.0
    %5374 = vmatpush1.xpose.msra.mxu0 %v5335
    %5375 = vmatprep.subr.mxu0 0.0
    %5376 = vmatpush2.xpose.msra.mxu0 0.0
    %5377 = vmatprep.subr.mxu0 0.0
    %5378 = vmatpush2.xpose.msra.mxu0 0.0
    %5379 = vmatprep.subr.mxu0 0.0
    %5380 = vmatpush2.xpose.msra.mxu0 0.0
    %5381 = vmatprep.subr.mxu0 0.0
    %5382 = vmatpush2.xpose.msra.mxu0 0.0
    %5383 = vmatprep.subr.mxu0 0.0
    %5384 = vmatpush2.xpose.msra.mxu0 0.0
    %5385 = vmatprep.subr.mxu0 0.0
    %5386 = vmatpush2.xpose.msra.mxu0 0.0
    %5387 = vmatprep.subr.mxu0 0.0
    %5388 = vmatpush2.xpose.msra.mxu0 0.0
    %5389 = vmatprep.subr.mxu0 0.0
    %5390 = vmatpush2.xpose.msra.mxu0 0.0
    %5391 = vmatprep.subr.mxu0 0.0
    %5392 = vmatpush2.xpose.msra.mxu0 0.0
    %5393 = vmatprep.subr.mxu0 0.0
    %5394 = vmatpush2.xpose.msra.mxu0 0.0
    %5395 = vmatprep.subr.mxu0 0.0
    %5396 = vmatpush2.xpose.msra.mxu0 0.0
    %5397 = vmatprep.subr.mxu0 0.0
    %5398 = vmatpush2.xpose.msra.mxu0 0.0
    %5399 = vmatprep.subr.mxu0 0.0
    %5400 = vmatpush2.xpose.msra.mxu0 0.0
    %5401 = vmatprep.subr.mxu0 0.0
    %5402 = vmatpush2.xpose.msra.mxu0 0.0
    %5403 = vmatprep.subr.mxu0 0.0
    %5404 = vmatpush2.xpose.msra.mxu0 0.0
    %5405 = vmatprep.subr.mxu0 0.0
    %5406 = vmatpush2.xpose.msra.mxu0 0.0
    %5407 = vmatprep.mubr.f32.mxu0 0.0
    %5408 = vmatmul.mubr.f32.gmra.mxu0 %v5327
    %v5409 = vpop.f32.mrf.mxu0
    %v5410 = vadd.f32 %v4839, %v5409
    %v5411 = vpop.f32.mrf.mxu0
    %5412 = vmatprep.mubr.f32.mxu0 0.0
    %5413 = vmatmul.mubr.f32.gmra.mxu0 %v5329
    %v5414 = vpop.f32.mrf.mxu0
    %v5415 = vadd.f32 %v4840, %v5414
    %v5416 = vpop.f32.mrf.mxu0
    %5417 = vmatprep.mubr.f32.mxu0 0.0
    %5418 = vmatmul.mubr.f32.gmra.mxu0 %v5331
    %v5419 = vpop.f32.mrf.mxu0
    %v5420 = vadd.f32 %v4841, %v5419
    %v5421 = vpop.f32.mrf.mxu0
    %5422 = vmatprep.mubr.f32.mxu0 0.0
    %5423 = vmatmul.mubr.f32.gmra.mxu0 %v5333
    %v5424 = vpop.f32.mrf.mxu0
    %v5425 = vadd.f32 %v4842, %v5424
    %v5426 = vpop.f32.mrf.mxu0
    %5427 = vdwg.mxu0
    %5428 = vrot.lane.b32.xlu0 %v402, 112
    %v5429 = vpop.permute.xlu0 %5428
    %5430 = vrot.lane.b32.xlu0 %v407, 112
    %v5431 = vpop.permute.xlu0 %5430
    %5432 = vrot.lane.b32.xlu0 %v412, 112
    %v5433 = vpop.permute.xlu0 %5432
    %5434 = vrot.lane.b32.xlu0 %v417, 112
    %v5435 = vpop.permute.xlu0 %5434
    %5436 = vrot.lane.b32.xlu0 %v402, 80
    %v5437 = vpop.permute.xlu0 %5436
    %5438 = vrot.lane.b32.xlu0 %v407, 80
    %v5439 = vpop.permute.xlu0 %5438
    %5440 = vrot.lane.b32.xlu0 %v412, 80
    %v5441 = vpop.permute.xlu0 %5440
    %5442 = vrot.lane.b32.xlu0 %v417, 80
    %v5443 = vpop.permute.xlu0 %5442
    %v5444 = vsel %vm492, %v5429, 0
    %v5446 = vsel %vm492, %v5431, 0
    %v5448 = vsel %vm492, %v5433, 0
    %v5450 = vsel %vm492, %v5435, 0
    %v5452 = vsel %vm492, %v5437, 0
    %v5454 = vsel %vm492, %v5439, 0
    %v5456 = vsel %vm492, %v5441, 0
    %v5458 = vsel %vm492, %v5443, 0
    %5460 = vmatprep.subr.mxu0 0.0
    %5461 = vmatpush1.xpose.msra.mxu0 0.0
    %5462 = vmatprep.subr.mxu0 0.0
    %5463 = vmatpush1.xpose.msra.mxu0 0.0
    %5464 = vmatprep.subr.mxu0 0.0
    %5465 = vmatpush1.xpose.msra.mxu0 0.0
    %5466 = vmatprep.subr.mxu0 0.0
    %5467 = vmatpush1.xpose.msra.mxu0 0.0
    %5468 = vmatprep.subr.mxu0 0.0
    %5469 = vmatpush1.xpose.msra.mxu0 0.0
    %5470 = vmatprep.subr.mxu0 0.0
    %5471 = vmatpush1.xpose.msra.mxu0 0.0
    %5472 = vmatprep.subr.mxu0 0.0
    %5473 = vmatpush1.xpose.msra.mxu0 0.0
    %5474 = vmatprep.subr.mxu0 0.0
    %5475 = vmatpush1.xpose.msra.mxu0 0.0
    %5476 = vmatprep.subr.mxu0 0.0
    %5477 = vmatpush1.xpose.msra.mxu0 0.0
    %5478 = vmatprep.subr.mxu0 0.0
    %5479 = vmatpush1.xpose.msra.mxu0 0.0
    %5480 = vmatprep.subr.mxu0 0.0
    %5481 = vmatpush1.xpose.msra.mxu0 0.0
    %5482 = vmatprep.subr.mxu0 0.0
    %5483 = vmatpush1.xpose.msra.mxu0 0.0
    %5484 = vmatprep.subr.mxu0 0.0
    %5485 = vmatpush1.xpose.msra.mxu0 %v5458
    %5486 = vmatprep.subr.mxu0 0.0
    %5487 = vmatpush1.xpose.msra.mxu0 %v5456
    %5488 = vmatprep.subr.mxu0 0.0
    %5489 = vmatpush1.xpose.msra.mxu0 %v5454
    %5490 = vmatprep.subr.mxu0 0.0
    %5491 = vmatpush1.xpose.msra.mxu0 %v5452
    %5492 = vmatprep.subr.mxu0 0.0
    %5493 = vmatpush2.xpose.msra.mxu0 0.0
    %5494 = vmatprep.subr.mxu0 0.0
    %5495 = vmatpush2.xpose.msra.mxu0 0.0
    %5496 = vmatprep.subr.mxu0 0.0
    %5497 = vmatpush2.xpose.msra.mxu0 0.0
    %5498 = vmatprep.subr.mxu0 0.0
    %5499 = vmatpush2.xpose.msra.mxu0 0.0
    %5500 = vmatprep.subr.mxu0 0.0
    %5501 = vmatpush2.xpose.msra.mxu0 0.0
    %5502 = vmatprep.subr.mxu0 0.0
    %5503 = vmatpush2.xpose.msra.mxu0 0.0
    %5504 = vmatprep.subr.mxu0 0.0
    %5505 = vmatpush2.xpose.msra.mxu0 0.0
    %5506 = vmatprep.subr.mxu0 0.0
    %5507 = vmatpush2.xpose.msra.mxu0 0.0
    %5508 = vmatprep.subr.mxu0 0.0
    %5509 = vmatpush2.xpose.msra.mxu0 0.0
    %5510 = vmatprep.subr.mxu0 0.0
    %5511 = vmatpush2.xpose.msra.mxu0 0.0
    %5512 = vmatprep.subr.mxu0 0.0
    %5513 = vmatpush2.xpose.msra.mxu0 0.0
    %5514 = vmatprep.subr.mxu0 0.0
    %5515 = vmatpush2.xpose.msra.mxu0 0.0
    %5516 = vmatprep.subr.mxu0 0.0
    %5517 = vmatpush2.xpose.msra.mxu0 0.0
    %5518 = vmatprep.subr.mxu0 0.0
    %5519 = vmatpush2.xpose.msra.mxu0 0.0
    %5520 = vmatprep.subr.mxu0 0.0
    %5521 = vmatpush2.xpose.msra.mxu0 0.0
    %5522 = vmatprep.subr.mxu0 0.0
    %5523 = vmatpush2.xpose.msra.mxu0 0.0
    %5524 = vmatprep.mubr.f32.mxu0 0.0
    %5525 = vmatmul.mubr.f32.gmra.mxu0 %v5444
    %v5526 = vpop.f32.mrf.mxu0
    %v5527 = vadd.f32 %v4839, %v5526
    %v5528 = vpop.f32.mrf.mxu0
    %5529 = vmatprep.mubr.f32.mxu0 0.0
    %5530 = vmatmul.mubr.f32.gmra.mxu0 %v5446
    %v5531 = vpop.f32.mrf.mxu0
    %v5532 = vadd.f32 %v4840, %v5531
    %v5533 = vpop.f32.mrf.mxu0
    %5534 = vmatprep.mubr.f32.mxu0 0.0
    %5535 = vmatmul.mubr.f32.gmra.mxu0 %v5448
    %v5536 = vpop.f32.mrf.mxu0
    %v5537 = vadd.f32 %v4841, %v5536
    %v5538 = vpop.f32.mrf.mxu0
    %5539 = vmatprep.mubr.f32.mxu0 0.0
    %5540 = vmatmul.mubr.f32.gmra.mxu0 %v5450
    %v5541 = vpop.f32.mrf.mxu0
    %v5542 = vadd.f32 %v4842, %v5541
    %v5543 = vpop.f32.mrf.mxu0
    %5544 = vdwg.mxu0
    %5545 = vrot.lane.b32.xlu0 %v422, 112
    %v5546 = vpop.permute.xlu0 %5545
    %5547 = vrot.lane.b32.xlu0 %v427, 112
    %v5548 = vpop.permute.xlu0 %5547
    %5549 = vrot.lane.b32.xlu0 %v432, 112
    %v5550 = vpop.permute.xlu0 %5549
    %5551 = vrot.lane.b32.xlu0 %v437, 112
    %v5552 = vpop.permute.xlu0 %5551
    %5553 = vrot.lane.b32.xlu0 %v422, 80
    %v5554 = vpop.permute.xlu0 %5553
    %5555 = vrot.lane.b32.xlu0 %v427, 80
    %v5556 = vpop.permute.xlu0 %5555
    %5557 = vrot.lane.b32.xlu0 %v432, 80
    %v5558 = vpop.permute.xlu0 %5557
    %5559 = vrot.lane.b32.xlu0 %v437, 80
    %v5560 = vpop.permute.xlu0 %5559
    %v5561 = vsel %vm492, %v5546, 0
    %v5563 = vsel %vm492, %v5548, 0
    %v5565 = vsel %vm492, %v5550, 0
    %v5567 = vsel %vm492, %v5552, 0
    %v5569 = vsel %vm492, %v5554, 0
    %v5571 = vsel %vm492, %v5556, 0
    %v5573 = vsel %vm492, %v5558, 0
    %v5575 = vsel %vm492, %v5560, 0
    %5577 = vmatprep.subr.mxu0 0.0
    %5578 = vmatpush1.xpose.msra.mxu0 0.0
    %5579 = vmatprep.subr.mxu0 0.0
    %5580 = vmatpush1.xpose.msra.mxu0 0.0
    %5581 = vmatprep.subr.mxu0 0.0
    %5582 = vmatpush1.xpose.msra.mxu0 0.0
    %5583 = vmatprep.subr.mxu0 0.0
    %5584 = vmatpush1.xpose.msra.mxu0 0.0
    %5585 = vmatprep.subr.mxu0 0.0
    %5586 = vmatpush1.xpose.msra.mxu0 0.0
    %5587 = vmatprep.subr.mxu0 0.0
    %5588 = vmatpush1.xpose.msra.mxu0 0.0
    %5589 = vmatprep.subr.mxu0 0.0
    %5590 = vmatpush1.xpose.msra.mxu0 0.0
    %5591 = vmatprep.subr.mxu0 0.0
    %5592 = vmatpush1.xpose.msra.mxu0 0.0
    %5593 = vmatprep.subr.mxu0 0.0
    %5594 = vmatpush1.xpose.msra.mxu0 0.0
    %5595 = vmatprep.subr.mxu0 0.0
    %5596 = vmatpush1.xpose.msra.mxu0 0.0
    %5597 = vmatprep.subr.mxu0 0.0
    %5598 = vmatpush1.xpose.msra.mxu0 0.0
    %5599 = vmatprep.subr.mxu0 0.0
    %5600 = vmatpush1.xpose.msra.mxu0 0.0
    %5601 = vmatprep.subr.mxu0 0.0
    %5602 = vmatpush1.xpose.msra.mxu0 %v5575
    %5603 = vmatprep.subr.mxu0 0.0
    %5604 = vmatpush1.xpose.msra.mxu0 %v5573
    %5605 = vmatprep.subr.mxu0 0.0
    %5606 = vmatpush1.xpose.msra.mxu0 %v5571
    %5607 = vmatprep.subr.mxu0 0.0
    %5608 = vmatpush1.xpose.msra.mxu0 %v5569
    %5609 = vmatprep.subr.mxu0 0.0
    %5610 = vmatpush2.xpose.msra.mxu0 0.0
    %5611 = vmatprep.subr.mxu0 0.0
    %5612 = vmatpush2.xpose.msra.mxu0 0.0
    %5613 = vmatprep.subr.mxu0 0.0
    %5614 = vmatpush2.xpose.msra.mxu0 0.0
    %5615 = vmatprep.subr.mxu0 0.0
    %5616 = vmatpush2.xpose.msra.mxu0 0.0
    %5617 = vmatprep.subr.mxu0 0.0
    %5618 = vmatpush2.xpose.msra.mxu0 0.0
    %5619 = vmatprep.subr.mxu0 0.0
    %5620 = vmatpush2.xpose.msra.mxu0 0.0
    %5621 = vmatprep.subr.mxu0 0.0
    %5622 = vmatpush2.xpose.msra.mxu0 0.0
    %5623 = vmatprep.subr.mxu0 0.0
    %5624 = vmatpush2.xpose.msra.mxu0 0.0
    %5625 = vmatprep.subr.mxu0 0.0
    %5626 = vmatpush2.xpose.msra.mxu0 0.0
    %5627 = vmatprep.subr.mxu0 0.0
    %5628 = vmatpush2.xpose.msra.mxu0 0.0
    %5629 = vmatprep.subr.mxu0 0.0
    %5630 = vmatpush2.xpose.msra.mxu0 0.0
    %5631 = vmatprep.subr.mxu0 0.0
    %5632 = vmatpush2.xpose.msra.mxu0 0.0
    %5633 = vmatprep.subr.mxu0 0.0
    %5634 = vmatpush2.xpose.msra.mxu0 0.0
    %5635 = vmatprep.subr.mxu0 0.0
    %5636 = vmatpush2.xpose.msra.mxu0 0.0
    %5637 = vmatprep.subr.mxu0 0.0
    %5638 = vmatpush2.xpose.msra.mxu0 0.0
    %5639 = vmatprep.subr.mxu0 0.0
    %5640 = vmatpush2.xpose.msra.mxu0 0.0
    %5641 = vmatprep.mubr.f32.mxu0 0.0
    %5642 = vmatmul.mubr.f32.gmra.mxu0 %v5561
    %v5643 = vpop.f32.mrf.mxu0
    %v5644 = vadd.f32 %v4839, %v5643
    %v5645 = vpop.f32.mrf.mxu0
    %5646 = vmatprep.mubr.f32.mxu0 0.0
    %5647 = vmatmul.mubr.f32.gmra.mxu0 %v5563
    %v5648 = vpop.f32.mrf.mxu0
    %v5649 = vadd.f32 %v4840, %v5648
    %v5650 = vpop.f32.mrf.mxu0
    %5651 = vmatprep.mubr.f32.mxu0 0.0
    %5652 = vmatmul.mubr.f32.gmra.mxu0 %v5565
    %v5653 = vpop.f32.mrf.mxu0
    %v5654 = vadd.f32 %v4841, %v5653
    %v5655 = vpop.f32.mrf.mxu0
    %5656 = vmatprep.mubr.f32.mxu0 0.0
    %5657 = vmatmul.mubr.f32.gmra.mxu0 %v5567
    %v5658 = vpop.f32.mrf.mxu0
    %v5659 = vadd.f32 %v4842, %v5658
    %v5660 = vpop.f32.mrf.mxu0
    %5661 = vdwg.mxu0
    %5662 = vrot.lane.b32.xlu0 %v442, 112
    %v5663 = vpop.permute.xlu0 %5662
    %5664 = vrot.lane.b32.xlu0 %v447, 112
    %v5665 = vpop.permute.xlu0 %5664
    %5666 = vrot.lane.b32.xlu0 %v452, 112
    %v5667 = vpop.permute.xlu0 %5666
    %5668 = vrot.lane.b32.xlu0 %v457, 112
    %v5669 = vpop.permute.xlu0 %5668
    %5670 = vrot.lane.b32.xlu0 %v442, 80
    %v5671 = vpop.permute.xlu0 %5670
    %5672 = vrot.lane.b32.xlu0 %v447, 80
    %v5673 = vpop.permute.xlu0 %5672
    %5674 = vrot.lane.b32.xlu0 %v452, 80
    %v5675 = vpop.permute.xlu0 %5674
    %5676 = vrot.lane.b32.xlu0 %v457, 80
    %v5677 = vpop.permute.xlu0 %5676
    %v5678 = vsel %vm492, %v5663, 0
    %v5680 = vsel %vm492, %v5665, 0
    %v5682 = vsel %vm492, %v5667, 0
    %v5684 = vsel %vm492, %v5669, 0
    %v5686 = vsel %vm492, %v5671, 0
    %v5688 = vsel %vm492, %v5673, 0
    %v5690 = vsel %vm492, %v5675, 0
    %v5692 = vsel %vm492, %v5677, 0
    %5694 = vmatprep.subr.mxu0 0.0
    %5695 = vmatpush1.xpose.msra.mxu0 0.0
    %5696 = vmatprep.subr.mxu0 0.0
    %5697 = vmatpush1.xpose.msra.mxu0 0.0
    %5698 = vmatprep.subr.mxu0 0.0
    %5699 = vmatpush1.xpose.msra.mxu0 0.0
    %5700 = vmatprep.subr.mxu0 0.0
    %5701 = vmatpush1.xpose.msra.mxu0 0.0
    %5702 = vmatprep.subr.mxu0 0.0
    %5703 = vmatpush1.xpose.msra.mxu0 0.0
    %5704 = vmatprep.subr.mxu0 0.0
    %5705 = vmatpush1.xpose.msra.mxu0 0.0
    %5706 = vmatprep.subr.mxu0 0.0
    %5707 = vmatpush1.xpose.msra.mxu0 0.0
    %5708 = vmatprep.subr.mxu0 0.0
    %5709 = vmatpush1.xpose.msra.mxu0 0.0
    %5710 = vmatprep.subr.mxu0 0.0
    %5711 = vmatpush1.xpose.msra.mxu0 0.0
    %5712 = vmatprep.subr.mxu0 0.0
    %5713 = vmatpush1.xpose.msra.mxu0 0.0
    %5714 = vmatprep.subr.mxu0 0.0
    %5715 = vmatpush1.xpose.msra.mxu0 0.0
    %5716 = vmatprep.subr.mxu0 0.0
    %5717 = vmatpush1.xpose.msra.mxu0 0.0
    %5718 = vmatprep.subr.mxu0 0.0
    %5719 = vmatpush1.xpose.msra.mxu0 %v5692
    %5720 = vmatprep.subr.mxu0 0.0
    %5721 = vmatpush1.xpose.msra.mxu0 %v5690
    %5722 = vmatprep.subr.mxu0 0.0
    %5723 = vmatpush1.xpose.msra.mxu0 %v5688
    %5724 = vmatprep.subr.mxu0 0.0
    %5725 = vmatpush1.xpose.msra.mxu0 %v5686
    %5726 = vmatprep.subr.mxu0 0.0
    %5727 = vmatpush2.xpose.msra.mxu0 0.0
    %5728 = vmatprep.subr.mxu0 0.0
    %5729 = vmatpush2.xpose.msra.mxu0 0.0
    %5730 = vmatprep.subr.mxu0 0.0
    %5731 = vmatpush2.xpose.msra.mxu0 0.0
    %5732 = vmatprep.subr.mxu0 0.0
    %5733 = vmatpush2.xpose.msra.mxu0 0.0
    %5734 = vmatprep.subr.mxu0 0.0
    %5735 = vmatpush2.xpose.msra.mxu0 0.0
    %5736 = vmatprep.subr.mxu0 0.0
    %5737 = vmatpush2.xpose.msra.mxu0 0.0
    %5738 = vmatprep.subr.mxu0 0.0
    %5739 = vmatpush2.xpose.msra.mxu0 0.0
    %5740 = vmatprep.subr.mxu0 0.0
    %5741 = vmatpush2.xpose.msra.mxu0 0.0
    %5742 = vmatprep.subr.mxu0 0.0
    %5743 = vmatpush2.xpose.msra.mxu0 0.0
    %5744 = vmatprep.subr.mxu0 0.0
    %5745 = vmatpush2.xpose.msra.mxu0 0.0
    %5746 = vmatprep.subr.mxu0 0.0
    %5747 = vmatpush2.xpose.msra.mxu0 0.0
    %5748 = vmatprep.subr.mxu0 0.0
    %5749 = vmatpush2.xpose.msra.mxu0 0.0
    %5750 = vmatprep.subr.mxu0 0.0
    %5751 = vmatpush2.xpose.msra.mxu0 0.0
    %5752 = vmatprep.subr.mxu0 0.0
    %5753 = vmatpush2.xpose.msra.mxu0 0.0
    %5754 = vmatprep.subr.mxu0 0.0
    %5755 = vmatpush2.xpose.msra.mxu0 0.0
    %5756 = vmatprep.subr.mxu0 0.0
    %5757 = vmatpush2.xpose.msra.mxu0 0.0
    %5758 = vmatprep.mubr.f32.mxu0 0.0
    %5759 = vmatmul.mubr.f32.gmra.mxu0 %v5678
    %v5760 = vpop.f32.mrf.mxu0
    %v5761 = vadd.f32 %v4839, %v5760
    %v5762 = vpop.f32.mrf.mxu0
    %5763 = vmatprep.mubr.f32.mxu0 0.0
    %5764 = vmatmul.mubr.f32.gmra.mxu0 %v5680
    %v5765 = vpop.f32.mrf.mxu0
    %v5766 = vadd.f32 %v4840, %v5765
    %v5767 = vpop.f32.mrf.mxu0
    %5768 = vmatprep.mubr.f32.mxu0 0.0
    %5769 = vmatmul.mubr.f32.gmra.mxu0 %v5682
    %v5770 = vpop.f32.mrf.mxu0
    %v5771 = vadd.f32 %v4841, %v5770
    %v5772 = vpop.f32.mrf.mxu0
    %5773 = vmatprep.mubr.f32.mxu0 0.0
    %5774 = vmatmul.mubr.f32.gmra.mxu0 %v5684
    %v5775 = vpop.f32.mrf.mxu0
    %v5776 = vadd.f32 %v4842, %v5775
    %v5777 = vpop.f32.mrf.mxu0
    %5778 = vdwg.mxu0
    %v5779 = vadd.f32 %v4942, %v460
    %v5780 = vadd.f32 %v4947, %v461
    %v5781 = vadd.f32 %v4952, %v462
    %v5782 = vadd.f32 %v4957, %v463
    %v5783 = vadd.f32 %v5059, %v464
    %v5784 = vadd.f32 %v5064, %v465
    %v5785 = vadd.f32 %v5069, %v466
    %v5786 = vadd.f32 %v5074, %v467
    %v5787 = vadd.f32 %v5176, %v468
    %v5788 = vadd.f32 %v5181, %v469
    %v5789 = vadd.f32 %v5186, %v470
    %v5790 = vadd.f32 %v5191, %v471
    %v5791 = vadd.f32 %v5293, %v472
    %v5792 = vadd.f32 %v5298, %v473
    %v5793 = vadd.f32 %v5303, %v474
    %v5794 = vadd.f32 %v5308, %v475
    %v5795 = vadd.f32 %v5410, %v460
    %v5796 = vadd.f32 %v5415, %v461
    %v5797 = vadd.f32 %v5420, %v462
    %v5798 = vadd.f32 %v5425, %v463
    %v5799 = vadd.f32 %v5527, %v464
    %v5800 = vadd.f32 %v5532, %v465
    %v5801 = vadd.f32 %v5537, %v466
    %v5802 = vadd.f32 %v5542, %v467
    %v5803 = vadd.f32 %v5644, %v468
    %v5804 = vadd.f32 %v5649, %v469
    %v5805 = vadd.f32 %v5654, %v470
    %v5806 = vadd.f32 %v5659, %v471
    %v5807 = vadd.f32 %v5761, %v472
    %v5808 = vadd.f32 %v5766, %v473
    %v5809 = vadd.f32 %v5771, %v474
    %v5810 = vadd.f32 %v5776, %v475
    %v5811 = vsel %vm138, %v5779, -inf
    %5812 = vmax.xlane.f32.xlu0 %v5811
    %v5813 = vpop.xlane.xlu0 %5812
    %v5814 = vsel %vm138, %v5780, -inf
    %5815 = vmax.xlane.f32.xlu0 %v5814
    %v5816 = vpop.xlane.xlu0 %5815
    %v5817 = vsel %vm138, %v5781, -inf
    %5818 = vmax.xlane.f32.xlu0 %v5817
    %v5819 = vpop.xlane.xlu0 %5818
    %v5820 = vsel %vm138, %v5782, -inf
    %5821 = vmax.xlane.f32.xlu0 %v5820
    %v5822 = vpop.xlane.xlu0 %5821
    %v5823 = vsel %vm138, %v5783, -inf
    %5824 = vmax.xlane.f32.xlu0 %v5823
    %v5825 = vpop.xlane.xlu0 %5824
    %v5826 = vsel %vm138, %v5784, -inf
    %5827 = vmax.xlane.f32.xlu0 %v5826
    %v5828 = vpop.xlane.xlu0 %5827
    %v5829 = vsel %vm138, %v5785, -inf
    %5830 = vmax.xlane.f32.xlu0 %v5829
    %v5831 = vpop.xlane.xlu0 %5830
    %v5832 = vsel %vm138, %v5786, -inf
    %5833 = vmax.xlane.f32.xlu0 %v5832
    %v5834 = vpop.xlane.xlu0 %5833
    %v5835 = vsel %vm138, %v5787, -inf
    %5836 = vmax.xlane.f32.xlu0 %v5835
    %v5837 = vpop.xlane.xlu0 %5836
    %v5838 = vsel %vm138, %v5788, -inf
    %5839 = vmax.xlane.f32.xlu0 %v5838
    %v5840 = vpop.xlane.xlu0 %5839
    %v5841 = vsel %vm138, %v5789, -inf
    %5842 = vmax.xlane.f32.xlu0 %v5841
    %v5843 = vpop.xlane.xlu0 %5842
    %v5844 = vsel %vm138, %v5790, -inf
    %5845 = vmax.xlane.f32.xlu0 %v5844
    %v5846 = vpop.xlane.xlu0 %5845
    %v5847 = vsel %vm138, %v5791, -inf
    %5848 = vmax.xlane.f32.xlu0 %v5847
    %v5849 = vpop.xlane.xlu0 %5848
    %v5850 = vsel %vm138, %v5792, -inf
    %5851 = vmax.xlane.f32.xlu0 %v5850
    %v5852 = vpop.xlane.xlu0 %5851
    %v5853 = vsel %vm138, %v5793, -inf
    %5854 = vmax.xlane.f32.xlu0 %v5853
    %v5855 = vpop.xlane.xlu0 %5854
    %v5856 = vsel %vm138, %v5794, -inf
    %5857 = vmax.xlane.f32.xlu0 %v5856
    %v5858 = vpop.xlane.xlu0 %5857
    %v5859 = vsel %vm138, %v5795, -inf
    %5860 = vmax.xlane.f32.xlu0 %v5859
    %v5861 = vpop.xlane.xlu0 %5860
    %v5862 = vsel %vm138, %v5796, -inf
    %5863 = vmax.xlane.f32.xlu0 %v5862
    %v5864 = vpop.xlane.xlu0 %5863
    %v5865 = vsel %vm138, %v5797, -inf
    %5866 = vmax.xlane.f32.xlu0 %v5865
    %v5867 = vpop.xlane.xlu0 %5866
    %v5868 = vsel %vm138, %v5798, -inf
    %5869 = vmax.xlane.f32.xlu0 %v5868
    %v5870 = vpop.xlane.xlu0 %5869
    %v5871 = vsel %vm138, %v5799, -inf
    %5872 = vmax.xlane.f32.xlu0 %v5871
    %v5873 = vpop.xlane.xlu0 %5872
    %v5874 = vsel %vm138, %v5800, -inf
    %5875 = vmax.xlane.f32.xlu0 %v5874
    %v5876 = vpop.xlane.xlu0 %5875
    %v5877 = vsel %vm138, %v5801, -inf
    %5878 = vmax.xlane.f32.xlu0 %v5877
    %v5879 = vpop.xlane.xlu0 %5878
    %v5880 = vsel %vm138, %v5802, -inf
    %5881 = vmax.xlane.f32.xlu0 %v5880
    %v5882 = vpop.xlane.xlu0 %5881
    %v5883 = vsel %vm138, %v5803, -inf
    %5884 = vmax.xlane.f32.xlu0 %v5883
    %v5885 = vpop.xlane.xlu0 %5884
    %v5886 = vsel %vm138, %v5804, -inf
    %5887 = vmax.xlane.f32.xlu0 %v5886
    %v5888 = vpop.xlane.xlu0 %5887
    %v5889 = vsel %vm138, %v5805, -inf
    %5890 = vmax.xlane.f32.xlu0 %v5889
    %v5891 = vpop.xlane.xlu0 %5890
    %v5892 = vsel %vm138, %v5806, -inf
    %5893 = vmax.xlane.f32.xlu0 %v5892
    %v5894 = vpop.xlane.xlu0 %5893
    %v5895 = vsel %vm138, %v5807, -inf
    %5896 = vmax.xlane.f32.xlu0 %v5895
    %v5897 = vpop.xlane.xlu0 %5896
    %v5898 = vsel %vm138, %v5808, -inf
    %5899 = vmax.xlane.f32.xlu0 %v5898
    %v5900 = vpop.xlane.xlu0 %5899
    %v5901 = vsel %vm138, %v5809, -inf
    %5902 = vmax.xlane.f32.xlu0 %v5901
    %v5903 = vpop.xlane.xlu0 %5902
    %v5904 = vsel %vm138, %v5810, -inf
    %5905 = vmax.xlane.f32.xlu0 %v5904
    %v5906 = vpop.xlane.xlu0 %5905
    %v5907 = vsub.f32 %v5779, %v5813
    %v5908 = vsub.f32 %v5780, %v5816
    %v5909 = vsub.f32 %v5781, %v5819
    %v5910 = vsub.f32 %v5782, %v5822
    %v5911 = vsub.f32 %v5783, %v5825
    %v5912 = vsub.f32 %v5784, %v5828
    %v5913 = vsub.f32 %v5785, %v5831
    %v5914 = vsub.f32 %v5786, %v5834
    %v5915 = vsub.f32 %v5787, %v5837
    %v5916 = vsub.f32 %v5788, %v5840
    %v5917 = vsub.f32 %v5789, %v5843
    %v5918 = vsub.f32 %v5790, %v5846
    %v5919 = vsub.f32 %v5791, %v5849
    %v5920 = vsub.f32 %v5792, %v5852
    %v5921 = vsub.f32 %v5793, %v5855
    %v5922 = vsub.f32 %v5794, %v5858
    %v5923 = vsub.f32 %v5795, %v5861
    %v5924 = vsub.f32 %v5796, %v5864
    %v5925 = vsub.f32 %v5797, %v5867
    %v5926 = vsub.f32 %v5798, %v5870
    %v5927 = vsub.f32 %v5799, %v5873
    %v5928 = vsub.f32 %v5800, %v5876
    %v5929 = vsub.f32 %v5801, %v5879
    %v5930 = vsub.f32 %v5802, %v5882
    %v5931 = vsub.f32 %v5803, %v5885
    %v5932 = vsub.f32 %v5804, %v5888
    %v5933 = vsub.f32 %v5805, %v5891
    %v5934 = vsub.f32 %v5806, %v5894
    %v5935 = vsub.f32 %v5807, %v5897
    %v5936 = vsub.f32 %v5808, %v5900
    %v5937 = vsub.f32 %v5809, %v5903
    %v5938 = vsub.f32 %v5810, %v5906
    %v5939 = vmul.f32 %v5907, 1.442695
    %v5940 = vpow.pop %v5939
    %v5941 = vmul.f32 %v5908, 1.442695
    %v5942 = vpow.pop %v5941
    %v5943 = vmul.f32 %v5909, 1.442695
    %v5944 = vpow.pop %v5943
    %v5945 = vmul.f32 %v5910, 1.442695
    %v5946 = vpow.pop %v5945
    %v5947 = vmul.f32 %v5911, 1.442695
    %v5948 = vpow.pop %v5947
    %v5949 = vmul.f32 %v5912, 1.442695
    %v5950 = vpow.pop %v5949
    %v5951 = vmul.f32 %v5913, 1.442695
    %v5952 = vpow.pop %v5951
    %v5953 = vmul.f32 %v5914, 1.442695
    %v5954 = vpow.pop %v5953
    %v5955 = vmul.f32 %v5915, 1.442695
    %v5956 = vpow.pop %v5955
    %v5957 = vmul.f32 %v5916, 1.442695
    %v5958 = vpow.pop %v5957
    %v5959 = vmul.f32 %v5917, 1.442695
    %v5960 = vpow.pop %v5959
    %v5961 = vmul.f32 %v5918, 1.442695
    %v5962 = vpow.pop %v5961
    %v5963 = vmul.f32 %v5919, 1.442695
    %v5964 = vpow.pop %v5963
    %v5965 = vmul.f32 %v5920, 1.442695
    %v5966 = vpow.pop %v5965
    %v5967 = vmul.f32 %v5921, 1.442695
    %v5968 = vpow.pop %v5967
    %v5969 = vmul.f32 %v5922, 1.442695
    %v5970 = vpow.pop %v5969
    %v5971 = vmul.f32 %v5923, 1.442695
    %v5972 = vpow.pop %v5971
    %v5973 = vmul.f32 %v5924, 1.442695
    %v5974 = vpow.pop %v5973
    %v5975 = vmul.f32 %v5925, 1.442695
    %v5976 = vpow.pop %v5975
    %v5977 = vmul.f32 %v5926, 1.442695
    %v5978 = vpow.pop %v5977
    %v5979 = vmul.f32 %v5927, 1.442695
    %v5980 = vpow.pop %v5979
    %v5981 = vmul.f32 %v5928, 1.442695
    %v5982 = vpow.pop %v5981
    %v5983 = vmul.f32 %v5929, 1.442695
    %v5984 = vpow.pop %v5983
    %v5985 = vmul.f32 %v5930, 1.442695
    %v5986 = vpow.pop %v5985
    %v5987 = vmul.f32 %v5931, 1.442695
    %v5988 = vpow.pop %v5987
    %v5989 = vmul.f32 %v5932, 1.442695
    %v5990 = vpow.pop %v5989
    %v5991 = vmul.f32 %v5933, 1.442695
    %v5992 = vpow.pop %v5991
    %v5993 = vmul.f32 %v5934, 1.442695
    %v5994 = vpow.pop %v5993
    %v5995 = vmul.f32 %v5935, 1.442695
    %v5996 = vpow.pop %v5995
    %v5997 = vmul.f32 %v5936, 1.442695
    %v5998 = vpow.pop %v5997
    %v5999 = vmul.f32 %v5937, 1.442695
    %v6000 = vpow.pop %v5999
    %v6001 = vmul.f32 %v5938, 1.442695
    %v6002 = vpow.pop %v6001
    %v6003 = vsel %vm138, %v5940, 0.0
    %6004 = vadd.xlane.f32.xlu0 %v6003
    %v6005 = vpop.xlane.xlu0 %6004
    %v6006 = vsel %vm138, %v5942, 0.0
    %6007 = vadd.xlane.f32.xlu0 %v6006
    %v6008 = vpop.xlane.xlu0 %6007
    %v6009 = vsel %vm138, %v5944, 0.0
    %6010 = vadd.xlane.f32.xlu0 %v6009
    %v6011 = vpop.xlane.xlu0 %6010
    %v6012 = vsel %vm138, %v5946, 0.0
    %6013 = vadd.xlane.f32.xlu0 %v6012
    %v6014 = vpop.xlane.xlu0 %6013
    %v6015 = vsel %vm138, %v5948, 0.0
    %6016 = vadd.xlane.f32.xlu0 %v6015
    %v6017 = vpop.xlane.xlu0 %6016
    %v6018 = vsel %vm138, %v5950, 0.0
    %6019 = vadd.xlane.f32.xlu0 %v6018
    %v6020 = vpop.xlane.xlu0 %6019
    %v6021 = vsel %vm138, %v5952, 0.0
    %6022 = vadd.xlane.f32.xlu0 %v6021
    %v6023 = vpop.xlane.xlu0 %6022
    %v6024 = vsel %vm138, %v5954, 0.0
    %6025 = vadd.xlane.f32.xlu0 %v6024
    %v6026 = vpop.xlane.xlu0 %6025
    %v6027 = vsel %vm138, %v5956, 0.0
    %6028 = vadd.xlane.f32.xlu0 %v6027
    %v6029 = vpop.xlane.xlu0 %6028
    %v6030 = vsel %vm138, %v5958, 0.0
    %6031 = vadd.xlane.f32.xlu0 %v6030
    %v6032 = vpop.xlane.xlu0 %6031
    %v6033 = vsel %vm138, %v5960, 0.0
    %6034 = vadd.xlane.f32.xlu0 %v6033
    %v6035 = vpop.xlane.xlu0 %6034
    %v6036 = vsel %vm138, %v5962, 0.0
    %6037 = vadd.xlane.f32.xlu0 %v6036
    %v6038 = vpop.xlane.xlu0 %6037
    %v6039 = vsel %vm138, %v5964, 0.0
    %6040 = vadd.xlane.f32.xlu0 %v6039
    %v6041 = vpop.xlane.xlu0 %6040
    %v6042 = vsel %vm138, %v5966, 0.0
    %6043 = vadd.xlane.f32.xlu0 %v6042
    %v6044 = vpop.xlane.xlu0 %6043
    %v6045 = vsel %vm138, %v5968, 0.0
    %6046 = vadd.xlane.f32.xlu0 %v6045
    %v6047 = vpop.xlane.xlu0 %6046
    %v6048 = vsel %vm138, %v5970, 0.0
    %6049 = vadd.xlane.f32.xlu0 %v6048
    %v6050 = vpop.xlane.xlu0 %6049
    %v6051 = vsel %vm138, %v5972, 0.0
    %6052 = vadd.xlane.f32.xlu0 %v6051
    %v6053 = vpop.xlane.xlu0 %6052
    %v6054 = vsel %vm138, %v5974, 0.0
    %6055 = vadd.xlane.f32.xlu0 %v6054
    %v6056 = vpop.xlane.xlu0 %6055
    %v6057 = vsel %vm138, %v5976, 0.0
    %6058 = vadd.xlane.f32.xlu0 %v6057
    %v6059 = vpop.xlane.xlu0 %6058
    %v6060 = vsel %vm138, %v5978, 0.0
    %6061 = vadd.xlane.f32.xlu0 %v6060
    %v6062 = vpop.xlane.xlu0 %6061
    %v6063 = vsel %vm138, %v5980, 0.0
    %6064 = vadd.xlane.f32.xlu0 %v6063
    %v6065 = vpop.xlane.xlu0 %6064
    %v6066 = vsel %vm138, %v5982, 0.0
    %6067 = vadd.xlane.f32.xlu0 %v6066
    %v6068 = vpop.xlane.xlu0 %6067
    %v6069 = vsel %vm138, %v5984, 0.0
    %6070 = vadd.xlane.f32.xlu0 %v6069
    %v6071 = vpop.xlane.xlu0 %6070
    %v6072 = vsel %vm138, %v5986, 0.0
    %6073 = vadd.xlane.f32.xlu0 %v6072
    %v6074 = vpop.xlane.xlu0 %6073
    %v6075 = vsel %vm138, %v5988, 0.0
    %6076 = vadd.xlane.f32.xlu0 %v6075
    %v6077 = vpop.xlane.xlu0 %6076
    %v6078 = vsel %vm138, %v5990, 0.0
    %6079 = vadd.xlane.f32.xlu0 %v6078
    %v6080 = vpop.xlane.xlu0 %6079
    %v6081 = vsel %vm138, %v5992, 0.0
    %6082 = vadd.xlane.f32.xlu0 %v6081
    %v6083 = vpop.xlane.xlu0 %6082
    %v6084 = vsel %vm138, %v5994, 0.0
    %6085 = vadd.xlane.f32.xlu0 %v6084
    %v6086 = vpop.xlane.xlu0 %6085
    %v6087 = vsel %vm138, %v5996, 0.0
    %6088 = vadd.xlane.f32.xlu0 %v6087
    %v6089 = vpop.xlane.xlu0 %6088
    %v6090 = vsel %vm138, %v5998, 0.0
    %6091 = vadd.xlane.f32.xlu0 %v6090
    %v6092 = vpop.xlane.xlu0 %6091
    %v6093 = vsel %vm138, %v6000, 0.0
    %6094 = vadd.xlane.f32.xlu0 %v6093
    %v6095 = vpop.xlane.xlu0 %6094
    %v6096 = vsel %vm138, %v6002, 0.0
    %6097 = vadd.xlane.f32.xlu0 %v6096
    %v6098 = vpop.xlane.xlu0 %6097
    %v6099 = vrcp.pop %v6005
    %v6100 = vrcp.pop %v6008
    %v6101 = vrcp.pop %v6011
    %v6102 = vrcp.pop %v6014
    %v6103 = vrcp.pop %v6017
    %v6104 = vrcp.pop %v6020
    %v6105 = vrcp.pop %v6023
    %v6106 = vrcp.pop %v6026
    %v6107 = vrcp.pop %v6029
    %v6108 = vrcp.pop %v6032
    %v6109 = vrcp.pop %v6035
    %v6110 = vrcp.pop %v6038
    %v6111 = vrcp.pop %v6041
    %v6112 = vrcp.pop %v6044
    %v6113 = vrcp.pop %v6047
    %v6114 = vrcp.pop %v6050
    %v6115 = vrcp.pop %v6053
    %v6116 = vrcp.pop %v6056
    %v6117 = vrcp.pop %v6059
    %v6118 = vrcp.pop %v6062
    %v6119 = vrcp.pop %v6065
    %v6120 = vrcp.pop %v6068
    %v6121 = vrcp.pop %v6071
    %v6122 = vrcp.pop %v6074
    %v6123 = vrcp.pop %v6077
    %v6124 = vrcp.pop %v6080
    %v6125 = vrcp.pop %v6083
    %v6126 = vrcp.pop %v6086
    %v6127 = vrcp.pop %v6089
    %v6128 = vrcp.pop %v6092
    %v6129 = vrcp.pop %v6095
    %v6130 = vrcp.pop %v6098
    %v6131 = vmul.f32 %v5940, %v6099
    %v6132 = vmul.f32 %v5942, %v6100
    %v6133 = vmul.f32 %v5944, %v6101
    %v6134 = vmul.f32 %v5946, %v6102
    %v6135 = vmul.f32 %v5948, %v6103
    %v6136 = vmul.f32 %v5950, %v6104
    %v6137 = vmul.f32 %v5952, %v6105
    %v6138 = vmul.f32 %v5954, %v6106
    %v6139 = vmul.f32 %v5956, %v6107
    %v6140 = vmul.f32 %v5958, %v6108
    %v6141 = vmul.f32 %v5960, %v6109
    %v6142 = vmul.f32 %v5962, %v6110
    %v6143 = vmul.f32 %v5964, %v6111
    %v6144 = vmul.f32 %v5966, %v6112
    %v6145 = vmul.f32 %v5968, %v6113
    %v6146 = vmul.f32 %v5970, %v6114
    %v6147 = vmul.f32 %v5972, %v6115
    %v6148 = vmul.f32 %v5974, %v6116
    %v6149 = vmul.f32 %v5976, %v6117
    %v6150 = vmul.f32 %v5978, %v6118
    %v6151 = vmul.f32 %v5980, %v6119
    %v6152 = vmul.f32 %v5982, %v6120
    %v6153 = vmul.f32 %v5984, %v6121
    %v6154 = vmul.f32 %v5986, %v6122
    %v6155 = vmul.f32 %v5988, %v6123
    %v6156 = vmul.f32 %v5990, %v6124
    %v6157 = vmul.f32 %v5992, %v6125
    %v6158 = vmul.f32 %v5994, %v6126
    %v6159 = vmul.f32 %v5996, %v6127
    %v6160 = vmul.f32 %v5998, %v6128
    %v6161 = vmul.f32 %v6000, %v6129
    %v6162 = vmul.f32 %v6002, %v6130
    %6163 = vrot.lane.b32.xlu0 %v302, 48
    %v6164 = vpop.permute.xlu0 %6163
    %6165 = vrot.lane.b32.xlu0 %v307, 48
    %v6166 = vpop.permute.xlu0 %6165
    %6167 = vrot.lane.b32.xlu0 %v312, 48
    %v6168 = vpop.permute.xlu0 %6167
    %6169 = vrot.lane.b32.xlu0 %v317, 48
    %v6170 = vpop.permute.xlu0 %6169
    %v6176 = vsel %vm138, %v6131, 0
    %v6179 = vsel %vm138, %v6132, 0
    %v6182 = vsel %vm138, %v6133, 0
    %v6185 = vsel %vm138, %v6134, 0
    %6187 = vmatprep.subr.mxu0 0.0
    %6188 = vmatpush1.msra.mxu0 0.0
    %6189 = vmatprep.subr.mxu0 0.0
    %6190 = vmatpush1.msra.mxu0 0.0
    %6191 = vmatprep.subr.mxu0 0.0
    %6192 = vmatpush1.msra.mxu0 0.0
    %6193 = vmatprep.subr.mxu0 0.0
    %6194 = vmatpush1.msra.mxu0 0.0
    %6195 = vmatprep.subr.mxu0 0.0
    %6196 = vmatpush1.msra.mxu0 0.0
    %6197 = vmatprep.subr.mxu0 0.0
    %6198 = vmatpush1.msra.mxu0 0.0
    %6199 = vmatprep.subr.mxu0 0.0
    %6200 = vmatpush1.msra.mxu0 0.0
    %6201 = vmatprep.subr.mxu0 0.0
    %6202 = vmatpush1.msra.mxu0 0.0
    %6203 = vmatprep.subr.mxu0 0.0
    %6204 = vmatpush1.msra.mxu0 0.0
    %6205 = vmatprep.subr.mxu0 0.0
    %6206 = vmatpush1.msra.mxu0 0.0
    %6207 = vmatprep.subr.mxu0 0.0
    %6208 = vmatpush1.msra.mxu0 0.0
    %6209 = vmatprep.subr.mxu0 0.0
    %6210 = vmatpush1.msra.mxu0 0.0
    %6211 = vmatprep.subr.mxu0 0.0
    %6212 = vmatpush1.msra.mxu0 %v6170
    %6213 = vmatprep.subr.mxu0 0.0
    %6214 = vmatpush1.msra.mxu0 %v6168
    %6215 = vmatprep.subr.mxu0 0.0
    %6216 = vmatpush1.msra.mxu0 %v6166
    %6217 = vmatprep.subr.mxu0 0.0
    %6218 = vmatpush1.msra.mxu0 %v6164
    %6219 = vmatprep.subr.mxu0 0.0
    %6220 = vmatpush2.msra.mxu0 0.0
    %6221 = vmatprep.subr.mxu0 0.0
    %6222 = vmatpush2.msra.mxu0 0.0
    %6223 = vmatprep.subr.mxu0 0.0
    %6224 = vmatpush2.msra.mxu0 0.0
    %6225 = vmatprep.subr.mxu0 0.0
    %6226 = vmatpush2.msra.mxu0 0.0
    %6227 = vmatprep.subr.mxu0 0.0
    %6228 = vmatpush2.msra.mxu0 0.0
    %6229 = vmatprep.subr.mxu0 0.0
    %6230 = vmatpush2.msra.mxu0 0.0
    %6231 = vmatprep.subr.mxu0 0.0
    %6232 = vmatpush2.msra.mxu0 0.0
    %6233 = vmatprep.subr.mxu0 0.0
    %6234 = vmatpush2.msra.mxu0 0.0
    %6235 = vmatprep.subr.mxu0 0.0
    %6236 = vmatpush2.msra.mxu0 0.0
    %6237 = vmatprep.subr.mxu0 0.0
    %6238 = vmatpush2.msra.mxu0 0.0
    %6239 = vmatprep.subr.mxu0 0.0
    %6240 = vmatpush2.msra.mxu0 0.0
    %6241 = vmatprep.subr.mxu0 0.0
    %6242 = vmatpush2.msra.mxu0 0.0
    %6243 = vmatprep.subr.mxu0 0.0
    %6244 = vmatpush2.msra.mxu0 0.0
    %6245 = vmatprep.subr.mxu0 0.0
    %6246 = vmatpush2.msra.mxu0 0.0
    %6247 = vmatprep.subr.mxu0 0.0
    %6248 = vmatpush2.msra.mxu0 0.0
    %6249 = vmatprep.subr.mxu0 0.0
    %6250 = vmatpush2.msra.mxu0 0.0
    %6251 = vmatprep.mubr.f32.mxu0 0.0
    %6252 = vmatmul.mubr.f32.gmra.mxu0 %v6176
    %v6253 = vpop.f32.mrf.mxu0
    %v6254 = vadd.f32 0.0, %v6253
    %v6255 = vpop.f32.mrf.mxu0
    %6256 = vmatprep.mubr.f32.mxu0 0.0
    %6257 = vmatmul.mubr.f32.gmra.mxu0 %v6179
    %v6258 = vpop.f32.mrf.mxu0
    %v6259 = vadd.f32 0.0, %v6258
    %v6260 = vpop.f32.mrf.mxu0
    %6261 = vmatprep.mubr.f32.mxu0 0.0
    %6262 = vmatmul.mubr.f32.gmra.mxu0 %v6182
    %v6263 = vpop.f32.mrf.mxu0
    %v6264 = vadd.f32 0.0, %v6263
    %v6265 = vpop.f32.mrf.mxu0
    %6266 = vmatprep.mubr.f32.mxu0 0.0
    %6267 = vmatmul.mubr.f32.gmra.mxu0 %v6185
    %v6268 = vpop.f32.mrf.mxu0
    %v6269 = vadd.f32 0.0, %v6268
    %v6270 = vpop.f32.mrf.mxu0
    %6271 = vdwg.mxu0
    %6272 = vrot.lane.b32.xlu0 %v322, 48
    %v6273 = vpop.permute.xlu0 %6272
    %6274 = vrot.lane.b32.xlu0 %v327, 48
    %v6275 = vpop.permute.xlu0 %6274
    %6276 = vrot.lane.b32.xlu0 %v332, 48
    %v6277 = vpop.permute.xlu0 %6276
    %6278 = vrot.lane.b32.xlu0 %v337, 48
    %v6279 = vpop.permute.xlu0 %6278
    %v6285 = vsel %vm138, %v6135, 0
    %v6288 = vsel %vm138, %v6136, 0
    %v6291 = vsel %vm138, %v6137, 0
    %v6294 = vsel %vm138, %v6138, 0
    %6296 = vmatprep.subr.mxu0 0.0
    %6297 = vmatpush1.msra.mxu0 0.0
    %6298 = vmatprep.subr.mxu0 0.0
    %6299 = vmatpush1.msra.mxu0 0.0
    %6300 = vmatprep.subr.mxu0 0.0
    %6301 = vmatpush1.msra.mxu0 0.0
    %6302 = vmatprep.subr.mxu0 0.0
    %6303 = vmatpush1.msra.mxu0 0.0
    %6304 = vmatprep.subr.mxu0 0.0
    %6305 = vmatpush1.msra.mxu0 0.0
    %6306 = vmatprep.subr.mxu0 0.0
    %6307 = vmatpush1.msra.mxu0 0.0
    %6308 = vmatprep.subr.mxu0 0.0
    %6309 = vmatpush1.msra.mxu0 0.0
    %6310 = vmatprep.subr.mxu0 0.0
    %6311 = vmatpush1.msra.mxu0 0.0
    %6312 = vmatprep.subr.mxu0 0.0
    %6313 = vmatpush1.msra.mxu0 0.0
    %6314 = vmatprep.subr.mxu0 0.0
    %6315 = vmatpush1.msra.mxu0 0.0
    %6316 = vmatprep.subr.mxu0 0.0
    %6317 = vmatpush1.msra.mxu0 0.0
    %6318 = vmatprep.subr.mxu0 0.0
    %6319 = vmatpush1.msra.mxu0 0.0
    %6320 = vmatprep.subr.mxu0 0.0
    %6321 = vmatpush1.msra.mxu0 %v6279
    %6322 = vmatprep.subr.mxu0 0.0
    %6323 = vmatpush1.msra.mxu0 %v6277
    %6324 = vmatprep.subr.mxu0 0.0
    %6325 = vmatpush1.msra.mxu0 %v6275
    %6326 = vmatprep.subr.mxu0 0.0
    %6327 = vmatpush1.msra.mxu0 %v6273
    %6328 = vmatprep.subr.mxu0 0.0
    %6329 = vmatpush2.msra.mxu0 0.0
    %6330 = vmatprep.subr.mxu0 0.0
    %6331 = vmatpush2.msra.mxu0 0.0
    %6332 = vmatprep.subr.mxu0 0.0
    %6333 = vmatpush2.msra.mxu0 0.0
    %6334 = vmatprep.subr.mxu0 0.0
    %6335 = vmatpush2.msra.mxu0 0.0
    %6336 = vmatprep.subr.mxu0 0.0
    %6337 = vmatpush2.msra.mxu0 0.0
    %6338 = vmatprep.subr.mxu0 0.0
    %6339 = vmatpush2.msra.mxu0 0.0
    %6340 = vmatprep.subr.mxu0 0.0
    %6341 = vmatpush2.msra.mxu0 0.0
    %6342 = vmatprep.subr.mxu0 0.0
    %6343 = vmatpush2.msra.mxu0 0.0
    %6344 = vmatprep.subr.mxu0 0.0
    %6345 = vmatpush2.msra.mxu0 0.0
    %6346 = vmatprep.subr.mxu0 0.0
    %6347 = vmatpush2.msra.mxu0 0.0
    %6348 = vmatprep.subr.mxu0 0.0
    %6349 = vmatpush2.msra.mxu0 0.0
    %6350 = vmatprep.subr.mxu0 0.0
    %6351 = vmatpush2.msra.mxu0 0.0
    %6352 = vmatprep.subr.mxu0 0.0
    %6353 = vmatpush2.msra.mxu0 0.0
    %6354 = vmatprep.subr.mxu0 0.0
    %6355 = vmatpush2.msra.mxu0 0.0
    %6356 = vmatprep.subr.mxu0 0.0
    %6357 = vmatpush2.msra.mxu0 0.0
    %6358 = vmatprep.subr.mxu0 0.0
    %6359 = vmatpush2.msra.mxu0 0.0
    %6360 = vmatprep.mubr.f32.mxu0 0.0
    %6361 = vmatmul.mubr.f32.gmra.mxu0 %v6285
    %v6362 = vpop.f32.mrf.mxu0
    %v6363 = vadd.f32 0.0, %v6362
    %v6364 = vpop.f32.mrf.mxu0
    %6365 = vmatprep.mubr.f32.mxu0 0.0
    %6366 = vmatmul.mubr.f32.gmra.mxu0 %v6288
    %v6367 = vpop.f32.mrf.mxu0
    %v6368 = vadd.f32 0.0, %v6367
    %v6369 = vpop.f32.mrf.mxu0
    %6370 = vmatprep.mubr.f32.mxu0 0.0
    %6371 = vmatmul.mubr.f32.gmra.mxu0 %v6291
    %v6372 = vpop.f32.mrf.mxu0
    %v6373 = vadd.f32 0.0, %v6372
    %v6374 = vpop.f32.mrf.mxu0
    %6375 = vmatprep.mubr.f32.mxu0 0.0
    %6376 = vmatmul.mubr.f32.gmra.mxu0 %v6294
    %v6377 = vpop.f32.mrf.mxu0
    %v6378 = vadd.f32 0.0, %v6377
    %v6379 = vpop.f32.mrf.mxu0
    %6380 = vdwg.mxu0
    %6381 = vrot.lane.b32.xlu0 %v342, 48
    %v6382 = vpop.permute.xlu0 %6381
    %6383 = vrot.lane.b32.xlu0 %v347, 48
    %v6384 = vpop.permute.xlu0 %6383
    %6385 = vrot.lane.b32.xlu0 %v352, 48
    %v6386 = vpop.permute.xlu0 %6385
    %6387 = vrot.lane.b32.xlu0 %v357, 48
    %v6388 = vpop.permute.xlu0 %6387
    %v6394 = vsel %vm138, %v6139, 0
    %v6397 = vsel %vm138, %v6140, 0
    %v6400 = vsel %vm138, %v6141, 0
    %v6403 = vsel %vm138, %v6142, 0
    %6405 = vmatprep.subr.mxu0 0.0
    %6406 = vmatpush1.msra.mxu0 0.0
    %6407 = vmatprep.subr.mxu0 0.0
    %6408 = vmatpush1.msra.mxu0 0.0
    %6409 = vmatprep.subr.mxu0 0.0
    %6410 = vmatpush1.msra.mxu0 0.0
    %6411 = vmatprep.subr.mxu0 0.0
    %6412 = vmatpush1.msra.mxu0 0.0
    %6413 = vmatprep.subr.mxu0 0.0
    %6414 = vmatpush1.msra.mxu0 0.0
    %6415 = vmatprep.subr.mxu0 0.0
    %6416 = vmatpush1.msra.mxu0 0.0
    %6417 = vmatprep.subr.mxu0 0.0
    %6418 = vmatpush1.msra.mxu0 0.0
    %6419 = vmatprep.subr.mxu0 0.0
    %6420 = vmatpush1.msra.mxu0 0.0
    %6421 = vmatprep.subr.mxu0 0.0
    %6422 = vmatpush1.msra.mxu0 0.0
    %6423 = vmatprep.subr.mxu0 0.0
    %6424 = vmatpush1.msra.mxu0 0.0
    %6425 = vmatprep.subr.mxu0 0.0
    %6426 = vmatpush1.msra.mxu0 0.0
    %6427 = vmatprep.subr.mxu0 0.0
    %6428 = vmatpush1.msra.mxu0 0.0
    %6429 = vmatprep.subr.mxu0 0.0
    %6430 = vmatpush1.msra.mxu0 %v6388
    %6431 = vmatprep.subr.mxu0 0.0
    %6432 = vmatpush1.msra.mxu0 %v6386
    %6433 = vmatprep.subr.mxu0 0.0
    %6434 = vmatpush1.msra.mxu0 %v6384
    %6435 = vmatprep.subr.mxu0 0.0
    %6436 = vmatpush1.msra.mxu0 %v6382
    %6437 = vmatprep.subr.mxu0 0.0
    %6438 = vmatpush2.msra.mxu0 0.0
    %6439 = vmatprep.subr.mxu0 0.0
    %6440 = vmatpush2.msra.mxu0 0.0
    %6441 = vmatprep.subr.mxu0 0.0
    %6442 = vmatpush2.msra.mxu0 0.0
    %6443 = vmatprep.subr.mxu0 0.0
    %6444 = vmatpush2.msra.mxu0 0.0
    %6445 = vmatprep.subr.mxu0 0.0
    %6446 = vmatpush2.msra.mxu0 0.0
    %6447 = vmatprep.subr.mxu0 0.0
    %6448 = vmatpush2.msra.mxu0 0.0
    %6449 = vmatprep.subr.mxu0 0.0
    %6450 = vmatpush2.msra.mxu0 0.0
    %6451 = vmatprep.subr.mxu0 0.0
    %6452 = vmatpush2.msra.mxu0 0.0
    %6453 = vmatprep.subr.mxu0 0.0
    %6454 = vmatpush2.msra.mxu0 0.0
    %6455 = vmatprep.subr.mxu0 0.0
    %6456 = vmatpush2.msra.mxu0 0.0
    %6457 = vmatprep.subr.mxu0 0.0
    %6458 = vmatpush2.msra.mxu0 0.0
    %6459 = vmatprep.subr.mxu0 0.0
    %6460 = vmatpush2.msra.mxu0 0.0
    %6461 = vmatprep.subr.mxu0 0.0
    %6462 = vmatpush2.msra.mxu0 0.0
    %6463 = vmatprep.subr.mxu0 0.0
    %6464 = vmatpush2.msra.mxu0 0.0
    %6465 = vmatprep.subr.mxu0 0.0
    %6466 = vmatpush2.msra.mxu0 0.0
    %6467 = vmatprep.subr.mxu0 0.0
    %6468 = vmatpush2.msra.mxu0 0.0
    %6469 = vmatprep.mubr.f32.mxu0 0.0
    %6470 = vmatmul.mubr.f32.gmra.mxu0 %v6394
    %v6471 = vpop.f32.mrf.mxu0
    %v6472 = vadd.f32 0.0, %v6471
    %v6473 = vpop.f32.mrf.mxu0
    %6474 = vmatprep.mubr.f32.mxu0 0.0
    %6475 = vmatmul.mubr.f32.gmra.mxu0 %v6397
    %v6476 = vpop.f32.mrf.mxu0
    %v6477 = vadd.f32 0.0, %v6476
    %v6478 = vpop.f32.mrf.mxu0
    %6479 = vmatprep.mubr.f32.mxu0 0.0
    %6480 = vmatmul.mubr.f32.gmra.mxu0 %v6400
    %v6481 = vpop.f32.mrf.mxu0
    %v6482 = vadd.f32 0.0, %v6481
    %v6483 = vpop.f32.mrf.mxu0
    %6484 = vmatprep.mubr.f32.mxu0 0.0
    %6485 = vmatmul.mubr.f32.gmra.mxu0 %v6403
    %v6486 = vpop.f32.mrf.mxu0
    %v6487 = vadd.f32 0.0, %v6486
    %v6488 = vpop.f32.mrf.mxu0
    %6489 = vdwg.mxu0
    %6490 = vrot.lane.b32.xlu0 %v362, 48
    %v6491 = vpop.permute.xlu0 %6490
    %6492 = vrot.lane.b32.xlu0 %v367, 48
    %v6493 = vpop.permute.xlu0 %6492
    %6494 = vrot.lane.b32.xlu0 %v372, 48
    %v6495 = vpop.permute.xlu0 %6494
    %6496 = vrot.lane.b32.xlu0 %v377, 48
    %v6497 = vpop.permute.xlu0 %6496
    %v6503 = vsel %vm138, %v6143, 0
    %v6506 = vsel %vm138, %v6144, 0
    %v6509 = vsel %vm138, %v6145, 0
    %v6512 = vsel %vm138, %v6146, 0
    %6514 = vmatprep.subr.mxu0 0.0
    %6515 = vmatpush1.msra.mxu0 0.0
    %6516 = vmatprep.subr.mxu0 0.0
    %6517 = vmatpush1.msra.mxu0 0.0
    %6518 = vmatprep.subr.mxu0 0.0
    %6519 = vmatpush1.msra.mxu0 0.0
    %6520 = vmatprep.subr.mxu0 0.0
    %6521 = vmatpush1.msra.mxu0 0.0
    %6522 = vmatprep.subr.mxu0 0.0
    %6523 = vmatpush1.msra.mxu0 0.0
    %6524 = vmatprep.subr.mxu0 0.0
    %6525 = vmatpush1.msra.mxu0 0.0
    %6526 = vmatprep.subr.mxu0 0.0
    %6527 = vmatpush1.msra.mxu0 0.0
    %6528 = vmatprep.subr.mxu0 0.0
    %6529 = vmatpush1.msra.mxu0 0.0
    %6530 = vmatprep.subr.mxu0 0.0
    %6531 = vmatpush1.msra.mxu0 0.0
    %6532 = vmatprep.subr.mxu0 0.0
    %6533 = vmatpush1.msra.mxu0 0.0
    %6534 = vmatprep.subr.mxu0 0.0
    %6535 = vmatpush1.msra.mxu0 0.0
    %6536 = vmatprep.subr.mxu0 0.0
    %6537 = vmatpush1.msra.mxu0 0.0
    %6538 = vmatprep.subr.mxu0 0.0
    %6539 = vmatpush1.msra.mxu0 %v6497
    %6540 = vmatprep.subr.mxu0 0.0
    %6541 = vmatpush1.msra.mxu0 %v6495
    %6542 = vmatprep.subr.mxu0 0.0
    %6543 = vmatpush1.msra.mxu0 %v6493
    %6544 = vmatprep.subr.mxu0 0.0
    %6545 = vmatpush1.msra.mxu0 %v6491
    %6546 = vmatprep.subr.mxu0 0.0
    %6547 = vmatpush2.msra.mxu0 0.0
    %6548 = vmatprep.subr.mxu0 0.0
    %6549 = vmatpush2.msra.mxu0 0.0
    %6550 = vmatprep.subr.mxu0 0.0
    %6551 = vmatpush2.msra.mxu0 0.0
    %6552 = vmatprep.subr.mxu0 0.0
    %6553 = vmatpush2.msra.mxu0 0.0
    %6554 = vmatprep.subr.mxu0 0.0
    %6555 = vmatpush2.msra.mxu0 0.0
    %6556 = vmatprep.subr.mxu0 0.0
    %6557 = vmatpush2.msra.mxu0 0.0
    %6558 = vmatprep.subr.mxu0 0.0
    %6559 = vmatpush2.msra.mxu0 0.0
    %6560 = vmatprep.subr.mxu0 0.0
    %6561 = vmatpush2.msra.mxu0 0.0
    %6562 = vmatprep.subr.mxu0 0.0
    %6563 = vmatpush2.msra.mxu0 0.0
    %6564 = vmatprep.subr.mxu0 0.0
    %6565 = vmatpush2.msra.mxu0 0.0
    %6566 = vmatprep.subr.mxu0 0.0
    %6567 = vmatpush2.msra.mxu0 0.0
    %6568 = vmatprep.subr.mxu0 0.0
    %6569 = vmatpush2.msra.mxu0 0.0
    %6570 = vmatprep.subr.mxu0 0.0
    %6571 = vmatpush2.msra.mxu0 0.0
    %6572 = vmatprep.subr.mxu0 0.0
    %6573 = vmatpush2.msra.mxu0 0.0
    %6574 = vmatprep.subr.mxu0 0.0
    %6575 = vmatpush2.msra.mxu0 0.0
    %6576 = vmatprep.subr.mxu0 0.0
    %6577 = vmatpush2.msra.mxu0 0.0
    %6578 = vmatprep.mubr.f32.mxu0 0.0
    %6579 = vmatmul.mubr.f32.gmra.mxu0 %v6503
    %v6580 = vpop.f32.mrf.mxu0
    %v6581 = vadd.f32 0.0, %v6580
    %v6582 = vpop.f32.mrf.mxu0
    %6583 = vmatprep.mubr.f32.mxu0 0.0
    %6584 = vmatmul.mubr.f32.gmra.mxu0 %v6506
    %v6585 = vpop.f32.mrf.mxu0
    %v6586 = vadd.f32 0.0, %v6585
    %v6587 = vpop.f32.mrf.mxu0
    %6588 = vmatprep.mubr.f32.mxu0 0.0
    %6589 = vmatmul.mubr.f32.gmra.mxu0 %v6509
    %v6590 = vpop.f32.mrf.mxu0
    %v6591 = vadd.f32 0.0, %v6590
    %v6592 = vpop.f32.mrf.mxu0
    %6593 = vmatprep.mubr.f32.mxu0 0.0
    %6594 = vmatmul.mubr.f32.gmra.mxu0 %v6512
    %v6595 = vpop.f32.mrf.mxu0
    %v6596 = vadd.f32 0.0, %v6595
    %v6597 = vpop.f32.mrf.mxu0
    %6598 = vdwg.mxu0
    %6599 = vrot.lane.b32.xlu0 %v382, 48
    %v6600 = vpop.permute.xlu0 %6599
    %6601 = vrot.lane.b32.xlu0 %v387, 48
    %v6602 = vpop.permute.xlu0 %6601
    %6603 = vrot.lane.b32.xlu0 %v392, 48
    %v6604 = vpop.permute.xlu0 %6603
    %6605 = vrot.lane.b32.xlu0 %v397, 48
    %v6606 = vpop.permute.xlu0 %6605
    %v6612 = vsel %vm138, %v6147, 0
    %v6615 = vsel %vm138, %v6148, 0
    %v6618 = vsel %vm138, %v6149, 0
    %v6621 = vsel %vm138, %v6150, 0
    %6623 = vmatprep.subr.mxu0 0.0
    %6624 = vmatpush1.msra.mxu0 0.0
    %6625 = vmatprep.subr.mxu0 0.0
    %6626 = vmatpush1.msra.mxu0 0.0
    %6627 = vmatprep.subr.mxu0 0.0
    %6628 = vmatpush1.msra.mxu0 0.0
    %6629 = vmatprep.subr.mxu0 0.0
    %6630 = vmatpush1.msra.mxu0 0.0
    %6631 = vmatprep.subr.mxu0 0.0
    %6632 = vmatpush1.msra.mxu0 0.0
    %6633 = vmatprep.subr.mxu0 0.0
    %6634 = vmatpush1.msra.mxu0 0.0
    %6635 = vmatprep.subr.mxu0 0.0
    %6636 = vmatpush1.msra.mxu0 0.0
    %6637 = vmatprep.subr.mxu0 0.0
    %6638 = vmatpush1.msra.mxu0 0.0
    %6639 = vmatprep.subr.mxu0 0.0
    %6640 = vmatpush1.msra.mxu0 0.0
    %6641 = vmatprep.subr.mxu0 0.0
    %6642 = vmatpush1.msra.mxu0 0.0
    %6643 = vmatprep.subr.mxu0 0.0
    %6644 = vmatpush1.msra.mxu0 0.0
    %6645 = vmatprep.subr.mxu0 0.0
    %6646 = vmatpush1.msra.mxu0 0.0
    %6647 = vmatprep.subr.mxu0 0.0
    %6648 = vmatpush1.msra.mxu0 %v6606
    %6649 = vmatprep.subr.mxu0 0.0
    %6650 = vmatpush1.msra.mxu0 %v6604
    %6651 = vmatprep.subr.mxu0 0.0
    %6652 = vmatpush1.msra.mxu0 %v6602
    %6653 = vmatprep.subr.mxu0 0.0
    %6654 = vmatpush1.msra.mxu0 %v6600
    %6655 = vmatprep.subr.mxu0 0.0
    %6656 = vmatpush2.msra.mxu0 0.0
    %6657 = vmatprep.subr.mxu0 0.0
    %6658 = vmatpush2.msra.mxu0 0.0
    %6659 = vmatprep.subr.mxu0 0.0
    %6660 = vmatpush2.msra.mxu0 0.0
    %6661 = vmatprep.subr.mxu0 0.0
    %6662 = vmatpush2.msra.mxu0 0.0
    %6663 = vmatprep.subr.mxu0 0.0
    %6664 = vmatpush2.msra.mxu0 0.0
    %6665 = vmatprep.subr.mxu0 0.0
    %6666 = vmatpush2.msra.mxu0 0.0
    %6667 = vmatprep.subr.mxu0 0.0
    %6668 = vmatpush2.msra.mxu0 0.0
    %6669 = vmatprep.subr.mxu0 0.0
    %6670 = vmatpush2.msra.mxu0 0.0
    %6671 = vmatprep.subr.mxu0 0.0
    %6672 = vmatpush2.msra.mxu0 0.0
    %6673 = vmatprep.subr.mxu0 0.0
    %6674 = vmatpush2.msra.mxu0 0.0
    %6675 = vmatprep.subr.mxu0 0.0
    %6676 = vmatpush2.msra.mxu0 0.0
    %6677 = vmatprep.subr.mxu0 0.0
    %6678 = vmatpush2.msra.mxu0 0.0
    %6679 = vmatprep.subr.mxu0 0.0
    %6680 = vmatpush2.msra.mxu0 0.0
    %6681 = vmatprep.subr.mxu0 0.0
    %6682 = vmatpush2.msra.mxu0 0.0
    %6683 = vmatprep.subr.mxu0 0.0
    %6684 = vmatpush2.msra.mxu0 0.0
    %6685 = vmatprep.subr.mxu0 0.0
    %6686 = vmatpush2.msra.mxu0 0.0
    %6687 = vmatprep.mubr.f32.mxu0 0.0
    %6688 = vmatmul.mubr.f32.gmra.mxu0 %v6612
    %v6689 = vpop.f32.mrf.mxu0
    %v6690 = vadd.f32 0.0, %v6689
    %v6691 = vpop.f32.mrf.mxu0
    %6692 = vmatprep.mubr.f32.mxu0 0.0
    %6693 = vmatmul.mubr.f32.gmra.mxu0 %v6615
    %v6694 = vpop.f32.mrf.mxu0
    %v6695 = vadd.f32 0.0, %v6694
    %v6696 = vpop.f32.mrf.mxu0
    %6697 = vmatprep.mubr.f32.mxu0 0.0
    %6698 = vmatmul.mubr.f32.gmra.mxu0 %v6618
    %v6699 = vpop.f32.mrf.mxu0
    %v6700 = vadd.f32 0.0, %v6699
    %v6701 = vpop.f32.mrf.mxu0
    %6702 = vmatprep.mubr.f32.mxu0 0.0
    %6703 = vmatmul.mubr.f32.gmra.mxu0 %v6621
    %v6704 = vpop.f32.mrf.mxu0
    %v6705 = vadd.f32 0.0, %v6704
    %v6706 = vpop.f32.mrf.mxu0
    %6707 = vdwg.mxu0
    %6708 = vrot.lane.b32.xlu0 %v402, 48
    %v6709 = vpop.permute.xlu0 %6708
    %6710 = vrot.lane.b32.xlu0 %v407, 48
    %v6711 = vpop.permute.xlu0 %6710
    %6712 = vrot.lane.b32.xlu0 %v412, 48
    %v6713 = vpop.permute.xlu0 %6712
    %6714 = vrot.lane.b32.xlu0 %v417, 48
    %v6715 = vpop.permute.xlu0 %6714
    %v6721 = vsel %vm138, %v6151, 0
    %v6724 = vsel %vm138, %v6152, 0
    %v6727 = vsel %vm138, %v6153, 0
    %v6730 = vsel %vm138, %v6154, 0
    %6732 = vmatprep.subr.mxu0 0.0
    %6733 = vmatpush1.msra.mxu0 0.0
    %6734 = vmatprep.subr.mxu0 0.0
    %6735 = vmatpush1.msra.mxu0 0.0
    %6736 = vmatprep.subr.mxu0 0.0
    %6737 = vmatpush1.msra.mxu0 0.0
    %6738 = vmatprep.subr.mxu0 0.0
    %6739 = vmatpush1.msra.mxu0 0.0
    %6740 = vmatprep.subr.mxu0 0.0
    %6741 = vmatpush1.msra.mxu0 0.0
    %6742 = vmatprep.subr.mxu0 0.0
    %6743 = vmatpush1.msra.mxu0 0.0
    %6744 = vmatprep.subr.mxu0 0.0
    %6745 = vmatpush1.msra.mxu0 0.0
    %6746 = vmatprep.subr.mxu0 0.0
    %6747 = vmatpush1.msra.mxu0 0.0
    %6748 = vmatprep.subr.mxu0 0.0
    %6749 = vmatpush1.msra.mxu0 0.0
    %6750 = vmatprep.subr.mxu0 0.0
    %6751 = vmatpush1.msra.mxu0 0.0
    %6752 = vmatprep.subr.mxu0 0.0
    %6753 = vmatpush1.msra.mxu0 0.0
    %6754 = vmatprep.subr.mxu0 0.0
    %6755 = vmatpush1.msra.mxu0 0.0
    %6756 = vmatprep.subr.mxu0 0.0
    %6757 = vmatpush1.msra.mxu0 %v6715
    %6758 = vmatprep.subr.mxu0 0.0
    %6759 = vmatpush1.msra.mxu0 %v6713
    %6760 = vmatprep.subr.mxu0 0.0
    %6761 = vmatpush1.msra.mxu0 %v6711
    %6762 = vmatprep.subr.mxu0 0.0
    %6763 = vmatpush1.msra.mxu0 %v6709
    %6764 = vmatprep.subr.mxu0 0.0
    %6765 = vmatpush2.msra.mxu0 0.0
    %6766 = vmatprep.subr.mxu0 0.0
    %6767 = vmatpush2.msra.mxu0 0.0
    %6768 = vmatprep.subr.mxu0 0.0
    %6769 = vmatpush2.msra.mxu0 0.0
    %6770 = vmatprep.subr.mxu0 0.0
    %6771 = vmatpush2.msra.mxu0 0.0
    %6772 = vmatprep.subr.mxu0 0.0
    %6773 = vmatpush2.msra.mxu0 0.0
    %6774 = vmatprep.subr.mxu0 0.0
    %6775 = vmatpush2.msra.mxu0 0.0
    %6776 = vmatprep.subr.mxu0 0.0
    %6777 = vmatpush2.msra.mxu0 0.0
    %6778 = vmatprep.subr.mxu0 0.0
    %6779 = vmatpush2.msra.mxu0 0.0
    %6780 = vmatprep.subr.mxu0 0.0
    %6781 = vmatpush2.msra.mxu0 0.0
    %6782 = vmatprep.subr.mxu0 0.0
    %6783 = vmatpush2.msra.mxu0 0.0
    %6784 = vmatprep.subr.mxu0 0.0
    %6785 = vmatpush2.msra.mxu0 0.0
    %6786 = vmatprep.subr.mxu0 0.0
    %6787 = vmatpush2.msra.mxu0 0.0
    %6788 = vmatprep.subr.mxu0 0.0
    %6789 = vmatpush2.msra.mxu0 0.0
    %6790 = vmatprep.subr.mxu0 0.0
    %6791 = vmatpush2.msra.mxu0 0.0
    %6792 = vmatprep.subr.mxu0 0.0
    %6793 = vmatpush2.msra.mxu0 0.0
    %6794 = vmatprep.subr.mxu0 0.0
    %6795 = vmatpush2.msra.mxu0 0.0
    %6796 = vmatprep.mubr.f32.mxu0 0.0
    %6797 = vmatmul.mubr.f32.gmra.mxu0 %v6721
    %v6798 = vpop.f32.mrf.mxu0
    %v6799 = vadd.f32 0.0, %v6798
    %v6800 = vpop.f32.mrf.mxu0
    %6801 = vmatprep.mubr.f32.mxu0 0.0
    %6802 = vmatmul.mubr.f32.gmra.mxu0 %v6724
    %v6803 = vpop.f32.mrf.mxu0
    %v6804 = vadd.f32 0.0, %v6803
    %v6805 = vpop.f32.mrf.mxu0
    %6806 = vmatprep.mubr.f32.mxu0 0.0
    %6807 = vmatmul.mubr.f32.gmra.mxu0 %v6727
    %v6808 = vpop.f32.mrf.mxu0
    %v6809 = vadd.f32 0.0, %v6808
    %v6810 = vpop.f32.mrf.mxu0
    %6811 = vmatprep.mubr.f32.mxu0 0.0
    %6812 = vmatmul.mubr.f32.gmra.mxu0 %v6730
    %v6813 = vpop.f32.mrf.mxu0
    %v6814 = vadd.f32 0.0, %v6813
    %v6815 = vpop.f32.mrf.mxu0
    %6816 = vdwg.mxu0
    %6817 = vrot.lane.b32.xlu0 %v422, 48
    %v6818 = vpop.permute.xlu0 %6817
    %6819 = vrot.lane.b32.xlu0 %v427, 48
    %v6820 = vpop.permute.xlu0 %6819
    %6821 = vrot.lane.b32.xlu0 %v432, 48
    %v6822 = vpop.permute.xlu0 %6821
    %6823 = vrot.lane.b32.xlu0 %v437, 48
    %v6824 = vpop.permute.xlu0 %6823
    %v6830 = vsel %vm138, %v6155, 0
    %v6833 = vsel %vm138, %v6156, 0
    %v6836 = vsel %vm138, %v6157, 0
    %v6839 = vsel %vm138, %v6158, 0
    %6841 = vmatprep.subr.mxu0 0.0
    %6842 = vmatpush1.msra.mxu0 0.0
    %6843 = vmatprep.subr.mxu0 0.0
    %6844 = vmatpush1.msra.mxu0 0.0
    %6845 = vmatprep.subr.mxu0 0.0
    %6846 = vmatpush1.msra.mxu0 0.0
    %6847 = vmatprep.subr.mxu0 0.0
    %6848 = vmatpush1.msra.mxu0 0.0
    %6849 = vmatprep.subr.mxu0 0.0
    %6850 = vmatpush1.msra.mxu0 0.0
    %6851 = vmatprep.subr.mxu0 0.0
    %6852 = vmatpush1.msra.mxu0 0.0
    %6853 = vmatprep.subr.mxu0 0.0
    %6854 = vmatpush1.msra.mxu0 0.0
    %6855 = vmatprep.subr.mxu0 0.0
    %6856 = vmatpush1.msra.mxu0 0.0
    %6857 = vmatprep.subr.mxu0 0.0
    %6858 = vmatpush1.msra.mxu0 0.0
    %6859 = vmatprep.subr.mxu0 0.0
    %6860 = vmatpush1.msra.mxu0 0.0
    %6861 = vmatprep.subr.mxu0 0.0
    %6862 = vmatpush1.msra.mxu0 0.0
    %6863 = vmatprep.subr.mxu0 0.0
    %6864 = vmatpush1.msra.mxu0 0.0
    %6865 = vmatprep.subr.mxu0 0.0
    %6866 = vmatpush1.msra.mxu0 %v6824
    %6867 = vmatprep.subr.mxu0 0.0
    %6868 = vmatpush1.msra.mxu0 %v6822
    %6869 = vmatprep.subr.mxu0 0.0
    %6870 = vmatpush1.msra.mxu0 %v6820
    %6871 = vmatprep.subr.mxu0 0.0
    %6872 = vmatpush1.msra.mxu0 %v6818
    %6873 = vmatprep.subr.mxu0 0.0
    %6874 = vmatpush2.msra.mxu0 0.0
    %6875 = vmatprep.subr.mxu0 0.0
    %6876 = vmatpush2.msra.mxu0 0.0
    %6877 = vmatprep.subr.mxu0 0.0
    %6878 = vmatpush2.msra.mxu0 0.0
    %6879 = vmatprep.subr.mxu0 0.0
    %6880 = vmatpush2.msra.mxu0 0.0
    %6881 = vmatprep.subr.mxu0 0.0
    %6882 = vmatpush2.msra.mxu0 0.0
    %6883 = vmatprep.subr.mxu0 0.0
    %6884 = vmatpush2.msra.mxu0 0.0
    %6885 = vmatprep.subr.mxu0 0.0
    %6886 = vmatpush2.msra.mxu0 0.0
    %6887 = vmatprep.subr.mxu0 0.0
    %6888 = vmatpush2.msra.mxu0 0.0
    %6889 = vmatprep.subr.mxu0 0.0
    %6890 = vmatpush2.msra.mxu0 0.0
    %6891 = vmatprep.subr.mxu0 0.0
    %6892 = vmatpush2.msra.mxu0 0.0
    %6893 = vmatprep.subr.mxu0 0.0
    %6894 = vmatpush2.msra.mxu0 0.0
    %6895 = vmatprep.subr.mxu0 0.0
    %6896 = vmatpush2.msra.mxu0 0.0
    %6897 = vmatprep.subr.mxu0 0.0
    %6898 = vmatpush2.msra.mxu0 0.0
    %6899 = vmatprep.subr.mxu0 0.0
    %6900 = vmatpush2.msra.mxu0 0.0
    %6901 = vmatprep.subr.mxu0 0.0
    %6902 = vmatpush2.msra.mxu0 0.0
    %6903 = vmatprep.subr.mxu0 0.0
    %6904 = vmatpush2.msra.mxu0 0.0
    %6905 = vmatprep.mubr.f32.mxu0 0.0
    %6906 = vmatmul.mubr.f32.gmra.mxu0 %v6830
    %v6907 = vpop.f32.mrf.mxu0
    %v6908 = vadd.f32 0.0, %v6907
    %v6909 = vpop.f32.mrf.mxu0
    %6910 = vmatprep.mubr.f32.mxu0 0.0
    %6911 = vmatmul.mubr.f32.gmra.mxu0 %v6833
    %v6912 = vpop.f32.mrf.mxu0
    %v6913 = vadd.f32 0.0, %v6912
    %v6914 = vpop.f32.mrf.mxu0
    %6915 = vmatprep.mubr.f32.mxu0 0.0
    %6916 = vmatmul.mubr.f32.gmra.mxu0 %v6836
    %v6917 = vpop.f32.mrf.mxu0
    %v6918 = vadd.f32 0.0, %v6917
    %v6919 = vpop.f32.mrf.mxu0
    %6920 = vmatprep.mubr.f32.mxu0 0.0
    %6921 = vmatmul.mubr.f32.gmra.mxu0 %v6839
    %v6922 = vpop.f32.mrf.mxu0
    %v6923 = vadd.f32 0.0, %v6922
    %v6924 = vpop.f32.mrf.mxu0
    %6925 = vdwg.mxu0
    %6926 = vrot.lane.b32.xlu0 %v442, 48
    %v6927 = vpop.permute.xlu0 %6926
    %6928 = vrot.lane.b32.xlu0 %v447, 48
    %v6929 = vpop.permute.xlu0 %6928
    %6930 = vrot.lane.b32.xlu0 %v452, 48
    %v6931 = vpop.permute.xlu0 %6930
    %6932 = vrot.lane.b32.xlu0 %v457, 48
    %v6933 = vpop.permute.xlu0 %6932
    %v6939 = vsel %vm138, %v6159, 0
    %v6942 = vsel %vm138, %v6160, 0
    %v6945 = vsel %vm138, %v6161, 0
    %v6948 = vsel %vm138, %v6162, 0
    %6950 = vmatprep.subr.mxu0 0.0
    %6951 = vmatpush1.msra.mxu0 0.0
    %6952 = vmatprep.subr.mxu0 0.0
    %6953 = vmatpush1.msra.mxu0 0.0
    %6954 = vmatprep.subr.mxu0 0.0
    %6955 = vmatpush1.msra.mxu0 0.0
    %6956 = vmatprep.subr.mxu0 0.0
    %6957 = vmatpush1.msra.mxu0 0.0
    %6958 = vmatprep.subr.mxu0 0.0
    %6959 = vmatpush1.msra.mxu0 0.0
    %6960 = vmatprep.subr.mxu0 0.0
    %6961 = vmatpush1.msra.mxu0 0.0
    %6962 = vmatprep.subr.mxu0 0.0
    %6963 = vmatpush1.msra.mxu0 0.0
    %6964 = vmatprep.subr.mxu0 0.0
    %6965 = vmatpush1.msra.mxu0 0.0
    %6966 = vmatprep.subr.mxu0 0.0
    %6967 = vmatpush1.msra.mxu0 0.0
    %6968 = vmatprep.subr.mxu0 0.0
    %6969 = vmatpush1.msra.mxu0 0.0
    %6970 = vmatprep.subr.mxu0 0.0
    %6971 = vmatpush1.msra.mxu0 0.0
    %6972 = vmatprep.subr.mxu0 0.0
    %6973 = vmatpush1.msra.mxu0 0.0
    %6974 = vmatprep.subr.mxu0 0.0
    %6975 = vmatpush1.msra.mxu0 %v6933
    %6976 = vmatprep.subr.mxu0 0.0
    %6977 = vmatpush1.msra.mxu0 %v6931
    %6978 = vmatprep.subr.mxu0 0.0
    %6979 = vmatpush1.msra.mxu0 %v6929
    %6980 = vmatprep.subr.mxu0 0.0
    %6981 = vmatpush1.msra.mxu0 %v6927
    %6982 = vmatprep.subr.mxu0 0.0
    %6983 = vmatpush2.msra.mxu0 0.0
    %6984 = vmatprep.subr.mxu0 0.0
    %6985 = vmatpush2.msra.mxu0 0.0
    %6986 = vmatprep.subr.mxu0 0.0
    %6987 = vmatpush2.msra.mxu0 0.0
    %6988 = vmatprep.subr.mxu0 0.0
    %6989 = vmatpush2.msra.mxu0 0.0
    %6990 = vmatprep.subr.mxu0 0.0
    %6991 = vmatpush2.msra.mxu0 0.0
    %6992 = vmatprep.subr.mxu0 0.0
    %6993 = vmatpush2.msra.mxu0 0.0
    %6994 = vmatprep.subr.mxu0 0.0
    %6995 = vmatpush2.msra.mxu0 0.0
    %6996 = vmatprep.subr.mxu0 0.0
    %6997 = vmatpush2.msra.mxu0 0.0
    %6998 = vmatprep.subr.mxu0 0.0
    %6999 = vmatpush2.msra.mxu0 0.0
    %7000 = vmatprep.subr.mxu0 0.0
    %7001 = vmatpush2.msra.mxu0 0.0
    %7002 = vmatprep.subr.mxu0 0.0
    %7003 = vmatpush2.msra.mxu0 0.0
    %7004 = vmatprep.subr.mxu0 0.0
    %7005 = vmatpush2.msra.mxu0 0.0
    %7006 = vmatprep.subr.mxu0 0.0
    %7007 = vmatpush2.msra.mxu0 0.0
    %7008 = vmatprep.subr.mxu0 0.0
    %7009 = vmatpush2.msra.mxu0 0.0
    %7010 = vmatprep.subr.mxu0 0.0
    %7011 = vmatpush2.msra.mxu0 0.0
    %7012 = vmatprep.subr.mxu0 0.0
    %7013 = vmatpush2.msra.mxu0 0.0
    %7014 = vmatprep.mubr.f32.mxu0 0.0
    %7015 = vmatmul.mubr.f32.gmra.mxu0 %v6939
    %v7016 = vpop.f32.mrf.mxu0
    %v7017 = vadd.f32 0.0, %v7016
    %v7018 = vpop.f32.mrf.mxu0
    %7019 = vmatprep.mubr.f32.mxu0 0.0
    %7020 = vmatmul.mubr.f32.gmra.mxu0 %v6942
    %v7021 = vpop.f32.mrf.mxu0
    %v7022 = vadd.f32 0.0, %v7021
    %v7023 = vpop.f32.mrf.mxu0
    %7024 = vmatprep.mubr.f32.mxu0 0.0
    %7025 = vmatmul.mubr.f32.gmra.mxu0 %v6945
    %v7026 = vpop.f32.mrf.mxu0
    %v7027 = vadd.f32 0.0, %v7026
    %v7028 = vpop.f32.mrf.mxu0
    %7029 = vmatprep.mubr.f32.mxu0 0.0
    %7030 = vmatmul.mubr.f32.gmra.mxu0 %v6948
    %v7031 = vpop.f32.mrf.mxu0
    %v7032 = vadd.f32 0.0, %v7031
    %v7033 = vpop.f32.mrf.mxu0
    %7034 = vdwg.mxu0
    %s7035 = scalar_lea.vmem [#allocation7], 96
    %v7036 = vld [vmem:[%s7035] sm:$0xff]
    %v7037 = vld [vmem:[%s7035 + $0x8] sm:$0xff]
    %v7038 = vld [vmem:[%s7035 + $0x10] sm:$0xff]
    %v7039 = vld [vmem:[%s7035 + $0x18] sm:$0xff]
    %7040 = vrot.lane.b32.xlu0 %v302, 104
    %v7041 = vpop.permute.xlu0 %7040
    %7042 = vrot.lane.b32.xlu0 %v307, 104
    %v7043 = vpop.permute.xlu0 %7042
    %7044 = vrot.lane.b32.xlu0 %v312, 104
    %v7045 = vpop.permute.xlu0 %7044
    %7046 = vrot.lane.b32.xlu0 %v317, 104
    %v7047 = vpop.permute.xlu0 %7046
    %7048 = vrot.lane.b32.xlu0 %v302, 72
    %v7049 = vpop.permute.xlu0 %7048
    %7050 = vrot.lane.b32.xlu0 %v307, 72
    %v7051 = vpop.permute.xlu0 %7050
    %7052 = vrot.lane.b32.xlu0 %v312, 72
    %v7053 = vpop.permute.xlu0 %7052
    %7054 = vrot.lane.b32.xlu0 %v317, 72
    %v7055 = vpop.permute.xlu0 %7054
    %v7056 = vsel %vm492, %v7041, 0
    %v7058 = vsel %vm492, %v7043, 0
    %v7060 = vsel %vm492, %v7045, 0
    %v7062 = vsel %vm492, %v7047, 0
    %v7064 = vsel %vm492, %v7049, 0
    %v7066 = vsel %vm492, %v7051, 0
    %v7068 = vsel %vm492, %v7053, 0
    %v7070 = vsel %vm492, %v7055, 0
    %7072 = vmatprep.subr.mxu0 0.0
    %7073 = vmatpush1.xpose.msra.mxu0 0.0
    %7074 = vmatprep.subr.mxu0 0.0
    %7075 = vmatpush1.xpose.msra.mxu0 0.0
    %7076 = vmatprep.subr.mxu0 0.0
    %7077 = vmatpush1.xpose.msra.mxu0 0.0
    %7078 = vmatprep.subr.mxu0 0.0
    %7079 = vmatpush1.xpose.msra.mxu0 0.0
    %7080 = vmatprep.subr.mxu0 0.0
    %7081 = vmatpush1.xpose.msra.mxu0 0.0
    %7082 = vmatprep.subr.mxu0 0.0
    %7083 = vmatpush1.xpose.msra.mxu0 0.0
    %7084 = vmatprep.subr.mxu0 0.0
    %7085 = vmatpush1.xpose.msra.mxu0 0.0
    %7086 = vmatprep.subr.mxu0 0.0
    %7087 = vmatpush1.xpose.msra.mxu0 0.0
    %7088 = vmatprep.subr.mxu0 0.0
    %7089 = vmatpush1.xpose.msra.mxu0 0.0
    %7090 = vmatprep.subr.mxu0 0.0
    %7091 = vmatpush1.xpose.msra.mxu0 0.0
    %7092 = vmatprep.subr.mxu0 0.0
    %7093 = vmatpush1.xpose.msra.mxu0 0.0
    %7094 = vmatprep.subr.mxu0 0.0
    %7095 = vmatpush1.xpose.msra.mxu0 0.0
    %7096 = vmatprep.subr.mxu0 0.0
    %7097 = vmatpush1.xpose.msra.mxu0 %v7070
    %7098 = vmatprep.subr.mxu0 0.0
    %7099 = vmatpush1.xpose.msra.mxu0 %v7068
    %7100 = vmatprep.subr.mxu0 0.0
    %7101 = vmatpush1.xpose.msra.mxu0 %v7066
    %7102 = vmatprep.subr.mxu0 0.0
    %7103 = vmatpush1.xpose.msra.mxu0 %v7064
    %7104 = vmatprep.subr.mxu0 0.0
    %7105 = vmatpush2.xpose.msra.mxu0 0.0
    %7106 = vmatprep.subr.mxu0 0.0
    %7107 = vmatpush2.xpose.msra.mxu0 0.0
    %7108 = vmatprep.subr.mxu0 0.0
    %7109 = vmatpush2.xpose.msra.mxu0 0.0
    %7110 = vmatprep.subr.mxu0 0.0
    %7111 = vmatpush2.xpose.msra.mxu0 0.0
    %7112 = vmatprep.subr.mxu0 0.0
    %7113 = vmatpush2.xpose.msra.mxu0 0.0
    %7114 = vmatprep.subr.mxu0 0.0
    %7115 = vmatpush2.xpose.msra.mxu0 0.0
    %7116 = vmatprep.subr.mxu0 0.0
    %7117 = vmatpush2.xpose.msra.mxu0 0.0
    %7118 = vmatprep.subr.mxu0 0.0
    %7119 = vmatpush2.xpose.msra.mxu0 0.0
    %7120 = vmatprep.subr.mxu0 0.0
    %7121 = vmatpush2.xpose.msra.mxu0 0.0
    %7122 = vmatprep.subr.mxu0 0.0
    %7123 = vmatpush2.xpose.msra.mxu0 0.0
    %7124 = vmatprep.subr.mxu0 0.0
    %7125 = vmatpush2.xpose.msra.mxu0 0.0
    %7126 = vmatprep.subr.mxu0 0.0
    %7127 = vmatpush2.xpose.msra.mxu0 0.0
    %7128 = vmatprep.subr.mxu0 0.0
    %7129 = vmatpush2.xpose.msra.mxu0 0.0
    %7130 = vmatprep.subr.mxu0 0.0
    %7131 = vmatpush2.xpose.msra.mxu0 0.0
    %7132 = vmatprep.subr.mxu0 0.0
    %7133 = vmatpush2.xpose.msra.mxu0 0.0
    %7134 = vmatprep.subr.mxu0 0.0
    %7135 = vmatpush2.xpose.msra.mxu0 0.0
    %7136 = vmatprep.mubr.f32.mxu0 0.0
    %7137 = vmatmul.mubr.f32.gmra.mxu0 %v7056
    %v7138 = vpop.f32.mrf.mxu0
    %v7139 = vadd.f32 %v7036, %v7138
    %v7140 = vpop.f32.mrf.mxu0
    %7141 = vmatprep.mubr.f32.mxu0 0.0
    %7142 = vmatmul.mubr.f32.gmra.mxu0 %v7058
    %v7143 = vpop.f32.mrf.mxu0
    %v7144 = vadd.f32 %v7037, %v7143
    %v7145 = vpop.f32.mrf.mxu0
    %7146 = vmatprep.mubr.f32.mxu0 0.0
    %7147 = vmatmul.mubr.f32.gmra.mxu0 %v7060
    %v7148 = vpop.f32.mrf.mxu0
    %v7149 = vadd.f32 %v7038, %v7148
    %v7150 = vpop.f32.mrf.mxu0
    %7151 = vmatprep.mubr.f32.mxu0 0.0
    %7152 = vmatmul.mubr.f32.gmra.mxu0 %v7062
    %v7153 = vpop.f32.mrf.mxu0
    %v7154 = vadd.f32 %v7039, %v7153
    %v7155 = vpop.f32.mrf.mxu0
    %7156 = vdwg.mxu0
    %7157 = vrot.lane.b32.xlu0 %v322, 104
    %v7158 = vpop.permute.xlu0 %7157
    %7159 = vrot.lane.b32.xlu0 %v327, 104
    %v7160 = vpop.permute.xlu0 %7159
    %7161 = vrot.lane.b32.xlu0 %v332, 104
    %v7162 = vpop.permute.xlu0 %7161
    %7163 = vrot.lane.b32.xlu0 %v337, 104
    %v7164 = vpop.permute.xlu0 %7163
    %7165 = vrot.lane.b32.xlu0 %v322, 72
    %v7166 = vpop.permute.xlu0 %7165
    %7167 = vrot.lane.b32.xlu0 %v327, 72
    %v7168 = vpop.permute.xlu0 %7167
    %7169 = vrot.lane.b32.xlu0 %v332, 72
    %v7170 = vpop.permute.xlu0 %7169
    %7171 = vrot.lane.b32.xlu0 %v337, 72
    %v7172 = vpop.permute.xlu0 %7171
    %v7173 = vsel %vm492, %v7158, 0
    %v7175 = vsel %vm492, %v7160, 0
    %v7177 = vsel %vm492, %v7162, 0
    %v7179 = vsel %vm492, %v7164, 0
    %v7181 = vsel %vm492, %v7166, 0
    %v7183 = vsel %vm492, %v7168, 0
    %v7185 = vsel %vm492, %v7170, 0
    %v7187 = vsel %vm492, %v7172, 0
    %7189 = vmatprep.subr.mxu0 0.0
    %7190 = vmatpush1.xpose.msra.mxu0 0.0
    %7191 = vmatprep.subr.mxu0 0.0
    %7192 = vmatpush1.xpose.msra.mxu0 0.0
    %7193 = vmatprep.subr.mxu0 0.0
    %7194 = vmatpush1.xpose.msra.mxu0 0.0
    %7195 = vmatprep.subr.mxu0 0.0
    %7196 = vmatpush1.xpose.msra.mxu0 0.0
    %7197 = vmatprep.subr.mxu0 0.0
    %7198 = vmatpush1.xpose.msra.mxu0 0.0
    %7199 = vmatprep.subr.mxu0 0.0
    %7200 = vmatpush1.xpose.msra.mxu0 0.0
    %7201 = vmatprep.subr.mxu0 0.0
    %7202 = vmatpush1.xpose.msra.mxu0 0.0
    %7203 = vmatprep.subr.mxu0 0.0
    %7204 = vmatpush1.xpose.msra.mxu0 0.0
    %7205 = vmatprep.subr.mxu0 0.0
    %7206 = vmatpush1.xpose.msra.mxu0 0.0
    %7207 = vmatprep.subr.mxu0 0.0
    %7208 = vmatpush1.xpose.msra.mxu0 0.0
    %7209 = vmatprep.subr.mxu0 0.0
    %7210 = vmatpush1.xpose.msra.mxu0 0.0
    %7211 = vmatprep.subr.mxu0 0.0
    %7212 = vmatpush1.xpose.msra.mxu0 0.0
    %7213 = vmatprep.subr.mxu0 0.0
    %7214 = vmatpush1.xpose.msra.mxu0 %v7187
    %7215 = vmatprep.subr.mxu0 0.0
    %7216 = vmatpush1.xpose.msra.mxu0 %v7185
    %7217 = vmatprep.subr.mxu0 0.0
    %7218 = vmatpush1.xpose.msra.mxu0 %v7183
    %7219 = vmatprep.subr.mxu0 0.0
    %7220 = vmatpush1.xpose.msra.mxu0 %v7181
    %7221 = vmatprep.subr.mxu0 0.0
    %7222 = vmatpush2.xpose.msra.mxu0 0.0
    %7223 = vmatprep.subr.mxu0 0.0
    %7224 = vmatpush2.xpose.msra.mxu0 0.0
    %7225 = vmatprep.subr.mxu0 0.0
    %7226 = vmatpush2.xpose.msra.mxu0 0.0
    %7227 = vmatprep.subr.mxu0 0.0
    %7228 = vmatpush2.xpose.msra.mxu0 0.0
    %7229 = vmatprep.subr.mxu0 0.0
    %7230 = vmatpush2.xpose.msra.mxu0 0.0
    %7231 = vmatprep.subr.mxu0 0.0
    %7232 = vmatpush2.xpose.msra.mxu0 0.0
    %7233 = vmatprep.subr.mxu0 0.0
    %7234 = vmatpush2.xpose.msra.mxu0 0.0
    %7235 = vmatprep.subr.mxu0 0.0
    %7236 = vmatpush2.xpose.msra.mxu0 0.0
    %7237 = vmatprep.subr.mxu0 0.0
    %7238 = vmatpush2.xpose.msra.mxu0 0.0
    %7239 = vmatprep.subr.mxu0 0.0
    %7240 = vmatpush2.xpose.msra.mxu0 0.0
    %7241 = vmatprep.subr.mxu0 0.0
    %7242 = vmatpush2.xpose.msra.mxu0 0.0
    %7243 = vmatprep.subr.mxu0 0.0
    %7244 = vmatpush2.xpose.msra.mxu0 0.0
    %7245 = vmatprep.subr.mxu0 0.0
    %7246 = vmatpush2.xpose.msra.mxu0 0.0
    %7247 = vmatprep.subr.mxu0 0.0
    %7248 = vmatpush2.xpose.msra.mxu0 0.0
    %7249 = vmatprep.subr.mxu0 0.0
    %7250 = vmatpush2.xpose.msra.mxu0 0.0
    %7251 = vmatprep.subr.mxu0 0.0
    %7252 = vmatpush2.xpose.msra.mxu0 0.0
    %7253 = vmatprep.mubr.f32.mxu0 0.0
    %7254 = vmatmul.mubr.f32.gmra.mxu0 %v7173
    %v7255 = vpop.f32.mrf.mxu0
    %v7256 = vadd.f32 %v7036, %v7255
    %v7257 = vpop.f32.mrf.mxu0
    %7258 = vmatprep.mubr.f32.mxu0 0.0
    %7259 = vmatmul.mubr.f32.gmra.mxu0 %v7175
    %v7260 = vpop.f32.mrf.mxu0
    %v7261 = vadd.f32 %v7037, %v7260
    %v7262 = vpop.f32.mrf.mxu0
    %7263 = vmatprep.mubr.f32.mxu0 0.0
    %7264 = vmatmul.mubr.f32.gmra.mxu0 %v7177
    %v7265 = vpop.f32.mrf.mxu0
    %v7266 = vadd.f32 %v7038, %v7265
    %v7267 = vpop.f32.mrf.mxu0
    %7268 = vmatprep.mubr.f32.mxu0 0.0
    %7269 = vmatmul.mubr.f32.gmra.mxu0 %v7179
    %v7270 = vpop.f32.mrf.mxu0
    %v7271 = vadd.f32 %v7039, %v7270
    %v7272 = vpop.f32.mrf.mxu0
    %7273 = vdwg.mxu0
    %7274 = vrot.lane.b32.xlu0 %v342, 104
    %v7275 = vpop.permute.xlu0 %7274
    %7276 = vrot.lane.b32.xlu0 %v347, 104
    %v7277 = vpop.permute.xlu0 %7276
    %7278 = vrot.lane.b32.xlu0 %v352, 104
    %v7279 = vpop.permute.xlu0 %7278
    %7280 = vrot.lane.b32.xlu0 %v357, 104
    %v7281 = vpop.permute.xlu0 %7280
    %7282 = vrot.lane.b32.xlu0 %v342, 72
    %v7283 = vpop.permute.xlu0 %7282
    %7284 = vrot.lane.b32.xlu0 %v347, 72
    %v7285 = vpop.permute.xlu0 %7284
    %7286 = vrot.lane.b32.xlu0 %v352, 72
    %v7287 = vpop.permute.xlu0 %7286
    %7288 = vrot.lane.b32.xlu0 %v357, 72
    %v7289 = vpop.permute.xlu0 %7288
    %v7290 = vsel %vm492, %v7275, 0
    %v7292 = vsel %vm492, %v7277, 0
    %v7294 = vsel %vm492, %v7279, 0
    %v7296 = vsel %vm492, %v7281, 0
    %v7298 = vsel %vm492, %v7283, 0
    %v7300 = vsel %vm492, %v7285, 0
    %v7302 = vsel %vm492, %v7287, 0
    %v7304 = vsel %vm492, %v7289, 0
    %7306 = vmatprep.subr.mxu0 0.0
    %7307 = vmatpush1.xpose.msra.mxu0 0.0
    %7308 = vmatprep.subr.mxu0 0.0
    %7309 = vmatpush1.xpose.msra.mxu0 0.0
    %7310 = vmatprep.subr.mxu0 0.0
    %7311 = vmatpush1.xpose.msra.mxu0 0.0
    %7312 = vmatprep.subr.mxu0 0.0
    %7313 = vmatpush1.xpose.msra.mxu0 0.0
    %7314 = vmatprep.subr.mxu0 0.0
    %7315 = vmatpush1.xpose.msra.mxu0 0.0
    %7316 = vmatprep.subr.mxu0 0.0
    %7317 = vmatpush1.xpose.msra.mxu0 0.0
    %7318 = vmatprep.subr.mxu0 0.0
    %7319 = vmatpush1.xpose.msra.mxu0 0.0
    %7320 = vmatprep.subr.mxu0 0.0
    %7321 = vmatpush1.xpose.msra.mxu0 0.0
    %7322 = vmatprep.subr.mxu0 0.0
    %7323 = vmatpush1.xpose.msra.mxu0 0.0
    %7324 = vmatprep.subr.mxu0 0.0
    %7325 = vmatpush1.xpose.msra.mxu0 0.0
    %7326 = vmatprep.subr.mxu0 0.0
    %7327 = vmatpush1.xpose.msra.mxu0 0.0
    %7328 = vmatprep.subr.mxu0 0.0
    %7329 = vmatpush1.xpose.msra.mxu0 0.0
    %7330 = vmatprep.subr.mxu0 0.0
    %7331 = vmatpush1.xpose.msra.mxu0 %v7304
    %7332 = vmatprep.subr.mxu0 0.0
    %7333 = vmatpush1.xpose.msra.mxu0 %v7302
    %7334 = vmatprep.subr.mxu0 0.0
    %7335 = vmatpush1.xpose.msra.mxu0 %v7300
    %7336 = vmatprep.subr.mxu0 0.0
    %7337 = vmatpush1.xpose.msra.mxu0 %v7298
    %7338 = vmatprep.subr.mxu0 0.0
    %7339 = vmatpush2.xpose.msra.mxu0 0.0
    %7340 = vmatprep.subr.mxu0 0.0
    %7341 = vmatpush2.xpose.msra.mxu0 0.0
    %7342 = vmatprep.subr.mxu0 0.0
    %7343 = vmatpush2.xpose.msra.mxu0 0.0
    %7344 = vmatprep.subr.mxu0 0.0
    %7345 = vmatpush2.xpose.msra.mxu0 0.0
    %7346 = vmatprep.subr.mxu0 0.0
    %7347 = vmatpush2.xpose.msra.mxu0 0.0
    %7348 = vmatprep.subr.mxu0 0.0
    %7349 = vmatpush2.xpose.msra.mxu0 0.0
    %7350 = vmatprep.subr.mxu0 0.0
    %7351 = vmatpush2.xpose.msra.mxu0 0.0
    %7352 = vmatprep.subr.mxu0 0.0
    %7353 = vmatpush2.xpose.msra.mxu0 0.0
    %7354 = vmatprep.subr.mxu0 0.0
    %7355 = vmatpush2.xpose.msra.mxu0 0.0
    %7356 = vmatprep.subr.mxu0 0.0
    %7357 = vmatpush2.xpose.msra.mxu0 0.0
    %7358 = vmatprep.subr.mxu0 0.0
    %7359 = vmatpush2.xpose.msra.mxu0 0.0
    %7360 = vmatprep.subr.mxu0 0.0
    %7361 = vmatpush2.xpose.msra.mxu0 0.0
    %7362 = vmatprep.subr.mxu0 0.0
    %7363 = vmatpush2.xpose.msra.mxu0 0.0
    %7364 = vmatprep.subr.mxu0 0.0
    %7365 = vmatpush2.xpose.msra.mxu0 0.0
    %7366 = vmatprep.subr.mxu0 0.0
    %7367 = vmatpush2.xpose.msra.mxu0 0.0
    %7368 = vmatprep.subr.mxu0 0.0
    %7369 = vmatpush2.xpose.msra.mxu0 0.0
    %7370 = vmatprep.mubr.f32.mxu0 0.0
    %7371 = vmatmul.mubr.f32.gmra.mxu0 %v7290
    %v7372 = vpop.f32.mrf.mxu0
    %v7373 = vadd.f32 %v7036, %v7372
    %v7374 = vpop.f32.mrf.mxu0
    %7375 = vmatprep.mubr.f32.mxu0 0.0
    %7376 = vmatmul.mubr.f32.gmra.mxu0 %v7292
    %v7377 = vpop.f32.mrf.mxu0
    %v7378 = vadd.f32 %v7037, %v7377
    %v7379 = vpop.f32.mrf.mxu0
    %7380 = vmatprep.mubr.f32.mxu0 0.0
    %7381 = vmatmul.mubr.f32.gmra.mxu0 %v7294
    %v7382 = vpop.f32.mrf.mxu0
    %v7383 = vadd.f32 %v7038, %v7382
    %v7384 = vpop.f32.mrf.mxu0
    %7385 = vmatprep.mubr.f32.mxu0 0.0
    %7386 = vmatmul.mubr.f32.gmra.mxu0 %v7296
    %v7387 = vpop.f32.mrf.mxu0
    %v7388 = vadd.f32 %v7039, %v7387
    %v7389 = vpop.f32.mrf.mxu0
    %7390 = vdwg.mxu0
    %7391 = vrot.lane.b32.xlu0 %v362, 104
    %v7392 = vpop.permute.xlu0 %7391
    %7393 = vrot.lane.b32.xlu0 %v367, 104
    %v7394 = vpop.permute.xlu0 %7393
    %7395 = vrot.lane.b32.xlu0 %v372, 104
    %v7396 = vpop.permute.xlu0 %7395
    %7397 = vrot.lane.b32.xlu0 %v377, 104
    %v7398 = vpop.permute.xlu0 %7397
    %7399 = vrot.lane.b32.xlu0 %v362, 72
    %v7400 = vpop.permute.xlu0 %7399
    %7401 = vrot.lane.b32.xlu0 %v367, 72
    %v7402 = vpop.permute.xlu0 %7401
    %7403 = vrot.lane.b32.xlu0 %v372, 72
    %v7404 = vpop.permute.xlu0 %7403
    %7405 = vrot.lane.b32.xlu0 %v377, 72
    %v7406 = vpop.permute.xlu0 %7405
    %v7407 = vsel %vm492, %v7392, 0
    %v7409 = vsel %vm492, %v7394, 0
    %v7411 = vsel %vm492, %v7396, 0
    %v7413 = vsel %vm492, %v7398, 0
    %v7415 = vsel %vm492, %v7400, 0
    %v7417 = vsel %vm492, %v7402, 0
    %v7419 = vsel %vm492, %v7404, 0
    %v7421 = vsel %vm492, %v7406, 0
    %7423 = vmatprep.subr.mxu0 0.0
    %7424 = vmatpush1.xpose.msra.mxu0 0.0
    %7425 = vmatprep.subr.mxu0 0.0
    %7426 = vmatpush1.xpose.msra.mxu0 0.0
    %7427 = vmatprep.subr.mxu0 0.0
    %7428 = vmatpush1.xpose.msra.mxu0 0.0
    %7429 = vmatprep.subr.mxu0 0.0
    %7430 = vmatpush1.xpose.msra.mxu0 0.0
    %7431 = vmatprep.subr.mxu0 0.0
    %7432 = vmatpush1.xpose.msra.mxu0 0.0
    %7433 = vmatprep.subr.mxu0 0.0
    %7434 = vmatpush1.xpose.msra.mxu0 0.0
    %7435 = vmatprep.subr.mxu0 0.0
    %7436 = vmatpush1.xpose.msra.mxu0 0.0
    %7437 = vmatprep.subr.mxu0 0.0
    %7438 = vmatpush1.xpose.msra.mxu0 0.0
    %7439 = vmatprep.subr.mxu0 0.0
    %7440 = vmatpush1.xpose.msra.mxu0 0.0
    %7441 = vmatprep.subr.mxu0 0.0
    %7442 = vmatpush1.xpose.msra.mxu0 0.0
    %7443 = vmatprep.subr.mxu0 0.0
    %7444 = vmatpush1.xpose.msra.mxu0 0.0
    %7445 = vmatprep.subr.mxu0 0.0
    %7446 = vmatpush1.xpose.msra.mxu0 0.0
    %7447 = vmatprep.subr.mxu0 0.0
    %7448 = vmatpush1.xpose.msra.mxu0 %v7421
    %7449 = vmatprep.subr.mxu0 0.0
    %7450 = vmatpush1.xpose.msra.mxu0 %v7419
    %7451 = vmatprep.subr.mxu0 0.0
    %7452 = vmatpush1.xpose.msra.mxu0 %v7417
    %7453 = vmatprep.subr.mxu0 0.0
    %7454 = vmatpush1.xpose.msra.mxu0 %v7415
    %7455 = vmatprep.subr.mxu0 0.0
    %7456 = vmatpush2.xpose.msra.mxu0 0.0
    %7457 = vmatprep.subr.mxu0 0.0
    %7458 = vmatpush2.xpose.msra.mxu0 0.0
    %7459 = vmatprep.subr.mxu0 0.0
    %7460 = vmatpush2.xpose.msra.mxu0 0.0
    %7461 = vmatprep.subr.mxu0 0.0
    %7462 = vmatpush2.xpose.msra.mxu0 0.0
    %7463 = vmatprep.subr.mxu0 0.0
    %7464 = vmatpush2.xpose.msra.mxu0 0.0
    %7465 = vmatprep.subr.mxu0 0.0
    %7466 = vmatpush2.xpose.msra.mxu0 0.0
    %7467 = vmatprep.subr.mxu0 0.0
    %7468 = vmatpush2.xpose.msra.mxu0 0.0
    %7469 = vmatprep.subr.mxu0 0.0
    %7470 = vmatpush2.xpose.msra.mxu0 0.0
    %7471 = vmatprep.subr.mxu0 0.0
    %7472 = vmatpush2.xpose.msra.mxu0 0.0
    %7473 = vmatprep.subr.mxu0 0.0
    %7474 = vmatpush2.xpose.msra.mxu0 0.0
    %7475 = vmatprep.subr.mxu0 0.0
    %7476 = vmatpush2.xpose.msra.mxu0 0.0
    %7477 = vmatprep.subr.mxu0 0.0
    %7478 = vmatpush2.xpose.msra.mxu0 0.0
    %7479 = vmatprep.subr.mxu0 0.0
    %7480 = vmatpush2.xpose.msra.mxu0 0.0
    %7481 = vmatprep.subr.mxu0 0.0
    %7482 = vmatpush2.xpose.msra.mxu0 0.0
    %7483 = vmatprep.subr.mxu0 0.0
    %7484 = vmatpush2.xpose.msra.mxu0 0.0
    %7485 = vmatprep.subr.mxu0 0.0
    %7486 = vmatpush2.xpose.msra.mxu0 0.0
    %7487 = vmatprep.mubr.f32.mxu0 0.0
    %7488 = vmatmul.mubr.f32.gmra.mxu0 %v7407
    %v7489 = vpop.f32.mrf.mxu0
    %v7490 = vadd.f32 %v7036, %v7489
    %v7491 = vpop.f32.mrf.mxu0
    %7492 = vmatprep.mubr.f32.mxu0 0.0
    %7493 = vmatmul.mubr.f32.gmra.mxu0 %v7409
    %v7494 = vpop.f32.mrf.mxu0
    %v7495 = vadd.f32 %v7037, %v7494
    %v7496 = vpop.f32.mrf.mxu0
    %7497 = vmatprep.mubr.f32.mxu0 0.0
    %7498 = vmatmul.mubr.f32.gmra.mxu0 %v7411
    %v7499 = vpop.f32.mrf.mxu0
    %v7500 = vadd.f32 %v7038, %v7499
    %v7501 = vpop.f32.mrf.mxu0
    %7502 = vmatprep.mubr.f32.mxu0 0.0
    %7503 = vmatmul.mubr.f32.gmra.mxu0 %v7413
    %v7504 = vpop.f32.mrf.mxu0
    %v7505 = vadd.f32 %v7039, %v7504
    %v7506 = vpop.f32.mrf.mxu0
    %7507 = vdwg.mxu0
    %7508 = vrot.lane.b32.xlu0 %v382, 104
    %v7509 = vpop.permute.xlu0 %7508
    %7510 = vrot.lane.b32.xlu0 %v387, 104
    %v7511 = vpop.permute.xlu0 %7510
    %7512 = vrot.lane.b32.xlu0 %v392, 104
    %v7513 = vpop.permute.xlu0 %7512
    %7514 = vrot.lane.b32.xlu0 %v397, 104
    %v7515 = vpop.permute.xlu0 %7514
    %7516 = vrot.lane.b32.xlu0 %v382, 72
    %v7517 = vpop.permute.xlu0 %7516
    %7518 = vrot.lane.b32.xlu0 %v387, 72
    %v7519 = vpop.permute.xlu0 %7518
    %7520 = vrot.lane.b32.xlu0 %v392, 72
    %v7521 = vpop.permute.xlu0 %7520
    %7522 = vrot.lane.b32.xlu0 %v397, 72
    %v7523 = vpop.permute.xlu0 %7522
    %v7524 = vsel %vm492, %v7509, 0
    %v7526 = vsel %vm492, %v7511, 0
    %v7528 = vsel %vm492, %v7513, 0
    %v7530 = vsel %vm492, %v7515, 0
    %v7532 = vsel %vm492, %v7517, 0
    %v7534 = vsel %vm492, %v7519, 0
    %v7536 = vsel %vm492, %v7521, 0
    %v7538 = vsel %vm492, %v7523, 0
    %7540 = vmatprep.subr.mxu0 0.0
    %7541 = vmatpush1.xpose.msra.mxu0 0.0
    %7542 = vmatprep.subr.mxu0 0.0
    %7543 = vmatpush1.xpose.msra.mxu0 0.0
    %7544 = vmatprep.subr.mxu0 0.0
    %7545 = vmatpush1.xpose.msra.mxu0 0.0
    %7546 = vmatprep.subr.mxu0 0.0
    %7547 = vmatpush1.xpose.msra.mxu0 0.0
    %7548 = vmatprep.subr.mxu0 0.0
    %7549 = vmatpush1.xpose.msra.mxu0 0.0
    %7550 = vmatprep.subr.mxu0 0.0
    %7551 = vmatpush1.xpose.msra.mxu0 0.0
    %7552 = vmatprep.subr.mxu0 0.0
    %7553 = vmatpush1.xpose.msra.mxu0 0.0
    %7554 = vmatprep.subr.mxu0 0.0
    %7555 = vmatpush1.xpose.msra.mxu0 0.0
    %7556 = vmatprep.subr.mxu0 0.0
    %7557 = vmatpush1.xpose.msra.mxu0 0.0
    %7558 = vmatprep.subr.mxu0 0.0
    %7559 = vmatpush1.xpose.msra.mxu0 0.0
    %7560 = vmatprep.subr.mxu0 0.0
    %7561 = vmatpush1.xpose.msra.mxu0 0.0
    %7562 = vmatprep.subr.mxu0 0.0
    %7563 = vmatpush1.xpose.msra.mxu0 0.0
    %7564 = vmatprep.subr.mxu0 0.0
    %7565 = vmatpush1.xpose.msra.mxu0 %v7538
    %7566 = vmatprep.subr.mxu0 0.0
    %7567 = vmatpush1.xpose.msra.mxu0 %v7536
    %7568 = vmatprep.subr.mxu0 0.0
    %7569 = vmatpush1.xpose.msra.mxu0 %v7534
    %7570 = vmatprep.subr.mxu0 0.0
    %7571 = vmatpush1.xpose.msra.mxu0 %v7532
    %7572 = vmatprep.subr.mxu0 0.0
    %7573 = vmatpush2.xpose.msra.mxu0 0.0
    %7574 = vmatprep.subr.mxu0 0.0
    %7575 = vmatpush2.xpose.msra.mxu0 0.0
    %7576 = vmatprep.subr.mxu0 0.0
    %7577 = vmatpush2.xpose.msra.mxu0 0.0
    %7578 = vmatprep.subr.mxu0 0.0
    %7579 = vmatpush2.xpose.msra.mxu0 0.0
    %7580 = vmatprep.subr.mxu0 0.0
    %7581 = vmatpush2.xpose.msra.mxu0 0.0
    %7582 = vmatprep.subr.mxu0 0.0
    %7583 = vmatpush2.xpose.msra.mxu0 0.0
    %7584 = vmatprep.subr.mxu0 0.0
    %7585 = vmatpush2.xpose.msra.mxu0 0.0
    %7586 = vmatprep.subr.mxu0 0.0
    %7587 = vmatpush2.xpose.msra.mxu0 0.0
    %7588 = vmatprep.subr.mxu0 0.0
    %7589 = vmatpush2.xpose.msra.mxu0 0.0
    %7590 = vmatprep.subr.mxu0 0.0
    %7591 = vmatpush2.xpose.msra.mxu0 0.0
    %7592 = vmatprep.subr.mxu0 0.0
    %7593 = vmatpush2.xpose.msra.mxu0 0.0
    %7594 = vmatprep.subr.mxu0 0.0
    %7595 = vmatpush2.xpose.msra.mxu0 0.0
    %7596 = vmatprep.subr.mxu0 0.0
    %7597 = vmatpush2.xpose.msra.mxu0 0.0
    %7598 = vmatprep.subr.mxu0 0.0
    %7599 = vmatpush2.xpose.msra.mxu0 0.0
    %7600 = vmatprep.subr.mxu0 0.0
    %7601 = vmatpush2.xpose.msra.mxu0 0.0
    %7602 = vmatprep.subr.mxu0 0.0
    %7603 = vmatpush2.xpose.msra.mxu0 0.0
    %7604 = vmatprep.mubr.f32.mxu0 0.0
    %7605 = vmatmul.mubr.f32.gmra.mxu0 %v7524
    %v7606 = vpop.f32.mrf.mxu0
    %v7607 = vadd.f32 %v7036, %v7606
    %v7608 = vpop.f32.mrf.mxu0
    %7609 = vmatprep.mubr.f32.mxu0 0.0
    %7610 = vmatmul.mubr.f32.gmra.mxu0 %v7526
    %v7611 = vpop.f32.mrf.mxu0
    %v7612 = vadd.f32 %v7037, %v7611
    %v7613 = vpop.f32.mrf.mxu0
    %7614 = vmatprep.mubr.f32.mxu0 0.0
    %7615 = vmatmul.mubr.f32.gmra.mxu0 %v7528
    %v7616 = vpop.f32.mrf.mxu0
    %v7617 = vadd.f32 %v7038, %v7616
    %v7618 = vpop.f32.mrf.mxu0
    %7619 = vmatprep.mubr.f32.mxu0 0.0
    %7620 = vmatmul.mubr.f32.gmra.mxu0 %v7530
    %v7621 = vpop.f32.mrf.mxu0
    %v7622 = vadd.f32 %v7039, %v7621
    %v7623 = vpop.f32.mrf.mxu0
    %7624 = vdwg.mxu0
    %7625 = vrot.lane.b32.xlu0 %v402, 104
    %v7626 = vpop.permute.xlu0 %7625
    %7627 = vrot.lane.b32.xlu0 %v407, 104
    %v7628 = vpop.permute.xlu0 %7627
    %7629 = vrot.lane.b32.xlu0 %v412, 104
    %v7630 = vpop.permute.xlu0 %7629
    %7631 = vrot.lane.b32.xlu0 %v417, 104
    %v7632 = vpop.permute.xlu0 %7631
    %7633 = vrot.lane.b32.xlu0 %v402, 72
    %v7634 = vpop.permute.xlu0 %7633
    %7635 = vrot.lane.b32.xlu0 %v407, 72
    %v7636 = vpop.permute.xlu0 %7635
    %7637 = vrot.lane.b32.xlu0 %v412, 72
    %v7638 = vpop.permute.xlu0 %7637
    %7639 = vrot.lane.b32.xlu0 %v417, 72
    %v7640 = vpop.permute.xlu0 %7639
    %v7641 = vsel %vm492, %v7626, 0
    %v7643 = vsel %vm492, %v7628, 0
    %v7645 = vsel %vm492, %v7630, 0
    %v7647 = vsel %vm492, %v7632, 0
    %v7649 = vsel %vm492, %v7634, 0
    %v7651 = vsel %vm492, %v7636, 0
    %v7653 = vsel %vm492, %v7638, 0
    %v7655 = vsel %vm492, %v7640, 0
    %7657 = vmatprep.subr.mxu0 0.0
    %7658 = vmatpush1.xpose.msra.mxu0 0.0
    %7659 = vmatprep.subr.mxu0 0.0
    %7660 = vmatpush1.xpose.msra.mxu0 0.0
    %7661 = vmatprep.subr.mxu0 0.0
    %7662 = vmatpush1.xpose.msra.mxu0 0.0
    %7663 = vmatprep.subr.mxu0 0.0
    %7664 = vmatpush1.xpose.msra.mxu0 0.0
    %7665 = vmatprep.subr.mxu0 0.0
    %7666 = vmatpush1.xpose.msra.mxu0 0.0
    %7667 = vmatprep.subr.mxu0 0.0
    %7668 = vmatpush1.xpose.msra.mxu0 0.0
    %7669 = vmatprep.subr.mxu0 0.0
    %7670 = vmatpush1.xpose.msra.mxu0 0.0
    %7671 = vmatprep.subr.mxu0 0.0
    %7672 = vmatpush1.xpose.msra.mxu0 0.0
    %7673 = vmatprep.subr.mxu0 0.0
    %7674 = vmatpush1.xpose.msra.mxu0 0.0
    %7675 = vmatprep.subr.mxu0 0.0
    %7676 = vmatpush1.xpose.msra.mxu0 0.0
    %7677 = vmatprep.subr.mxu0 0.0
    %7678 = vmatpush1.xpose.msra.mxu0 0.0
    %7679 = vmatprep.subr.mxu0 0.0
    %7680 = vmatpush1.xpose.msra.mxu0 0.0
    %7681 = vmatprep.subr.mxu0 0.0
    %7682 = vmatpush1.xpose.msra.mxu0 %v7655
    %7683 = vmatprep.subr.mxu0 0.0
    %7684 = vmatpush1.xpose.msra.mxu0 %v7653
    %7685 = vmatprep.subr.mxu0 0.0
    %7686 = vmatpush1.xpose.msra.mxu0 %v7651
    %7687 = vmatprep.subr.mxu0 0.0
    %7688 = vmatpush1.xpose.msra.mxu0 %v7649
    %7689 = vmatprep.subr.mxu0 0.0
    %7690 = vmatpush2.xpose.msra.mxu0 0.0
    %7691 = vmatprep.subr.mxu0 0.0
    %7692 = vmatpush2.xpose.msra.mxu0 0.0
    %7693 = vmatprep.subr.mxu0 0.0
    %7694 = vmatpush2.xpose.msra.mxu0 0.0
    %7695 = vmatprep.subr.mxu0 0.0
    %7696 = vmatpush2.xpose.msra.mxu0 0.0
    %7697 = vmatprep.subr.mxu0 0.0
    %7698 = vmatpush2.xpose.msra.mxu0 0.0
    %7699 = vmatprep.subr.mxu0 0.0
    %7700 = vmatpush2.xpose.msra.mxu0 0.0
    %7701 = vmatprep.subr.mxu0 0.0
    %7702 = vmatpush2.xpose.msra.mxu0 0.0
    %7703 = vmatprep.subr.mxu0 0.0
    %7704 = vmatpush2.xpose.msra.mxu0 0.0
    %7705 = vmatprep.subr.mxu0 0.0
    %7706 = vmatpush2.xpose.msra.mxu0 0.0
    %7707 = vmatprep.subr.mxu0 0.0
    %7708 = vmatpush2.xpose.msra.mxu0 0.0
    %7709 = vmatprep.subr.mxu0 0.0
    %7710 = vmatpush2.xpose.msra.mxu0 0.0
    %7711 = vmatprep.subr.mxu0 0.0
    %7712 = vmatpush2.xpose.msra.mxu0 0.0
    %7713 = vmatprep.subr.mxu0 0.0
    %7714 = vmatpush2.xpose.msra.mxu0 0.0
    %7715 = vmatprep.subr.mxu0 0.0
    %7716 = vmatpush2.xpose.msra.mxu0 0.0
    %7717 = vmatprep.subr.mxu0 0.0
    %7718 = vmatpush2.xpose.msra.mxu0 0.0
    %7719 = vmatprep.subr.mxu0 0.0
    %7720 = vmatpush2.xpose.msra.mxu0 0.0
    %7721 = vmatprep.mubr.f32.mxu0 0.0
    %7722 = vmatmul.mubr.f32.gmra.mxu0 %v7641
    %v7723 = vpop.f32.mrf.mxu0
    %v7724 = vadd.f32 %v7036, %v7723
    %v7725 = vpop.f32.mrf.mxu0
    %7726 = vmatprep.mubr.f32.mxu0 0.0
    %7727 = vmatmul.mubr.f32.gmra.mxu0 %v7643
    %v7728 = vpop.f32.mrf.mxu0
    %v7729 = vadd.f32 %v7037, %v7728
    %v7730 = vpop.f32.mrf.mxu0
    %7731 = vmatprep.mubr.f32.mxu0 0.0
    %7732 = vmatmul.mubr.f32.gmra.mxu0 %v7645
    %v7733 = vpop.f32.mrf.mxu0
    %v7734 = vadd.f32 %v7038, %v7733
    %v7735 = vpop.f32.mrf.mxu0
    %7736 = vmatprep.mubr.f32.mxu0 0.0
    %7737 = vmatmul.mubr.f32.gmra.mxu0 %v7647
    %v7738 = vpop.f32.mrf.mxu0
    %v7739 = vadd.f32 %v7039, %v7738
    %v7740 = vpop.f32.mrf.mxu0
    %7741 = vdwg.mxu0
    %7742 = vrot.lane.b32.xlu0 %v422, 104
    %v7743 = vpop.permute.xlu0 %7742
    %7744 = vrot.lane.b32.xlu0 %v427, 104
    %v7745 = vpop.permute.xlu0 %7744
    %7746 = vrot.lane.b32.xlu0 %v432, 104
    %v7747 = vpop.permute.xlu0 %7746
    %7748 = vrot.lane.b32.xlu0 %v437, 104
    %v7749 = vpop.permute.xlu0 %7748
    %7750 = vrot.lane.b32.xlu0 %v422, 72
    %v7751 = vpop.permute.xlu0 %7750
    %7752 = vrot.lane.b32.xlu0 %v427, 72
    %v7753 = vpop.permute.xlu0 %7752
    %7754 = vrot.lane.b32.xlu0 %v432, 72
    %v7755 = vpop.permute.xlu0 %7754
    %7756 = vrot.lane.b32.xlu0 %v437, 72
    %v7757 = vpop.permute.xlu0 %7756
    %v7758 = vsel %vm492, %v7743, 0
    %v7760 = vsel %vm492, %v7745, 0
    %v7762 = vsel %vm492, %v7747, 0
    %v7764 = vsel %vm492, %v7749, 0
    %v7766 = vsel %vm492, %v7751, 0
    %v7768 = vsel %vm492, %v7753, 0
    %v7770 = vsel %vm492, %v7755, 0
    %v7772 = vsel %vm492, %v7757, 0
    %7774 = vmatprep.subr.mxu0 0.0
    %7775 = vmatpush1.xpose.msra.mxu0 0.0
    %7776 = vmatprep.subr.mxu0 0.0
    %7777 = vmatpush1.xpose.msra.mxu0 0.0
    %7778 = vmatprep.subr.mxu0 0.0
    %7779 = vmatpush1.xpose.msra.mxu0 0.0
    %7780 = vmatprep.subr.mxu0 0.0
    %7781 = vmatpush1.xpose.msra.mxu0 0.0
    %7782 = vmatprep.subr.mxu0 0.0
    %7783 = vmatpush1.xpose.msra.mxu0 0.0
    %7784 = vmatprep.subr.mxu0 0.0
    %7785 = vmatpush1.xpose.msra.mxu0 0.0
    %7786 = vmatprep.subr.mxu0 0.0
    %7787 = vmatpush1.xpose.msra.mxu0 0.0
    %7788 = vmatprep.subr.mxu0 0.0
    %7789 = vmatpush1.xpose.msra.mxu0 0.0
    %7790 = vmatprep.subr.mxu0 0.0
    %7791 = vmatpush1.xpose.msra.mxu0 0.0
    %7792 = vmatprep.subr.mxu0 0.0
    %7793 = vmatpush1.xpose.msra.mxu0 0.0
    %7794 = vmatprep.subr.mxu0 0.0
    %7795 = vmatpush1.xpose.msra.mxu0 0.0
    %7796 = vmatprep.subr.mxu0 0.0
    %7797 = vmatpush1.xpose.msra.mxu0 0.0
    %7798 = vmatprep.subr.mxu0 0.0
    %7799 = vmatpush1.xpose.msra.mxu0 %v7772
    %7800 = vmatprep.subr.mxu0 0.0
    %7801 = vmatpush1.xpose.msra.mxu0 %v7770
    %7802 = vmatprep.subr.mxu0 0.0
    %7803 = vmatpush1.xpose.msra.mxu0 %v7768
    %7804 = vmatprep.subr.mxu0 0.0
    %7805 = vmatpush1.xpose.msra.mxu0 %v7766
    %7806 = vmatprep.subr.mxu0 0.0
    %7807 = vmatpush2.xpose.msra.mxu0 0.0
    %7808 = vmatprep.subr.mxu0 0.0
    %7809 = vmatpush2.xpose.msra.mxu0 0.0
    %7810 = vmatprep.subr.mxu0 0.0
    %7811 = vmatpush2.xpose.msra.mxu0 0.0
    %7812 = vmatprep.subr.mxu0 0.0
    %7813 = vmatpush2.xpose.msra.mxu0 0.0
    %7814 = vmatprep.subr.mxu0 0.0
    %7815 = vmatpush2.xpose.msra.mxu0 0.0
    %7816 = vmatprep.subr.mxu0 0.0
    %7817 = vmatpush2.xpose.msra.mxu0 0.0
    %7818 = vmatprep.subr.mxu0 0.0
    %7819 = vmatpush2.xpose.msra.mxu0 0.0
    %7820 = vmatprep.subr.mxu0 0.0
    %7821 = vmatpush2.xpose.msra.mxu0 0.0
    %7822 = vmatprep.subr.mxu0 0.0
    %7823 = vmatpush2.xpose.msra.mxu0 0.0
    %7824 = vmatprep.subr.mxu0 0.0
    %7825 = vmatpush2.xpose.msra.mxu0 0.0
    %7826 = vmatprep.subr.mxu0 0.0
    %7827 = vmatpush2.xpose.msra.mxu0 0.0
    %7828 = vmatprep.subr.mxu0 0.0
    %7829 = vmatpush2.xpose.msra.mxu0 0.0
    %7830 = vmatprep.subr.mxu0 0.0
    %7831 = vmatpush2.xpose.msra.mxu0 0.0
    %7832 = vmatprep.subr.mxu0 0.0
    %7833 = vmatpush2.xpose.msra.mxu0 0.0
    %7834 = vmatprep.subr.mxu0 0.0
    %7835 = vmatpush2.xpose.msra.mxu0 0.0
    %7836 = vmatprep.subr.mxu0 0.0
    %7837 = vmatpush2.xpose.msra.mxu0 0.0
    %7838 = vmatprep.mubr.f32.mxu0 0.0
    %7839 = vmatmul.mubr.f32.gmra.mxu0 %v7758
    %v7840 = vpop.f32.mrf.mxu0
    %v7841 = vadd.f32 %v7036, %v7840
    %v7842 = vpop.f32.mrf.mxu0
    %7843 = vmatprep.mubr.f32.mxu0 0.0
    %7844 = vmatmul.mubr.f32.gmra.mxu0 %v7760
    %v7845 = vpop.f32.mrf.mxu0
    %v7846 = vadd.f32 %v7037, %v7845
    %v7847 = vpop.f32.mrf.mxu0
    %7848 = vmatprep.mubr.f32.mxu0 0.0
    %7849 = vmatmul.mubr.f32.gmra.mxu0 %v7762
    %v7850 = vpop.f32.mrf.mxu0
    %v7851 = vadd.f32 %v7038, %v7850
    %v7852 = vpop.f32.mrf.mxu0
    %7853 = vmatprep.mubr.f32.mxu0 0.0
    %7854 = vmatmul.mubr.f32.gmra.mxu0 %v7764
    %v7855 = vpop.f32.mrf.mxu0
    %v7856 = vadd.f32 %v7039, %v7855
    %v7857 = vpop.f32.mrf.mxu0
    %7858 = vdwg.mxu0
    %7859 = vrot.lane.b32.xlu0 %v442, 104
    %v7860 = vpop.permute.xlu0 %7859
    %7861 = vrot.lane.b32.xlu0 %v447, 104
    %v7862 = vpop.permute.xlu0 %7861
    %7863 = vrot.lane.b32.xlu0 %v452, 104
    %v7864 = vpop.permute.xlu0 %7863
    %7865 = vrot.lane.b32.xlu0 %v457, 104
    %v7866 = vpop.permute.xlu0 %7865
    %7867 = vrot.lane.b32.xlu0 %v442, 72
    %v7868 = vpop.permute.xlu0 %7867
    %7869 = vrot.lane.b32.xlu0 %v447, 72
    %v7870 = vpop.permute.xlu0 %7869
    %7871 = vrot.lane.b32.xlu0 %v452, 72
    %v7872 = vpop.permute.xlu0 %7871
    %7873 = vrot.lane.b32.xlu0 %v457, 72
    %v7874 = vpop.permute.xlu0 %7873
    %v7875 = vsel %vm492, %v7860, 0
    %v7877 = vsel %vm492, %v7862, 0
    %v7879 = vsel %vm492, %v7864, 0
    %v7881 = vsel %vm492, %v7866, 0
    %v7883 = vsel %vm492, %v7868, 0
    %v7885 = vsel %vm492, %v7870, 0
    %v7887 = vsel %vm492, %v7872, 0
    %v7889 = vsel %vm492, %v7874, 0
    %7891 = vmatprep.subr.mxu0 0.0
    %7892 = vmatpush1.xpose.msra.mxu0 0.0
    %7893 = vmatprep.subr.mxu0 0.0
    %7894 = vmatpush1.xpose.msra.mxu0 0.0
    %7895 = vmatprep.subr.mxu0 0.0
    %7896 = vmatpush1.xpose.msra.mxu0 0.0
    %7897 = vmatprep.subr.mxu0 0.0
    %7898 = vmatpush1.xpose.msra.mxu0 0.0
    %7899 = vmatprep.subr.mxu0 0.0
    %7900 = vmatpush1.xpose.msra.mxu0 0.0
    %7901 = vmatprep.subr.mxu0 0.0
    %7902 = vmatpush1.xpose.msra.mxu0 0.0
    %7903 = vmatprep.subr.mxu0 0.0
    %7904 = vmatpush1.xpose.msra.mxu0 0.0
    %7905 = vmatprep.subr.mxu0 0.0
    %7906 = vmatpush1.xpose.msra.mxu0 0.0
    %7907 = vmatprep.subr.mxu0 0.0
    %7908 = vmatpush1.xpose.msra.mxu0 0.0
    %7909 = vmatprep.subr.mxu0 0.0
    %7910 = vmatpush1.xpose.msra.mxu0 0.0
    %7911 = vmatprep.subr.mxu0 0.0
    %7912 = vmatpush1.xpose.msra.mxu0 0.0
    %7913 = vmatprep.subr.mxu0 0.0
    %7914 = vmatpush1.xpose.msra.mxu0 0.0
    %7915 = vmatprep.subr.mxu0 0.0
    %7916 = vmatpush1.xpose.msra.mxu0 %v7889
    %7917 = vmatprep.subr.mxu0 0.0
    %7918 = vmatpush1.xpose.msra.mxu0 %v7887
    %7919 = vmatprep.subr.mxu0 0.0
    %7920 = vmatpush1.xpose.msra.mxu0 %v7885
    %7921 = vmatprep.subr.mxu0 0.0
    %7922 = vmatpush1.xpose.msra.mxu0 %v7883
    %7923 = vmatprep.subr.mxu0 0.0
    %7924 = vmatpush2.xpose.msra.mxu0 0.0
    %7925 = vmatprep.subr.mxu0 0.0
    %7926 = vmatpush2.xpose.msra.mxu0 0.0
    %7927 = vmatprep.subr.mxu0 0.0
    %7928 = vmatpush2.xpose.msra.mxu0 0.0
    %7929 = vmatprep.subr.mxu0 0.0
    %7930 = vmatpush2.xpose.msra.mxu0 0.0
    %7931 = vmatprep.subr.mxu0 0.0
    %7932 = vmatpush2.xpose.msra.mxu0 0.0
    %7933 = vmatprep.subr.mxu0 0.0
    %7934 = vmatpush2.xpose.msra.mxu0 0.0
    %7935 = vmatprep.subr.mxu0 0.0
    %7936 = vmatpush2.xpose.msra.mxu0 0.0
    %7937 = vmatprep.subr.mxu0 0.0
    %7938 = vmatpush2.xpose.msra.mxu0 0.0
    %7939 = vmatprep.subr.mxu0 0.0
    %7940 = vmatpush2.xpose.msra.mxu0 0.0
    %7941 = vmatprep.subr.mxu0 0.0
    %7942 = vmatpush2.xpose.msra.mxu0 0.0
    %7943 = vmatprep.subr.mxu0 0.0
    %7944 = vmatpush2.xpose.msra.mxu0 0.0
    %7945 = vmatprep.subr.mxu0 0.0
    %7946 = vmatpush2.xpose.msra.mxu0 0.0
    %7947 = vmatprep.subr.mxu0 0.0
    %7948 = vmatpush2.xpose.msra.mxu0 0.0
    %7949 = vmatprep.subr.mxu0 0.0
    %7950 = vmatpush2.xpose.msra.mxu0 0.0
    %7951 = vmatprep.subr.mxu0 0.0
    %7952 = vmatpush2.xpose.msra.mxu0 0.0
    %7953 = vmatprep.subr.mxu0 0.0
    %7954 = vmatpush2.xpose.msra.mxu0 0.0
    %7955 = vmatprep.mubr.f32.mxu0 0.0
    %7956 = vmatmul.mubr.f32.gmra.mxu0 %v7875
    %v7957 = vpop.f32.mrf.mxu0
    %v7958 = vadd.f32 %v7036, %v7957
    %v7959 = vpop.f32.mrf.mxu0
    %7960 = vmatprep.mubr.f32.mxu0 0.0
    %7961 = vmatmul.mubr.f32.gmra.mxu0 %v7877
    %v7962 = vpop.f32.mrf.mxu0
    %v7963 = vadd.f32 %v7037, %v7962
    %v7964 = vpop.f32.mrf.mxu0
    %7965 = vmatprep.mubr.f32.mxu0 0.0
    %7966 = vmatmul.mubr.f32.gmra.mxu0 %v7879
    %v7967 = vpop.f32.mrf.mxu0
    %v7968 = vadd.f32 %v7038, %v7967
    %v7969 = vpop.f32.mrf.mxu0
    %7970 = vmatprep.mubr.f32.mxu0 0.0
    %7971 = vmatmul.mubr.f32.gmra.mxu0 %v7881
    %v7972 = vpop.f32.mrf.mxu0
    %v7973 = vadd.f32 %v7039, %v7972
    %v7974 = vpop.f32.mrf.mxu0
    %7975 = vdwg.mxu0
    %v7976 = vadd.f32 %v7139, %v460
    %v7977 = vadd.f32 %v7144, %v461
    %v7978 = vadd.f32 %v7149, %v462
    %v7979 = vadd.f32 %v7154, %v463
    %v7980 = vadd.f32 %v7256, %v464
    %v7981 = vadd.f32 %v7261, %v465
    %v7982 = vadd.f32 %v7266, %v466
    %v7983 = vadd.f32 %v7271, %v467
    %v7984 = vadd.f32 %v7373, %v468
    %v7985 = vadd.f32 %v7378, %v469
    %v7986 = vadd.f32 %v7383, %v470
    %v7987 = vadd.f32 %v7388, %v471
    %v7988 = vadd.f32 %v7490, %v472
    %v7989 = vadd.f32 %v7495, %v473
    %v7990 = vadd.f32 %v7500, %v474
    %v7991 = vadd.f32 %v7505, %v475
    %v7992 = vadd.f32 %v7607, %v460
    %v7993 = vadd.f32 %v7612, %v461
    %v7994 = vadd.f32 %v7617, %v462
    %v7995 = vadd.f32 %v7622, %v463
    %v7996 = vadd.f32 %v7724, %v464
    %v7997 = vadd.f32 %v7729, %v465
    %v7998 = vadd.f32 %v7734, %v466
    %v7999 = vadd.f32 %v7739, %v467
    %v8000 = vadd.f32 %v7841, %v468
    %v8001 = vadd.f32 %v7846, %v469
    %v8002 = vadd.f32 %v7851, %v470
    %v8003 = vadd.f32 %v7856, %v471
    %v8004 = vadd.f32 %v7958, %v472
    %v8005 = vadd.f32 %v7963, %v473
    %v8006 = vadd.f32 %v7968, %v474
    %v8007 = vadd.f32 %v7973, %v475
    %v8008 = vsel %vm138, %v7976, -inf
    %8009 = vmax.xlane.f32.xlu0 %v8008
    %v8010 = vpop.xlane.xlu0 %8009
    %v8011 = vsel %vm138, %v7977, -inf
    %8012 = vmax.xlane.f32.xlu0 %v8011
    %v8013 = vpop.xlane.xlu0 %8012
    %v8014 = vsel %vm138, %v7978, -inf
    %8015 = vmax.xlane.f32.xlu0 %v8014
    %v8016 = vpop.xlane.xlu0 %8015
    %v8017 = vsel %vm138, %v7979, -inf
    %8018 = vmax.xlane.f32.xlu0 %v8017
    %v8019 = vpop.xlane.xlu0 %8018
    %v8020 = vsel %vm138, %v7980, -inf
    %8021 = vmax.xlane.f32.xlu0 %v8020
    %v8022 = vpop.xlane.xlu0 %8021
    %v8023 = vsel %vm138, %v7981, -inf
    %8024 = vmax.xlane.f32.xlu0 %v8023
    %v8025 = vpop.xlane.xlu0 %8024
    %v8026 = vsel %vm138, %v7982, -inf
    %8027 = vmax.xlane.f32.xlu0 %v8026
    %v8028 = vpop.xlane.xlu0 %8027
    %v8029 = vsel %vm138, %v7983, -inf
    %8030 = vmax.xlane.f32.xlu0 %v8029
    %v8031 = vpop.xlane.xlu0 %8030
    %v8032 = vsel %vm138, %v7984, -inf
    %8033 = vmax.xlane.f32.xlu0 %v8032
    %v8034 = vpop.xlane.xlu0 %8033
    %v8035 = vsel %vm138, %v7985, -inf
    %8036 = vmax.xlane.f32.xlu0 %v8035
    %v8037 = vpop.xlane.xlu0 %8036
    %v8038 = vsel %vm138, %v7986, -inf
    %8039 = vmax.xlane.f32.xlu0 %v8038
    %v8040 = vpop.xlane.xlu0 %8039
    %v8041 = vsel %vm138, %v7987, -inf
    %8042 = vmax.xlane.f32.xlu0 %v8041
    %v8043 = vpop.xlane.xlu0 %8042
    %v8044 = vsel %vm138, %v7988, -inf
    %8045 = vmax.xlane.f32.xlu0 %v8044
    %v8046 = vpop.xlane.xlu0 %8045
    %v8047 = vsel %vm138, %v7989, -inf
    %8048 = vmax.xlane.f32.xlu0 %v8047
    %v8049 = vpop.xlane.xlu0 %8048
    %v8050 = vsel %vm138, %v7990, -inf
    %8051 = vmax.xlane.f32.xlu0 %v8050
    %v8052 = vpop.xlane.xlu0 %8051
    %v8053 = vsel %vm138, %v7991, -inf
    %8054 = vmax.xlane.f32.xlu0 %v8053
    %v8055 = vpop.xlane.xlu0 %8054
    %v8056 = vsel %vm138, %v7992, -inf
    %8057 = vmax.xlane.f32.xlu0 %v8056
    %v8058 = vpop.xlane.xlu0 %8057
    %v8059 = vsel %vm138, %v7993, -inf
    %8060 = vmax.xlane.f32.xlu0 %v8059
    %v8061 = vpop.xlane.xlu0 %8060
    %v8062 = vsel %vm138, %v7994, -inf
    %8063 = vmax.xlane.f32.xlu0 %v8062
    %v8064 = vpop.xlane.xlu0 %8063
    %v8065 = vsel %vm138, %v7995, -inf
    %8066 = vmax.xlane.f32.xlu0 %v8065
    %v8067 = vpop.xlane.xlu0 %8066
    %v8068 = vsel %vm138, %v7996, -inf
    %8069 = vmax.xlane.f32.xlu0 %v8068
    %v8070 = vpop.xlane.xlu0 %8069
    %v8071 = vsel %vm138, %v7997, -inf
    %8072 = vmax.xlane.f32.xlu0 %v8071
    %v8073 = vpop.xlane.xlu0 %8072
    %v8074 = vsel %vm138, %v7998, -inf
    %8075 = vmax.xlane.f32.xlu0 %v8074
    %v8076 = vpop.xlane.xlu0 %8075
    %v8077 = vsel %vm138, %v7999, -inf
    %8078 = vmax.xlane.f32.xlu0 %v8077
    %v8079 = vpop.xlane.xlu0 %8078
    %v8080 = vsel %vm138, %v8000, -inf
    %8081 = vmax.xlane.f32.xlu0 %v8080
    %v8082 = vpop.xlane.xlu0 %8081
    %v8083 = vsel %vm138, %v8001, -inf
    %8084 = vmax.xlane.f32.xlu0 %v8083
    %v8085 = vpop.xlane.xlu0 %8084
    %v8086 = vsel %vm138, %v8002, -inf
    %8087 = vmax.xlane.f32.xlu0 %v8086
    %v8088 = vpop.xlane.xlu0 %8087
    %v8089 = vsel %vm138, %v8003, -inf
    %8090 = vmax.xlane.f32.xlu0 %v8089
    %v8091 = vpop.xlane.xlu0 %8090
    %v8092 = vsel %vm138, %v8004, -inf
    %8093 = vmax.xlane.f32.xlu0 %v8092
    %v8094 = vpop.xlane.xlu0 %8093
    %v8095 = vsel %vm138, %v8005, -inf
    %8096 = vmax.xlane.f32.xlu0 %v8095
    %v8097 = vpop.xlane.xlu0 %8096
    %v8098 = vsel %vm138, %v8006, -inf
    %8099 = vmax.xlane.f32.xlu0 %v8098
    %v8100 = vpop.xlane.xlu0 %8099
    %v8101 = vsel %vm138, %v8007, -inf
    %8102 = vmax.xlane.f32.xlu0 %v8101
    %v8103 = vpop.xlane.xlu0 %8102
    %v8104 = vsub.f32 %v7976, %v8010
    %v8105 = vsub.f32 %v7977, %v8013
    %v8106 = vsub.f32 %v7978, %v8016
    %v8107 = vsub.f32 %v7979, %v8019
    %v8108 = vsub.f32 %v7980, %v8022
    %v8109 = vsub.f32 %v7981, %v8025
    %v8110 = vsub.f32 %v7982, %v8028
    %v8111 = vsub.f32 %v7983, %v8031
    %v8112 = vsub.f32 %v7984, %v8034
    %v8113 = vsub.f32 %v7985, %v8037
    %v8114 = vsub.f32 %v7986, %v8040
    %v8115 = vsub.f32 %v7987, %v8043
    %v8116 = vsub.f32 %v7988, %v8046
    %v8117 = vsub.f32 %v7989, %v8049
    %v8118 = vsub.f32 %v7990, %v8052
    %v8119 = vsub.f32 %v7991, %v8055
    %v8120 = vsub.f32 %v7992, %v8058
    %v8121 = vsub.f32 %v7993, %v8061
    %v8122 = vsub.f32 %v7994, %v8064
    %v8123 = vsub.f32 %v7995, %v8067
    %v8124 = vsub.f32 %v7996, %v8070
    %v8125 = vsub.f32 %v7997, %v8073
    %v8126 = vsub.f32 %v7998, %v8076
    %v8127 = vsub.f32 %v7999, %v8079
    %v8128 = vsub.f32 %v8000, %v8082
    %v8129 = vsub.f32 %v8001, %v8085
    %v8130 = vsub.f32 %v8002, %v8088
    %v8131 = vsub.f32 %v8003, %v8091
    %v8132 = vsub.f32 %v8004, %v8094
    %v8133 = vsub.f32 %v8005, %v8097
    %v8134 = vsub.f32 %v8006, %v8100
    %v8135 = vsub.f32 %v8007, %v8103
    %v8136 = vmul.f32 %v8104, 1.442695
    %v8137 = vpow.pop %v8136
    %v8138 = vmul.f32 %v8105, 1.442695
    %v8139 = vpow.pop %v8138
    %v8140 = vmul.f32 %v8106, 1.442695
    %v8141 = vpow.pop %v8140
    %v8142 = vmul.f32 %v8107, 1.442695
    %v8143 = vpow.pop %v8142
    %v8144 = vmul.f32 %v8108, 1.442695
    %v8145 = vpow.pop %v8144
    %v8146 = vmul.f32 %v8109, 1.442695
    %v8147 = vpow.pop %v8146
    %v8148 = vmul.f32 %v8110, 1.442695
    %v8149 = vpow.pop %v8148
    %v8150 = vmul.f32 %v8111, 1.442695
    %v8151 = vpow.pop %v8150
    %v8152 = vmul.f32 %v8112, 1.442695
    %v8153 = vpow.pop %v8152
    %v8154 = vmul.f32 %v8113, 1.442695
    %v8155 = vpow.pop %v8154
    %v8156 = vmul.f32 %v8114, 1.442695
    %v8157 = vpow.pop %v8156
    %v8158 = vmul.f32 %v8115, 1.442695
    %v8159 = vpow.pop %v8158
    %v8160 = vmul.f32 %v8116, 1.442695
    %v8161 = vpow.pop %v8160
    %v8162 = vmul.f32 %v8117, 1.442695
    %v8163 = vpow.pop %v8162
    %v8164 = vmul.f32 %v8118, 1.442695
    %v8165 = vpow.pop %v8164
    %v8166 = vmul.f32 %v8119, 1.442695
    %v8167 = vpow.pop %v8166
    %v8168 = vmul.f32 %v8120, 1.442695
    %v8169 = vpow.pop %v8168
    %v8170 = vmul.f32 %v8121, 1.442695
    %v8171 = vpow.pop %v8170
    %v8172 = vmul.f32 %v8122, 1.442695
    %v8173 = vpow.pop %v8172
    %v8174 = vmul.f32 %v8123, 1.442695
    %v8175 = vpow.pop %v8174
    %v8176 = vmul.f32 %v8124, 1.442695
    %v8177 = vpow.pop %v8176
    %v8178 = vmul.f32 %v8125, 1.442695
    %v8179 = vpow.pop %v8178
    %v8180 = vmul.f32 %v8126, 1.442695
    %v8181 = vpow.pop %v8180
    %v8182 = vmul.f32 %v8127, 1.442695
    %v8183 = vpow.pop %v8182
    %v8184 = vmul.f32 %v8128, 1.442695
    %v8185 = vpow.pop %v8184
    %v8186 = vmul.f32 %v8129, 1.442695
    %v8187 = vpow.pop %v8186
    %v8188 = vmul.f32 %v8130, 1.442695
    %v8189 = vpow.pop %v8188
    %v8190 = vmul.f32 %v8131, 1.442695
    %v8191 = vpow.pop %v8190
    %v8192 = vmul.f32 %v8132, 1.442695
    %v8193 = vpow.pop %v8192
    %v8194 = vmul.f32 %v8133, 1.442695
    %v8195 = vpow.pop %v8194
    %v8196 = vmul.f32 %v8134, 1.442695
    %v8197 = vpow.pop %v8196
    %v8198 = vmul.f32 %v8135, 1.442695
    %v8199 = vpow.pop %v8198
    %v8200 = vsel %vm138, %v8137, 0.0
    %8201 = vadd.xlane.f32.xlu0 %v8200
    %v8202 = vpop.xlane.xlu0 %8201
    %v8203 = vsel %vm138, %v8139, 0.0
    %8204 = vadd.xlane.f32.xlu0 %v8203
    %v8205 = vpop.xlane.xlu0 %8204
    %v8206 = vsel %vm138, %v8141, 0.0
    %8207 = vadd.xlane.f32.xlu0 %v8206
    %v8208 = vpop.xlane.xlu0 %8207
    %v8209 = vsel %vm138, %v8143, 0.0
    %8210 = vadd.xlane.f32.xlu0 %v8209
    %v8211 = vpop.xlane.xlu0 %8210
    %v8212 = vsel %vm138, %v8145, 0.0
    %8213 = vadd.xlane.f32.xlu0 %v8212
    %v8214 = vpop.xlane.xlu0 %8213
    %v8215 = vsel %vm138, %v8147, 0.0
    %8216 = vadd.xlane.f32.xlu0 %v8215
    %v8217 = vpop.xlane.xlu0 %8216
    %v8218 = vsel %vm138, %v8149, 0.0
    %8219 = vadd.xlane.f32.xlu0 %v8218
    %v8220 = vpop.xlane.xlu0 %8219
    %v8221 = vsel %vm138, %v8151, 0.0
    %8222 = vadd.xlane.f32.xlu0 %v8221
    %v8223 = vpop.xlane.xlu0 %8222
    %v8224 = vsel %vm138, %v8153, 0.0
    %8225 = vadd.xlane.f32.xlu0 %v8224
    %v8226 = vpop.xlane.xlu0 %8225
    %v8227 = vsel %vm138, %v8155, 0.0
    %8228 = vadd.xlane.f32.xlu0 %v8227
    %v8229 = vpop.xlane.xlu0 %8228
    %v8230 = vsel %vm138, %v8157, 0.0
    %8231 = vadd.xlane.f32.xlu0 %v8230
    %v8232 = vpop.xlane.xlu0 %8231
    %v8233 = vsel %vm138, %v8159, 0.0
    %8234 = vadd.xlane.f32.xlu0 %v8233
    %v8235 = vpop.xlane.xlu0 %8234
    %v8236 = vsel %vm138, %v8161, 0.0
    %8237 = vadd.xlane.f32.xlu0 %v8236
    %v8238 = vpop.xlane.xlu0 %8237
    %v8239 = vsel %vm138, %v8163, 0.0
    %8240 = vadd.xlane.f32.xlu0 %v8239
    %v8241 = vpop.xlane.xlu0 %8240
    %v8242 = vsel %vm138, %v8165, 0.0
    %8243 = vadd.xlane.f32.xlu0 %v8242
    %v8244 = vpop.xlane.xlu0 %8243
    %v8245 = vsel %vm138, %v8167, 0.0
    %8246 = vadd.xlane.f32.xlu0 %v8245
    %v8247 = vpop.xlane.xlu0 %8246
    %v8248 = vsel %vm138, %v8169, 0.0
    %8249 = vadd.xlane.f32.xlu0 %v8248
    %v8250 = vpop.xlane.xlu0 %8249
    %v8251 = vsel %vm138, %v8171, 0.0
    %8252 = vadd.xlane.f32.xlu0 %v8251
    %v8253 = vpop.xlane.xlu0 %8252
    %v8254 = vsel %vm138, %v8173, 0.0
    %8255 = vadd.xlane.f32.xlu0 %v8254
    %v8256 = vpop.xlane.xlu0 %8255
    %v8257 = vsel %vm138, %v8175, 0.0
    %8258 = vadd.xlane.f32.xlu0 %v8257
    %v8259 = vpop.xlane.xlu0 %8258
    %v8260 = vsel %vm138, %v8177, 0.0
    %8261 = vadd.xlane.f32.xlu0 %v8260
    %v8262 = vpop.xlane.xlu0 %8261
    %v8263 = vsel %vm138, %v8179, 0.0
    %8264 = vadd.xlane.f32.xlu0 %v8263
    %v8265 = vpop.xlane.xlu0 %8264
    %v8266 = vsel %vm138, %v8181, 0.0
    %8267 = vadd.xlane.f32.xlu0 %v8266
    %v8268 = vpop.xlane.xlu0 %8267
    %v8269 = vsel %vm138, %v8183, 0.0
    %8270 = vadd.xlane.f32.xlu0 %v8269
    %v8271 = vpop.xlane.xlu0 %8270
    %v8272 = vsel %vm138, %v8185, 0.0
    %8273 = vadd.xlane.f32.xlu0 %v8272
    %v8274 = vpop.xlane.xlu0 %8273
    %v8275 = vsel %vm138, %v8187, 0.0
    %8276 = vadd.xlane.f32.xlu0 %v8275
    %v8277 = vpop.xlane.xlu0 %8276
    %v8278 = vsel %vm138, %v8189, 0.0
    %8279 = vadd.xlane.f32.xlu0 %v8278
    %v8280 = vpop.xlane.xlu0 %8279
    %v8281 = vsel %vm138, %v8191, 0.0
    %8282 = vadd.xlane.f32.xlu0 %v8281
    %v8283 = vpop.xlane.xlu0 %8282
    %v8284 = vsel %vm138, %v8193, 0.0
    %8285 = vadd.xlane.f32.xlu0 %v8284
    %v8286 = vpop.xlane.xlu0 %8285
    %v8287 = vsel %vm138, %v8195, 0.0
    %8288 = vadd.xlane.f32.xlu0 %v8287
    %v8289 = vpop.xlane.xlu0 %8288
    %v8290 = vsel %vm138, %v8197, 0.0
    %8291 = vadd.xlane.f32.xlu0 %v8290
    %v8292 = vpop.xlane.xlu0 %8291
    %v8293 = vsel %vm138, %v8199, 0.0
    %8294 = vadd.xlane.f32.xlu0 %v8293
    %v8295 = vpop.xlane.xlu0 %8294
    %v8296 = vrcp.pop %v8202
    %v8297 = vrcp.pop %v8205
    %v8298 = vrcp.pop %v8208
    %v8299 = vrcp.pop %v8211
    %v8300 = vrcp.pop %v8214
    %v8301 = vrcp.pop %v8217
    %v8302 = vrcp.pop %v8220
    %v8303 = vrcp.pop %v8223
    %v8304 = vrcp.pop %v8226
    %v8305 = vrcp.pop %v8229
    %v8306 = vrcp.pop %v8232
    %v8307 = vrcp.pop %v8235
    %v8308 = vrcp.pop %v8238
    %v8309 = vrcp.pop %v8241
    %v8310 = vrcp.pop %v8244
    %v8311 = vrcp.pop %v8247
    %v8312 = vrcp.pop %v8250
    %v8313 = vrcp.pop %v8253
    %v8314 = vrcp.pop %v8256
    %v8315 = vrcp.pop %v8259
    %v8316 = vrcp.pop %v8262
    %v8317 = vrcp.pop %v8265
    %v8318 = vrcp.pop %v8268
    %v8319 = vrcp.pop %v8271
    %v8320 = vrcp.pop %v8274
    %v8321 = vrcp.pop %v8277
    %v8322 = vrcp.pop %v8280
    %v8323 = vrcp.pop %v8283
    %v8324 = vrcp.pop %v8286
    %v8325 = vrcp.pop %v8289
    %v8326 = vrcp.pop %v8292
    %v8327 = vrcp.pop %v8295
    %v8328 = vmul.f32 %v8137, %v8296
    %v8329 = vmul.f32 %v8139, %v8297
    %v8330 = vmul.f32 %v8141, %v8298
    %v8331 = vmul.f32 %v8143, %v8299
    %v8332 = vmul.f32 %v8145, %v8300
    %v8333 = vmul.f32 %v8147, %v8301
    %v8334 = vmul.f32 %v8149, %v8302
    %v8335 = vmul.f32 %v8151, %v8303
    %v8336 = vmul.f32 %v8153, %v8304
    %v8337 = vmul.f32 %v8155, %v8305
    %v8338 = vmul.f32 %v8157, %v8306
    %v8339 = vmul.f32 %v8159, %v8307
    %v8340 = vmul.f32 %v8161, %v8308
    %v8341 = vmul.f32 %v8163, %v8309
    %v8342 = vmul.f32 %v8165, %v8310
    %v8343 = vmul.f32 %v8167, %v8311
    %v8344 = vmul.f32 %v8169, %v8312
    %v8345 = vmul.f32 %v8171, %v8313
    %v8346 = vmul.f32 %v8173, %v8314
    %v8347 = vmul.f32 %v8175, %v8315
    %v8348 = vmul.f32 %v8177, %v8316
    %v8349 = vmul.f32 %v8179, %v8317
    %v8350 = vmul.f32 %v8181, %v8318
    %v8351 = vmul.f32 %v8183, %v8319
    %v8352 = vmul.f32 %v8185, %v8320
    %v8353 = vmul.f32 %v8187, %v8321
    %v8354 = vmul.f32 %v8189, %v8322
    %v8355 = vmul.f32 %v8191, %v8323
    %v8356 = vmul.f32 %v8193, %v8324
    %v8357 = vmul.f32 %v8195, %v8325
    %v8358 = vmul.f32 %v8197, %v8326
    %v8359 = vmul.f32 %v8199, %v8327
    %8360 = vrot.lane.b32.xlu0 %v302, 40
    %v8361 = vpop.permute.xlu0 %8360
    %8362 = vrot.lane.b32.xlu0 %v307, 40
    %v8363 = vpop.permute.xlu0 %8362
    %8364 = vrot.lane.b32.xlu0 %v312, 40
    %v8365 = vpop.permute.xlu0 %8364
    %8366 = vrot.lane.b32.xlu0 %v317, 40
    %v8367 = vpop.permute.xlu0 %8366
    %v8373 = vsel %vm138, %v8328, 0
    %v8376 = vsel %vm138, %v8329, 0
    %v8379 = vsel %vm138, %v8330, 0
    %v8382 = vsel %vm138, %v8331, 0
    %8384 = vmatprep.subr.mxu0 0.0
    %8385 = vmatpush1.msra.mxu0 0.0
    %8386 = vmatprep.subr.mxu0 0.0
    %8387 = vmatpush1.msra.mxu0 0.0
    %8388 = vmatprep.subr.mxu0 0.0
    %8389 = vmatpush1.msra.mxu0 0.0
    %8390 = vmatprep.subr.mxu0 0.0
    %8391 = vmatpush1.msra.mxu0 0.0
    %8392 = vmatprep.subr.mxu0 0.0
    %8393 = vmatpush1.msra.mxu0 0.0
    %8394 = vmatprep.subr.mxu0 0.0
    %8395 = vmatpush1.msra.mxu0 0.0
    %8396 = vmatprep.subr.mxu0 0.0
    %8397 = vmatpush1.msra.mxu0 0.0
    %8398 = vmatprep.subr.mxu0 0.0
    %8399 = vmatpush1.msra.mxu0 0.0
    %8400 = vmatprep.subr.mxu0 0.0
    %8401 = vmatpush1.msra.mxu0 0.0
    %8402 = vmatprep.subr.mxu0 0.0
    %8403 = vmatpush1.msra.mxu0 0.0
    %8404 = vmatprep.subr.mxu0 0.0
    %8405 = vmatpush1.msra.mxu0 0.0
    %8406 = vmatprep.subr.mxu0 0.0
    %8407 = vmatpush1.msra.mxu0 0.0
    %8408 = vmatprep.subr.mxu0 0.0
    %8409 = vmatpush1.msra.mxu0 %v8367
    %8410 = vmatprep.subr.mxu0 0.0
    %8411 = vmatpush1.msra.mxu0 %v8365
    %8412 = vmatprep.subr.mxu0 0.0
    %8413 = vmatpush1.msra.mxu0 %v8363
    %8414 = vmatprep.subr.mxu0 0.0
    %8415 = vmatpush1.msra.mxu0 %v8361
    %8416 = vmatprep.subr.mxu0 0.0
    %8417 = vmatpush2.msra.mxu0 0.0
    %8418 = vmatprep.subr.mxu0 0.0
    %8419 = vmatpush2.msra.mxu0 0.0
    %8420 = vmatprep.subr.mxu0 0.0
    %8421 = vmatpush2.msra.mxu0 0.0
    %8422 = vmatprep.subr.mxu0 0.0
    %8423 = vmatpush2.msra.mxu0 0.0
    %8424 = vmatprep.subr.mxu0 0.0
    %8425 = vmatpush2.msra.mxu0 0.0
    %8426 = vmatprep.subr.mxu0 0.0
    %8427 = vmatpush2.msra.mxu0 0.0
    %8428 = vmatprep.subr.mxu0 0.0
    %8429 = vmatpush2.msra.mxu0 0.0
    %8430 = vmatprep.subr.mxu0 0.0
    %8431 = vmatpush2.msra.mxu0 0.0
    %8432 = vmatprep.subr.mxu0 0.0
    %8433 = vmatpush2.msra.mxu0 0.0
    %8434 = vmatprep.subr.mxu0 0.0
    %8435 = vmatpush2.msra.mxu0 0.0
    %8436 = vmatprep.subr.mxu0 0.0
    %8437 = vmatpush2.msra.mxu0 0.0
    %8438 = vmatprep.subr.mxu0 0.0
    %8439 = vmatpush2.msra.mxu0 0.0
    %8440 = vmatprep.subr.mxu0 0.0
    %8441 = vmatpush2.msra.mxu0 0.0
    %8442 = vmatprep.subr.mxu0 0.0
    %8443 = vmatpush2.msra.mxu0 0.0
    %8444 = vmatprep.subr.mxu0 0.0
    %8445 = vmatpush2.msra.mxu0 0.0
    %8446 = vmatprep.subr.mxu0 0.0
    %8447 = vmatpush2.msra.mxu0 0.0
    %8448 = vmatprep.mubr.f32.mxu0 0.0
    %8449 = vmatmul.mubr.f32.gmra.mxu0 %v8373
    %v8450 = vpop.f32.mrf.mxu0
    %v8451 = vadd.f32 0.0, %v8450
    %v8452 = vpop.f32.mrf.mxu0
    %8453 = vmatprep.mubr.f32.mxu0 0.0
    %8454 = vmatmul.mubr.f32.gmra.mxu0 %v8376
    %v8455 = vpop.f32.mrf.mxu0
    %v8456 = vadd.f32 0.0, %v8455
    %v8457 = vpop.f32.mrf.mxu0
    %8458 = vmatprep.mubr.f32.mxu0 0.0
    %8459 = vmatmul.mubr.f32.gmra.mxu0 %v8379
    %v8460 = vpop.f32.mrf.mxu0
    %v8461 = vadd.f32 0.0, %v8460
    %v8462 = vpop.f32.mrf.mxu0
    %8463 = vmatprep.mubr.f32.mxu0 0.0
    %8464 = vmatmul.mubr.f32.gmra.mxu0 %v8382
    %v8465 = vpop.f32.mrf.mxu0
    %v8466 = vadd.f32 0.0, %v8465
    %v8467 = vpop.f32.mrf.mxu0
    %8468 = vdwg.mxu0
    %8469 = vrot.lane.b32.xlu0 %v322, 40
    %v8470 = vpop.permute.xlu0 %8469
    %8471 = vrot.lane.b32.xlu0 %v327, 40
    %v8472 = vpop.permute.xlu0 %8471
    %8473 = vrot.lane.b32.xlu0 %v332, 40
    %v8474 = vpop.permute.xlu0 %8473
    %8475 = vrot.lane.b32.xlu0 %v337, 40
    %v8476 = vpop.permute.xlu0 %8475
    %v8482 = vsel %vm138, %v8332, 0
    %v8485 = vsel %vm138, %v8333, 0
    %v8488 = vsel %vm138, %v8334, 0
    %v8491 = vsel %vm138, %v8335, 0
    %8493 = vmatprep.subr.mxu0 0.0
    %8494 = vmatpush1.msra.mxu0 0.0
    %8495 = vmatprep.subr.mxu0 0.0
    %8496 = vmatpush1.msra.mxu0 0.0
    %8497 = vmatprep.subr.mxu0 0.0
    %8498 = vmatpush1.msra.mxu0 0.0
    %8499 = vmatprep.subr.mxu0 0.0
    %8500 = vmatpush1.msra.mxu0 0.0
    %8501 = vmatprep.subr.mxu0 0.0
    %8502 = vmatpush1.msra.mxu0 0.0
    %8503 = vmatprep.subr.mxu0 0.0
    %8504 = vmatpush1.msra.mxu0 0.0
    %8505 = vmatprep.subr.mxu0 0.0
    %8506 = vmatpush1.msra.mxu0 0.0
    %8507 = vmatprep.subr.mxu0 0.0
    %8508 = vmatpush1.msra.mxu0 0.0
    %8509 = vmatprep.subr.mxu0 0.0
    %8510 = vmatpush1.msra.mxu0 0.0
    %8511 = vmatprep.subr.mxu0 0.0
    %8512 = vmatpush1.msra.mxu0 0.0
    %8513 = vmatprep.subr.mxu0 0.0
    %8514 = vmatpush1.msra.mxu0 0.0
    %8515 = vmatprep.subr.mxu0 0.0
    %8516 = vmatpush1.msra.mxu0 0.0
    %8517 = vmatprep.subr.mxu0 0.0
    %8518 = vmatpush1.msra.mxu0 %v8476
    %8519 = vmatprep.subr.mxu0 0.0
    %8520 = vmatpush1.msra.mxu0 %v8474
    %8521 = vmatprep.subr.mxu0 0.0
    %8522 = vmatpush1.msra.mxu0 %v8472
    %8523 = vmatprep.subr.mxu0 0.0
    %8524 = vmatpush1.msra.mxu0 %v8470
    %8525 = vmatprep.subr.mxu0 0.0
    %8526 = vmatpush2.msra.mxu0 0.0
    %8527 = vmatprep.subr.mxu0 0.0
    %8528 = vmatpush2.msra.mxu0 0.0
    %8529 = vmatprep.subr.mxu0 0.0
    %8530 = vmatpush2.msra.mxu0 0.0
    %8531 = vmatprep.subr.mxu0 0.0
    %8532 = vmatpush2.msra.mxu0 0.0
    %8533 = vmatprep.subr.mxu0 0.0
    %8534 = vmatpush2.msra.mxu0 0.0
    %8535 = vmatprep.subr.mxu0 0.0
    %8536 = vmatpush2.msra.mxu0 0.0
    %8537 = vmatprep.subr.mxu0 0.0
    %8538 = vmatpush2.msra.mxu0 0.0
    %8539 = vmatprep.subr.mxu0 0.0
    %8540 = vmatpush2.msra.mxu0 0.0
    %8541 = vmatprep.subr.mxu0 0.0
    %8542 = vmatpush2.msra.mxu0 0.0
    %8543 = vmatprep.subr.mxu0 0.0
    %8544 = vmatpush2.msra.mxu0 0.0
    %8545 = vmatprep.subr.mxu0 0.0
    %8546 = vmatpush2.msra.mxu0 0.0
    %8547 = vmatprep.subr.mxu0 0.0
    %8548 = vmatpush2.msra.mxu0 0.0
    %8549 = vmatprep.subr.mxu0 0.0
    %8550 = vmatpush2.msra.mxu0 0.0
    %8551 = vmatprep.subr.mxu0 0.0
    %8552 = vmatpush2.msra.mxu0 0.0
    %8553 = vmatprep.subr.mxu0 0.0
    %8554 = vmatpush2.msra.mxu0 0.0
    %8555 = vmatprep.subr.mxu0 0.0
    %8556 = vmatpush2.msra.mxu0 0.0
    %8557 = vmatprep.mubr.f32.mxu0 0.0
    %8558 = vmatmul.mubr.f32.gmra.mxu0 %v8482
    %v8559 = vpop.f32.mrf.mxu0
    %v8560 = vadd.f32 0.0, %v8559
    %v8561 = vpop.f32.mrf.mxu0
    %8562 = vmatprep.mubr.f32.mxu0 0.0
    %8563 = vmatmul.mubr.f32.gmra.mxu0 %v8485
    %v8564 = vpop.f32.mrf.mxu0
    %v8565 = vadd.f32 0.0, %v8564
    %v8566 = vpop.f32.mrf.mxu0
    %8567 = vmatprep.mubr.f32.mxu0 0.0
    %8568 = vmatmul.mubr.f32.gmra.mxu0 %v8488
    %v8569 = vpop.f32.mrf.mxu0
    %v8570 = vadd.f32 0.0, %v8569
    %v8571 = vpop.f32.mrf.mxu0
    %8572 = vmatprep.mubr.f32.mxu0 0.0
    %8573 = vmatmul.mubr.f32.gmra.mxu0 %v8491
    %v8574 = vpop.f32.mrf.mxu0
    %v8575 = vadd.f32 0.0, %v8574
    %v8576 = vpop.f32.mrf.mxu0
    %8577 = vdwg.mxu0
    %8578 = vrot.lane.b32.xlu0 %v342, 40
    %v8579 = vpop.permute.xlu0 %8578
    %8580 = vrot.lane.b32.xlu0 %v347, 40
    %v8581 = vpop.permute.xlu0 %8580
    %8582 = vrot.lane.b32.xlu0 %v352, 40
    %v8583 = vpop.permute.xlu0 %8582
    %8584 = vrot.lane.b32.xlu0 %v357, 40
    %v8585 = vpop.permute.xlu0 %8584
    %v8591 = vsel %vm138, %v8336, 0
    %v8594 = vsel %vm138, %v8337, 0
    %v8597 = vsel %vm138, %v8338, 0
    %v8600 = vsel %vm138, %v8339, 0
    %8602 = vmatprep.subr.mxu0 0.0
    %8603 = vmatpush1.msra.mxu0 0.0
    %8604 = vmatprep.subr.mxu0 0.0
    %8605 = vmatpush1.msra.mxu0 0.0
    %8606 = vmatprep.subr.mxu0 0.0
    %8607 = vmatpush1.msra.mxu0 0.0
    %8608 = vmatprep.subr.mxu0 0.0
    %8609 = vmatpush1.msra.mxu0 0.0
    %8610 = vmatprep.subr.mxu0 0.0
    %8611 = vmatpush1.msra.mxu0 0.0
    %8612 = vmatprep.subr.mxu0 0.0
    %8613 = vmatpush1.msra.mxu0 0.0
    %8614 = vmatprep.subr.mxu0 0.0
    %8615 = vmatpush1.msra.mxu0 0.0
    %8616 = vmatprep.subr.mxu0 0.0
    %8617 = vmatpush1.msra.mxu0 0.0
    %8618 = vmatprep.subr.mxu0 0.0
    %8619 = vmatpush1.msra.mxu0 0.0
    %8620 = vmatprep.subr.mxu0 0.0
    %8621 = vmatpush1.msra.mxu0 0.0
    %8622 = vmatprep.subr.mxu0 0.0
    %8623 = vmatpush1.msra.mxu0 0.0
    %8624 = vmatprep.subr.mxu0 0.0
    %8625 = vmatpush1.msra.mxu0 0.0
    %8626 = vmatprep.subr.mxu0 0.0
    %8627 = vmatpush1.msra.mxu0 %v8585
    %8628 = vmatprep.subr.mxu0 0.0
    %8629 = vmatpush1.msra.mxu0 %v8583
    %8630 = vmatprep.subr.mxu0 0.0
    %8631 = vmatpush1.msra.mxu0 %v8581
    %8632 = vmatprep.subr.mxu0 0.0
    %8633 = vmatpush1.msra.mxu0 %v8579
    %8634 = vmatprep.subr.mxu0 0.0
    %8635 = vmatpush2.msra.mxu0 0.0
    %8636 = vmatprep.subr.mxu0 0.0
    %8637 = vmatpush2.msra.mxu0 0.0
    %8638 = vmatprep.subr.mxu0 0.0
    %8639 = vmatpush2.msra.mxu0 0.0
    %8640 = vmatprep.subr.mxu0 0.0
    %8641 = vmatpush2.msra.mxu0 0.0
    %8642 = vmatprep.subr.mxu0 0.0
    %8643 = vmatpush2.msra.mxu0 0.0
    %8644 = vmatprep.subr.mxu0 0.0
    %8645 = vmatpush2.msra.mxu0 0.0
    %8646 = vmatprep.subr.mxu0 0.0
    %8647 = vmatpush2.msra.mxu0 0.0
    %8648 = vmatprep.subr.mxu0 0.0
    %8649 = vmatpush2.msra.mxu0 0.0
    %8650 = vmatprep.subr.mxu0 0.0
    %8651 = vmatpush2.msra.mxu0 0.0
    %8652 = vmatprep.subr.mxu0 0.0
    %8653 = vmatpush2.msra.mxu0 0.0
    %8654 = vmatprep.subr.mxu0 0.0
    %8655 = vmatpush2.msra.mxu0 0.0
    %8656 = vmatprep.subr.mxu0 0.0
    %8657 = vmatpush2.msra.mxu0 0.0
    %8658 = vmatprep.subr.mxu0 0.0
    %8659 = vmatpush2.msra.mxu0 0.0
    %8660 = vmatprep.subr.mxu0 0.0
    %8661 = vmatpush2.msra.mxu0 0.0
    %8662 = vmatprep.subr.mxu0 0.0
    %8663 = vmatpush2.msra.mxu0 0.0
    %8664 = vmatprep.subr.mxu0 0.0
    %8665 = vmatpush2.msra.mxu0 0.0
    %8666 = vmatprep.mubr.f32.mxu0 0.0
    %8667 = vmatmul.mubr.f32.gmra.mxu0 %v8591
    %v8668 = vpop.f32.mrf.mxu0
    %v8669 = vadd.f32 0.0, %v8668
    %v8670 = vpop.f32.mrf.mxu0
    %8671 = vmatprep.mubr.f32.mxu0 0.0
    %8672 = vmatmul.mubr.f32.gmra.mxu0 %v8594
    %v8673 = vpop.f32.mrf.mxu0
    %v8674 = vadd.f32 0.0, %v8673
    %v8675 = vpop.f32.mrf.mxu0
    %8676 = vmatprep.mubr.f32.mxu0 0.0
    %8677 = vmatmul.mubr.f32.gmra.mxu0 %v8597
    %v8678 = vpop.f32.mrf.mxu0
    %v8679 = vadd.f32 0.0, %v8678
    %v8680 = vpop.f32.mrf.mxu0
    %8681 = vmatprep.mubr.f32.mxu0 0.0
    %8682 = vmatmul.mubr.f32.gmra.mxu0 %v8600
    %v8683 = vpop.f32.mrf.mxu0
    %v8684 = vadd.f32 0.0, %v8683
    %v8685 = vpop.f32.mrf.mxu0
    %8686 = vdwg.mxu0
    %8687 = vrot.lane.b32.xlu0 %v362, 40
    %v8688 = vpop.permute.xlu0 %8687
    %8689 = vrot.lane.b32.xlu0 %v367, 40
    %v8690 = vpop.permute.xlu0 %8689
    %8691 = vrot.lane.b32.xlu0 %v372, 40
    %v8692 = vpop.permute.xlu0 %8691
    %8693 = vrot.lane.b32.xlu0 %v377, 40
    %v8694 = vpop.permute.xlu0 %8693
    %v8700 = vsel %vm138, %v8340, 0
    %v8703 = vsel %vm138, %v8341, 0
    %v8706 = vsel %vm138, %v8342, 0
    %v8709 = vsel %vm138, %v8343, 0
    %8711 = vmatprep.subr.mxu0 0.0
    %8712 = vmatpush1.msra.mxu0 0.0
    %8713 = vmatprep.subr.mxu0 0.0
    %8714 = vmatpush1.msra.mxu0 0.0
    %8715 = vmatprep.subr.mxu0 0.0
    %8716 = vmatpush1.msra.mxu0 0.0
    %8717 = vmatprep.subr.mxu0 0.0
    %8718 = vmatpush1.msra.mxu0 0.0
    %8719 = vmatprep.subr.mxu0 0.0
    %8720 = vmatpush1.msra.mxu0 0.0
    %8721 = vmatprep.subr.mxu0 0.0
    %8722 = vmatpush1.msra.mxu0 0.0
    %8723 = vmatprep.subr.mxu0 0.0
    %8724 = vmatpush1.msra.mxu0 0.0
    %8725 = vmatprep.subr.mxu0 0.0
    %8726 = vmatpush1.msra.mxu0 0.0
    %8727 = vmatprep.subr.mxu0 0.0
    %8728 = vmatpush1.msra.mxu0 0.0
    %8729 = vmatprep.subr.mxu0 0.0
    %8730 = vmatpush1.msra.mxu0 0.0
    %8731 = vmatprep.subr.mxu0 0.0
    %8732 = vmatpush1.msra.mxu0 0.0
    %8733 = vmatprep.subr.mxu0 0.0
    %8734 = vmatpush1.msra.mxu0 0.0
    %8735 = vmatprep.subr.mxu0 0.0
    %8736 = vmatpush1.msra.mxu0 %v8694
    %8737 = vmatprep.subr.mxu0 0.0
    %8738 = vmatpush1.msra.mxu0 %v8692
    %8739 = vmatprep.subr.mxu0 0.0
    %8740 = vmatpush1.msra.mxu0 %v8690
    %8741 = vmatprep.subr.mxu0 0.0
    %8742 = vmatpush1.msra.mxu0 %v8688
    %8743 = vmatprep.subr.mxu0 0.0
    %8744 = vmatpush2.msra.mxu0 0.0
    %8745 = vmatprep.subr.mxu0 0.0
    %8746 = vmatpush2.msra.mxu0 0.0
    %8747 = vmatprep.subr.mxu0 0.0
    %8748 = vmatpush2.msra.mxu0 0.0
    %8749 = vmatprep.subr.mxu0 0.0
    %8750 = vmatpush2.msra.mxu0 0.0
    %8751 = vmatprep.subr.mxu0 0.0
    %8752 = vmatpush2.msra.mxu0 0.0
    %8753 = vmatprep.subr.mxu0 0.0
    %8754 = vmatpush2.msra.mxu0 0.0
    %8755 = vmatprep.subr.mxu0 0.0
    %8756 = vmatpush2.msra.mxu0 0.0
    %8757 = vmatprep.subr.mxu0 0.0
    %8758 = vmatpush2.msra.mxu0 0.0
    %8759 = vmatprep.subr.mxu0 0.0
    %8760 = vmatpush2.msra.mxu0 0.0
    %8761 = vmatprep.subr.mxu0 0.0
    %8762 = vmatpush2.msra.mxu0 0.0
    %8763 = vmatprep.subr.mxu0 0.0
    %8764 = vmatpush2.msra.mxu0 0.0
    %8765 = vmatprep.subr.mxu0 0.0
    %8766 = vmatpush2.msra.mxu0 0.0
    %8767 = vmatprep.subr.mxu0 0.0
    %8768 = vmatpush2.msra.mxu0 0.0
    %8769 = vmatprep.subr.mxu0 0.0
    %8770 = vmatpush2.msra.mxu0 0.0
    %8771 = vmatprep.subr.mxu0 0.0
    %8772 = vmatpush2.msra.mxu0 0.0
    %8773 = vmatprep.subr.mxu0 0.0
    %8774 = vmatpush2.msra.mxu0 0.0
    %8775 = vmatprep.mubr.f32.mxu0 0.0
    %8776 = vmatmul.mubr.f32.gmra.mxu0 %v8700
    %v8777 = vpop.f32.mrf.mxu0
    %v8778 = vadd.f32 0.0, %v8777
    %v8779 = vpop.f32.mrf.mxu0
    %8780 = vmatprep.mubr.f32.mxu0 0.0
    %8781 = vmatmul.mubr.f32.gmra.mxu0 %v8703
    %v8782 = vpop.f32.mrf.mxu0
    %v8783 = vadd.f32 0.0, %v8782
    %v8784 = vpop.f32.mrf.mxu0
    %8785 = vmatprep.mubr.f32.mxu0 0.0
    %8786 = vmatmul.mubr.f32.gmra.mxu0 %v8706
    %v8787 = vpop.f32.mrf.mxu0
    %v8788 = vadd.f32 0.0, %v8787
    %v8789 = vpop.f32.mrf.mxu0
    %8790 = vmatprep.mubr.f32.mxu0 0.0
    %8791 = vmatmul.mubr.f32.gmra.mxu0 %v8709
    %v8792 = vpop.f32.mrf.mxu0
    %v8793 = vadd.f32 0.0, %v8792
    %v8794 = vpop.f32.mrf.mxu0
    %8795 = vdwg.mxu0
    %8796 = vrot.lane.b32.xlu0 %v382, 40
    %v8797 = vpop.permute.xlu0 %8796
    %8798 = vrot.lane.b32.xlu0 %v387, 40
    %v8799 = vpop.permute.xlu0 %8798
    %8800 = vrot.lane.b32.xlu0 %v392, 40
    %v8801 = vpop.permute.xlu0 %8800
    %8802 = vrot.lane.b32.xlu0 %v397, 40
    %v8803 = vpop.permute.xlu0 %8802
    %v8809 = vsel %vm138, %v8344, 0
    %v8812 = vsel %vm138, %v8345, 0
    %v8815 = vsel %vm138, %v8346, 0
    %v8818 = vsel %vm138, %v8347, 0
    %8820 = vmatprep.subr.mxu0 0.0
    %8821 = vmatpush1.msra.mxu0 0.0
    %8822 = vmatprep.subr.mxu0 0.0
    %8823 = vmatpush1.msra.mxu0 0.0
    %8824 = vmatprep.subr.mxu0 0.0
    %8825 = vmatpush1.msra.mxu0 0.0
    %8826 = vmatprep.subr.mxu0 0.0
    %8827 = vmatpush1.msra.mxu0 0.0
    %8828 = vmatprep.subr.mxu0 0.0
    %8829 = vmatpush1.msra.mxu0 0.0
    %8830 = vmatprep.subr.mxu0 0.0
    %8831 = vmatpush1.msra.mxu0 0.0
    %8832 = vmatprep.subr.mxu0 0.0
    %8833 = vmatpush1.msra.mxu0 0.0
    %8834 = vmatprep.subr.mxu0 0.0
    %8835 = vmatpush1.msra.mxu0 0.0
    %8836 = vmatprep.subr.mxu0 0.0
    %8837 = vmatpush1.msra.mxu0 0.0
    %8838 = vmatprep.subr.mxu0 0.0
    %8839 = vmatpush1.msra.mxu0 0.0
    %8840 = vmatprep.subr.mxu0 0.0
    %8841 = vmatpush1.msra.mxu0 0.0
    %8842 = vmatprep.subr.mxu0 0.0
    %8843 = vmatpush1.msra.mxu0 0.0
    %8844 = vmatprep.subr.mxu0 0.0
    %8845 = vmatpush1.msra.mxu0 %v8803
    %8846 = vmatprep.subr.mxu0 0.0
    %8847 = vmatpush1.msra.mxu0 %v8801
    %8848 = vmatprep.subr.mxu0 0.0
    %8849 = vmatpush1.msra.mxu0 %v8799
    %8850 = vmatprep.subr.mxu0 0.0
    %8851 = vmatpush1.msra.mxu0 %v8797
    %8852 = vmatprep.subr.mxu0 0.0
    %8853 = vmatpush2.msra.mxu0 0.0
    %8854 = vmatprep.subr.mxu0 0.0
    %8855 = vmatpush2.msra.mxu0 0.0
    %8856 = vmatprep.subr.mxu0 0.0
    %8857 = vmatpush2.msra.mxu0 0.0
    %8858 = vmatprep.subr.mxu0 0.0
    %8859 = vmatpush2.msra.mxu0 0.0
    %8860 = vmatprep.subr.mxu0 0.0
    %8861 = vmatpush2.msra.mxu0 0.0
    %8862 = vmatprep.subr.mxu0 0.0
    %8863 = vmatpush2.msra.mxu0 0.0
    %8864 = vmatprep.subr.mxu0 0.0
    %8865 = vmatpush2.msra.mxu0 0.0
    %8866 = vmatprep.subr.mxu0 0.0
    %8867 = vmatpush2.msra.mxu0 0.0
    %8868 = vmatprep.subr.mxu0 0.0
    %8869 = vmatpush2.msra.mxu0 0.0
    %8870 = vmatprep.subr.mxu0 0.0
    %8871 = vmatpush2.msra.mxu0 0.0
    %8872 = vmatprep.subr.mxu0 0.0
    %8873 = vmatpush2.msra.mxu0 0.0
    %8874 = vmatprep.subr.mxu0 0.0
    %8875 = vmatpush2.msra.mxu0 0.0
    %8876 = vmatprep.subr.mxu0 0.0
    %8877 = vmatpush2.msra.mxu0 0.0
    %8878 = vmatprep.subr.mxu0 0.0
    %8879 = vmatpush2.msra.mxu0 0.0
    %8880 = vmatprep.subr.mxu0 0.0
    %8881 = vmatpush2.msra.mxu0 0.0
    %8882 = vmatprep.subr.mxu0 0.0
    %8883 = vmatpush2.msra.mxu0 0.0
    %8884 = vmatprep.mubr.f32.mxu0 0.0
    %8885 = vmatmul.mubr.f32.gmra.mxu0 %v8809
    %v8886 = vpop.f32.mrf.mxu0
    %v8887 = vadd.f32 0.0, %v8886
    %v8888 = vpop.f32.mrf.mxu0
    %8889 = vmatprep.mubr.f32.mxu0 0.0
    %8890 = vmatmul.mubr.f32.gmra.mxu0 %v8812
    %v8891 = vpop.f32.mrf.mxu0
    %v8892 = vadd.f32 0.0, %v8891
    %v8893 = vpop.f32.mrf.mxu0
    %8894 = vmatprep.mubr.f32.mxu0 0.0
    %8895 = vmatmul.mubr.f32.gmra.mxu0 %v8815
    %v8896 = vpop.f32.mrf.mxu0
    %v8897 = vadd.f32 0.0, %v8896
    %v8898 = vpop.f32.mrf.mxu0
    %8899 = vmatprep.mubr.f32.mxu0 0.0
    %8900 = vmatmul.mubr.f32.gmra.mxu0 %v8818
    %v8901 = vpop.f32.mrf.mxu0
    %v8902 = vadd.f32 0.0, %v8901
    %v8903 = vpop.f32.mrf.mxu0
    %8904 = vdwg.mxu0
    %8905 = vrot.lane.b32.xlu0 %v402, 40
    %v8906 = vpop.permute.xlu0 %8905
    %8907 = vrot.lane.b32.xlu0 %v407, 40
    %v8908 = vpop.permute.xlu0 %8907
    %8909 = vrot.lane.b32.xlu0 %v412, 40
    %v8910 = vpop.permute.xlu0 %8909
    %8911 = vrot.lane.b32.xlu0 %v417, 40
    %v8912 = vpop.permute.xlu0 %8911
    %v8918 = vsel %vm138, %v8348, 0
    %v8921 = vsel %vm138, %v8349, 0
    %v8924 = vsel %vm138, %v8350, 0
    %v8927 = vsel %vm138, %v8351, 0
    %8929 = vmatprep.subr.mxu0 0.0
    %8930 = vmatpush1.msra.mxu0 0.0
    %8931 = vmatprep.subr.mxu0 0.0
    %8932 = vmatpush1.msra.mxu0 0.0
    %8933 = vmatprep.subr.mxu0 0.0
    %8934 = vmatpush1.msra.mxu0 0.0
    %8935 = vmatprep.subr.mxu0 0.0
    %8936 = vmatpush1.msra.mxu0 0.0
    %8937 = vmatprep.subr.mxu0 0.0
    %8938 = vmatpush1.msra.mxu0 0.0
    %8939 = vmatprep.subr.mxu0 0.0
    %8940 = vmatpush1.msra.mxu0 0.0
    %8941 = vmatprep.subr.mxu0 0.0
    %8942 = vmatpush1.msra.mxu0 0.0
    %8943 = vmatprep.subr.mxu0 0.0
    %8944 = vmatpush1.msra.mxu0 0.0
    %8945 = vmatprep.subr.mxu0 0.0
    %8946 = vmatpush1.msra.mxu0 0.0
    %8947 = vmatprep.subr.mxu0 0.0
    %8948 = vmatpush1.msra.mxu0 0.0
    %8949 = vmatprep.subr.mxu0 0.0
    %8950 = vmatpush1.msra.mxu0 0.0
    %8951 = vmatprep.subr.mxu0 0.0
    %8952 = vmatpush1.msra.mxu0 0.0
    %8953 = vmatprep.subr.mxu0 0.0
    %8954 = vmatpush1.msra.mxu0 %v8912
    %8955 = vmatprep.subr.mxu0 0.0
    %8956 = vmatpush1.msra.mxu0 %v8910
    %8957 = vmatprep.subr.mxu0 0.0
    %8958 = vmatpush1.msra.mxu0 %v8908
    %8959 = vmatprep.subr.mxu0 0.0
    %8960 = vmatpush1.msra.mxu0 %v8906
    %8961 = vmatprep.subr.mxu0 0.0
    %8962 = vmatpush2.msra.mxu0 0.0
    %8963 = vmatprep.subr.mxu0 0.0
    %8964 = vmatpush2.msra.mxu0 0.0
    %8965 = vmatprep.subr.mxu0 0.0
    %8966 = vmatpush2.msra.mxu0 0.0
    %8967 = vmatprep.subr.mxu0 0.0
    %8968 = vmatpush2.msra.mxu0 0.0
    %8969 = vmatprep.subr.mxu0 0.0
    %8970 = vmatpush2.msra.mxu0 0.0
    %8971 = vmatprep.subr.mxu0 0.0
    %8972 = vmatpush2.msra.mxu0 0.0
    %8973 = vmatprep.subr.mxu0 0.0
    %8974 = vmatpush2.msra.mxu0 0.0
    %8975 = vmatprep.subr.mxu0 0.0
    %8976 = vmatpush2.msra.mxu0 0.0
    %8977 = vmatprep.subr.mxu0 0.0
    %8978 = vmatpush2.msra.mxu0 0.0
    %8979 = vmatprep.subr.mxu0 0.0
    %8980 = vmatpush2.msra.mxu0 0.0
    %8981 = vmatprep.subr.mxu0 0.0
    %8982 = vmatpush2.msra.mxu0 0.0
    %8983 = vmatprep.subr.mxu0 0.0
    %8984 = vmatpush2.msra.mxu0 0.0
    %8985 = vmatprep.subr.mxu0 0.0
    %8986 = vmatpush2.msra.mxu0 0.0
    %8987 = vmatprep.subr.mxu0 0.0
    %8988 = vmatpush2.msra.mxu0 0.0
    %8989 = vmatprep.subr.mxu0 0.0
    %8990 = vmatpush2.msra.mxu0 0.0
    %8991 = vmatprep.subr.mxu0 0.0
    %8992 = vmatpush2.msra.mxu0 0.0
    %8993 = vmatprep.mubr.f32.mxu0 0.0
    %8994 = vmatmul.mubr.f32.gmra.mxu0 %v8918
    %v8995 = vpop.f32.mrf.mxu0
    %v8996 = vadd.f32 0.0, %v8995
    %v8997 = vpop.f32.mrf.mxu0
    %8998 = vmatprep.mubr.f32.mxu0 0.0
    %8999 = vmatmul.mubr.f32.gmra.mxu0 %v8921
    %v9000 = vpop.f32.mrf.mxu0
    %v9001 = vadd.f32 0.0, %v9000
    %v9002 = vpop.f32.mrf.mxu0
    %9003 = vmatprep.mubr.f32.mxu0 0.0
    %9004 = vmatmul.mubr.f32.gmra.mxu0 %v8924
    %v9005 = vpop.f32.mrf.mxu0
    %v9006 = vadd.f32 0.0, %v9005
    %v9007 = vpop.f32.mrf.mxu0
    %9008 = vmatprep.mubr.f32.mxu0 0.0
    %9009 = vmatmul.mubr.f32.gmra.mxu0 %v8927
    %v9010 = vpop.f32.mrf.mxu0
    %v9011 = vadd.f32 0.0, %v9010
    %v9012 = vpop.f32.mrf.mxu0
    %9013 = vdwg.mxu0
    %9014 = vrot.lane.b32.xlu0 %v422, 40
    %v9015 = vpop.permute.xlu0 %9014
    %9016 = vrot.lane.b32.xlu0 %v427, 40
    %v9017 = vpop.permute.xlu0 %9016
    %9018 = vrot.lane.b32.xlu0 %v432, 40
    %v9019 = vpop.permute.xlu0 %9018
    %9020 = vrot.lane.b32.xlu0 %v437, 40
    %v9021 = vpop.permute.xlu0 %9020
    %v9027 = vsel %vm138, %v8352, 0
    %v9030 = vsel %vm138, %v8353, 0
    %v9033 = vsel %vm138, %v8354, 0
    %v9036 = vsel %vm138, %v8355, 0
    %9038 = vmatprep.subr.mxu0 0.0
    %9039 = vmatpush1.msra.mxu0 0.0
    %9040 = vmatprep.subr.mxu0 0.0
    %9041 = vmatpush1.msra.mxu0 0.0
    %9042 = vmatprep.subr.mxu0 0.0
    %9043 = vmatpush1.msra.mxu0 0.0
    %9044 = vmatprep.subr.mxu0 0.0
    %9045 = vmatpush1.msra.mxu0 0.0
    %9046 = vmatprep.subr.mxu0 0.0
    %9047 = vmatpush1.msra.mxu0 0.0
    %9048 = vmatprep.subr.mxu0 0.0
    %9049 = vmatpush1.msra.mxu0 0.0
    %9050 = vmatprep.subr.mxu0 0.0
    %9051 = vmatpush1.msra.mxu0 0.0
    %9052 = vmatprep.subr.mxu0 0.0
    %9053 = vmatpush1.msra.mxu0 0.0
    %9054 = vmatprep.subr.mxu0 0.0
    %9055 = vmatpush1.msra.mxu0 0.0
    %9056 = vmatprep.subr.mxu0 0.0
    %9057 = vmatpush1.msra.mxu0 0.0
    %9058 = vmatprep.subr.mxu0 0.0
    %9059 = vmatpush1.msra.mxu0 0.0
    %9060 = vmatprep.subr.mxu0 0.0
    %9061 = vmatpush1.msra.mxu0 0.0
    %9062 = vmatprep.subr.mxu0 0.0
    %9063 = vmatpush1.msra.mxu0 %v9021
    %9064 = vmatprep.subr.mxu0 0.0
    %9065 = vmatpush1.msra.mxu0 %v9019
    %9066 = vmatprep.subr.mxu0 0.0
    %9067 = vmatpush1.msra.mxu0 %v9017
    %9068 = vmatprep.subr.mxu0 0.0
    %9069 = vmatpush1.msra.mxu0 %v9015
    %9070 = vmatprep.subr.mxu0 0.0
    %9071 = vmatpush2.msra.mxu0 0.0
    %9072 = vmatprep.subr.mxu0 0.0
    %9073 = vmatpush2.msra.mxu0 0.0
    %9074 = vmatprep.subr.mxu0 0.0
    %9075 = vmatpush2.msra.mxu0 0.0
    %9076 = vmatprep.subr.mxu0 0.0
    %9077 = vmatpush2.msra.mxu0 0.0
    %9078 = vmatprep.subr.mxu0 0.0
    %9079 = vmatpush2.msra.mxu0 0.0
    %9080 = vmatprep.subr.mxu0 0.0
    %9081 = vmatpush2.msra.mxu0 0.0
    %9082 = vmatprep.subr.mxu0 0.0
    %9083 = vmatpush2.msra.mxu0 0.0
    %9084 = vmatprep.subr.mxu0 0.0
    %9085 = vmatpush2.msra.mxu0 0.0
    %9086 = vmatprep.subr.mxu0 0.0
    %9087 = vmatpush2.msra.mxu0 0.0
    %9088 = vmatprep.subr.mxu0 0.0
    %9089 = vmatpush2.msra.mxu0 0.0
    %9090 = vmatprep.subr.mxu0 0.0
    %9091 = vmatpush2.msra.mxu0 0.0
    %9092 = vmatprep.subr.mxu0 0.0
    %9093 = vmatpush2.msra.mxu0 0.0
    %9094 = vmatprep.subr.mxu0 0.0
    %9095 = vmatpush2.msra.mxu0 0.0
    %9096 = vmatprep.subr.mxu0 0.0
    %9097 = vmatpush2.msra.mxu0 0.0
    %9098 = vmatprep.subr.mxu0 0.0
    %9099 = vmatpush2.msra.mxu0 0.0
    %9100 = vmatprep.subr.mxu0 0.0
    %9101 = vmatpush2.msra.mxu0 0.0
    %9102 = vmatprep.mubr.f32.mxu0 0.0
    %9103 = vmatmul.mubr.f32.gmra.mxu0 %v9027
    %v9104 = vpop.f32.mrf.mxu0
    %v9105 = vadd.f32 0.0, %v9104
    %v9106 = vpop.f32.mrf.mxu0
    %9107 = vmatprep.mubr.f32.mxu0 0.0
    %9108 = vmatmul.mubr.f32.gmra.mxu0 %v9030
    %v9109 = vpop.f32.mrf.mxu0
    %v9110 = vadd.f32 0.0, %v9109
    %v9111 = vpop.f32.mrf.mxu0
    %9112 = vmatprep.mubr.f32.mxu0 0.0
    %9113 = vmatmul.mubr.f32.gmra.mxu0 %v9033
    %v9114 = vpop.f32.mrf.mxu0
    %v9115 = vadd.f32 0.0, %v9114
    %v9116 = vpop.f32.mrf.mxu0
    %9117 = vmatprep.mubr.f32.mxu0 0.0
    %9118 = vmatmul.mubr.f32.gmra.mxu0 %v9036
    %v9119 = vpop.f32.mrf.mxu0
    %v9120 = vadd.f32 0.0, %v9119
    %v9121 = vpop.f32.mrf.mxu0
    %9122 = vdwg.mxu0
    %9123 = vrot.lane.b32.xlu0 %v442, 40
    %v9124 = vpop.permute.xlu0 %9123
    %9125 = vrot.lane.b32.xlu0 %v447, 40
    %v9126 = vpop.permute.xlu0 %9125
    %9127 = vrot.lane.b32.xlu0 %v452, 40
    %v9128 = vpop.permute.xlu0 %9127
    %9129 = vrot.lane.b32.xlu0 %v457, 40
    %v9130 = vpop.permute.xlu0 %9129
    %v9136 = vsel %vm138, %v8356, 0
    %v9139 = vsel %vm138, %v8357, 0
    %v9142 = vsel %vm138, %v8358, 0
    %v9145 = vsel %vm138, %v8359, 0
    %9147 = vmatprep.subr.mxu0 0.0
    %9148 = vmatpush1.msra.mxu0 0.0
    %9149 = vmatprep.subr.mxu0 0.0
    %9150 = vmatpush1.msra.mxu0 0.0
    %9151 = vmatprep.subr.mxu0 0.0
    %9152 = vmatpush1.msra.mxu0 0.0
    %9153 = vmatprep.subr.mxu0 0.0
    %9154 = vmatpush1.msra.mxu0 0.0
    %9155 = vmatprep.subr.mxu0 0.0
    %9156 = vmatpush1.msra.mxu0 0.0
    %9157 = vmatprep.subr.mxu0 0.0
    %9158 = vmatpush1.msra.mxu0 0.0
    %9159 = vmatprep.subr.mxu0 0.0
    %9160 = vmatpush1.msra.mxu0 0.0
    %9161 = vmatprep.subr.mxu0 0.0
    %9162 = vmatpush1.msra.mxu0 0.0
    %9163 = vmatprep.subr.mxu0 0.0
    %9164 = vmatpush1.msra.mxu0 0.0
    %9165 = vmatprep.subr.mxu0 0.0
    %9166 = vmatpush1.msra.mxu0 0.0
    %9167 = vmatprep.subr.mxu0 0.0
    %9168 = vmatpush1.msra.mxu0 0.0
    %9169 = vmatprep.subr.mxu0 0.0
    %9170 = vmatpush1.msra.mxu0 0.0
    %9171 = vmatprep.subr.mxu0 0.0
    %9172 = vmatpush1.msra.mxu0 %v9130
    %9173 = vmatprep.subr.mxu0 0.0
    %9174 = vmatpush1.msra.mxu0 %v9128
    %9175 = vmatprep.subr.mxu0 0.0
    %9176 = vmatpush1.msra.mxu0 %v9126
    %9177 = vmatprep.subr.mxu0 0.0
    %9178 = vmatpush1.msra.mxu0 %v9124
    %9179 = vmatprep.subr.mxu0 0.0
    %9180 = vmatpush2.msra.mxu0 0.0
    %9181 = vmatprep.subr.mxu0 0.0
    %9182 = vmatpush2.msra.mxu0 0.0
    %9183 = vmatprep.subr.mxu0 0.0
    %9184 = vmatpush2.msra.mxu0 0.0
    %9185 = vmatprep.subr.mxu0 0.0
    %9186 = vmatpush2.msra.mxu0 0.0
    %9187 = vmatprep.subr.mxu0 0.0
    %9188 = vmatpush2.msra.mxu0 0.0
    %9189 = vmatprep.subr.mxu0 0.0
    %9190 = vmatpush2.msra.mxu0 0.0
    %9191 = vmatprep.subr.mxu0 0.0
    %9192 = vmatpush2.msra.mxu0 0.0
    %9193 = vmatprep.subr.mxu0 0.0
    %9194 = vmatpush2.msra.mxu0 0.0
    %9195 = vmatprep.subr.mxu0 0.0
    %9196 = vmatpush2.msra.mxu0 0.0
    %9197 = vmatprep.subr.mxu0 0.0
    %9198 = vmatpush2.msra.mxu0 0.0
    %9199 = vmatprep.subr.mxu0 0.0
    %9200 = vmatpush2.msra.mxu0 0.0
    %9201 = vmatprep.subr.mxu0 0.0
    %9202 = vmatpush2.msra.mxu0 0.0
    %9203 = vmatprep.subr.mxu0 0.0
    %9204 = vmatpush2.msra.mxu0 0.0
    %9205 = vmatprep.subr.mxu0 0.0
    %9206 = vmatpush2.msra.mxu0 0.0
    %9207 = vmatprep.subr.mxu0 0.0
    %9208 = vmatpush2.msra.mxu0 0.0
    %9209 = vmatprep.subr.mxu0 0.0
    %9210 = vmatpush2.msra.mxu0 0.0
    %9211 = vmatprep.mubr.f32.mxu0 0.0
    %9212 = vmatmul.mubr.f32.gmra.mxu0 %v9136
    %v9213 = vpop.f32.mrf.mxu0
    %v9214 = vadd.f32 0.0, %v9213
    %v9215 = vpop.f32.mrf.mxu0
    %9216 = vmatprep.mubr.f32.mxu0 0.0
    %9217 = vmatmul.mubr.f32.gmra.mxu0 %v9139
    %v9218 = vpop.f32.mrf.mxu0
    %v9219 = vadd.f32 0.0, %v9218
    %v9220 = vpop.f32.mrf.mxu0
    %9221 = vmatprep.mubr.f32.mxu0 0.0
    %9222 = vmatmul.mubr.f32.gmra.mxu0 %v9142
    %v9223 = vpop.f32.mrf.mxu0
    %v9224 = vadd.f32 0.0, %v9223
    %v9225 = vpop.f32.mrf.mxu0
    %9226 = vmatprep.mubr.f32.mxu0 0.0
    %9227 = vmatmul.mubr.f32.gmra.mxu0 %v9145
    %v9228 = vpop.f32.mrf.mxu0
    %v9229 = vadd.f32 0.0, %v9228
    %v9230 = vpop.f32.mrf.mxu0
    %9231 = vdwg.mxu0
    %9264 = vrot.lane.b32.xlu0 %v4057, 8
    %v9265 = vpop.permute.xlu0 %9264
    %9266 = vrot.lane.b32.xlu0 %v4062, 8
    %v9267 = vpop.permute.xlu0 %9266
    %9268 = vrot.lane.b32.xlu0 %v4067, 8
    %v9269 = vpop.permute.xlu0 %9268
    %9270 = vrot.lane.b32.xlu0 %v4072, 8
    %v9271 = vpop.permute.xlu0 %9270
    %9272 = vrot.lane.b32.xlu0 %v4166, 8
    %v9273 = vpop.permute.xlu0 %9272
    %9274 = vrot.lane.b32.xlu0 %v4171, 8
    %v9275 = vpop.permute.xlu0 %9274
    %9276 = vrot.lane.b32.xlu0 %v4176, 8
    %v9277 = vpop.permute.xlu0 %9276
    %9278 = vrot.lane.b32.xlu0 %v4181, 8
    %v9279 = vpop.permute.xlu0 %9278
    %9280 = vrot.lane.b32.xlu0 %v4275, 8
    %v9281 = vpop.permute.xlu0 %9280
    %9282 = vrot.lane.b32.xlu0 %v4280, 8
    %v9283 = vpop.permute.xlu0 %9282
    %9284 = vrot.lane.b32.xlu0 %v4285, 8
    %v9285 = vpop.permute.xlu0 %9284
    %9286 = vrot.lane.b32.xlu0 %v4290, 8
    %v9287 = vpop.permute.xlu0 %9286
    %9288 = vrot.lane.b32.xlu0 %v4384, 8
    %v9289 = vpop.permute.xlu0 %9288
    %9290 = vrot.lane.b32.xlu0 %v4389, 8
    %v9291 = vpop.permute.xlu0 %9290
    %9292 = vrot.lane.b32.xlu0 %v4394, 8
    %v9293 = vpop.permute.xlu0 %9292
    %9294 = vrot.lane.b32.xlu0 %v4399, 8
    %v9295 = vpop.permute.xlu0 %9294
    %9296 = vrot.lane.b32.xlu0 %v4493, 8
    %v9297 = vpop.permute.xlu0 %9296
    %9298 = vrot.lane.b32.xlu0 %v4498, 8
    %v9299 = vpop.permute.xlu0 %9298
    %9300 = vrot.lane.b32.xlu0 %v4503, 8
    %v9301 = vpop.permute.xlu0 %9300
    %9302 = vrot.lane.b32.xlu0 %v4508, 8
    %v9303 = vpop.permute.xlu0 %9302
    %9304 = vrot.lane.b32.xlu0 %v4602, 8
    %v9305 = vpop.permute.xlu0 %9304
    %9306 = vrot.lane.b32.xlu0 %v4607, 8
    %v9307 = vpop.permute.xlu0 %9306
    %9308 = vrot.lane.b32.xlu0 %v4612, 8
    %v9309 = vpop.permute.xlu0 %9308
    %9310 = vrot.lane.b32.xlu0 %v4617, 8
    %v9311 = vpop.permute.xlu0 %9310
    %9312 = vrot.lane.b32.xlu0 %v4711, 8
    %v9313 = vpop.permute.xlu0 %9312
    %9314 = vrot.lane.b32.xlu0 %v4716, 8
    %v9315 = vpop.permute.xlu0 %9314
    %9316 = vrot.lane.b32.xlu0 %v4721, 8
    %v9317 = vpop.permute.xlu0 %9316
    %9318 = vrot.lane.b32.xlu0 %v4726, 8
    %v9319 = vpop.permute.xlu0 %9318
    %9320 = vrot.lane.b32.xlu0 %v4820, 8
    %v9321 = vpop.permute.xlu0 %9320
    %9322 = vrot.lane.b32.xlu0 %v4825, 8
    %v9323 = vpop.permute.xlu0 %9322
    %9324 = vrot.lane.b32.xlu0 %v4830, 8
    %v9325 = vpop.permute.xlu0 %9324
    %9326 = vrot.lane.b32.xlu0 %v4835, 8
    %v9327 = vpop.permute.xlu0 %9326
    %9392 = vrot.lane.b32.xlu0 %v6254, 16
    %v9393 = vpop.permute.xlu0 %9392
    %9394 = vrot.lane.b32.xlu0 %v6259, 16
    %v9395 = vpop.permute.xlu0 %9394
    %9396 = vrot.lane.b32.xlu0 %v6264, 16
    %v9397 = vpop.permute.xlu0 %9396
    %9398 = vrot.lane.b32.xlu0 %v6269, 16
    %v9399 = vpop.permute.xlu0 %9398
    %9400 = vrot.lane.b32.xlu0 %v6363, 16
    %v9401 = vpop.permute.xlu0 %9400
    %9402 = vrot.lane.b32.xlu0 %v6368, 16
    %v9403 = vpop.permute.xlu0 %9402
    %9404 = vrot.lane.b32.xlu0 %v6373, 16
    %v9405 = vpop.permute.xlu0 %9404
    %9406 = vrot.lane.b32.xlu0 %v6378, 16
    %v9407 = vpop.permute.xlu0 %9406
    %9408 = vrot.lane.b32.xlu0 %v6472, 16
    %v9409 = vpop.permute.xlu0 %9408
    %9410 = vrot.lane.b32.xlu0 %v6477, 16
    %v9411 = vpop.permute.xlu0 %9410
    %9412 = vrot.lane.b32.xlu0 %v6482, 16
    %v9413 = vpop.permute.xlu0 %9412
    %9414 = vrot.lane.b32.xlu0 %v6487, 16
    %v9415 = vpop.permute.xlu0 %9414
    %9416 = vrot.lane.b32.xlu0 %v6581, 16
    %v9417 = vpop.permute.xlu0 %9416
    %9418 = vrot.lane.b32.xlu0 %v6586, 16
    %v9419 = vpop.permute.xlu0 %9418
    %9420 = vrot.lane.b32.xlu0 %v6591, 16
    %v9421 = vpop.permute.xlu0 %9420
    %9422 = vrot.lane.b32.xlu0 %v6596, 16
    %v9423 = vpop.permute.xlu0 %9422
    %9424 = vrot.lane.b32.xlu0 %v6690, 16
    %v9425 = vpop.permute.xlu0 %9424
    %9426 = vrot.lane.b32.xlu0 %v6695, 16
    %v9427 = vpop.permute.xlu0 %9426
    %9428 = vrot.lane.b32.xlu0 %v6700, 16
    %v9429 = vpop.permute.xlu0 %9428
    %9430 = vrot.lane.b32.xlu0 %v6705, 16
    %v9431 = vpop.permute.xlu0 %9430
    %9432 = vrot.lane.b32.xlu0 %v6799, 16
    %v9433 = vpop.permute.xlu0 %9432
    %9434 = vrot.lane.b32.xlu0 %v6804, 16
    %v9435 = vpop.permute.xlu0 %9434
    %9436 = vrot.lane.b32.xlu0 %v6809, 16
    %v9437 = vpop.permute.xlu0 %9436
    %9438 = vrot.lane.b32.xlu0 %v6814, 16
    %v9439 = vpop.permute.xlu0 %9438
    %9440 = vrot.lane.b32.xlu0 %v6908, 16
    %v9441 = vpop.permute.xlu0 %9440
    %9442 = vrot.lane.b32.xlu0 %v6913, 16
    %v9443 = vpop.permute.xlu0 %9442
    %9444 = vrot.lane.b32.xlu0 %v6918, 16
    %v9445 = vpop.permute.xlu0 %9444
    %9446 = vrot.lane.b32.xlu0 %v6923, 16
    %v9447 = vpop.permute.xlu0 %9446
    %9448 = vrot.lane.b32.xlu0 %v7017, 16
    %v9449 = vpop.permute.xlu0 %9448
    %9450 = vrot.lane.b32.xlu0 %v7022, 16
    %v9451 = vpop.permute.xlu0 %9450
    %9452 = vrot.lane.b32.xlu0 %v7027, 16
    %v9453 = vpop.permute.xlu0 %9452
    %9454 = vrot.lane.b32.xlu0 %v7032, 16
    %v9455 = vpop.permute.xlu0 %9454
    %9520 = vrot.lane.b32.xlu0 %v8451, 24
    %v9521 = vpop.permute.xlu0 %9520
    %9522 = vrot.lane.b32.xlu0 %v8456, 24
    %v9523 = vpop.permute.xlu0 %9522
    %9524 = vrot.lane.b32.xlu0 %v8461, 24
    %v9525 = vpop.permute.xlu0 %9524
    %9526 = vrot.lane.b32.xlu0 %v8466, 24
    %v9527 = vpop.permute.xlu0 %9526
    %9528 = vrot.lane.b32.xlu0 %v8560, 24
    %v9529 = vpop.permute.xlu0 %9528
    %9530 = vrot.lane.b32.xlu0 %v8565, 24
    %v9531 = vpop.permute.xlu0 %9530
    %9532 = vrot.lane.b32.xlu0 %v8570, 24
    %v9533 = vpop.permute.xlu0 %9532
    %9534 = vrot.lane.b32.xlu0 %v8575, 24
    %v9535 = vpop.permute.xlu0 %9534
    %9536 = vrot.lane.b32.xlu0 %v8669, 24
    %v9537 = vpop.permute.xlu0 %9536
    %9538 = vrot.lane.b32.xlu0 %v8674, 24
    %v9539 = vpop.permute.xlu0 %9538
    %9540 = vrot.lane.b32.xlu0 %v8679, 24
    %v9541 = vpop.permute.xlu0 %9540
    %9542 = vrot.lane.b32.xlu0 %v8684, 24
    %v9543 = vpop.permute.xlu0 %9542
    %9544 = vrot.lane.b32.xlu0 %v8778, 24
    %v9545 = vpop.permute.xlu0 %9544
    %9546 = vrot.lane.b32.xlu0 %v8783, 24
    %v9547 = vpop.permute.xlu0 %9546
    %9548 = vrot.lane.b32.xlu0 %v8788, 24
    %v9549 = vpop.permute.xlu0 %9548
    %9550 = vrot.lane.b32.xlu0 %v8793, 24
    %v9551 = vpop.permute.xlu0 %9550
    %9552 = vrot.lane.b32.xlu0 %v8887, 24
    %v9553 = vpop.permute.xlu0 %9552
    %9554 = vrot.lane.b32.xlu0 %v8892, 24
    %v9555 = vpop.permute.xlu0 %9554
    %9556 = vrot.lane.b32.xlu0 %v8897, 24
    %v9557 = vpop.permute.xlu0 %9556
    %9558 = vrot.lane.b32.xlu0 %v8902, 24
    %v9559 = vpop.permute.xlu0 %9558
    %9560 = vrot.lane.b32.xlu0 %v8996, 24
    %v9561 = vpop.permute.xlu0 %9560
    %9562 = vrot.lane.b32.xlu0 %v9001, 24
    %v9563 = vpop.permute.xlu0 %9562
    %9564 = vrot.lane.b32.xlu0 %v9006, 24
    %v9565 = vpop.permute.xlu0 %9564
    %9566 = vrot.lane.b32.xlu0 %v9011, 24
    %v9567 = vpop.permute.xlu0 %9566
    %9568 = vrot.lane.b32.xlu0 %v9105, 24
    %v9569 = vpop.permute.xlu0 %9568
    %9570 = vrot.lane.b32.xlu0 %v9110, 24
    %v9571 = vpop.permute.xlu0 %9570
    %9572 = vrot.lane.b32.xlu0 %v9115, 24
    %v9573 = vpop.permute.xlu0 %9572
    %9574 = vrot.lane.b32.xlu0 %v9120, 24
    %v9575 = vpop.permute.xlu0 %9574
    %9576 = vrot.lane.b32.xlu0 %v9214, 24
    %v9577 = vpop.permute.xlu0 %9576
    %9578 = vrot.lane.b32.xlu0 %v9219, 24
    %v9579 = vpop.permute.xlu0 %9578
    %9580 = vrot.lane.b32.xlu0 %v9224, 24
    %v9581 = vpop.permute.xlu0 %9580
    %9582 = vrot.lane.b32.xlu0 %v9229, 24
    %v9583 = vpop.permute.xlu0 %9582
    %v9616 = vsel %vm492, %v1860, %v9265
    %v9617 = vsel %vm492, %v1865, %v9267
    %v9618 = vsel %vm492, %v1870, %v9269
    %v9619 = vsel %vm492, %v1875, %v9271
    %v9620 = vsel %vm492, %v1969, %v9273
    %v9621 = vsel %vm492, %v1974, %v9275
    %v9622 = vsel %vm492, %v1979, %v9277
    %v9623 = vsel %vm492, %v1984, %v9279
    %v9624 = vsel %vm492, %v2078, %v9281
    %v9625 = vsel %vm492, %v2083, %v9283
    %v9626 = vsel %vm492, %v2088, %v9285
    %v9627 = vsel %vm492, %v2093, %v9287
    %v9628 = vsel %vm492, %v2187, %v9289
    %v9629 = vsel %vm492, %v2192, %v9291
    %v9630 = vsel %vm492, %v2197, %v9293
    %v9631 = vsel %vm492, %v2202, %v9295
    %v9632 = vsel %vm492, %v2296, %v9297
    %v9633 = vsel %vm492, %v2301, %v9299
    %v9634 = vsel %vm492, %v2306, %v9301
    %v9635 = vsel %vm492, %v2311, %v9303
    %v9636 = vsel %vm492, %v2405, %v9305
    %v9637 = vsel %vm492, %v2410, %v9307
    %v9638 = vsel %vm492, %v2415, %v9309
    %v9639 = vsel %vm492, %v2420, %v9311
    %v9640 = vsel %vm492, %v2514, %v9313
    %v9641 = vsel %vm492, %v2519, %v9315
    %v9642 = vsel %vm492, %v2524, %v9317
    %v9643 = vsel %vm492, %v2529, %v9319
    %v9644 = vsel %vm492, %v2623, %v9321
    %v9645 = vsel %vm492, %v2628, %v9323
    %v9646 = vsel %vm492, %v2633, %v9325
    %v9647 = vsel %vm492, %v2638, %v9327
    %vm9648 = vcmask 130048
    %v9649 = vsel %vm9648, %v9616, %v9393
    %v9650 = vsel %vm9648, %v9617, %v9395
    %v9651 = vsel %vm9648, %v9618, %v9397
    %v9652 = vsel %vm9648, %v9619, %v9399
    %v9653 = vsel %vm9648, %v9620, %v9401
    %v9654 = vsel %vm9648, %v9621, %v9403
    %v9655 = vsel %vm9648, %v9622, %v9405
    %v9656 = vsel %vm9648, %v9623, %v9407
    %v9657 = vsel %vm9648, %v9624, %v9409
    %v9658 = vsel %vm9648, %v9625, %v9411
    %v9659 = vsel %vm9648, %v9626, %v9413
    %v9660 = vsel %vm9648, %v9627, %v9415
    %v9661 = vsel %vm9648, %v9628, %v9417
    %v9662 = vsel %vm9648, %v9629, %v9419
    %v9663 = vsel %vm9648, %v9630, %v9421
    %v9664 = vsel %vm9648, %v9631, %v9423
    %v9665 = vsel %vm9648, %v9632, %v9425
    %v9666 = vsel %vm9648, %v9633, %v9427
    %v9667 = vsel %vm9648, %v9634, %v9429
    %v9668 = vsel %vm9648, %v9635, %v9431
    %v9669 = vsel %vm9648, %v9636, %v9433
    %v9670 = vsel %vm9648, %v9637, %v9435
    %v9671 = vsel %vm9648, %v9638, %v9437
    %v9672 = vsel %vm9648, %v9639, %v9439
    %v9673 = vsel %vm9648, %v9640, %v9441
    %v9674 = vsel %vm9648, %v9641, %v9443
    %v9675 = vsel %vm9648, %v9642, %v9445
    %v9676 = vsel %vm9648, %v9643, %v9447
    %v9677 = vsel %vm9648, %v9644, %v9449
    %v9678 = vsel %vm9648, %v9645, %v9451
    %v9679 = vsel %vm9648, %v9646, %v9453
    %v9680 = vsel %vm9648, %v9647, %v9455
    %vm9681 = vcmask 195584
    %v9682 = vsel %vm9681, %v9649, %v9521
    %v9683 = vsel %vm9681, %v9650, %v9523
    %v9684 = vsel %vm9681, %v9651, %v9525
    %v9685 = vsel %vm9681, %v9652, %v9527
    %v9686 = vsel %vm9681, %v9653, %v9529
    %v9687 = vsel %vm9681, %v9654, %v9531
    %v9688 = vsel %vm9681, %v9655, %v9533
    %v9689 = vsel %vm9681, %v9656, %v9535
    %v9690 = vsel %vm9681, %v9657, %v9537
    %v9691 = vsel %vm9681, %v9658, %v9539
    %v9692 = vsel %vm9681, %v9659, %v9541
    %v9693 = vsel %vm9681, %v9660, %v9543
    %v9694 = vsel %vm9681, %v9661, %v9545
    %v9695 = vsel %vm9681, %v9662, %v9547
    %v9696 = vsel %vm9681, %v9663, %v9549
    %v9697 = vsel %vm9681, %v9664, %v9551
    %v9698 = vsel %vm9681, %v9665, %v9553
    %v9699 = vsel %vm9681, %v9666, %v9555
    %v9700 = vsel %vm9681, %v9667, %v9557
    %v9701 = vsel %vm9681, %v9668, %v9559
    %v9702 = vsel %vm9681, %v9669, %v9561
    %v9703 = vsel %vm9681, %v9670, %v9563
    %v9704 = vsel %vm9681, %v9671, %v9565
    %v9705 = vsel %vm9681, %v9672, %v9567
    %v9706 = vsel %vm9681, %v9673, %v9569
    %v9707 = vsel %vm9681, %v9674, %v9571
    %v9708 = vsel %vm9681, %v9675, %v9573
    %v9709 = vsel %vm9681, %v9676, %v9575
    %v9710 = vsel %vm9681, %v9677, %v9577
    %v9711 = vsel %vm9681, %v9678, %v9579
    %v9712 = vsel %vm9681, %v9679, %v9581
    %v9713 = vsel %vm9681, %v9680, %v9583
    %v9714 = vld [vmem:[#allocation10] sm:$0xff]
    %v9715 = vld [vmem:[#allocation10 + $0x8] sm:$0xff]
    %v9716 = vld [vmem:[#allocation10 + $0x10] sm:$0xff]
    %v9717 = vld [vmem:[#allocation10 + $0x18] sm:$0xff]
    %v9718 = vld [vmem:[%s6] sm:$0x1]
    %v9720 = vlaneseq
    %v9721 = vshrl.u32 %v9720, 7
    %v9722 = vsub.s32 0, %v9721
    %v9723 = vrot.slane %v9718, %v9722
    %v9726 = vsel %vm138, %v9682, 0
    %v9729 = vsel %vm138, %v9683, 0
    %v9732 = vsel %vm138, %v9684, 0
    %v9735 = vsel %vm138, %v9685, 0
    %v9738 = vsel %vm138, %v9686, 0
    %v9741 = vsel %vm138, %v9687, 0
    %v9744 = vsel %vm138, %v9688, 0
    %v9747 = vsel %vm138, %v9689, 0
    %v9750 = vsel %vm138, %v9690, 0
    %v9753 = vsel %vm138, %v9691, 0
    %v9756 = vsel %vm138, %v9692, 0
    %v9759 = vsel %vm138, %v9693, 0
    %v9762 = vsel %vm138, %v9694, 0
    %v9765 = vsel %vm138, %v9695, 0
    %v9768 = vsel %vm138, %v9696, 0
    %v9771 = vsel %vm138, %v9697, 0
    %v9774 = vsel %vm138, %v9698, 0
    %v9777 = vsel %vm138, %v9699, 0
    %v9780 = vsel %vm138, %v9700, 0
    %v9783 = vsel %vm138, %v9701, 0
    %v9786 = vsel %vm138, %v9702, 0
    %v9789 = vsel %vm138, %v9703, 0
    %v9792 = vsel %vm138, %v9704, 0
    %v9795 = vsel %vm138, %v9705, 0
    %v9798 = vsel %vm138, %v9706, 0
    %v9801 = vsel %vm138, %v9707, 0
    %v9804 = vsel %vm138, %v9708, 0
    %v9807 = vsel %vm138, %v9709, 0
    %v9810 = vsel %vm138, %v9710, 0
    %v9813 = vsel %vm138, %v9711, 0
    %v9816 = vsel %vm138, %v9712, 0
    %v9819 = vsel %vm138, %v9713, 0
    %9821 = vmatprep.subr.mxu0 0.0
    %9822 = vmatpush1.msra.mxu0 0.0
    %9823 = vmatprep.subr.mxu0 0.0
    %9824 = vmatpush1.msra.mxu0 0.0
    %9825 = vmatprep.subr.mxu0 0.0
    %9826 = vmatpush1.msra.mxu0 0.0
    %9827 = vmatprep.subr.mxu0 0.0
    %9828 = vmatpush1.msra.mxu0 0.0
    %9829 = vmatprep.subr.mxu0 0.0
    %9830 = vmatpush1.msra.mxu0 0.0
    %9831 = vmatprep.subr.mxu0 0.0
    %9832 = vmatpush1.msra.mxu0 0.0
    %9833 = vmatprep.subr.mxu0 0.0
    %9834 = vmatpush1.msra.mxu0 0.0
    %9835 = vmatprep.subr.mxu0 0.0
    %9836 = vmatpush1.msra.mxu0 0.0
    %9837 = vmatprep.subr.mxu0 0.0
    %9838 = vmatpush1.msra.mxu0 0.0
    %9839 = vmatprep.subr.mxu0 0.0
    %9840 = vmatpush1.msra.mxu0 0.0
    %9841 = vmatprep.subr.mxu0 0.0
    %9842 = vmatpush1.msra.mxu0 0.0
    %9843 = vmatprep.subr.mxu0 0.0
    %9844 = vmatpush1.msra.mxu0 0.0
    %9845 = vmatprep.subr.mxu0 0.0
    %9846 = vmatpush1.msra.mxu0 %v9717
    %9847 = vmatprep.subr.mxu0 0.0
    %9848 = vmatpush1.msra.mxu0 %v9716
    %9849 = vmatprep.subr.mxu0 0.0
    %9850 = vmatpush1.msra.mxu0 %v9715
    %9851 = vmatprep.subr.mxu0 0.0
    %9852 = vmatpush1.msra.mxu0 %v9714
    %9853 = vmatprep.subr.mxu0 0.0
    %9854 = vmatpush2.msra.mxu0 0.0
    %9855 = vmatprep.subr.mxu0 0.0
    %9856 = vmatpush2.msra.mxu0 0.0
    %9857 = vmatprep.subr.mxu0 0.0
    %9858 = vmatpush2.msra.mxu0 0.0
    %9859 = vmatprep.subr.mxu0 0.0
    %9860 = vmatpush2.msra.mxu0 0.0
    %9861 = vmatprep.subr.mxu0 0.0
    %9862 = vmatpush2.msra.mxu0 0.0
    %9863 = vmatprep.subr.mxu0 0.0
    %9864 = vmatpush2.msra.mxu0 0.0
    %9865 = vmatprep.subr.mxu0 0.0
    %9866 = vmatpush2.msra.mxu0 0.0
    %9867 = vmatprep.subr.mxu0 0.0
    %9868 = vmatpush2.msra.mxu0 0.0
    %9869 = vmatprep.subr.mxu0 0.0
    %9870 = vmatpush2.msra.mxu0 0.0
    %9871 = vmatprep.subr.mxu0 0.0
    %9872 = vmatpush2.msra.mxu0 0.0
    %9873 = vmatprep.subr.mxu0 0.0
    %9874 = vmatpush2.msra.mxu0 0.0
    %9875 = vmatprep.subr.mxu0 0.0
    %9876 = vmatpush2.msra.mxu0 0.0
    %9877 = vmatprep.subr.mxu0 0.0
    %9878 = vmatpush2.msra.mxu0 0.0
    %9879 = vmatprep.subr.mxu0 0.0
    %9880 = vmatpush2.msra.mxu0 0.0
    %9881 = vmatprep.subr.mxu0 0.0
    %9882 = vmatpush2.msra.mxu0 0.0
    %9883 = vmatprep.subr.mxu0 0.0
    %9884 = vmatpush2.msra.mxu0 0.0
    %9885 = vmatprep.mubr.f32.mxu0 0.0
    %9886 = vmatmul.mubr.f32.gmra.mxu0 %v9726
    %v9887 = vpop.f32.mrf.mxu0
    %v9888 = vadd.f32 %v9723, %v9887
    %v9889 = vpop.f32.mrf.mxu0
    %9890 = vmatprep.mubr.f32.mxu0 0.0
    %9891 = vmatmul.mubr.f32.gmra.mxu0 %v9729
    %v9892 = vpop.f32.mrf.mxu0
    %v9893 = vadd.f32 %v9723, %v9892
    %v9894 = vpop.f32.mrf.mxu0
    %9895 = vmatprep.mubr.f32.mxu0 0.0
    %9896 = vmatmul.mubr.f32.gmra.mxu0 %v9732
    %v9897 = vpop.f32.mrf.mxu0
    %v9898 = vadd.f32 %v9723, %v9897
    %v9899 = vpop.f32.mrf.mxu0
    %9900 = vmatprep.mubr.f32.mxu0 0.0
    %9901 = vmatmul.mubr.f32.gmra.mxu0 %v9735
    %v9902 = vpop.f32.mrf.mxu0
    %v9903 = vadd.f32 %v9723, %v9902
    %v9904 = vpop.f32.mrf.mxu0
    %9905 = vmatprep.mubr.f32.mxu0 0.0
    %9906 = vmatmul.mubr.f32.gmra.mxu0 %v9738
    %v9907 = vpop.f32.mrf.mxu0
    %v9908 = vadd.f32 %v9723, %v9907
    %v9909 = vpop.f32.mrf.mxu0
    %9910 = vmatprep.mubr.f32.mxu0 0.0
    %9911 = vmatmul.mubr.f32.gmra.mxu0 %v9741
    %v9912 = vpop.f32.mrf.mxu0
    %v9913 = vadd.f32 %v9723, %v9912
    %v9914 = vpop.f32.mrf.mxu0
    %9915 = vmatprep.mubr.f32.mxu0 0.0
    %9916 = vmatmul.mubr.f32.gmra.mxu0 %v9744
    %v9917 = vpop.f32.mrf.mxu0
    %v9918 = vadd.f32 %v9723, %v9917
    %v9919 = vpop.f32.mrf.mxu0
    %9920 = vmatprep.mubr.f32.mxu0 0.0
    %9921 = vmatmul.mubr.f32.gmra.mxu0 %v9747
    %v9922 = vpop.f32.mrf.mxu0
    %v9923 = vadd.f32 %v9723, %v9922
    %v9924 = vpop.f32.mrf.mxu0
    %9925 = vmatprep.mubr.f32.mxu0 0.0
    %9926 = vmatmul.mubr.f32.gmra.mxu0 %v9750
    %v9927 = vpop.f32.mrf.mxu0
    %v9928 = vadd.f32 %v9723, %v9927
    %v9929 = vpop.f32.mrf.mxu0
    %9930 = vmatprep.mubr.f32.mxu0 0.0
    %9931 = vmatmul.mubr.f32.gmra.mxu0 %v9753
    %v9932 = vpop.f32.mrf.mxu0
    %v9933 = vadd.f32 %v9723, %v9932
    %v9934 = vpop.f32.mrf.mxu0
    %9935 = vmatprep.mubr.f32.mxu0 0.0
    %9936 = vmatmul.mubr.f32.gmra.mxu0 %v9756
    %v9937 = vpop.f32.mrf.mxu0
    %v9938 = vadd.f32 %v9723, %v9937
    %v9939 = vpop.f32.mrf.mxu0
    %9940 = vmatprep.mubr.f32.mxu0 0.0
    %9941 = vmatmul.mubr.f32.gmra.mxu0 %v9759
    %v9942 = vpop.f32.mrf.mxu0
    %v9943 = vadd.f32 %v9723, %v9942
    %v9944 = vpop.f32.mrf.mxu0
    %9945 = vmatprep.mubr.f32.mxu0 0.0
    %9946 = vmatmul.mubr.f32.gmra.mxu0 %v9762
    %v9947 = vpop.f32.mrf.mxu0
    %v9948 = vadd.f32 %v9723, %v9947
    %v9949 = vpop.f32.mrf.mxu0
    %9950 = vmatprep.mubr.f32.mxu0 0.0
    %9951 = vmatmul.mubr.f32.gmra.mxu0 %v9765
    %v9952 = vpop.f32.mrf.mxu0
    %v9953 = vadd.f32 %v9723, %v9952
    %v9954 = vpop.f32.mrf.mxu0
    %9955 = vmatprep.mubr.f32.mxu0 0.0
    %9956 = vmatmul.mubr.f32.gmra.mxu0 %v9768
    %v9957 = vpop.f32.mrf.mxu0
    %v9958 = vadd.f32 %v9723, %v9957
    %v9959 = vpop.f32.mrf.mxu0
    %9960 = vmatprep.mubr.f32.mxu0 0.0
    %9961 = vmatmul.mubr.f32.gmra.mxu0 %v9771
    %v9962 = vpop.f32.mrf.mxu0
    %v9963 = vadd.f32 %v9723, %v9962
    %v9964 = vpop.f32.mrf.mxu0
    %9965 = vmatprep.mubr.f32.mxu0 0.0
    %9966 = vmatmul.mubr.f32.gmra.mxu0 %v9774
    %v9967 = vpop.f32.mrf.mxu0
    %v9968 = vadd.f32 %v9723, %v9967
    %v9969 = vpop.f32.mrf.mxu0
    %9970 = vmatprep.mubr.f32.mxu0 0.0
    %9971 = vmatmul.mubr.f32.gmra.mxu0 %v9777
    %v9972 = vpop.f32.mrf.mxu0
    %v9973 = vadd.f32 %v9723, %v9972
    %v9974 = vpop.f32.mrf.mxu0
    %9975 = vmatprep.mubr.f32.mxu0 0.0
    %9976 = vmatmul.mubr.f32.gmra.mxu0 %v9780
    %v9977 = vpop.f32.mrf.mxu0
    %v9978 = vadd.f32 %v9723, %v9977
    %v9979 = vpop.f32.mrf.mxu0
    %9980 = vmatprep.mubr.f32.mxu0 0.0
    %9981 = vmatmul.mubr.f32.gmra.mxu0 %v9783
    %v9982 = vpop.f32.mrf.mxu0
    %v9983 = vadd.f32 %v9723, %v9982
    %v9984 = vpop.f32.mrf.mxu0
    %9985 = vmatprep.mubr.f32.mxu0 0.0
    %9986 = vmatmul.mubr.f32.gmra.mxu0 %v9786
    %v9987 = vpop.f32.mrf.mxu0
    %v9988 = vadd.f32 %v9723, %v9987
    %v9989 = vpop.f32.mrf.mxu0
    %9990 = vmatprep.mubr.f32.mxu0 0.0
    %9991 = vmatmul.mubr.f32.gmra.mxu0 %v9789
    %v9992 = vpop.f32.mrf.mxu0
    %v9993 = vadd.f32 %v9723, %v9992
    %v9994 = vpop.f32.mrf.mxu0
    %9995 = vmatprep.mubr.f32.mxu0 0.0
    %9996 = vmatmul.mubr.f32.gmra.mxu0 %v9792
    %v9997 = vpop.f32.mrf.mxu0
    %v9998 = vadd.f32 %v9723, %v9997
    %v9999 = vpop.f32.mrf.mxu0
    %10000 = vmatprep.mubr.f32.mxu0 0.0
    %10001 = vmatmul.mubr.f32.gmra.mxu0 %v9795
    %v10002 = vpop.f32.mrf.mxu0
    %v10003 = vadd.f32 %v9723, %v10002
    %v10004 = vpop.f32.mrf.mxu0
    %10005 = vmatprep.mubr.f32.mxu0 0.0
    %10006 = vmatmul.mubr.f32.gmra.mxu0 %v9798
    %v10007 = vpop.f32.mrf.mxu0
    %v10008 = vadd.f32 %v9723, %v10007
    %v10009 = vpop.f32.mrf.mxu0
    %10010 = vmatprep.mubr.f32.mxu0 0.0
    %10011 = vmatmul.mubr.f32.gmra.mxu0 %v9801
    %v10012 = vpop.f32.mrf.mxu0
    %v10013 = vadd.f32 %v9723, %v10012
    %v10014 = vpop.f32.mrf.mxu0
    %10015 = vmatprep.mubr.f32.mxu0 0.0
    %10016 = vmatmul.mubr.f32.gmra.mxu0 %v9804
    %v10017 = vpop.f32.mrf.mxu0
    %v10018 = vadd.f32 %v9723, %v10017
    %v10019 = vpop.f32.mrf.mxu0
    %10020 = vmatprep.mubr.f32.mxu0 0.0
    %10021 = vmatmul.mubr.f32.gmra.mxu0 %v9807
    %v10022 = vpop.f32.mrf.mxu0
    %v10023 = vadd.f32 %v9723, %v10022
    %v10024 = vpop.f32.mrf.mxu0
    %10025 = vmatprep.mubr.f32.mxu0 0.0
    %10026 = vmatmul.mubr.f32.gmra.mxu0 %v9810
    %v10027 = vpop.f32.mrf.mxu0
    %v10028 = vadd.f32 %v9723, %v10027
    %v10029 = vpop.f32.mrf.mxu0
    %10030 = vmatprep.mubr.f32.mxu0 0.0
    %10031 = vmatmul.mubr.f32.gmra.mxu0 %v9813
    %v10032 = vpop.f32.mrf.mxu0
    %v10033 = vadd.f32 %v9723, %v10032
    %v10034 = vpop.f32.mrf.mxu0
    %10035 = vmatprep.mubr.f32.mxu0 0.0
    %10036 = vmatmul.mubr.f32.gmra.mxu0 %v9816
    %v10037 = vpop.f32.mrf.mxu0
    %v10038 = vadd.f32 %v9723, %v10037
    %v10039 = vpop.f32.mrf.mxu0
    %10040 = vmatprep.mubr.f32.mxu0 0.0
    %10041 = vmatmul.mubr.f32.gmra.mxu0 %v9819
    %v10042 = vpop.f32.mrf.mxu0
    %v10043 = vadd.f32 %v9723, %v10042
    %v10044 = vpop.f32.mrf.mxu0
    %10045 = vdwg.mxu0
    %10046 = vst.msk [vmem:[#allocation11] sm:$0xff] %vm138, %v9888
    %10047 = vst.msk [vmem:[#allocation11 + $0x8] sm:$0xff] %vm138, %v9893
    %10048 = vst.msk [vmem:[#allocation11 + $0x10] sm:$0xff] %vm138, %v9898
    %10049 = vst.msk [vmem:[#allocation11 + $0x18] sm:$0xff] %vm138, %v9903
    %10050 = vst.msk [vmem:[#allocation11 + $0x20] sm:$0xff] %vm138, %v9908
    %10051 = vst.msk [vmem:[#allocation11 + $0x28] sm:$0xff] %vm138, %v9913
    %10052 = vst.msk [vmem:[#allocation11 + $0x30] sm:$0xff] %vm138, %v9918
    %10053 = vst.msk [vmem:[#allocation11 + $0x38] sm:$0xff] %vm138, %v9923
    %10054 = vst.msk [vmem:[#allocation11 + $0x40] sm:$0xff] %vm138, %v9928
    %10055 = vst.msk [vmem:[#allocation11 + $0x48] sm:$0xff] %vm138, %v9933
    %10056 = vst.msk [vmem:[#allocation11 + $0x50] sm:$0xff] %vm138, %v9938
    %10057 = vst.msk [vmem:[#allocation11 + $0x58] sm:$0xff] %vm138, %v9943
    %10058 = vst.msk [vmem:[#allocation11 + $0x60] sm:$0xff] %vm138, %v9948
    %10059 = vst.msk [vmem:[#allocation11 + $0x68] sm:$0xff] %vm138, %v9953
    %10060 = vst.msk [vmem:[#allocation11 + $0x70] sm:$0xff] %vm138, %v9958
    %10061 = vst.msk [vmem:[#allocation11 + $0x78] sm:$0xff] %vm138, %v9963
    %10062 = vst.msk [vmem:[#allocation11 + $0x80] sm:$0xff] %vm138, %v9968
    %10063 = vst.msk [vmem:[#allocation11 + $0x88] sm:$0xff] %vm138, %v9973
    %10064 = vst.msk [vmem:[#allocation11 + $0x90] sm:$0xff] %vm138, %v9978
    %10065 = vst.msk [vmem:[#allocation11 + $0x98] sm:$0xff] %vm138, %v9983
    %10066 = vst.msk [vmem:[#allocation11 + $0xa0] sm:$0xff] %vm138, %v9988
    %10067 = vst.msk [vmem:[#allocation11 + $0xa8] sm:$0xff] %vm138, %v9993
    %10068 = vst.msk [vmem:[#allocation11 + $0xb0] sm:$0xff] %vm138, %v9998
    %10069 = vst.msk [vmem:[#allocation11 + $0xb8] sm:$0xff] %vm138, %v10003
    %10070 = vst.msk [vmem:[#allocation11 + $0xc0] sm:$0xff] %vm138, %v10008
    %10071 = vst.msk [vmem:[#allocation11 + $0xc8] sm:$0xff] %vm138, %v10013
    %10072 = vst.msk [vmem:[#allocation11 + $0xd0] sm:$0xff] %vm138, %v10018
    %10073 = vst.msk [vmem:[#allocation11 + $0xd8] sm:$0xff] %vm138, %v10023
    %10074 = vst.msk [vmem:[#allocation11 + $0xe0] sm:$0xff] %vm138, %v10028
    %10075 = vst.msk [vmem:[#allocation11 + $0xe8] sm:$0xff] %vm138, %v10033
    %10076 = vst.msk [vmem:[#allocation11 + $0xf0] sm:$0xff] %vm138, %v10038
    %10077 = vst.msk [vmem:[#allocation11 + $0xf8] sm:$0xff] %vm138, %v10043
    // Predicated region
    $region50: #{tpu_custom_call.1} parent=1 // pred_check
      _
    $region51: #{tpu_custom_call.1} parent=1 // pred_check_branch
      %10079 = sbr.rel (0) target = $region53
    $region52: #{tpu_custom_call.1} parent=1 // pred_region
      %s10081 = ssub.s32 4096, 4096
      %10082 = vsyncadd [#allocation4], %s10081
      %s10083 = sshll.u32 [#allocation11], 4
      %s10084 = int_to_ptr.vmem [resolvable:$true] %s10083
      %10089 = dma.vmem_to_hbm [thread:$0]  %s10084, 4096, %s7, [#allocation4], 128, 128, 8
    $region53: #{tpu_custom_call.1} parent=1 // pred_fallthru
      _
    // Predicated region
    $region54: #{tpu_custom_call.1} parent=1 // pred_check
      _
    $region55: #{tpu_custom_call.1} parent=1 // pred_check_branch
      %10091 = sbr.rel (0) target = $region57
    $region56: #{tpu_custom_call.1} parent=1 // pred_region
      %10092 = dma.done [#allocation4], 4096
    $region57: #{tpu_custom_call.1} parent=1 // pred_fallthru
      _
    %10093 = vsyncpa [#allocation3], 1
    %10094 = vsyncpa [#allocation6], 1
    %10095 = vsyncpa [#allocation9], 1
    %10096 = vsyncpa [#allocation4], 1

</llo_original>
